<compile_context>
chip_gen: v5e
topology: v5e:2x2
jax: 0.10.0
libtpu: 0.0.40
codegen_flags: <defaults>
</compile_context>

<pallas_src>
import functools

import numpy as np
import jax
import jax.numpy as jnp
from jax import lax
from jax.experimental import pallas as pl
from jax.experimental.pallas import tpu as pltpu


# ----------------------------------------------------------------------------
# In-kernel helpers (activations are (C, pixels) with pixels on the lane axis,
# stored in "padded row pitch": pixel (h, w) lives at 1 + (h+1)*Wp + (w+1))
# ----------------------------------------------------------------------------

def _conv3x3(pad_ref, Wp, Pc, w_ref):
    """Reflect-padded 3x3 'same' conv as 9 accumulated per-tap MXU dots.

    pad_ref : (Cin, SW) bf16 scratch holding the fully reflect-padded image.
    w_ref   : (9, Cout, Cin) bf16, tap order k = (dy+1)*3 + (dx+1).
    Returns (Cout, Pc) f32 conv output over padded rows 1..H (all Wp columns;
    the pad-column outputs are garbage and are excluded downstream)."""
    acc = None
    k = 0
    for dy in (-1, 0, 1):
        for dx in (-1, 0, 1):
            start = 1 + (1 + dy) * Wp + dx
            tap = pad_ref[:, start:start + Pc]                  # bf16, no copy
            d = jnp.dot(w_ref[k], tap, preferred_element_type=jnp.float32)
            acc = d if acc is None else acc + d
            k += 1
    return acc


def _instance_norm_relu(y, v_ref, n, a_ref):
    """InstanceNorm2d(affine=True, eps=1e-5, biased var) + ReLU on (C, Pc).

    Sums are computed on the MXU: dot against the valid-pixel mask v
    ((Pc, 128) f32, 1.0 at image pixels / 0.0 at pad columns), so the garbage
    pad-column outputs never pollute the statistics."""
    v = v_ref[...]
    s = jnp.dot(y, v, preferred_element_type=jnp.float32)[:, 0:1]
    s2 = jnp.dot(y * y, v, preferred_element_type=jnp.float32)[:, 0:1]
    mean = s * (1.0 / n)
    var = s2 * (1.0 / n) - mean * mean
    aff = a_ref[...]                                            # (C, 2)
    scale = lax.rsqrt(var + 1e-5) * aff[:, 0:1]
    return jnp.maximum((y - mean) * scale + aff[:, 1:2], 0.0)


# ----------------------------------------------------------------------------
# Fused decoder kernel (one grid step == one batch sample)
# ----------------------------------------------------------------------------

def decoder_kernel(x_ref, u1_ref, w1_ref, a1_ref, v1_ref,
                   u2_ref, w2_ref, a2_ref, v2_ref, cm_ref, w3_ref, b3_ref,
                   o_ref, pad1_ref, pad2_ref,
                   *, Wp1, Pc1, n1, Wp2, Hp2, Pc2, n2):
    bf16 = jnp.bfloat16
    f32 = jnp.float32

    # --- stage 1: Upsample(2x)+Blur+reflect-pad fused into one matmul -------
    # u1 maps the (c0, H*W) input straight to the reflect-padded upsampled
    # image in padded pitch Wp1, writing the ENTIRE scratch (margins are 0).
    x = x_ref[0].astype(bf16)                                   # (c0p, H*W)
    pad1_ref[...] = jnp.dot(x, u1_ref[...],
                            preferred_element_type=f32).astype(bf16)
    y1 = _conv3x3(pad1_ref, Wp1, Pc1, w1_ref)                   # (cp, Pc1) f32
    h1 = _instance_norm_relu(y1, v1_ref, n1, a1_ref)            # (cp, Pc1) f32

    # --- stage 2: same structure on the 2H x 2W image ------------------------
    # u2's rows for h1's pad-column positions are zero, so h1's garbage
    # columns contribute nothing.
    pad2_ref[...] = jnp.dot(h1.astype(bf16), u2_ref[...],
                            preferred_element_type=f32).astype(bf16)
    y2 = _conv3x3(pad2_ref, Wp2, Pc2, w2_ref)                   # (cp, Pc2) f32
    h2 = _instance_norm_relu(y2, v2_ref, n2, a2_ref)

    # --- stage 3: rebuild reflect padding in the SAME scratch, final conv ----
    h2b = h2.astype(bf16)
    base = 1 + Wp2                                              # padded row 1
    pad2_ref[:, base:base + Pc2] = h2b
    # column reflection (reflect-101): col 0 <- col 2, col Wp2-1 <- col Wp2-3
    left = pad2_ref[:, base + 2:base + 2 + Pc2]
    right = pad2_ref[:, base - 2:base - 2 + Pc2]
    is_c0 = cm_ref[0:1, :] > 0.5
    is_cl = cm_ref[1:2, :] > 0.5
    pad2_ref[:, base:base + Pc2] = jnp.where(
        is_c0, left, jnp.where(is_cl, right, h2b))
    # row reflection: padded row 0 <- row 2, padded row Hp2-1 <- row Hp2-3
    pad2_ref[:, 1:1 + Wp2] = pad2_ref[:, 1 + 2 * Wp2:1 + 3 * Wp2]
    pad2_ref[:, 1 + (Hp2 - 1) * Wp2:1 + Hp2 * Wp2] = (
        pad2_ref[:, 1 + (Hp2 - 3) * Wp2:1 + (Hp2 - 2) * Wp2])

    y3 = _conv3x3(pad2_ref, Wp2, Pc2, w3_ref) + b3_ref[...]     # (3, Pc2) f32
    o_ref[0] = y3.astype(o_ref.dtype)


# ----------------------------------------------------------------------------
# Host-side operator / weight preparation
# ----------------------------------------------------------------------------

def _round_up(x, m):
    return (x + m - 1) // m * m


def _upblur_1d(n):
    # nearest-2x upsample then [1,2,1]/4 blur with reflect-101 on the
    # upsampled grid == this 2-tap polyphase operator on the low-res grid.
    m = np.zeros((n, 2 * n), np.float32)
    for i in range(n):
        m[i, 2 * i] += 0.75
        m[max(i - 1, 0), 2 * i] += 0.25
        m[i, 2 * i + 1] += 0.75
        m[min(i + 1, n - 1), 2 * i + 1] += 0.25
    return m


def _reflect_pad_cols(m):
    # append reflect-101 OUTPUT columns: col -1 := col 1, col L := col L-2.
    n, L = m.shape
    p = np.zeros((n, L + 2), np.float32)
    p[:, 1:L + 1] = m
    p[:, 0] = m[:, 1]
    p[:, L + 1] = m[:, L - 2]
    return p


def _upblur_pad_operator(h, w, in_pitch_w, sw):
    """(h*in_pitch_w, sw) operator: input image (h, w) flattened with row
    pitch in_pitch_w (extra pitch columns -> zero rows); output = the 2x
    upsampled, blurred, reflect-101-padded image in padded pitch (2w+2),
    written at lane offset 1 of a width-sw slab (all other lanes 0).
    Every coefficient is an exact bf16 multiple of 1/16."""
    a = _reflect_pad_cols(_upblur_1d(h))                        # (h, 2h+2)
    b = _reflect_pad_cols(_upblur_1d(w))                        # (w, 2w+2)
    if in_pitch_w != w:
        bz = np.zeros((in_pitch_w, b.shape[1]), np.float32)
        bz[1:w + 1] = b
        b = bz
    core = np.kron(a, b)
    out = np.zeros((core.shape[0], sw), np.float32)
    out[:, 1:1 + core.shape[1]] = core
    return out


def _valid_cols(h, wp):
    c = np.arange(h * wp) % wp
    return ((c != 0) & (c != wp - 1)).astype(np.float32)


def _pack_conv_w(w_hwio, cin_p, cout_p):
    # (3,3,cin,cout) HWIO -> (9, cout_p, cin_p) bf16, zero-padded channels,
    # tap order k = (dy+1)*3 + (dx+1).
    w = np.asarray(w_hwio, np.float32)
    kh, kw, cin, cout = w.shape
    out = np.zeros((kh * kw, cout_p, cin_p), np.float32)
    out[:, :cout, :cin] = np.transpose(w, (0, 1, 3, 2)).reshape(kh * kw, cout, cin)
    return jnp.asarray(out, jnp.bfloat16)


def _pack_affine(gamma, beta, cp):
    a = np.zeros((cp, 2), np.float32)
    a[:np.asarray(gamma).shape[0], 0] = np.asarray(gamma)
    a[:np.asarray(beta).shape[0], 1] = np.asarray(beta)
    return jnp.asarray(a)


def init_decoder_params(key, filter_counts):
    """Synthetic Decoder weights (shapes mirror the PyTorch module)."""
    c0, c1, c2 = filter_counts
    ks = jax.random.split(key, 6)
    s = 0.1
    return {
        # ConvNormLayer(c0 -> c1)
        "w1": s * jax.random.normal(ks[0], (3, 3, c0, c1), jnp.float32),
        "b1": s * jax.random.normal(ks[1], (c1,), jnp.float32),  # cancelled by IN
        "g1": jnp.ones((c1,), jnp.float32),
        "bt1": jnp.zeros((c1,), jnp.float32),
        # ConvNormLayer(c1 -> c2)
        "w2": s * jax.random.normal(ks[2], (3, 3, c1, c2), jnp.float32),
        "b2": s * jax.random.normal(ks[3], (c2,), jnp.float32),  # cancelled by IN
        "g2": jnp.ones((c2,), jnp.float32),
        "bt2": jnp.zeros((c2,), jnp.float32),
        # ConvNoTanhLayer(c2 -> 3)
        "w3": s * jax.random.normal(ks[4], (3, 3, c2, 3), jnp.float32),
        "b3": s * jax.random.normal(ks[5], (3,), jnp.float32),
    }


def prepare_kernel_params(params, c0, H, W):
    """Bake weights + fused upsample/blur/pad operators into kernel layout."""
    c1 = params["w1"].shape[3]
    c2 = params["w2"].shape[3]
    c0p = _round_up(c0, 8)
    cp = max(_round_up(c1, 8), _round_up(c2, 8))   # shared channel padding
    H1, W1 = 2 * H, 2 * W
    H2, W2 = 2 * H1, 2 * W1
    Wp1, Hp1 = W1 + 2, H1 + 2
    Wp2, Hp2 = W2 + 2, H2 + 2
    SW1 = _round_up(Hp1 * Wp1 + 2, 128)
    SW2 = _round_up(Hp2 * Wp2 + 2, 128)
    Pc1, Pc2 = H1 * Wp1, H2 * Wp2

    c2cols = np.arange(Pc2) % Wp2
    cm3 = np.stack([(c2cols == 0), (c2cols == Wp2 - 1)]).astype(np.float32)

    return {
        "u1": jnp.asarray(_upblur_pad_operator(H, W, W, SW1), jnp.bfloat16),
        "u2": jnp.asarray(_upblur_pad_operator(H1, W1, Wp1, SW2), jnp.bfloat16),
        "w1": _pack_conv_w(params["w1"], c0p, cp),
        "aff1": _pack_affine(params["g1"], params["bt1"], cp),
        "v1": jnp.asarray(np.tile(_valid_cols(H1, Wp1)[:, None], (1, 128))),
        "w2": _pack_conv_w(params["w2"], cp, cp),
        "aff2": _pack_affine(params["g2"], params["bt2"], cp),
        "v2": jnp.asarray(np.tile(_valid_cols(H2, Wp2)[:, None], (1, 128))),
        "cm3": jnp.asarray(cm3),
        "w3": _pack_conv_w(params["w3"], cp, 3),
        "b3": jnp.asarray(np.asarray(params["b3"], np.float32).reshape(3, 1)),
        # b1/b2 intentionally dropped: InstanceNorm's mean subtraction cancels
        # a per-channel constant conv bias exactly.
    }


# ----------------------------------------------------------------------------
# Decoder forward (use_skip=False)
# ----------------------------------------------------------------------------

@jax.jit
def decoder_forward(x_nchw, kp):
    B, c0, H, W = x_nchw.shape
    cp = kp["w1"].shape[1]
    c0p = kp["w1"].shape[2]
    H1, W1, H2, W2 = 2 * H, 2 * W, 4 * H, 4 * W
    Wp1, Wp2, Hp2 = W1 + 2, W2 + 2, H2 + 2
    Pc1, Pc2 = H1 * Wp1, H2 * Wp2
    SW1, SW2 = kp["u1"].shape[1], kp["u2"].shape[1]
    P0 = H * W

    if c0p != c0:
        x_nchw = jnp.pad(x_nchw, ((0, 0), (0, c0p - c0), (0, 0), (0, 0)))
    x_flat = x_nchw.reshape(B, c0p, P0)      # NCHW is already (C, H*W) flat

    kernel = functools.partial(decoder_kernel, Wp1=Wp1, Pc1=Pc1, n1=H1 * W1,
                               Wp2=Wp2, Hp2=Hp2, Pc2=Pc2, n2=H2 * W2)
    out_flat = pl.pallas_call(
        kernel,
        out_shape=jax.ShapeDtypeStruct((B, 3, Pc2), jnp.float32),
        grid=(B,),
        in_specs=[
            pl.BlockSpec((1, c0p, P0), lambda b: (b, 0, 0)),
            pl.BlockSpec((P0, SW1), lambda b: (0, 0)),
            pl.BlockSpec((9, cp, c0p), lambda b: (0, 0, 0)),
            pl.BlockSpec((cp, 2), lambda b: (0, 0)),
            pl.BlockSpec((Pc1, 128), lambda b: (0, 0)),
            pl.BlockSpec((Pc1, SW2), lambda b: (0, 0)),
            pl.BlockSpec((9, cp, cp), lambda b: (0, 0, 0)),
            pl.BlockSpec((cp, 2), lambda b: (0, 0)),
            pl.BlockSpec((Pc2, 128), lambda b: (0, 0)),
            pl.BlockSpec((2, Pc2), lambda b: (0, 0)),
            pl.BlockSpec((9, 3, cp), lambda b: (0, 0, 0)),
            pl.BlockSpec((3, 1), lambda b: (0, 0)),
        ],
        out_specs=pl.BlockSpec((1, 3, Pc2), lambda b: (b, 0, 0)),
        scratch_shapes=[
            pltpu.VMEM((c0p, SW1), jnp.bfloat16),   # stage-1 padded image
            pltpu.VMEM((cp, SW2), jnp.bfloat16),    # stage-2 AND stage-3 padded image
        ],
        # grid=(B,) "parallel": on v7x each sample lands on one TensorCore.
        # TODO(synk): for production B==1 on v7x, split the pixel axis across
        # a 2-wide parallel grid axis instead (review item 5).
        compiler_params=pltpu.CompilerParams(
            dimension_semantics=("parallel",)),
    )(x_flat, kp["u1"], kp["w1"], kp["aff1"], kp["v1"],
      kp["u2"], kp["w2"], kp["aff2"], kp["v2"], kp["cm3"], kp["w3"], kp["b3"])

    # kernel output is in padded row pitch (Wp2); drop the pad columns here
    # (pure layout plumbing on a tiny tensor).
    out = out_flat.reshape(B, 3, H2, Wp2)[:, :, :, 1:1 + W2]
    return out


if __name__ == "__main__":
    a = 0.25
    filter_counts = [int(a * 64), int(a * 48), int(a * 32)]   # [16, 12, 8]
    B, H, W = 2, 8, 8

    key = jax.random.PRNGKey(0)
    kx, kw = jax.random.split(key)
    x = jax.random.normal(kx, (B, filter_counts[0], H, W), jnp.float32)
    params = init_decoder_params(kw, filter_counts)
    kparams = prepare_kernel_params(params, filter_counts[0], H, W)

    out = decoder_forward(x, kparams)
    jax.block_until_ready(out)

    assert out.shape == (B, 3, 4 * H, 4 * W), out.shape
    assert out.dtype == jnp.float32
    assert bool(jnp.all(jnp.isfinite(out)))
    print("KERNEL_OK")
</pallas_src>

<mosaic_0001>
module attributes {stable_mosaic.version = 11 : i64} {
  func.func @decoder_kernel(%arg0: i32, %arg1: memref<1x16x64xf32, #tpu.memory_space<vmem>>, %arg2: memref<64x384xbf16, #tpu.memory_space<vmem>>, %arg3: memref<9x16x16xbf16, #tpu.memory_space<vmem>>, %arg4: memref<16x2xf32, #tpu.memory_space<vmem>>, %arg5: memref<288x128xf32, #tpu.memory_space<vmem>>, %arg6: memref<288x1280xbf16, #tpu.memory_space<vmem>>, %arg7: memref<9x16x16xbf16, #tpu.memory_space<vmem>>, %arg8: memref<16x2xf32, #tpu.memory_space<vmem>>, %arg9: memref<1088x128xf32, #tpu.memory_space<vmem>>, %arg10: memref<2x1088xf32, #tpu.memory_space<vmem>>, %arg11: memref<9x3x16xbf16, #tpu.memory_space<vmem>>, %arg12: memref<3x1xf32, #tpu.memory_space<vmem>>, %arg13: memref<1x3x1088xf32, #tpu.memory_space<vmem>>, %arg14: memref<16x384xbf16, #tpu.memory_space<vmem>>, %arg15: memref<16x1280xbf16, #tpu.memory_space<vmem>>) attributes {dimension_semantics = [#tpu.dimension_semantics<parallel>], iteration_bounds = array<i64: 2>, scalar_prefetch = 0 : i64, scratch_operands = 2 : i64, tpu.core_type = #tpu.core_type<tc>, window_params = [{transform_indices = @transform_0, window_bounds = array<i64: 1, 16, 64>}, {pipeline_mode = #tpu.pipeline_mode<synchronous>, transform_indices = @transform_1, window_bounds = array<i64: 64, 384>}, {pipeline_mode = #tpu.pipeline_mode<synchronous>, transform_indices = @transform_2, window_bounds = array<i64: 9, 16, 16>}, {pipeline_mode = #tpu.pipeline_mode<synchronous>, transform_indices = @transform_3, window_bounds = array<i64: 16, 2>}, {pipeline_mode = #tpu.pipeline_mode<synchronous>, transform_indices = @transform_4, window_bounds = array<i64: 288, 128>}, {pipeline_mode = #tpu.pipeline_mode<synchronous>, transform_indices = @transform_5, window_bounds = array<i64: 288, 1280>}, {pipeline_mode = #tpu.pipeline_mode<synchronous>, transform_indices = @transform_6, window_bounds = array<i64: 9, 16, 16>}, {pipeline_mode = #tpu.pipeline_mode<synchronous>, transform_indices = @transform_7, window_bounds = array<i64: 16, 2>}, {pipeline_mode = #tpu.pipeline_mode<synchronous>, transform_indices = @transform_8, window_bounds = array<i64: 1088, 128>}, {pipeline_mode = #tpu.pipeline_mode<synchronous>, transform_indices = @transform_9, window_bounds = array<i64: 2, 1088>}, {pipeline_mode = #tpu.pipeline_mode<synchronous>, transform_indices = @transform_10, window_bounds = array<i64: 9, 3, 16>}, {pipeline_mode = #tpu.pipeline_mode<synchronous>, transform_indices = @transform_11, window_bounds = array<i64: 3, 1>}, {transform_indices = @transform_12, window_bounds = array<i64: 1, 3, 1088>}]} {
    %c0 = arith.constant 0 : index
    %c0_0 = arith.constant 0 : index
    %c0_1 = arith.constant 0 : index
    %0 = vector.load %arg1[%c0, %c0_0, %c0_1] : memref<1x16x64xf32, #tpu.memory_space<vmem>>, vector<1x16x64xf32>
    %1 = vector.shape_cast %0 : vector<1x16x64xf32> to vector<16x64xf32>
    %2 = arith.truncf %1 : vector<16x64xf32> to vector<16x64xbf16>
    %c0_2 = arith.constant 0 : index
    %c0_3 = arith.constant 0 : index
    %3 = vector.load %arg2[%c0_2, %c0_3] : memref<64x384xbf16, #tpu.memory_space<vmem>>, vector<64x384xbf16>
    %cst = arith.constant dense<0.000000e+00> : vector<16x384xf32>
    %4 = tpu.matmul %2, %3, %cst {dimension_numbers = #tpu.dot_dimension_numbers<[1], [0], [0], [1], [0, 0, 1, 1], [], []>} : vector<16x64xbf16>, vector<64x384xbf16>, vector<16x384xf32> -> vector<16x384xf32>
    %5 = arith.truncf %4 : vector<16x384xf32> to vector<16x384xbf16>
    %c0_4 = arith.constant 0 : index
    %c0_5 = arith.constant 0 : index
    %6 = vector.load %arg14[%c0_4, %c0_5] : memref<16x384xbf16, #tpu.memory_space<vmem>>, vector<16x384xbf16>
    tpu.vector_store %arg14[%c0_4, %c0_5], %5 {strides = array<i32>} : memref<16x384xbf16, #tpu.memory_space<vmem>>, vector<16x384xbf16>,
    %c0_6 = arith.constant 0 : index
    %c0_7 = arith.constant 0 : index
    %7 = vector.load %arg14[%c0_6, %c0_7] : memref<16x384xbf16, #tpu.memory_space<vmem>>, vector<16x288xbf16>
    %c0_8 = arith.constant 0 : index
    %c0_9 = arith.constant 0 : index
    %c0_10 = arith.constant 0 : index
    %8 = vector.load %arg3[%c0_8, %c0_9, %c0_10] : memref<9x16x16xbf16, #tpu.memory_space<vmem>>, vector<1x16x16xbf16>
    %9 = vector.shape_cast %8 : vector<1x16x16xbf16> to vector<16x16xbf16>
    %cst_11 = arith.constant dense<0.000000e+00> : vector<16x288xf32>
    %10 = tpu.matmul %9, %7, %cst_11 {dimension_numbers = #tpu.dot_dimension_numbers<[1], [0], [0], [1], [0, 0, 1, 1], [], []>} : vector<16x16xbf16>, vector<16x288xbf16>, vector<16x288xf32> -> vector<16x288xf32>
    %c0_12 = arith.constant 0 : index
    %c1 = arith.constant 1 : index
    %11 = vector.load %arg14[%c0_12, %c1] : memref<16x384xbf16, #tpu.memory_space<vmem>>, vector<16x288xbf16>
    %c1_13 = arith.constant 1 : index
    %c0_14 = arith.constant 0 : index
    %c0_15 = arith.constant 0 : index
    %12 = vector.load %arg3[%c1_13, %c0_14, %c0_15] : memref<9x16x16xbf16, #tpu.memory_space<vmem>>, vector<1x16x16xbf16>
    %13 = vector.shape_cast %12 : vector<1x16x16xbf16> to vector<16x16xbf16>
    %cst_16 = arith.constant dense<0.000000e+00> : vector<16x288xf32>
    %14 = tpu.matmul %13, %11, %cst_16 {dimension_numbers = #tpu.dot_dimension_numbers<[1], [0], [0], [1], [0, 0, 1, 1], [], []>} : vector<16x16xbf16>, vector<16x288xbf16>, vector<16x288xf32> -> vector<16x288xf32>
    %15 = arith.addf %10, %14 : vector<16x288xf32>
    %c0_17 = arith.constant 0 : index
    %c2 = arith.constant 2 : index
    %16 = vector.load %arg14[%c0_17, %c2] : memref<16x384xbf16, #tpu.memory_space<vmem>>, vector<16x288xbf16>
    %c2_18 = arith.constant 2 : index
    %c0_19 = arith.constant 0 : index
    %c0_20 = arith.constant 0 : index
    %17 = vector.load %arg3[%c2_18, %c0_19, %c0_20] : memref<9x16x16xbf16, #tpu.memory_space<vmem>>, vector<1x16x16xbf16>
    %18 = vector.shape_cast %17 : vector<1x16x16xbf16> to vector<16x16xbf16>
    %cst_21 = arith.constant dense<0.000000e+00> : vector<16x288xf32>
    %19 = tpu.matmul %18, %16, %cst_21 {dimension_numbers = #tpu.dot_dimension_numbers<[1], [0], [0], [1], [0, 0, 1, 1], [], []>} : vector<16x16xbf16>, vector<16x288xbf16>, vector<16x288xf32> -> vector<16x288xf32>
    %20 = arith.addf %15, %19 : vector<16x288xf32>
    %c0_22 = arith.constant 0 : index
    %c18 = arith.constant 18 : index
    %21 = vector.load %arg14[%c0_22, %c18] : memref<16x384xbf16, #tpu.memory_space<vmem>>, vector<16x288xbf16>
    %c3 = arith.constant 3 : index
    %c0_23 = arith.constant 0 : index
    %c0_24 = arith.constant 0 : index
    %22 = vector.load %arg3[%c3, %c0_23, %c0_24] : memref<9x16x16xbf16, #tpu.memory_space<vmem>>, vector<1x16x16xbf16>
    %23 = vector.shape_cast %22 : vector<1x16x16xbf16> to vector<16x16xbf16>
    %cst_25 = arith.constant dense<0.000000e+00> : vector<16x288xf32>
    %24 = tpu.matmul %23, %21, %cst_25 {dimension_numbers = #tpu.dot_dimension_numbers<[1], [0], [0], [1], [0, 0, 1, 1], [], []>} : vector<16x16xbf16>, vector<16x288xbf16>, vector<16x288xf32> -> vector<16x288xf32>
    %25 = arith.addf %20, %24 : vector<16x288xf32>
    %c0_26 = arith.constant 0 : index
    %c19 = arith.constant 19 : index
    %26 = vector.load %arg14[%c0_26, %c19] : memref<16x384xbf16, #tpu.memory_space<vmem>>, vector<16x288xbf16>
    %c4 = arith.constant 4 : index
    %c0_27 = arith.constant 0 : index
    %c0_28 = arith.constant 0 : index
    %27 = vector.load %arg3[%c4, %c0_27, %c0_28] : memref<9x16x16xbf16, #tpu.memory_space<vmem>>, vector<1x16x16xbf16>
    %28 = vector.shape_cast %27 : vector<1x16x16xbf16> to vector<16x16xbf16>
    %cst_29 = arith.constant dense<0.000000e+00> : vector<16x288xf32>
    %29 = tpu.matmul %28, %26, %cst_29 {dimension_numbers = #tpu.dot_dimension_numbers<[1], [0], [0], [1], [0, 0, 1, 1], [], []>} : vector<16x16xbf16>, vector<16x288xbf16>, vector<16x288xf32> -> vector<16x288xf32>
    %30 = arith.addf %25, %29 : vector<16x288xf32>
    %c0_30 = arith.constant 0 : index
    %c20 = arith.constant 20 : index
    %31 = vector.load %arg14[%c0_30, %c20] : memref<16x384xbf16, #tpu.memory_space<vmem>>, vector<16x288xbf16>
    %c5 = arith.constant 5 : index
    %c0_31 = arith.constant 0 : index
    %c0_32 = arith.constant 0 : index
    %32 = vector.load %arg3[%c5, %c0_31, %c0_32] : memref<9x16x16xbf16, #tpu.memory_space<vmem>>, vector<1x16x16xbf16>
    %33 = vector.shape_cast %32 : vector<1x16x16xbf16> to vector<16x16xbf16>
    %cst_33 = arith.constant dense<0.000000e+00> : vector<16x288xf32>
    %34 = tpu.matmul %33, %31, %cst_33 {dimension_numbers = #tpu.dot_dimension_numbers<[1], [0], [0], [1], [0, 0, 1, 1], [], []>} : vector<16x16xbf16>, vector<16x288xbf16>, vector<16x288xf32> -> vector<16x288xf32>
    %35 = arith.addf %30, %34 : vector<16x288xf32>
    %c0_34 = arith.constant 0 : index
    %c36 = arith.constant 36 : index
    %36 = vector.load %arg14[%c0_34, %c36] : memref<16x384xbf16, #tpu.memory_space<vmem>>, vector<16x288xbf16>
    %c6 = arith.constant 6 : index
    %c0_35 = arith.constant 0 : index
    %c0_36 = arith.constant 0 : index
    %37 = vector.load %arg3[%c6, %c0_35, %c0_36] : memref<9x16x16xbf16, #tpu.memory_space<vmem>>, vector<1x16x16xbf16>
    %38 = vector.shape_cast %37 : vector<1x16x16xbf16> to vector<16x16xbf16>
    %cst_37 = arith.constant dense<0.000000e+00> : vector<16x288xf32>
    %39 = tpu.matmul %38, %36, %cst_37 {dimension_numbers = #tpu.dot_dimension_numbers<[1], [0], [0], [1], [0, 0, 1, 1], [], []>} : vector<16x16xbf16>, vector<16x288xbf16>, vector<16x288xf32> -> vector<16x288xf32>
    %40 = arith.addf %35, %39 : vector<16x288xf32>
    %c0_38 = arith.constant 0 : index
    %c37 = arith.constant 37 : index
    %41 = vector.load %arg14[%c0_38, %c37] : memref<16x384xbf16, #tpu.memory_space<vmem>>, vector<16x288xbf16>
    %c7 = arith.constant 7 : index
    %c0_39 = arith.constant 0 : index
    %c0_40 = arith.constant 0 : index
    %42 = vector.load %arg3[%c7, %c0_39, %c0_40] : memref<9x16x16xbf16, #tpu.memory_space<vmem>>, vector<1x16x16xbf16>
    %43 = vector.shape_cast %42 : vector<1x16x16xbf16> to vector<16x16xbf16>
    %cst_41 = arith.constant dense<0.000000e+00> : vector<16x288xf32>
    %44 = tpu.matmul %43, %41, %cst_41 {dimension_numbers = #tpu.dot_dimension_numbers<[1], [0], [0], [1], [0, 0, 1, 1], [], []>} : vector<16x16xbf16>, vector<16x288xbf16>, vector<16x288xf32> -> vector<16x288xf32>
    %45 = arith.addf %40, %44 : vector<16x288xf32>
    %c0_42 = arith.constant 0 : index
    %c38 = arith.constant 38 : index
    %46 = vector.load %arg14[%c0_42, %c38] : memref<16x384xbf16, #tpu.memory_space<vmem>>, vector<16x288xbf16>
    %c8 = arith.constant 8 : index
    %c0_43 = arith.constant 0 : index
    %c0_44 = arith.constant 0 : index
    %47 = vector.load %arg3[%c8, %c0_43, %c0_44] : memref<9x16x16xbf16, #tpu.memory_space<vmem>>, vector<1x16x16xbf16>
    %48 = vector.shape_cast %47 : vector<1x16x16xbf16> to vector<16x16xbf16>
    %cst_45 = arith.constant dense<0.000000e+00> : vector<16x288xf32>
    %49 = tpu.matmul %48, %46, %cst_45 {dimension_numbers = #tpu.dot_dimension_numbers<[1], [0], [0], [1], [0, 0, 1, 1], [], []>} : vector<16x16xbf16>, vector<16x288xbf16>, vector<16x288xf32> -> vector<16x288xf32>
    %50 = arith.addf %45, %49 : vector<16x288xf32>
    %c0_46 = arith.constant 0 : index
    %c0_47 = arith.constant 0 : index
    %51 = vector.load %arg5[%c0_46, %c0_47] : memref<288x128xf32, #tpu.memory_space<vmem>>, vector<288x128xf32>
    %cst_48 = arith.constant dense<0.000000e+00> : vector<16x128xf32>
    %52 = tpu.matmul %50, %51, %cst_48 {dimension_numbers = #tpu.dot_dimension_numbers<[1], [0], [0], [1], [0, 0, 1, 1], [], []>} : vector<16x288xf32>, vector<288x128xf32>, vector<16x128xf32> -> vector<16x128xf32>
    %53 = vector.extract_strided_slice %52 {offsets = [0, 0], sizes = [16, 1], strides = [1, 1]} : vector<16x128xf32> to vector<16x1xf32>
    %54 = arith.mulf %50, %50 : vector<16x288xf32>
    %cst_49 = arith.constant dense<0.000000e+00> : vector<16x128xf32>
    %55 = tpu.matmul %54, %51, %cst_49 {dimension_numbers = #tpu.dot_dimension_numbers<[1], [0], [0], [1], [0, 0, 1, 1], [], []>} : vector<16x288xf32>, vector<288x128xf32>, vector<16x128xf32> -> vector<16x128xf32>
    %56 = vector.extract_strided_slice %55 {offsets = [0, 0], sizes = [16, 1], strides = [1, 1]} : vector<16x128xf32> to vector<16x1xf32>
    %cst_50 = arith.constant 3.906250e-03 : f32
    %57 = vector.broadcast %cst_50 : f32 to vector<16x1xf32>
    %58 = arith.mulf %53, %57 : vector<16x1xf32>
    %cst_51 = arith.constant 3.906250e-03 : f32
    %59 = vector.broadcast %cst_51 : f32 to vector<16x1xf32>
    %60 = arith.mulf %56, %59 : vector<16x1xf32>
    %61 = arith.mulf %58, %58 : vector<16x1xf32>
    %62 = arith.subf %60, %61 : vector<16x1xf32>
    %c0_52 = arith.constant 0 : index
    %c0_53 = arith.constant 0 : index
    %63 = vector.load %arg4[%c0_52, %c0_53] : memref<16x2xf32, #tpu.memory_space<vmem>>, vector<16x2xf32>
    %cst_54 = arith.constant 9.99999974E-6 : f32
    %64 = vector.broadcast %cst_54 : f32 to vector<16x1xf32>
    %65 = arith.addf %62, %64 : vector<16x1xf32>
    %66 = math.rsqrt %65 : vector<16x1xf32>
    %67 = vector.extract_strided_slice %63 {offsets = [0, 0], sizes = [16, 1], strides = [1, 1]} : vector<16x2xf32> to vector<16x1xf32>
    %68 = arith.mulf %66, %67 : vector<16x1xf32>
    %69 = vector.broadcast %58 : vector<16x1xf32> to vector<16x288xf32>
    %70 = arith.subf %50, %69 : vector<16x288xf32>
    %71 = vector.broadcast %68 : vector<16x1xf32> to vector<16x288xf32>
    %72 = arith.mulf %70, %71 : vector<16x288xf32>
    %73 = vector.extract_strided_slice %63 {offsets = [0, 1], sizes = [16, 1], strides = [1, 1]} : vector<16x2xf32> to vector<16x1xf32>
    %74 = vector.broadcast %73 : vector<16x1xf32> to vector<16x288xf32>
    %75 = arith.addf %72, %74 : vector<16x288xf32>
    %cst_55 = arith.constant 0.000000e+00 : f32
    %76 = vector.broadcast %cst_55 : f32 to vector<16x288xf32>
    %77 = arith.maximumf %75, %76 : vector<16x288xf32>
    %78 = arith.truncf %77 : vector<16x288xf32> to vector<16x288xbf16>
    %c0_56 = arith.constant 0 : index
    %c0_57 = arith.constant 0 : index
    %79 = vector.load %arg6[%c0_56, %c0_57] : memref<288x1280xbf16, #tpu.memory_space<vmem>>, vector<288x1280xbf16>
    %cst_58 = arith.constant dense<0.000000e+00> : vector<16x1280xf32>
    %80 = tpu.matmul %78, %79, %cst_58 {dimension_numbers = #tpu.dot_dimension_numbers<[1], [0], [0], [1], [0, 0, 1, 1], [], []>} : vector<16x288xbf16>, vector<288x1280xbf16>, vector<16x1280xf32> -> vector<16x1280xf32>
    %81 = arith.truncf %80 : vector<16x1280xf32> to vector<16x1280xbf16>
    %c0_59 = arith.constant 0 : index
    %c0_60 = arith.constant 0 : index
    %82 = vector.load %arg15[%c0_59, %c0_60] : memref<16x1280xbf16, #tpu.memory_space<vmem>>, vector<16x1280xbf16>
    tpu.vector_store %arg15[%c0_59, %c0_60], %81 {strides = array<i32>} : memref<16x1280xbf16, #tpu.memory_space<vmem>>, vector<16x1280xbf16>,
    %c0_61 = arith.constant 0 : index
    %c0_62 = arith.constant 0 : index
    %83 = vector.load %arg15[%c0_61, %c0_62] : memref<16x1280xbf16, #tpu.memory_space<vmem>>, vector<16x1088xbf16>
    %c0_63 = arith.constant 0 : index
    %c0_64 = arith.constant 0 : index
    %c0_65 = arith.constant 0 : index
    %84 = vector.load %arg7[%c0_63, %c0_64, %c0_65] : memref<9x16x16xbf16, #tpu.memory_space<vmem>>, vector<1x16x16xbf16>
    %85 = vector.shape_cast %84 : vector<1x16x16xbf16> to vector<16x16xbf16>
    %cst_66 = arith.constant dense<0.000000e+00> : vector<16x1088xf32>
    %86 = tpu.matmul %85, %83, %cst_66 {dimension_numbers = #tpu.dot_dimension_numbers<[1], [0], [0], [1], [0, 0, 1, 1], [], []>} : vector<16x16xbf16>, vector<16x1088xbf16>, vector<16x1088xf32> -> vector<16x1088xf32>
    %c0_67 = arith.constant 0 : index
    %c1_68 = arith.constant 1 : index
    %87 = vector.load %arg15[%c0_67, %c1_68] : memref<16x1280xbf16, #tpu.memory_space<vmem>>, vector<16x1088xbf16>
    %c1_69 = arith.constant 1 : index
    %c0_70 = arith.constant 0 : index
    %c0_71 = arith.constant 0 : index
    %88 = vector.load %arg7[%c1_69, %c0_70, %c0_71] : memref<9x16x16xbf16, #tpu.memory_space<vmem>>, vector<1x16x16xbf16>
    %89 = vector.shape_cast %88 : vector<1x16x16xbf16> to vector<16x16xbf16>
    %cst_72 = arith.constant dense<0.000000e+00> : vector<16x1088xf32>
    %90 = tpu.matmul %89, %87, %cst_72 {dimension_numbers = #tpu.dot_dimension_numbers<[1], [0], [0], [1], [0, 0, 1, 1], [], []>} : vector<16x16xbf16>, vector<16x1088xbf16>, vector<16x1088xf32> -> vector<16x1088xf32>
    %91 = arith.addf %86, %90 : vector<16x1088xf32>
    %c0_73 = arith.constant 0 : index
    %c2_74 = arith.constant 2 : index
    %92 = vector.load %arg15[%c0_73, %c2_74] : memref<16x1280xbf16, #tpu.memory_space<vmem>>, vector<16x1088xbf16>
    %c2_75 = arith.constant 2 : index
    %c0_76 = arith.constant 0 : index
    %c0_77 = arith.constant 0 : index
    %93 = vector.load %arg7[%c2_75, %c0_76, %c0_77] : memref<9x16x16xbf16, #tpu.memory_space<vmem>>, vector<1x16x16xbf16>
    %94 = vector.shape_cast %93 : vector<1x16x16xbf16> to vector<16x16xbf16>
    %cst_78 = arith.constant dense<0.000000e+00> : vector<16x1088xf32>
    %95 = tpu.matmul %94, %92, %cst_78 {dimension_numbers = #tpu.dot_dimension_numbers<[1], [0], [0], [1], [0, 0, 1, 1], [], []>} : vector<16x16xbf16>, vector<16x1088xbf16>, vector<16x1088xf32> -> vector<16x1088xf32>
    %96 = arith.addf %91, %95 : vector<16x1088xf32>
    %c0_79 = arith.constant 0 : index
    %c34 = arith.constant 34 : index
    %97 = vector.load %arg15[%c0_79, %c34] : memref<16x1280xbf16, #tpu.memory_space<vmem>>, vector<16x1088xbf16>
    %c3_80 = arith.constant 3 : index
    %c0_81 = arith.constant 0 : index
    %c0_82 = arith.constant 0 : index
    %98 = vector.load %arg7[%c3_80, %c0_81, %c0_82] : memref<9x16x16xbf16, #tpu.memory_space<vmem>>, vector<1x16x16xbf16>
    %99 = vector.shape_cast %98 : vector<1x16x16xbf16> to vector<16x16xbf16>
    %cst_83 = arith.constant dense<0.000000e+00> : vector<16x1088xf32>
    %100 = tpu.matmul %99, %97, %cst_83 {dimension_numbers = #tpu.dot_dimension_numbers<[1], [0], [0], [1], [0, 0, 1, 1], [], []>} : vector<16x16xbf16>, vector<16x1088xbf16>, vector<16x1088xf32> -> vector<16x1088xf32>
    %101 = arith.addf %96, %100 : vector<16x1088xf32>
    %c0_84 = arith.constant 0 : index
    %c35 = arith.constant 35 : index
    %102 = vector.load %arg15[%c0_84, %c35] : memref<16x1280xbf16, #tpu.memory_space<vmem>>, vector<16x1088xbf16>
    %c4_85 = arith.constant 4 : index
    %c0_86 = arith.constant 0 : index
    %c0_87 = arith.constant 0 : index
    %103 = vector.load %arg7[%c4_85, %c0_86, %c0_87] : memref<9x16x16xbf16, #tpu.memory_space<vmem>>, vector<1x16x16xbf16>
    %104 = vector.shape_cast %103 : vector<1x16x16xbf16> to vector<16x16xbf16>
    %cst_88 = arith.constant dense<0.000000e+00> : vector<16x1088xf32>
    %105 = tpu.matmul %104, %102, %cst_88 {dimension_numbers = #tpu.dot_dimension_numbers<[1], [0], [0], [1], [0, 0, 1, 1], [], []>} : vector<16x16xbf16>, vector<16x1088xbf16>, vector<16x1088xf32> -> vector<16x1088xf32>
    %106 = arith.addf %101, %105 : vector<16x1088xf32>
    %c0_89 = arith.constant 0 : index
    %c36_90 = arith.constant 36 : index
    %107 = vector.load %arg15[%c0_89, %c36_90] : memref<16x1280xbf16, #tpu.memory_space<vmem>>, vector<16x1088xbf16>
    %c5_91 = arith.constant 5 : index
    %c0_92 = arith.constant 0 : index
    %c0_93 = arith.constant 0 : index
    %108 = vector.load %arg7[%c5_91, %c0_92, %c0_93] : memref<9x16x16xbf16, #tpu.memory_space<vmem>>, vector<1x16x16xbf16>
    %109 = vector.shape_cast %108 : vector<1x16x16xbf16> to vector<16x16xbf16>
    %cst_94 = arith.constant dense<0.000000e+00> : vector<16x1088xf32>
    %110 = tpu.matmul %109, %107, %cst_94 {dimension_numbers = #tpu.dot_dimension_numbers<[1], [0], [0], [1], [0, 0, 1, 1], [], []>} : vector<16x16xbf16>, vector<16x1088xbf16>, vector<16x1088xf32> -> vector<16x1088xf32>
    %111 = arith.addf %106, %110 : vector<16x1088xf32>
    %c0_95 = arith.constant 0 : index
    %c68 = arith.constant 68 : index
    %112 = vector.load %arg15[%c0_95, %c68] : memref<16x1280xbf16, #tpu.memory_space<vmem>>, vector<16x1088xbf16>
    %c6_96 = arith.constant 6 : index
    %c0_97 = arith.constant 0 : index
    %c0_98 = arith.constant 0 : index
    %113 = vector.load %arg7[%c6_96, %c0_97, %c0_98] : memref<9x16x16xbf16, #tpu.memory_space<vmem>>, vector<1x16x16xbf16>
    %114 = vector.shape_cast %113 : vector<1x16x16xbf16> to vector<16x16xbf16>
    %cst_99 = arith.constant dense<0.000000e+00> : vector<16x1088xf32>
    %115 = tpu.matmul %114, %112, %cst_99 {dimension_numbers = #tpu.dot_dimension_numbers<[1], [0], [0], [1], [0, 0, 1, 1], [], []>} : vector<16x16xbf16>, vector<16x1088xbf16>, vector<16x1088xf32> -> vector<16x1088xf32>
    %116 = arith.addf %111, %115 : vector<16x1088xf32>
    %c0_100 = arith.constant 0 : index
    %c69 = arith.constant 69 : index
    %117 = vector.load %arg15[%c0_100, %c69] : memref<16x1280xbf16, #tpu.memory_space<vmem>>, vector<16x1088xbf16>
    %c7_101 = arith.constant 7 : index
    %c0_102 = arith.constant 0 : index
    %c0_103 = arith.constant 0 : index
    %118 = vector.load %arg7[%c7_101, %c0_102, %c0_103] : memref<9x16x16xbf16, #tpu.memory_space<vmem>>, vector<1x16x16xbf16>
    %119 = vector.shape_cast %118 : vector<1x16x16xbf16> to vector<16x16xbf16>
    %cst_104 = arith.constant dense<0.000000e+00> : vector<16x1088xf32>
    %120 = tpu.matmul %119, %117, %cst_104 {dimension_numbers = #tpu.dot_dimension_numbers<[1], [0], [0], [1], [0, 0, 1, 1], [], []>} : vector<16x16xbf16>, vector<16x1088xbf16>, vector<16x1088xf32> -> vector<16x1088xf32>
    %121 = arith.addf %116, %120 : vector<16x1088xf32>
    %c0_105 = arith.constant 0 : index
    %c70 = arith.constant 70 : index
    %122 = vector.load %arg15[%c0_105, %c70] : memref<16x1280xbf16, #tpu.memory_space<vmem>>, vector<16x1088xbf16>
    %c8_106 = arith.constant 8 : index
    %c0_107 = arith.constant 0 : index
    %c0_108 = arith.constant 0 : index
    %123 = vector.load %arg7[%c8_106, %c0_107, %c0_108] : memref<9x16x16xbf16, #tpu.memory_space<vmem>>, vector<1x16x16xbf16>
    %124 = vector.shape_cast %123 : vector<1x16x16xbf16> to vector<16x16xbf16>
    %cst_109 = arith.constant dense<0.000000e+00> : vector<16x1088xf32>
    %125 = tpu.matmul %124, %122, %cst_109 {dimension_numbers = #tpu.dot_dimension_numbers<[1], [0], [0], [1], [0, 0, 1, 1], [], []>} : vector<16x16xbf16>, vector<16x1088xbf16>, vector<16x1088xf32> -> vector<16x1088xf32>
    %126 = arith.addf %121, %125 : vector<16x1088xf32>
    %c0_110 = arith.constant 0 : index
    %c0_111 = arith.constant 0 : index
    %127 = vector.load %arg9[%c0_110, %c0_111] : memref<1088x128xf32, #tpu.memory_space<vmem>>, vector<1088x128xf32>
    %cst_112 = arith.constant dense<0.000000e+00> : vector<16x128xf32>
    %128 = tpu.matmul %126, %127, %cst_112 {dimension_numbers = #tpu.dot_dimension_numbers<[1], [0], [0], [1], [0, 0, 1, 1], [], []>} : vector<16x1088xf32>, vector<1088x128xf32>, vector<16x128xf32> -> vector<16x128xf32>
    %129 = vector.extract_strided_slice %128 {offsets = [0, 0], sizes = [16, 1], strides = [1, 1]} : vector<16x128xf32> to vector<16x1xf32>
    %130 = arith.mulf %126, %126 : vector<16x1088xf32>
    %cst_113 = arith.constant dense<0.000000e+00> : vector<16x128xf32>
    %131 = tpu.matmul %130, %127, %cst_113 {dimension_numbers = #tpu.dot_dimension_numbers<[1], [0], [0], [1], [0, 0, 1, 1], [], []>} : vector<16x1088xf32>, vector<1088x128xf32>, vector<16x128xf32> -> vector<16x128xf32>
    %132 = vector.extract_strided_slice %131 {offsets = [0, 0], sizes = [16, 1], strides = [1, 1]} : vector<16x128xf32> to vector<16x1xf32>
    %cst_114 = arith.constant 9.765625E-4 : f32
    %133 = vector.broadcast %cst_114 : f32 to vector<16x1xf32>
    %134 = arith.mulf %129, %133 : vector<16x1xf32>
    %cst_115 = arith.constant 9.765625E-4 : f32
    %135 = vector.broadcast %cst_115 : f32 to vector<16x1xf32>
    %136 = arith.mulf %132, %135 : vector<16x1xf32>
    %137 = arith.mulf %134, %134 : vector<16x1xf32>
    %138 = arith.subf %136, %137 : vector<16x1xf32>
    %c0_116 = arith.constant 0 : index
    %c0_117 = arith.constant 0 : index
    %139 = vector.load %arg8[%c0_116, %c0_117] : memref<16x2xf32, #tpu.memory_space<vmem>>, vector<16x2xf32>
    %cst_118 = arith.constant 9.99999974E-6 : f32
    %140 = vector.broadcast %cst_118 : f32 to vector<16x1xf32>
    %141 = arith.addf %138, %140 : vector<16x1xf32>
    %142 = math.rsqrt %141 : vector<16x1xf32>
    %143 = vector.extract_strided_slice %139 {offsets = [0, 0], sizes = [16, 1], strides = [1, 1]} : vector<16x2xf32> to vector<16x1xf32>
    %144 = arith.mulf %142, %143 : vector<16x1xf32>
    %145 = vector.broadcast %134 : vector<16x1xf32> to vector<16x1088xf32>
    %146 = arith.subf %126, %145 : vector<16x1088xf32>
    %147 = vector.broadcast %144 : vector<16x1xf32> to vector<16x1088xf32>
    %148 = arith.mulf %146, %147 : vector<16x1088xf32>
    %149 = vector.extract_strided_slice %139 {offsets = [0, 1], sizes = [16, 1], strides = [1, 1]} : vector<16x2xf32> to vector<16x1xf32>
    %150 = vector.broadcast %149 : vector<16x1xf32> to vector<16x1088xf32>
    %151 = arith.addf %148, %150 : vector<16x1088xf32>
    %cst_119 = arith.constant 0.000000e+00 : f32
    %152 = vector.broadcast %cst_119 : f32 to vector<16x1088xf32>
    %153 = arith.maximumf %151, %152 : vector<16x1088xf32>
    %154 = arith.truncf %153 : vector<16x1088xf32> to vector<16x1088xbf16>
    %c0_120 = arith.constant 0 : index
    %c35_121 = arith.constant 35 : index
    %155 = vector.load %arg15[%c0_120, %c35_121] : memref<16x1280xbf16, #tpu.memory_space<vmem>>, vector<16x1088xbf16>
    tpu.vector_store %arg15[%c0_120, %c35_121], %154 {strides = array<i32>} : memref<16x1280xbf16, #tpu.memory_space<vmem>>, vector<16x1088xbf16>,
    %c0_122 = arith.constant 0 : index
    %c37_123 = arith.constant 37 : index
    %156 = vector.load %arg15[%c0_122, %c37_123] : memref<16x1280xbf16, #tpu.memory_space<vmem>>, vector<16x1088xbf16>
    %c0_124 = arith.constant 0 : index
    %c33 = arith.constant 33 : index
    %157 = vector.load %arg15[%c0_124, %c33] : memref<16x1280xbf16, #tpu.memory_space<vmem>>, vector<16x1088xbf16>
    %c0_125 = arith.constant 0 : index
    %c0_126 = arith.constant 0 : index
    %158 = vector.load %arg10[%c0_125, %c0_126] : memref<2x1088xf32, #tpu.memory_space<vmem>>, vector<1x1088xf32>
    %cst_127 = arith.constant 5.000000e-01 : f32
    %159 = vector.broadcast %cst_127 : f32 to vector<1x1088xf32>
    %160 = arith.cmpf ogt, %158, %159 : vector<1x1088xf32>
    %c1_128 = arith.constant 1 : index
    %c0_129 = arith.constant 0 : index
    %161 = vector.load %arg10[%c1_128, %c0_129] : memref<2x1088xf32, #tpu.memory_space<vmem>>, vector<1x1088xf32>
    %cst_130 = arith.constant 5.000000e-01 : f32
    %162 = vector.broadcast %cst_130 : f32 to vector<1x1088xf32>
    %163 = arith.cmpf ogt, %161, %162 : vector<1x1088xf32>
    %164 = vector.shape_cast %163 : vector<1x1088xi1> to vector<1x1088xi1>
    %165 = vector.broadcast %164 : vector<1x1088xi1> to vector<16x1088xi1>
    %166 = arith.select %165, %157, %154 : vector<16x1088xi1>, vector<16x1088xbf16>
    %167 = vector.shape_cast %160 : vector<1x1088xi1> to vector<1x1088xi1>
    %168 = vector.broadcast %167 : vector<1x1088xi1> to vector<16x1088xi1>
    %169 = arith.select %168, %156, %166 : vector<16x1088xi1>, vector<16x1088xbf16>
    %c0_131 = arith.constant 0 : index
    %c35_132 = arith.constant 35 : index
    %170 = vector.load %arg15[%c0_131, %c35_132] : memref<16x1280xbf16, #tpu.memory_space<vmem>>, vector<16x1088xbf16>
    tpu.vector_store %arg15[%c0_131, %c35_132], %169 {strides = array<i32>} : memref<16x1280xbf16, #tpu.memory_space<vmem>>, vector<16x1088xbf16>,
    %c0_133 = arith.constant 0 : index
    %c69_134 = arith.constant 69 : index
    %171 = vector.load %arg15[%c0_133, %c69_134] : memref<16x1280xbf16, #tpu.memory_space<vmem>>, vector<16x34xbf16>
    %c0_135 = arith.constant 0 : index
    %c1_136 = arith.constant 1 : index
    %172 = vector.load %arg15[%c0_135, %c1_136] : memref<16x1280xbf16, #tpu.memory_space<vmem>>, vector<16x34xbf16>
    tpu.vector_store %arg15[%c0_135, %c1_136], %171 {strides = array<i32>} : memref<16x1280xbf16, #tpu.memory_space<vmem>>, vector<16x34xbf16>,
    %c0_137 = arith.constant 0 : index
    %c1055 = arith.constant 1055 : index
    %173 = vector.load %arg15[%c0_137, %c1055] : memref<16x1280xbf16, #tpu.memory_space<vmem>>, vector<16x34xbf16>
    %c0_138 = arith.constant 0 : index
    %c1123 = arith.constant 1123 : index
    %174 = vector.load %arg15[%c0_138, %c1123] : memref<16x1280xbf16, #tpu.memory_space<vmem>>, vector<16x34xbf16>
    tpu.vector_store %arg15[%c0_138, %c1123], %173 {strides = array<i32>} : memref<16x1280xbf16, #tpu.memory_space<vmem>>, vector<16x34xbf16>,
    %c0_139 = arith.constant 0 : index
    %c0_140 = arith.constant 0 : index
    %175 = vector.load %arg15[%c0_139, %c0_140] : memref<16x1280xbf16, #tpu.memory_space<vmem>>, vector<16x1088xbf16>
    %c0_141 = arith.constant 0 : index
    %c0_142 = arith.constant 0 : index
    %c0_143 = arith.constant 0 : index
    %176 = vector.load %arg11[%c0_141, %c0_142, %c0_143] : memref<9x3x16xbf16, #tpu.memory_space<vmem>>, vector<1x3x16xbf16>
    %177 = vector.shape_cast %176 : vector<1x3x16xbf16> to vector<3x16xbf16>
    %cst_144 = arith.constant dense<0.000000e+00> : vector<3x1088xf32>
    %178 = tpu.matmul %177, %175, %cst_144 {dimension_numbers = #tpu.dot_dimension_numbers<[1], [0], [0], [1], [0, 0, 1, 1], [], []>} : vector<3x16xbf16>, vector<16x1088xbf16>, vector<3x1088xf32> -> vector<3x1088xf32>
    %c0_145 = arith.constant 0 : index
    %c1_146 = arith.constant 1 : index
    %179 = vector.load %arg15[%c0_145, %c1_146] : memref<16x1280xbf16, #tpu.memory_space<vmem>>, vector<16x1088xbf16>
    %c1_147 = arith.constant 1 : index
    %c0_148 = arith.constant 0 : index
    %c0_149 = arith.constant 0 : index
    %180 = vector.load %arg11[%c1_147, %c0_148, %c0_149] : memref<9x3x16xbf16, #tpu.memory_space<vmem>>, vector<1x3x16xbf16>
    %181 = vector.shape_cast %180 : vector<1x3x16xbf16> to vector<3x16xbf16>
    %cst_150 = arith.constant dense<0.000000e+00> : vector<3x1088xf32>
    %182 = tpu.matmul %181, %179, %cst_150 {dimension_numbers = #tpu.dot_dimension_numbers<[1], [0], [0], [1], [0, 0, 1, 1], [], []>} : vector<3x16xbf16>, vector<16x1088xbf16>, vector<3x1088xf32> -> vector<3x1088xf32>
    %183 = arith.addf %178, %182 : vector<3x1088xf32>
    %c0_151 = arith.constant 0 : index
    %c2_152 = arith.constant 2 : index
    %184 = vector.load %arg15[%c0_151, %c2_152] : memref<16x1280xbf16, #tpu.memory_space<vmem>>, vector<16x1088xbf16>
    %c2_153 = arith.constant 2 : index
    %c0_154 = arith.constant 0 : index
    %c0_155 = arith.constant 0 : index
    %185 = vector.load %arg11[%c2_153, %c0_154, %c0_155] : memref<9x3x16xbf16, #tpu.memory_space<vmem>>, vector<1x3x16xbf16>
    %186 = vector.shape_cast %185 : vector<1x3x16xbf16> to vector<3x16xbf16>
    %cst_156 = arith.constant dense<0.000000e+00> : vector<3x1088xf32>
    %187 = tpu.matmul %186, %184, %cst_156 {dimension_numbers = #tpu.dot_dimension_numbers<[1], [0], [0], [1], [0, 0, 1, 1], [], []>} : vector<3x16xbf16>, vector<16x1088xbf16>, vector<3x1088xf32> -> vector<3x1088xf32>
    %188 = arith.addf %183, %187 : vector<3x1088xf32>
    %c0_157 = arith.constant 0 : index
    %c34_158 = arith.constant 34 : index
    %189 = vector.load %arg15[%c0_157, %c34_158] : memref<16x1280xbf16, #tpu.memory_space<vmem>>, vector<16x1088xbf16>
    %c3_159 = arith.constant 3 : index
    %c0_160 = arith.constant 0 : index
    %c0_161 = arith.constant 0 : index
    %190 = vector.load %arg11[%c3_159, %c0_160, %c0_161] : memref<9x3x16xbf16, #tpu.memory_space<vmem>>, vector<1x3x16xbf16>
    %191 = vector.shape_cast %190 : vector<1x3x16xbf16> to vector<3x16xbf16>
    %cst_162 = arith.constant dense<0.000000e+00> : vector<3x1088xf32>
    %192 = tpu.matmul %191, %189, %cst_162 {dimension_numbers = #tpu.dot_dimension_numbers<[1], [0], [0], [1], [0, 0, 1, 1], [], []>} : vector<3x16xbf16>, vector<16x1088xbf16>, vector<3x1088xf32> -> vector<3x1088xf32>
    %193 = arith.addf %188, %192 : vector<3x1088xf32>
    %c0_163 = arith.constant 0 : index
    %c35_164 = arith.constant 35 : index
    %194 = vector.load %arg15[%c0_163, %c35_164] : memref<16x1280xbf16, #tpu.memory_space<vmem>>, vector<16x1088xbf16>
    %c4_165 = arith.constant 4 : index
    %c0_166 = arith.constant 0 : index
    %c0_167 = arith.constant 0 : index
    %195 = vector.load %arg11[%c4_165, %c0_166, %c0_167] : memref<9x3x16xbf16, #tpu.memory_space<vmem>>, vector<1x3x16xbf16>
    %196 = vector.shape_cast %195 : vector<1x3x16xbf16> to vector<3x16xbf16>
    %cst_168 = arith.constant dense<0.000000e+00> : vector<3x1088xf32>
    %197 = tpu.matmul %196, %194, %cst_168 {dimension_numbers = #tpu.dot_dimension_numbers<[1], [0], [0], [1], [0, 0, 1, 1], [], []>} : vector<3x16xbf16>, vector<16x1088xbf16>, vector<3x1088xf32> -> vector<3x1088xf32>
    %198 = arith.addf %193, %197 : vector<3x1088xf32>
    %c0_169 = arith.constant 0 : index
    %c36_170 = arith.constant 36 : index
    %199 = vector.load %arg15[%c0_169, %c36_170] : memref<16x1280xbf16, #tpu.memory_space<vmem>>, vector<16x1088xbf16>
    %c5_171 = arith.constant 5 : index
    %c0_172 = arith.constant 0 : index
    %c0_173 = arith.constant 0 : index
    %200 = vector.load %arg11[%c5_171, %c0_172, %c0_173] : memref<9x3x16xbf16, #tpu.memory_space<vmem>>, vector<1x3x16xbf16>
    %201 = vector.shape_cast %200 : vector<1x3x16xbf16> to vector<3x16xbf16>
    %cst_174 = arith.constant dense<0.000000e+00> : vector<3x1088xf32>
    %202 = tpu.matmul %201, %199, %cst_174 {dimension_numbers = #tpu.dot_dimension_numbers<[1], [0], [0], [1], [0, 0, 1, 1], [], []>} : vector<3x16xbf16>, vector<16x1088xbf16>, vector<3x1088xf32> -> vector<3x1088xf32>
    %203 = arith.addf %198, %202 : vector<3x1088xf32>
    %c0_175 = arith.constant 0 : index
    %c68_176 = arith.constant 68 : index
    %204 = vector.load %arg15[%c0_175, %c68_176] : memref<16x1280xbf16, #tpu.memory_space<vmem>>, vector<16x1088xbf16>
    %c6_177 = arith.constant 6 : index
    %c0_178 = arith.constant 0 : index
    %c0_179 = arith.constant 0 : index
    %205 = vector.load %arg11[%c6_177, %c0_178, %c0_179] : memref<9x3x16xbf16, #tpu.memory_space<vmem>>, vector<1x3x16xbf16>
    %206 = vector.shape_cast %205 : vector<1x3x16xbf16> to vector<3x16xbf16>
    %cst_180 = arith.constant dense<0.000000e+00> : vector<3x1088xf32>
    %207 = tpu.matmul %206, %204, %cst_180 {dimension_numbers = #tpu.dot_dimension_numbers<[1], [0], [0], [1], [0, 0, 1, 1], [], []>} : vector<3x16xbf16>, vector<16x1088xbf16>, vector<3x1088xf32> -> vector<3x1088xf32>
    %208 = arith.addf %203, %207 : vector<3x1088xf32>
    %c0_181 = arith.constant 0 : index
    %c69_182 = arith.constant 69 : index
    %209 = vector.load %arg15[%c0_181, %c69_182] : memref<16x1280xbf16, #tpu.memory_space<vmem>>, vector<16x1088xbf16>
    %c7_183 = arith.constant 7 : index
    %c0_184 = arith.constant 0 : index
    %c0_185 = arith.constant 0 : index
    %210 = vector.load %arg11[%c7_183, %c0_184, %c0_185] : memref<9x3x16xbf16, #tpu.memory_space<vmem>>, vector<1x3x16xbf16>
    %211 = vector.shape_cast %210 : vector<1x3x16xbf16> to vector<3x16xbf16>
    %cst_186 = arith.constant dense<0.000000e+00> : vector<3x1088xf32>
    %212 = tpu.matmul %211, %209, %cst_186 {dimension_numbers = #tpu.dot_dimension_numbers<[1], [0], [0], [1], [0, 0, 1, 1], [], []>} : vector<3x16xbf16>, vector<16x1088xbf16>, vector<3x1088xf32> -> vector<3x1088xf32>
    %213 = arith.addf %208, %212 : vector<3x1088xf32>
    %c0_187 = arith.constant 0 : index
    %c70_188 = arith.constant 70 : index
    %214 = vector.load %arg15[%c0_187, %c70_188] : memref<16x1280xbf16, #tpu.memory_space<vmem>>, vector<16x1088xbf16>
    %c8_189 = arith.constant 8 : index
    %c0_190 = arith.constant 0 : index
    %c0_191 = arith.constant 0 : index
    %215 = vector.load %arg11[%c8_189, %c0_190, %c0_191] : memref<9x3x16xbf16, #tpu.memory_space<vmem>>, vector<1x3x16xbf16>
    %216 = vector.shape_cast %215 : vector<1x3x16xbf16> to vector<3x16xbf16>
    %cst_192 = arith.constant dense<0.000000e+00> : vector<3x1088xf32>
    %217 = tpu.matmul %216, %214, %cst_192 {dimension_numbers = #tpu.dot_dimension_numbers<[1], [0], [0], [1], [0, 0, 1, 1], [], []>} : vector<3x16xbf16>, vector<16x1088xbf16>, vector<3x1088xf32> -> vector<3x1088xf32>
    %218 = arith.addf %213, %217 : vector<3x1088xf32>
    %c0_193 = arith.constant 0 : index
    %c0_194 = arith.constant 0 : index
    %219 = vector.load %arg12[%c0_193, %c0_194] : memref<3x1xf32, #tpu.memory_space<vmem>>, vector<3x1xf32>
    %220 = vector.broadcast %219 : vector<3x1xf32> to vector<3x1088xf32>
    %221 = arith.addf %218, %220 : vector<3x1088xf32>
    %c0_195 = arith.constant 0 : index
    %c0_196 = arith.constant 0 : index
    %c0_197 = arith.constant 0 : index
    %222 = vector.load %arg13[%c0_195, %c0_196, %c0_197] : memref<1x3x1088xf32, #tpu.memory_space<vmem>>, vector<1x3x1088xf32>
    %223 = vector.shape_cast %222 : vector<1x3x1088xf32> to vector<3x1088xf32>
    %224 = vector.shape_cast %221 : vector<3x1088xf32> to vector<1x3x1088xf32>
    tpu.vector_store %arg13[%c0_195, %c0_196, %c0_197], %224 {strides = array<i32>} : memref<1x3x1088xf32, #tpu.memory_space<vmem>>, vector<1x3x1088xf32>,
    return
  }
  func.func @transform_0(%arg0: i32) -> (i32, i32, i32) {
    %c0_i32 = arith.constant 0 : i32
    %c0_i32_0 = arith.constant 0 : i32
    %c0_i32_1 = arith.constant 0 : i32
    return %arg0, %c0_i32, %c0_i32_0 : i32, i32, i32
  }
  func.func @transform_1(%arg0: i32) -> (i32, i32) {
    %c0_i32 = arith.constant 0 : i32
    %c0_i32_0 = arith.constant 0 : i32
    %c0_i32_1 = arith.constant 0 : i32
    return %c0_i32, %c0_i32_0 : i32, i32
  }
  func.func @transform_2(%arg0: i32) -> (i32, i32, i32) {
    %c0_i32 = arith.constant 0 : i32
    %c0_i32_0 = arith.constant 0 : i32
    %c0_i32_1 = arith.constant 0 : i32
    %c0_i32_2 = arith.constant 0 : i32
    return %c0_i32, %c0_i32_0, %c0_i32_1 : i32, i32, i32
  }
  func.func @transform_3(%arg0: i32) -> (i32, i32) {
    %c0_i32 = arith.constant 0 : i32
    %c0_i32_0 = arith.constant 0 : i32
    %c0_i32_1 = arith.constant 0 : i32
    return %c0_i32, %c0_i32_0 : i32, i32
  }
  func.func @transform_4(%arg0: i32) -> (i32, i32) {
    %c0_i32 = arith.constant 0 : i32
    %c0_i32_0 = arith.constant 0 : i32
    %c0_i32_1 = arith.constant 0 : i32
    return %c0_i32, %c0_i32_0 : i32, i32
  }
  func.func @transform_5(%arg0: i32) -> (i32, i32) {
    %c0_i32 = arith.constant 0 : i32
    %c0_i32_0 = arith.constant 0 : i32
    %c0_i32_1 = arith.constant 0 : i32
    return %c0_i32, %c0_i32_0 : i32, i32
  }
  func.func @transform_6(%arg0: i32) -> (i32, i32, i32) {
    %c0_i32 = arith.constant 0 : i32
    %c0_i32_0 = arith.constant 0 : i32
    %c0_i32_1 = arith.constant 0 : i32
    %c0_i32_2 = arith.constant 0 : i32
    return %c0_i32, %c0_i32_0, %c0_i32_1 : i32, i32, i32
  }
  func.func @transform_7(%arg0: i32) -> (i32, i32) {
    %c0_i32 = arith.constant 0 : i32
    %c0_i32_0 = arith.constant 0 : i32
    %c0_i32_1 = arith.constant 0 : i32
    return %c0_i32, %c0_i32_0 : i32, i32
  }
  func.func @transform_8(%arg0: i32) -> (i32, i32) {
    %c0_i32 = arith.constant 0 : i32
    %c0_i32_0 = arith.constant 0 : i32
    %c0_i32_1 = arith.constant 0 : i32
    return %c0_i32, %c0_i32_0 : i32, i32
  }
  func.func @transform_9(%arg0: i32) -> (i32, i32) {
    %c0_i32 = arith.constant 0 : i32
    %c0_i32_0 = arith.constant 0 : i32
    %c0_i32_1 = arith.constant 0 : i32
    return %c0_i32, %c0_i32_0 : i32, i32
  }
  func.func @transform_10(%arg0: i32) -> (i32, i32, i32) {
    %c0_i32 = arith.constant 0 : i32
    %c0_i32_0 = arith.constant 0 : i32
    %c0_i32_1 = arith.constant 0 : i32
    %c0_i32_2 = arith.constant 0 : i32
    return %c0_i32, %c0_i32_0, %c0_i32_1 : i32, i32, i32
  }
  func.func @transform_11(%arg0: i32) -> (i32, i32) {
    %c0_i32 = arith.constant 0 : i32
    %c0_i32_0 = arith.constant 0 : i32
    %c0_i32_1 = arith.constant 0 : i32
    return %c0_i32, %c0_i32_0 : i32, i32
  }
  func.func @transform_12(%arg0: i32) -> (i32, i32, i32) {
    %c0_i32 = arith.constant 0 : i32
    %c0_i32_0 = arith.constant 0 : i32
    %c0_i32_1 = arith.constant 0 : i32
    return %arg0, %c0_i32, %c0_i32_0 : i32, i32, i32
  }
}

</mosaic_0001>

<llo_original>
// kernel: decoder_forward.1
$region0: #{decoder_forward.1}
  #allocation0 [shape = 'u32[]', space=smem, size = 0x4, offset = 0x4, fixed_abs, tag = 'smem constant byte address 0x4 - core index']
  #allocation1 [shape = 'u32[72,128]{1,0:T(1,128)}', space=vmem, size = 0x9000, scoped, tag = 'internal scratch']
  #allocation2 [shape = 'bf16[16,384]{1,0:T(8,128)(2,1)}', space=vmem, size = 0x3000, scoped, tag = 'scratch operand']
  #allocation3 [shape = 'bf16[16,1280]{1,0:T(8,128)(2,1)}', space=vmem, size = 0xa000, scoped, tag = 'scratch operand']
  %s0 = inlined_call_operand.vmem [shape: f32[2,16,64], index: 0, kind: input, shape index: {}]
  %s1 = inlined_call_operand.vmem [shape: bf16[64,384], index: 1, kind: input, shape index: {}]
  %s2 = inlined_call_operand.vmem [shape: bf16[9,16,16], index: 2, kind: input, shape index: {}]
  %s3 = inlined_call_operand.vmem [shape: f32[16,2], index: 3, kind: input, shape index: {}]
  %s4 = inlined_call_operand.hbm [shape: f32[288,128], index: 4, kind: input, shape index: {}]
  %s5 = inlined_call_operand.hbm [shape: bf16[288,1280], index: 5, kind: input, shape index: {}]
  %s6 = inlined_call_operand.hbm [shape: bf16[9,16,16], index: 6, kind: input, shape index: {}]
  %s7 = inlined_call_operand.vmem [shape: f32[16,2], index: 7, kind: input, shape index: {}]
  %s8 = inlined_call_operand.hbm [shape: f32[1088,128], index: 8, kind: input, shape index: {}]
  %s9 = inlined_call_operand.vmem [shape: f32[2,1088], index: 9, kind: input, shape index: {}]
  %s10 = inlined_call_operand.hbm [shape: bf16[9,3,16], index: 10, kind: input, shape index: {}]
  %s11 = inlined_call_operand.vmem [shape: f32[3,1], index: 11, kind: input, shape index: {}]
  %s12 = inlined_call_operand.vmem [shape: f32[2,3,1088], index: 12, kind: output, shape index: {}]
  %s13 = sld [smem:[#allocation0]]
  $region101: #{decoder_forward.1} parent=0
    _
  %s15 = ssub.s32 1, %s13
  %s16 = scalar_select 0, %s15, %s13
  $region1: #{decoder_forward.1} parent=0
    #allocation4 [shape = 'u8[147456]{0}', space=vmem, size = 0x24000, scoped, tag = 'input window, operand 4, single buffered']
    #allocation5 [shape = 's32[2]{0}', space=sflag, size = 0x8, scoped, tag = 'scoped memory for decoder_forward.1']
    #allocation6 [shape = 'u8[737280]{0}', space=vmem, size = 0xb4000, scoped, tag = 'input window, operand 5, single buffered']
    #allocation7 [shape = 's32[1]{0}', space=sflag, size = 0x4, scoped, tag = 'scoped memory for decoder_forward.1']
    #allocation8 [shape = 'u8[36864]{0}', space=vmem, size = 0x9000, scoped, tag = 'input window, operand 6, single buffered']
    #allocation9 [shape = 'u8[557056]{0}', space=vmem, size = 0x88000, scoped, tag = 'input window, operand 8, single buffered']
    #allocation10 [shape = 's32[1]{0}', space=sflag, size = 0x4, scoped, tag = 'scoped memory for decoder_forward.1']
    #allocation11 [shape = 'u8[9216]{0}', space=vmem, size = 0x2400, scoped, tag = 'input window, operand 10, single buffered']
    %17 = vsyncpa [#allocation5], 0
    %18 = vsyncpa [#allocation7], 0
    %19 = vsyncpa [#allocation10], 0
    loop: start=0, step=1, limit=4
    $region2: #{decoder_forward.1} parent=1 // loop_pre_header
      _
    $region3: #{decoder_forward.1} parent=1 // loop_header
      %s21 = sphi 0, %s25
      %p22 = scmp.ge.s32.totalorder %s21, 4
      %s31 = sphi 0, %s33
      %s34 = sphi 0, %s31
      %s35 = sphi 0, %s34
      %s51 = sphi 0, %s35
      %s55 = sphi 0, %s55
      %s57 = sphi 0, %s55
      %s58 = sphi 0, %s57
      %s72 = sphi 0, %s58
      %s76 = sphi 0, %s76
      %s78 = sphi 0, %s76
      %s79 = sphi 0, %s78
      %s93 = sphi 0, %s79
      %s97 = sphi 0, %s97
      %s99 = sphi 0, %s97
      %s100 = sphi 0, %s99
      %s114 = sphi 0, %s100
      %s118 = sphi 0, %s118
      %s120 = sphi 0, %s118
      %s121 = sphi 0, %s120
      %s135 = sphi 0, %s121
      %s139 = sphi 0, %s139
      %s141 = sphi 0, %s139
      %s142 = sphi 0, %s141
      %s156 = sphi 0, %s142
      %s160 = sphi 0, %s160
      %s162 = sphi 0, %s160
      %s163 = sphi 0, %s162
      %s177 = sphi 0, %s163
      %s181 = sphi 0, %s181
      %s183 = sphi 0, %s181
      %s184 = sphi 0, %s183
      %s198 = sphi 0, %s184
      %s202 = sphi 0, %s202
      %s204 = sphi 0, %s202
      %s205 = sphi 0, %s204
      %s219 = sphi 0, %s205
      %s223 = sphi 0, %s223
      %s225 = sphi 0, %s223
      %s226 = sphi 0, %s225
      %s240 = sphi 0, %s226
      %s244 = sphi 0, %s244
      %s246 = sphi 0, %s244
      %s247 = sphi 0, %s246
      %s261 = sphi 0, %s247
      %s265 = sphi 0, %s265
      %s267 = sphi 0, %s265
      %s268 = sphi 0, %s267
      %s282 = sphi 0, %s268
      %s288 = sphi 0, %s290
      %s291 = sphi 0, %s288
      %s292 = sphi 0, %s291
      %s308 = sphi 0, %s292
    $region4: #{decoder_forward.1} parent=1 // loop_header_branch
      %24 = sbr.rel (%p22) target = $region8
    $region5: #{decoder_forward.1} parent=1 // loop_body
      %s26 = ssub.s32 %s21, 1
      %s27 = ssub.s32 %s21, 2
      %s28 = sadd.s32 %s21, 1
      %s29 = ssub.s32 %s21, %s28
      %p30 = scmp.eq.s32.totalorder %s29, 0
      %s32 = sadd.s32 %s31, 1
      %s33 = scalar_select %p30, %s31, %s32
      %p36 = pneg %p30
      %p37 = scmp.eq.s32.totalorder %s21, 1
      %p38 = por %p36, %p37
      %p39 = scmp.ne.s32.totalorder %s31, %s34
      %p40 = scmp.eq.s32.totalorder %s21, 0
      %p41 = por %p39, %p40
      %p42 = scmp.ne.s32.totalorder %s31, %s34
      %p43 = scmp.eq.s32.totalorder %s26, 1
      %p44 = por %p42, %p43
      %p45 = scmp.ne.s32.totalorder %s34, %s35
      %p46 = scmp.eq.s32.totalorder %s26, 0
      %p47 = por %p45, %p46
      %p48 = scmp.ne.s32.totalorder %s34, %s35
      %p49 = scmp.eq.s32.totalorder %s27, 1
      %p50 = por %p48, %p49
      %p52 = scmp.ne.s32.totalorder %s35, %s51
      %p53 = scmp.eq.s32.totalorder %s27, 0
      %p54 = por %p52, %p53
      %s56 = sadd.s32 %s55, 1
      %p59 = scmp.eq.s32.totalorder %s21, 1
      %p60 = scmp.ne.s32.totalorder %s55, %s57
      %p61 = scmp.eq.s32.totalorder %s21, 0
      %p62 = por %p60, %p61
      %p63 = scmp.ne.s32.totalorder %s55, %s57
      %p64 = scmp.eq.s32.totalorder %s26, 1
      %p65 = por %p63, %p64
      %p66 = scmp.ne.s32.totalorder %s57, %s58
      %p67 = scmp.eq.s32.totalorder %s26, 0
      %p68 = por %p66, %p67
      %p69 = scmp.ne.s32.totalorder %s57, %s58
      %p70 = scmp.eq.s32.totalorder %s27, 1
      %p71 = por %p69, %p70
      %p73 = scmp.ne.s32.totalorder %s58, %s72
      %p74 = scmp.eq.s32.totalorder %s27, 0
      %p75 = por %p73, %p74
      %s77 = sadd.s32 %s76, 1
      %p80 = scmp.eq.s32.totalorder %s21, 1
      %p81 = scmp.ne.s32.totalorder %s76, %s78
      %p82 = scmp.eq.s32.totalorder %s21, 0
      %p83 = por %p81, %p82
      %p84 = scmp.ne.s32.totalorder %s76, %s78
      %p85 = scmp.eq.s32.totalorder %s26, 1
      %p86 = por %p84, %p85
      %p87 = scmp.ne.s32.totalorder %s78, %s79
      %p88 = scmp.eq.s32.totalorder %s26, 0
      %p89 = por %p87, %p88
      %p90 = scmp.ne.s32.totalorder %s78, %s79
      %p91 = scmp.eq.s32.totalorder %s27, 1
      %p92 = por %p90, %p91
      %p94 = scmp.ne.s32.totalorder %s79, %s93
      %p95 = scmp.eq.s32.totalorder %s27, 0
      %p96 = por %p94, %p95
      %s98 = sadd.s32 %s97, 1
      %p101 = scmp.eq.s32.totalorder %s21, 1
      %p102 = scmp.ne.s32.totalorder %s97, %s99
      %p103 = scmp.eq.s32.totalorder %s21, 0
      %p104 = por %p102, %p103
      %p105 = scmp.ne.s32.totalorder %s97, %s99
      %p106 = scmp.eq.s32.totalorder %s26, 1
      %p107 = por %p105, %p106
      %p108 = scmp.ne.s32.totalorder %s99, %s100
      %p109 = scmp.eq.s32.totalorder %s26, 0
      %p110 = por %p108, %p109
      %p111 = scmp.ne.s32.totalorder %s99, %s100
      %p112 = scmp.eq.s32.totalorder %s27, 1
      %p113 = por %p111, %p112
      %p115 = scmp.ne.s32.totalorder %s100, %s114
      %p116 = scmp.eq.s32.totalorder %s27, 0
      %p117 = por %p115, %p116
      %s119 = sadd.s32 %s118, 1
      %p122 = scmp.eq.s32.totalorder %s21, 1
      %p123 = scmp.ne.s32.totalorder %s118, %s120
      %p124 = scmp.eq.s32.totalorder %s21, 0
      %p125 = por %p123, %p124
      %p126 = scmp.ne.s32.totalorder %s118, %s120
      %p127 = scmp.eq.s32.totalorder %s26, 1
      %p128 = por %p126, %p127
      %p129 = scmp.ne.s32.totalorder %s120, %s121
      %p130 = scmp.eq.s32.totalorder %s26, 0
      %p131 = por %p129, %p130
      %p132 = scmp.ne.s32.totalorder %s120, %s121
      %p133 = scmp.eq.s32.totalorder %s27, 1
      %p134 = por %p132, %p133
      %p136 = scmp.ne.s32.totalorder %s121, %s135
      %p137 = scmp.eq.s32.totalorder %s27, 0
      %p138 = por %p136, %p137
      %s140 = sadd.s32 %s139, 1
      %p143 = scmp.eq.s32.totalorder %s21, 1
      %p144 = scmp.ne.s32.totalorder %s139, %s141
      %p145 = scmp.eq.s32.totalorder %s21, 0
      %p146 = por %p144, %p145
      %p147 = scmp.ne.s32.totalorder %s139, %s141
      %p148 = scmp.eq.s32.totalorder %s26, 1
      %p149 = por %p147, %p148
      %p150 = scmp.ne.s32.totalorder %s141, %s142
      %p151 = scmp.eq.s32.totalorder %s26, 0
      %p152 = por %p150, %p151
      %p153 = scmp.ne.s32.totalorder %s141, %s142
      %p154 = scmp.eq.s32.totalorder %s27, 1
      %p155 = por %p153, %p154
      %p157 = scmp.ne.s32.totalorder %s142, %s156
      %p158 = scmp.eq.s32.totalorder %s27, 0
      %p159 = por %p157, %p158
      %s161 = sadd.s32 %s160, 1
      %p164 = scmp.eq.s32.totalorder %s21, 1
      %p165 = scmp.ne.s32.totalorder %s160, %s162
      %p166 = scmp.eq.s32.totalorder %s21, 0
      %p167 = por %p165, %p166
      %p168 = scmp.ne.s32.totalorder %s160, %s162
      %p169 = scmp.eq.s32.totalorder %s26, 1
      %p170 = por %p168, %p169
      %p171 = scmp.ne.s32.totalorder %s162, %s163
      %p172 = scmp.eq.s32.totalorder %s26, 0
      %p173 = por %p171, %p172
      %p174 = scmp.ne.s32.totalorder %s162, %s163
      %p175 = scmp.eq.s32.totalorder %s27, 1
      %p176 = por %p174, %p175
      %p178 = scmp.ne.s32.totalorder %s163, %s177
      %p179 = scmp.eq.s32.totalorder %s27, 0
      %p180 = por %p178, %p179
      %s182 = sadd.s32 %s181, 1
      %p185 = scmp.eq.s32.totalorder %s21, 1
      %p186 = scmp.ne.s32.totalorder %s181, %s183
      %p187 = scmp.eq.s32.totalorder %s21, 0
      %p188 = por %p186, %p187
      %p189 = scmp.ne.s32.totalorder %s181, %s183
      %p190 = scmp.eq.s32.totalorder %s26, 1
      %p191 = por %p189, %p190
      %p192 = scmp.ne.s32.totalorder %s183, %s184
      %p193 = scmp.eq.s32.totalorder %s26, 0
      %p194 = por %p192, %p193
      %p195 = scmp.ne.s32.totalorder %s183, %s184
      %p196 = scmp.eq.s32.totalorder %s27, 1
      %p197 = por %p195, %p196
      %p199 = scmp.ne.s32.totalorder %s184, %s198
      %p200 = scmp.eq.s32.totalorder %s27, 0
      %p201 = por %p199, %p200
      %s203 = sadd.s32 %s202, 1
      %p206 = scmp.eq.s32.totalorder %s21, 1
      %p207 = scmp.ne.s32.totalorder %s202, %s204
      %p208 = scmp.eq.s32.totalorder %s21, 0
      %p209 = por %p207, %p208
      %p210 = scmp.ne.s32.totalorder %s202, %s204
      %p211 = scmp.eq.s32.totalorder %s26, 1
      %p212 = por %p210, %p211
      %p213 = scmp.ne.s32.totalorder %s204, %s205
      %p214 = scmp.eq.s32.totalorder %s26, 0
      %p215 = por %p213, %p214
      %p216 = scmp.ne.s32.totalorder %s204, %s205
      %p217 = scmp.eq.s32.totalorder %s27, 1
      %p218 = por %p216, %p217
      %p220 = scmp.ne.s32.totalorder %s205, %s219
      %p221 = scmp.eq.s32.totalorder %s27, 0
      %p222 = por %p220, %p221
      %s224 = sadd.s32 %s223, 1
      %p227 = scmp.eq.s32.totalorder %s21, 1
      %p228 = scmp.ne.s32.totalorder %s223, %s225
      %p229 = scmp.eq.s32.totalorder %s21, 0
      %p230 = por %p228, %p229
      %p231 = scmp.ne.s32.totalorder %s223, %s225
      %p232 = scmp.eq.s32.totalorder %s26, 1
      %p233 = por %p231, %p232
      %p234 = scmp.ne.s32.totalorder %s225, %s226
      %p235 = scmp.eq.s32.totalorder %s26, 0
      %p236 = por %p234, %p235
      %p237 = scmp.ne.s32.totalorder %s225, %s226
      %p238 = scmp.eq.s32.totalorder %s27, 1
      %p239 = por %p237, %p238
      %p241 = scmp.ne.s32.totalorder %s226, %s240
      %p242 = scmp.eq.s32.totalorder %s27, 0
      %p243 = por %p241, %p242
      %s245 = sadd.s32 %s244, 1
      %p248 = scmp.eq.s32.totalorder %s21, 1
      %p249 = scmp.ne.s32.totalorder %s244, %s246
      %p250 = scmp.eq.s32.totalorder %s21, 0
      %p251 = por %p249, %p250
      %p252 = scmp.ne.s32.totalorder %s244, %s246
      %p253 = scmp.eq.s32.totalorder %s26, 1
      %p254 = por %p252, %p253
      %p255 = scmp.ne.s32.totalorder %s246, %s247
      %p256 = scmp.eq.s32.totalorder %s26, 0
      %p257 = por %p255, %p256
      %p258 = scmp.ne.s32.totalorder %s246, %s247
      %p259 = scmp.eq.s32.totalorder %s27, 1
      %p260 = por %p258, %p259
      %p262 = scmp.ne.s32.totalorder %s247, %s261
      %p263 = scmp.eq.s32.totalorder %s27, 0
      %p264 = por %p262, %p263
      %s266 = sadd.s32 %s265, 1
      %p269 = scmp.eq.s32.totalorder %s21, 1
      %p270 = scmp.ne.s32.totalorder %s265, %s267
      %p271 = scmp.eq.s32.totalorder %s21, 0
      %p272 = por %p270, %p271
      %p273 = scmp.ne.s32.totalorder %s265, %s267
      %p274 = scmp.eq.s32.totalorder %s26, 1
      %p275 = por %p273, %p274
      %p276 = scmp.ne.s32.totalorder %s267, %s268
      %p277 = scmp.eq.s32.totalorder %s26, 0
      %p278 = por %p276, %p277
      %p279 = scmp.ne.s32.totalorder %s267, %s268
      %p280 = scmp.eq.s32.totalorder %s27, 1
      %p281 = por %p279, %p280
      %p283 = scmp.ne.s32.totalorder %s268, %s282
      %p284 = scmp.eq.s32.totalorder %s27, 0
      %p285 = por %p283, %p284
      %s286 = ssub.s32 %s21, %s28
      %p287 = scmp.eq.s32.totalorder %s286, 0
      %s289 = sadd.s32 %s288, 1
      %s290 = scalar_select %p287, %s288, %s289
      %p293 = pneg %p287
      %p294 = scmp.eq.s32.totalorder %s21, 1
      %p295 = por %p293, %p294
      %p296 = scmp.ne.s32.totalorder %s288, %s291
      %p297 = scmp.eq.s32.totalorder %s21, 0
      %p298 = por %p296, %p297
      %p299 = scmp.ne.s32.totalorder %s288, %s291
      %p300 = scmp.eq.s32.totalorder %s26, 1
      %p301 = por %p299, %p300
      %p302 = scmp.ne.s32.totalorder %s291, %s292
      %p303 = scmp.eq.s32.totalorder %s26, 0
      %p304 = por %p302, %p303
      %p305 = scmp.ne.s32.totalorder %s291, %s292
      %p306 = scmp.eq.s32.totalorder %s27, 1
      %p307 = por %p305, %p306
      %p309 = scmp.ne.s32.totalorder %s292, %s308
      %p310 = scmp.eq.s32.totalorder %s27, 0
      %p311 = por %p309, %p310
      %p312 = scmp.le.s32.totalorder 1, %s21
      %p313 = scmp.lt.s32.totalorder %s21, 3
      %p314 = pnand %p312, %p313
      %p315 = pneg %p314
      // Predicated region
      $region9: #{decoder_forward.1} parent=5 // pred_check
        _
      $region10: #{decoder_forward.1} parent=5 // pred_check_branch
        %317 = sbr.rel (%p314) target = $region12
      $region11: #{decoder_forward.1} parent=5 // pred_region
        %s318 = ssub.s32 %s21, 1
        // Predicated region
        $region13: #{decoder_forward.1} parent=11 // pred_check
          %p319 = pneg %p68
        $region14: #{decoder_forward.1} parent=11 // pred_check_branch
          %321 = sbr.rel (%p319) target = $region16
        $region15: #{decoder_forward.1} parent=11 // pred_region
          _
        $region16: #{decoder_forward.1} parent=11 // pred_fallthru
          _
        // Predicated region
        $region17: #{decoder_forward.1} parent=11 // pred_check
          %p322 = pneg %p89
        $region18: #{decoder_forward.1} parent=11 // pred_check_branch
          %324 = sbr.rel (%p322) target = $region20
        $region19: #{decoder_forward.1} parent=11 // pred_region
          _
        $region20: #{decoder_forward.1} parent=11 // pred_fallthru
          _
        // Predicated region
        $region21: #{decoder_forward.1} parent=11 // pred_check
          %p325 = pneg %p110
        $region22: #{decoder_forward.1} parent=11 // pred_check_branch
          %327 = sbr.rel (%p325) target = $region24
        $region23: #{decoder_forward.1} parent=11 // pred_region
          _
        $region24: #{decoder_forward.1} parent=11 // pred_fallthru
          _
        // Predicated region
        $region25: #{decoder_forward.1} parent=11 // pred_check
          %p328 = pneg %p131
        $region26: #{decoder_forward.1} parent=11 // pred_check_branch
          %330 = sbr.rel (%p328) target = $region28
        $region27: #{decoder_forward.1} parent=11 // pred_region
          %332 = vsyncadd [#allocation5], 0
          %s333 = sshll.u32 %s4, 4
          %s334 = int_to_ptr.hbm [resolvable:$true] %s333
          %s335 = sshll.u32 [#allocation4], 4
          %s336 = int_to_ptr.vmem [resolvable:$true] %s335
          %341 = dma.hbm_to_vmem [thread:$0]  %s334, 4608, %s336, [#allocation5], 128, 128, 8
        $region28: #{decoder_forward.1} parent=11 // pred_fallthru
          _
        // Predicated region
        $region29: #{decoder_forward.1} parent=11 // pred_check
          %p342 = pneg %p152
        $region30: #{decoder_forward.1} parent=11 // pred_check_branch
          %344 = sbr.rel (%p342) target = $region32
        $region31: #{decoder_forward.1} parent=11 // pred_region
          %346 = vsyncadd [#allocation7], 0
          %s347 = sshll.u32 %s5, 4
          %s348 = int_to_ptr.hbm [resolvable:$true] %s347
          %s349 = sshll.u32 [#allocation6], 4
          %s350 = int_to_ptr.vmem [resolvable:$true] %s349
          %355 = dma.hbm_to_vmem [thread:$0]  %s348, 23040, %s350, [#allocation7], 640, 640, 40
        $region32: #{decoder_forward.1} parent=11 // pred_fallthru
          _
        // Predicated region
        $region33: #{decoder_forward.1} parent=11 // pred_check
          %p356 = pneg %p173
        $region34: #{decoder_forward.1} parent=11 // pred_check_branch
          %358 = sbr.rel (%p356) target = $region36
        $region35: #{decoder_forward.1} parent=11 // pred_region
          %360 = vsyncadd [#allocation7], 0
          %s361 = sshll.u32 %s6, 4
          %s362 = int_to_ptr.hbm [resolvable:$true] %s361
          %s363 = sshll.u32 [#allocation8], 4
          %s364 = int_to_ptr.vmem [resolvable:$true] %s363
          %369 = dma.hbm_to_vmem [thread:$0]  %s362, 1152, %s364, [#allocation7], 64, 64, 4
        $region36: #{decoder_forward.1} parent=11 // pred_fallthru
          _
        // Predicated region
        $region37: #{decoder_forward.1} parent=11 // pred_check
          %p370 = pneg %p194
        $region38: #{decoder_forward.1} parent=11 // pred_check_branch
          %372 = sbr.rel (%p370) target = $region40
        $region39: #{decoder_forward.1} parent=11 // pred_region
          _
        $region40: #{decoder_forward.1} parent=11 // pred_fallthru
          _
        // Predicated region
        $region41: #{decoder_forward.1} parent=11 // pred_check
          %p373 = pneg %p215
        $region42: #{decoder_forward.1} parent=11 // pred_check_branch
          %375 = sbr.rel (%p373) target = $region44
        $region43: #{decoder_forward.1} parent=11 // pred_region
          %377 = vsyncadd [#allocation10], 0
          %s378 = sshll.u32 %s8, 4
          %s379 = int_to_ptr.hbm [resolvable:$true] %s378
          %s380 = sshll.u32 [#allocation9], 4
          %s381 = int_to_ptr.vmem [resolvable:$true] %s380
          %386 = dma.hbm_to_vmem [thread:$0]  %s379, 17408, %s381, [#allocation10], 128, 128, 8
        $region44: #{decoder_forward.1} parent=11 // pred_fallthru
          _
        // Predicated region
        $region45: #{decoder_forward.1} parent=11 // pred_check
          %p387 = pneg %p236
        $region46: #{decoder_forward.1} parent=11 // pred_check_branch
          %389 = sbr.rel (%p387) target = $region48
        $region47: #{decoder_forward.1} parent=11 // pred_region
          _
        $region48: #{decoder_forward.1} parent=11 // pred_fallthru
          _
        // Predicated region
        $region49: #{decoder_forward.1} parent=11 // pred_check
          %p390 = pneg %p257
        $region50: #{decoder_forward.1} parent=11 // pred_check_branch
          %392 = sbr.rel (%p390) target = $region52
        $region51: #{decoder_forward.1} parent=11 // pred_region
          %394 = vsyncadd [#allocation10], 0
          %s395 = sshll.u32 %s10, 4
          %s396 = int_to_ptr.hbm [resolvable:$true] %s395
          %s397 = sshll.u32 [#allocation11], 4
          %s398 = int_to_ptr.vmem [resolvable:$true] %s397
          %403 = dma.hbm_to_vmem [thread:$0]  %s396, 288, %s398, [#allocation10], 32, 32, 2
        $region52: #{decoder_forward.1} parent=11 // pred_fallthru
          _
        // Predicated region
        $region53: #{decoder_forward.1} parent=11 // pred_check
          %p404 = pneg %p278
        $region54: #{decoder_forward.1} parent=11 // pred_check_branch
          %406 = sbr.rel (%p404) target = $region56
        $region55: #{decoder_forward.1} parent=11 // pred_region
          _
        $region56: #{decoder_forward.1} parent=11 // pred_fallthru
          _
      $region12: #{decoder_forward.1} parent=5 // pred_fallthru
        _
      %p407 = scmp.lt.s32.totalorder %s21, 2
      // Predicated region
      $region57: #{decoder_forward.1} parent=5 // pred_check
        %p408 = pneg %p407
      $region58: #{decoder_forward.1} parent=5 // pred_check_branch
        %410 = sbr.rel (%p408) target = $region60
      $region59: #{decoder_forward.1} parent=5 // pred_region
        // Predicated region
        $region61: #{decoder_forward.1} parent=59 // pred_check
          %p411 = pneg %p41
        $region62: #{decoder_forward.1} parent=59 // pred_check_branch
          %413 = sbr.rel (%p411) target = $region64
        $region63: #{decoder_forward.1} parent=59 // pred_region
          %p414 = scmp.lt.s32.totalorder %s21, 1
          %s415 = scalar_select %p414, %s21, 1
          %s416 = smul.addr %s415, 2
          %s417 = smul.addr %s416, 8
          %s418 = scalar_lea.vmem %s0, %s417
        $region64: #{decoder_forward.1} parent=59 // pred_fallthru
          _
      $region60: #{decoder_forward.1} parent=5 // pred_fallthru
        _
      %p419 = scmp.le.s32.totalorder 1, %s21
      %p420 = scmp.lt.s32.totalorder %s21, 3
      %p421 = pnand %p419, %p420
      %p422 = pneg %p421
      // Predicated region
      $region65: #{decoder_forward.1} parent=5 // pred_check
        _
      $region66: #{decoder_forward.1} parent=5 // pred_check_branch
        %424 = sbr.rel (%p421) target = $region68
      $region67: #{decoder_forward.1} parent=5 // pred_region
        %s425 = ssub.s32 %s21, 1
        // Predicated region
        $region69: #{decoder_forward.1} parent=67 // pred_check
          %p426 = pneg %p131
        $region70: #{decoder_forward.1} parent=67 // pred_check_branch
          %428 = sbr.rel (%p426) target = $region72
        $region71: #{decoder_forward.1} parent=67 // pred_region
          %430 = dma.done [#allocation5], 4608
        $region72: #{decoder_forward.1} parent=67 // pred_fallthru
          _
        // Predicated region
        $region73: #{decoder_forward.1} parent=67 // pred_check
          %p431 = pneg %p152
        $region74: #{decoder_forward.1} parent=67 // pred_check_branch
          %433 = sbr.rel (%p431) target = $region76
        $region75: #{decoder_forward.1} parent=67 // pred_region
          %435 = dma.done [#allocation7], 23040
        $region76: #{decoder_forward.1} parent=67 // pred_fallthru
          _
        // Predicated region
        $region77: #{decoder_forward.1} parent=67 // pred_check
          %p436 = pneg %p173
        $region78: #{decoder_forward.1} parent=67 // pred_check_branch
          %438 = sbr.rel (%p436) target = $region80
        $region79: #{decoder_forward.1} parent=67 // pred_region
          %440 = dma.done [#allocation7], 1152
        $region80: #{decoder_forward.1} parent=67 // pred_fallthru
          _
        // Predicated region
        $region81: #{decoder_forward.1} parent=67 // pred_check
          %p441 = pneg %p215
        $region82: #{decoder_forward.1} parent=67 // pred_check_branch
          %443 = sbr.rel (%p441) target = $region84
        $region83: #{decoder_forward.1} parent=67 // pred_region
          %445 = dma.done [#allocation10], 17408
        $region84: #{decoder_forward.1} parent=67 // pred_fallthru
          _
        // Predicated region
        $region85: #{decoder_forward.1} parent=67 // pred_check
          %p446 = pneg %p257
        $region86: #{decoder_forward.1} parent=67 // pred_check_branch
          %448 = sbr.rel (%p446) target = $region88
        $region87: #{decoder_forward.1} parent=67 // pred_region
          %450 = dma.done [#allocation10], 288
        $region88: #{decoder_forward.1} parent=67 // pred_fallthru
          _
        %p451 = scmp.lt.s32.totalorder %s26, 1
        %s452 = scalar_select %p451, %s26, 1
        %s453 = smul.addr %s452, 2
        %s454 = smul.addr %s453, 8
        %s455 = scalar_lea.vmem %s0, %s454
        %p456 = pneg %p47
        %p457 = pneg %p44
        %p458 = pneg %p68
        %p459 = pneg %p65
        %p460 = pneg %p89
        %p461 = pneg %p86
        %p462 = pneg %p110
        %p463 = pneg %p107
        %p464 = pneg %p131
        %p465 = pneg %p128
        %p466 = pneg %p152
        %p467 = pneg %p149
        %p468 = pneg %p173
        %p469 = pneg %p170
        %p470 = pneg %p194
        %p471 = pneg %p191
        %p472 = pneg %p215
        %p473 = pneg %p212
        %p474 = pneg %p236
        %p475 = pneg %p233
        %p476 = pneg %p257
        %p477 = pneg %p254
        %p478 = pneg %p278
        %p479 = pneg %p275
        %p480 = pneg %p304
        %p481 = pneg %p301
        %p482 = scmp.lt.s32.totalorder %s26, 1
        %s483 = scalar_select %p482, %s26, 1
        %s484 = smul.addr %s483, 9
        %s485 = smul.addr %s484, 4
        %s486 = scalar_lea.vmem %s12, %s485
        %p487 = scmp.lt.s32.totalorder %s26, 1
        %s488 = scalar_select %p487, %s26, 1
        %s489 = smul.addr %s488, 2
        %s490 = smul.addr %s489, 8
        %s491 = scalar_lea.vmem %s0, %s490
        %p492 = scmp.lt.s32.totalorder %s26, 1
        %s493 = scalar_select %p492, %s26, 1
        %s494 = smul.addr %s493, 9
        %s495 = smul.addr %s494, 4
        %s496 = scalar_lea.vmem %s12, %s495
        %v500 = vld [vmem:[%s491] sm:$0xff]
        %v501 = vld [vmem:[%s491 + $0x8] sm:$0xff]
        %v502 = vpack.c.bf16 %v501, %v500
        %v503 = vld [vmem:[%s1] sm:$0xff]
        %v504 = vld [vmem:[%s1 + $0x8] sm:$0xf]
        %v505 = vld [vmem:[%s1 + $0xc] sm:$0xff]
        %v506 = vld [vmem:[%s1 + $0x14] sm:$0xf]
        %v507 = vld [vmem:[%s1 + $0x18] sm:$0xff]
        %v508 = vld [vmem:[%s1 + $0x20] sm:$0xf]
        %v509 = vld [vmem:[%s1 + $0x24] sm:$0xff]
        %v510 = vld [vmem:[%s1 + $0x2c] sm:$0xf]
        %v511 = vld [vmem:[%s1 + $0x30] sm:$0xff]
        %v512 = vld [vmem:[%s1 + $0x38] sm:$0xf]
        %v513 = vld [vmem:[%s1 + $0x3c] sm:$0xff]
        %v514 = vld [vmem:[%s1 + $0x44] sm:$0xf]
        %v515 = vld [vmem:[%s1 + $0x48] sm:$0xff]
        %v516 = vld [vmem:[%s1 + $0x50] sm:$0xf]
        %v517 = vld [vmem:[%s1 + $0x54] sm:$0xff]
        %v518 = vld [vmem:[%s1 + $0x5c] sm:$0xf]
        %v535 = vunpack.c.l.b16 %v503
        %v536 = vunpack.c.h.b16 %v503
        %v537 = vunpack.c.l.b16 %v504
        %v538 = vunpack.c.l.b16 %v505
        %v539 = vunpack.c.h.b16 %v505
        %v540 = vunpack.c.l.b16 %v506
        %v541 = vunpack.c.l.b16 %v507
        %v542 = vunpack.c.h.b16 %v507
        %v543 = vunpack.c.l.b16 %v508
        %v544 = vunpack.c.l.b16 %v509
        %v545 = vunpack.c.h.b16 %v509
        %v546 = vunpack.c.l.b16 %v510
        %v547 = vunpack.c.l.b16 %v511
        %v548 = vunpack.c.h.b16 %v511
        %v549 = vunpack.c.l.b16 %v512
        %v550 = vunpack.c.l.b16 %v513
        %v551 = vunpack.c.h.b16 %v513
        %v552 = vunpack.c.l.b16 %v514
        %v553 = vunpack.c.l.b16 %v515
        %v554 = vunpack.c.h.b16 %v515
        %v555 = vunpack.c.l.b16 %v516
        %v556 = vunpack.c.l.b16 %v517
        %v557 = vunpack.c.h.b16 %v517
        %v558 = vunpack.c.l.b16 %v518
        %v559 = vpack.c.b16 %v538, %v535
        %v560 = vpack.c.b16 %v539, %v536
        %v561 = vpack.c.b16 %v540, %v537
        %v562 = vpack.c.b16 %v544, %v541
        %v563 = vpack.c.b16 %v545, %v542
        %v564 = vpack.c.b16 %v546, %v543
        %v565 = vpack.c.b16 %v550, %v547
        %v566 = vpack.c.b16 %v551, %v548
        %v567 = vpack.c.b16 %v552, %v549
        %v568 = vpack.c.b16 %v556, %v553
        %v569 = vpack.c.b16 %v557, %v554
        %v570 = vpack.c.b16 %v558, %v555
        %vm583 = vcmask 523264
        %v585 = vsel %vm583, %v502, 0
        %587 = vmatpush.bf16.msra.mxu0 0
        %588 = vmatpush.bf16.msra.mxu0 0
        %589 = vmatpush.bf16.msra.mxu0 0
        %590 = vmatpush.bf16.msra.mxu0 0
        %591 = vmatpush.bf16.msra.mxu0 %v568
        %592 = vmatpush.bf16.msra.mxu0 %v565
        %593 = vmatpush.bf16.msra.mxu0 %v562
        %594 = vmatpush.bf16.msra.mxu0 %v559
        %595 = vmatmul.bf16.gmra.mxu0 %v585
        %v596 = vpop.f32.mrf.mxu0
        %v597 = vadd.f32 0.0, %v596
        %v598 = vpop.f32.mrf.mxu0
        %v599 = vadd.f32 0.0, %v598
        %600 = vdwg.mxu0
        %601 = vmatpush.bf16.msra.mxu0 0
        %602 = vmatpush.bf16.msra.mxu0 0
        %603 = vmatpush.bf16.msra.mxu0 0
        %604 = vmatpush.bf16.msra.mxu0 0
        %605 = vmatpush.bf16.msra.mxu0 %v569
        %606 = vmatpush.bf16.msra.mxu0 %v566
        %607 = vmatpush.bf16.msra.mxu0 %v563
        %608 = vmatpush.bf16.msra.mxu0 %v560
        %609 = vmatmul.bf16.gmra.mxu0 %v585
        %v610 = vpop.f32.mrf.mxu0
        %v611 = vadd.f32 0.0, %v610
        %v612 = vpop.f32.mrf.mxu0
        %v613 = vadd.f32 0.0, %v612
        %614 = vdwg.mxu0
        %615 = vmatpush.bf16.msra.mxu0 0
        %616 = vmatpush.bf16.msra.mxu0 0
        %617 = vmatpush.bf16.msra.mxu0 0
        %618 = vmatpush.bf16.msra.mxu0 0
        %619 = vmatpush.bf16.msra.mxu0 %v570
        %620 = vmatpush.bf16.msra.mxu0 %v567
        %621 = vmatpush.bf16.msra.mxu0 %v564
        %622 = vmatpush.bf16.msra.mxu0 %v561
        %623 = vmatmul.bf16.gmra.mxu0 %v585
        %v624 = vpop.f32.mrf.mxu0
        %v625 = vadd.f32 0.0, %v624
        %v626 = vpop.f32.mrf.mxu0
        %v627 = vadd.f32 0.0, %v626
        %628 = vdwg.mxu0
        %v629 = vpack.c.bf16 %v611, %v597
        %v630 = vpack.c.bf16 %v625, %v625
        %v631 = vpack.c.bf16 %v613, %v599
        %v632 = vpack.c.bf16 %v627, %v627
        %633 = vst [vmem:[#allocation2] sm:$0xff] %v629
        %634 = vst [vmem:[#allocation2 + $0x8] sm:$0xf] %v630
        %635 = vst [vmem:[#allocation2 + $0xc] sm:$0xff] %v631
        %636 = vst [vmem:[#allocation2 + $0x14] sm:$0xf] %v632
        %v637 = vld [vmem:[#allocation2] sm:$0xff]
        %v638 = vld [vmem:[#allocation2 + $0x8] sm:$0xf]
        %v639 = vld [vmem:[#allocation2 + $0xc] sm:$0xff]
        %v640 = vld [vmem:[#allocation2 + $0x14] sm:$0xf]
        %v641 = vld [vmem:[%s2] sm:$0xf]
        %v642 = vld [vmem:[%s2 + $0x4] sm:$0xf]
        %s643 = scalar_lea.vmem %s2, 8
        %v644 = vld [vmem:[%s643] sm:$0xf]
        %v645 = vld [vmem:[%s643 + $0x4] sm:$0xf]
        %v648 = vunpack.c.l.b16 %v644
        %v649 = vunpack.c.l.b16 %v645
        %v650 = vpack.c.b16 %v649, %v648
        %v655 = vunpack.c.l.b16 %v637
        %v656 = vunpack.c.h.b16 %v637
        %v657 = vunpack.c.l.b16 %v638
        %v658 = vunpack.c.l.b16 %v639
        %v659 = vunpack.c.h.b16 %v639
        %v660 = vunpack.c.l.b16 %v640
        %v661 = vpack.c.b16 %v658, %v655
        %v662 = vpack.c.b16 %v659, %v656
        %v663 = vpack.c.b16 %v660, %v657
        %664 = vrot.lane.b32.xlu0 %v661, 127
        %v665 = vpop.permute.xlu0 %664
        %666 = vrot.lane.b32.xlu0 %v662, 127
        %v667 = vpop.permute.xlu0 %666
        %668 = vrot.lane.b32.xlu0 %v663, 127
        %v669 = vpop.permute.xlu0 %668
        %vm670 = vcmask 1039360
        %v671 = vsel %vm670, %v665, %v667
        %v672 = vsel %vm670, %v667, %v669
        %vm676 = vcmask 130048
        %v678 = vsel %vm676, %v650, 0
        %680 = vmatpush.bf16.msra.mxu0 0
        %681 = vmatpush.bf16.msra.mxu0 0
        %682 = vmatpush.bf16.msra.mxu0 0
        %683 = vmatpush.bf16.msra.mxu0 0
        %684 = vmatpush.bf16.msra.mxu0 0
        %685 = vmatpush.bf16.msra.mxu0 0
        %686 = vmatpush.bf16.msra.mxu0 0
        %687 = vmatpush.bf16.msra.mxu0 %v671
        %688 = vmatmul.bf16.gmra.mxu0 %v678
        %v689 = vpop.f32.mrf.mxu0
        %v690 = vadd.f32 0.0, %v689
        %v691 = vpop.f32.mrf.mxu0
        %v692 = vadd.f32 0.0, %v691
        %693 = vdwg.mxu0
        %694 = vmatpush.bf16.msra.mxu0 0
        %695 = vmatpush.bf16.msra.mxu0 0
        %696 = vmatpush.bf16.msra.mxu0 0
        %697 = vmatpush.bf16.msra.mxu0 0
        %698 = vmatpush.bf16.msra.mxu0 0
        %699 = vmatpush.bf16.msra.mxu0 0
        %700 = vmatpush.bf16.msra.mxu0 0
        %701 = vmatpush.bf16.msra.mxu0 %v672
        %702 = vmatmul.bf16.gmra.mxu0 %v678
        %v703 = vpop.f32.mrf.mxu0
        %v704 = vadd.f32 0.0, %v703
        %v705 = vpop.f32.mrf.mxu0
        %v706 = vadd.f32 0.0, %v705
        %707 = vdwg.mxu0
        %708 = vmatpush.bf16.msra.mxu0 0
        %709 = vmatpush.bf16.msra.mxu0 0
        %710 = vmatpush.bf16.msra.mxu0 0
        %711 = vmatpush.bf16.msra.mxu0 0
        %712 = vmatpush.bf16.msra.mxu0 0
        %713 = vmatpush.bf16.msra.mxu0 0
        %714 = vmatpush.bf16.msra.mxu0 0
        %715 = vmatpush.bf16.msra.mxu0 %v669
        %716 = vmatmul.bf16.gmra.mxu0 %v678
        %v717 = vpop.f32.mrf.mxu0
        %v718 = vadd.f32 0.0, %v717
        %v719 = vpop.f32.mrf.mxu0
        %v720 = vadd.f32 0.0, %v719
        %721 = vdwg.mxu0
        %v724 = vunpack.c.l.b16 %v641
        %v725 = vunpack.c.l.b16 %v642
        %v726 = vpack.c.b16 %v725, %v724
        %v731 = vsel %vm676, %v726, 0
        %733 = vmatpush.bf16.msra.mxu0 0
        %734 = vmatpush.bf16.msra.mxu0 0
        %735 = vmatpush.bf16.msra.mxu0 0
        %736 = vmatpush.bf16.msra.mxu0 0
        %737 = vmatpush.bf16.msra.mxu0 0
        %738 = vmatpush.bf16.msra.mxu0 0
        %739 = vmatpush.bf16.msra.mxu0 0
        %740 = vmatpush.bf16.msra.mxu0 %v661
        %741 = vmatmul.bf16.gmra.mxu0 %v731
        %v742 = vpop.f32.mrf.mxu0
        %v743 = vadd.f32 %v690, %v742
        %v744 = vpop.f32.mrf.mxu0
        %v745 = vadd.f32 %v692, %v744
        %746 = vdwg.mxu0
        %747 = vmatpush.bf16.msra.mxu0 0
        %748 = vmatpush.bf16.msra.mxu0 0
        %749 = vmatpush.bf16.msra.mxu0 0
        %750 = vmatpush.bf16.msra.mxu0 0
        %751 = vmatpush.bf16.msra.mxu0 0
        %752 = vmatpush.bf16.msra.mxu0 0
        %753 = vmatpush.bf16.msra.mxu0 0
        %754 = vmatpush.bf16.msra.mxu0 %v662
        %755 = vmatmul.bf16.gmra.mxu0 %v731
        %v756 = vpop.f32.mrf.mxu0
        %v757 = vadd.f32 %v704, %v756
        %v758 = vpop.f32.mrf.mxu0
        %v759 = vadd.f32 %v706, %v758
        %760 = vdwg.mxu0
        %761 = vmatpush.bf16.msra.mxu0 0
        %762 = vmatpush.bf16.msra.mxu0 0
        %763 = vmatpush.bf16.msra.mxu0 0
        %764 = vmatpush.bf16.msra.mxu0 0
        %765 = vmatpush.bf16.msra.mxu0 0
        %766 = vmatpush.bf16.msra.mxu0 0
        %767 = vmatpush.bf16.msra.mxu0 0
        %768 = vmatpush.bf16.msra.mxu0 %v663
        %769 = vmatmul.bf16.gmra.mxu0 %v731
        %v770 = vpop.f32.mrf.mxu0
        %v771 = vadd.f32 %v718, %v770
        %v772 = vpop.f32.mrf.mxu0
        %v773 = vadd.f32 %v720, %v772
        %774 = vdwg.mxu0
        %s775 = scalar_lea.vmem %s2, 16
        %v776 = vld [vmem:[%s775] sm:$0xf]
        %v777 = vld [vmem:[%s775 + $0x4] sm:$0xf]
        %v780 = vunpack.c.l.b16 %v776
        %v781 = vunpack.c.l.b16 %v777
        %v782 = vpack.c.b16 %v781, %v780
        %783 = vrot.lane.b32.xlu0 %v661, 126
        %v784 = vpop.permute.xlu0 %783
        %785 = vrot.lane.b32.xlu0 %v662, 126
        %v786 = vpop.permute.xlu0 %785
        %787 = vrot.lane.b32.xlu0 %v663, 126
        %v788 = vpop.permute.xlu0 %787
        %vm789 = vcmask 1031168
        %v790 = vsel %vm789, %v784, %v786
        %v791 = vsel %vm789, %v786, %v788
        %v796 = vsel %vm676, %v782, 0
        %798 = vmatpush.bf16.msra.mxu0 0
        %799 = vmatpush.bf16.msra.mxu0 0
        %800 = vmatpush.bf16.msra.mxu0 0
        %801 = vmatpush.bf16.msra.mxu0 0
        %802 = vmatpush.bf16.msra.mxu0 0
        %803 = vmatpush.bf16.msra.mxu0 0
        %804 = vmatpush.bf16.msra.mxu0 0
        %805 = vmatpush.bf16.msra.mxu0 %v790
        %806 = vmatmul.bf16.gmra.mxu0 %v796
        %v807 = vpop.f32.mrf.mxu0
        %v808 = vadd.f32 0.0, %v807
        %v809 = vpop.f32.mrf.mxu0
        %v810 = vadd.f32 0.0, %v809
        %811 = vdwg.mxu0
        %812 = vmatpush.bf16.msra.mxu0 0
        %813 = vmatpush.bf16.msra.mxu0 0
        %814 = vmatpush.bf16.msra.mxu0 0
        %815 = vmatpush.bf16.msra.mxu0 0
        %816 = vmatpush.bf16.msra.mxu0 0
        %817 = vmatpush.bf16.msra.mxu0 0
        %818 = vmatpush.bf16.msra.mxu0 0
        %819 = vmatpush.bf16.msra.mxu0 %v791
        %820 = vmatmul.bf16.gmra.mxu0 %v796
        %v821 = vpop.f32.mrf.mxu0
        %v822 = vadd.f32 0.0, %v821
        %v823 = vpop.f32.mrf.mxu0
        %v824 = vadd.f32 0.0, %v823
        %825 = vdwg.mxu0
        %826 = vmatpush.bf16.msra.mxu0 0
        %827 = vmatpush.bf16.msra.mxu0 0
        %828 = vmatpush.bf16.msra.mxu0 0
        %829 = vmatpush.bf16.msra.mxu0 0
        %830 = vmatpush.bf16.msra.mxu0 0
        %831 = vmatpush.bf16.msra.mxu0 0
        %832 = vmatpush.bf16.msra.mxu0 0
        %833 = vmatpush.bf16.msra.mxu0 %v788
        %834 = vmatmul.bf16.gmra.mxu0 %v796
        %v835 = vpop.f32.mrf.mxu0
        %v836 = vadd.f32 0.0, %v835
        %v837 = vpop.f32.mrf.mxu0
        %v838 = vadd.f32 0.0, %v837
        %839 = vdwg.mxu0
        %v840 = vadd.f32 %v743, %v808
        %v841 = vadd.f32 %v757, %v822
        %v842 = vadd.f32 %v771, %v836
        %v843 = vadd.f32 %v745, %v810
        %v844 = vadd.f32 %v759, %v824
        %v845 = vadd.f32 %v773, %v838
        %s846 = scalar_lea.vmem %s2, 24
        %v847 = vld [vmem:[%s846] sm:$0xf]
        %v848 = vld [vmem:[%s846 + $0x4] sm:$0xf]
        %v851 = vunpack.c.l.b16 %v847
        %v852 = vunpack.c.l.b16 %v848
        %v853 = vpack.c.b16 %v852, %v851
        %854 = vrot.lane.b32.xlu0 %v661, 110
        %v855 = vpop.permute.xlu0 %854
        %856 = vrot.lane.b32.xlu0 %v662, 110
        %v857 = vpop.permute.xlu0 %856
        %858 = vrot.lane.b32.xlu0 %v663, 110
        %v859 = vpop.permute.xlu0 %858
        %vm860 = vcmask 900096
        %v861 = vsel %vm860, %v855, %v857
        %v862 = vsel %vm860, %v857, %v859
        %v867 = vsel %vm676, %v853, 0
        %869 = vmatpush.bf16.msra.mxu0 0
        %870 = vmatpush.bf16.msra.mxu0 0
        %871 = vmatpush.bf16.msra.mxu0 0
        %872 = vmatpush.bf16.msra.mxu0 0
        %873 = vmatpush.bf16.msra.mxu0 0
        %874 = vmatpush.bf16.msra.mxu0 0
        %875 = vmatpush.bf16.msra.mxu0 0
        %876 = vmatpush.bf16.msra.mxu0 %v861
        %877 = vmatmul.bf16.gmra.mxu0 %v867
        %v878 = vpop.f32.mrf.mxu0
        %v879 = vadd.f32 0.0, %v878
        %v880 = vpop.f32.mrf.mxu0
        %v881 = vadd.f32 0.0, %v880
        %882 = vdwg.mxu0
        %883 = vmatpush.bf16.msra.mxu0 0
        %884 = vmatpush.bf16.msra.mxu0 0
        %885 = vmatpush.bf16.msra.mxu0 0
        %886 = vmatpush.bf16.msra.mxu0 0
        %887 = vmatpush.bf16.msra.mxu0 0
        %888 = vmatpush.bf16.msra.mxu0 0
        %889 = vmatpush.bf16.msra.mxu0 0
        %890 = vmatpush.bf16.msra.mxu0 %v862
        %891 = vmatmul.bf16.gmra.mxu0 %v867
        %v892 = vpop.f32.mrf.mxu0
        %v893 = vadd.f32 0.0, %v892
        %v894 = vpop.f32.mrf.mxu0
        %v895 = vadd.f32 0.0, %v894
        %896 = vdwg.mxu0
        %897 = vmatpush.bf16.msra.mxu0 0
        %898 = vmatpush.bf16.msra.mxu0 0
        %899 = vmatpush.bf16.msra.mxu0 0
        %900 = vmatpush.bf16.msra.mxu0 0
        %901 = vmatpush.bf16.msra.mxu0 0
        %902 = vmatpush.bf16.msra.mxu0 0
        %903 = vmatpush.bf16.msra.mxu0 0
        %904 = vmatpush.bf16.msra.mxu0 %v859
        %905 = vmatmul.bf16.gmra.mxu0 %v867
        %v906 = vpop.f32.mrf.mxu0
        %v907 = vadd.f32 0.0, %v906
        %v908 = vpop.f32.mrf.mxu0
        %v909 = vadd.f32 0.0, %v908
        %910 = vdwg.mxu0
        %v911 = vadd.f32 %v840, %v879
        %v912 = vadd.f32 %v841, %v893
        %v913 = vadd.f32 %v842, %v907
        %v914 = vadd.f32 %v843, %v881
        %v915 = vadd.f32 %v844, %v895
        %v916 = vadd.f32 %v845, %v909
        %s917 = scalar_lea.vmem %s2, 32
        %v918 = vld [vmem:[%s917] sm:$0xf]
        %v919 = vld [vmem:[%s917 + $0x4] sm:$0xf]
        %v922 = vunpack.c.l.b16 %v918
        %v923 = vunpack.c.l.b16 %v919
        %v924 = vpack.c.b16 %v923, %v922
        %925 = vrot.lane.b32.xlu0 %v661, 109
        %v926 = vpop.permute.xlu0 %925
        %927 = vrot.lane.b32.xlu0 %v662, 109
        %v928 = vpop.permute.xlu0 %927
        %929 = vrot.lane.b32.xlu0 %v663, 109
        %v930 = vpop.permute.xlu0 %929
        %vm931 = vcmask 891904
        %v932 = vsel %vm931, %v926, %v928
        %v933 = vsel %vm931, %v928, %v930
        %v938 = vsel %vm676, %v924, 0
        %940 = vmatpush.bf16.msra.mxu0 0
        %941 = vmatpush.bf16.msra.mxu0 0
        %942 = vmatpush.bf16.msra.mxu0 0
        %943 = vmatpush.bf16.msra.mxu0 0
        %944 = vmatpush.bf16.msra.mxu0 0
        %945 = vmatpush.bf16.msra.mxu0 0
        %946 = vmatpush.bf16.msra.mxu0 0
        %947 = vmatpush.bf16.msra.mxu0 %v932
        %948 = vmatmul.bf16.gmra.mxu0 %v938
        %v949 = vpop.f32.mrf.mxu0
        %v950 = vadd.f32 0.0, %v949
        %v951 = vpop.f32.mrf.mxu0
        %v952 = vadd.f32 0.0, %v951
        %953 = vdwg.mxu0
        %954 = vmatpush.bf16.msra.mxu0 0
        %955 = vmatpush.bf16.msra.mxu0 0
        %956 = vmatpush.bf16.msra.mxu0 0
        %957 = vmatpush.bf16.msra.mxu0 0
        %958 = vmatpush.bf16.msra.mxu0 0
        %959 = vmatpush.bf16.msra.mxu0 0
        %960 = vmatpush.bf16.msra.mxu0 0
        %961 = vmatpush.bf16.msra.mxu0 %v933
        %962 = vmatmul.bf16.gmra.mxu0 %v938
        %v963 = vpop.f32.mrf.mxu0
        %v964 = vadd.f32 0.0, %v963
        %v965 = vpop.f32.mrf.mxu0
        %v966 = vadd.f32 0.0, %v965
        %967 = vdwg.mxu0
        %968 = vmatpush.bf16.msra.mxu0 0
        %969 = vmatpush.bf16.msra.mxu0 0
        %970 = vmatpush.bf16.msra.mxu0 0
        %971 = vmatpush.bf16.msra.mxu0 0
        %972 = vmatpush.bf16.msra.mxu0 0
        %973 = vmatpush.bf16.msra.mxu0 0
        %974 = vmatpush.bf16.msra.mxu0 0
        %975 = vmatpush.bf16.msra.mxu0 %v930
        %976 = vmatmul.bf16.gmra.mxu0 %v938
        %v977 = vpop.f32.mrf.mxu0
        %v978 = vadd.f32 0.0, %v977
        %v979 = vpop.f32.mrf.mxu0
        %v980 = vadd.f32 0.0, %v979
        %981 = vdwg.mxu0
        %v982 = vadd.f32 %v911, %v950
        %v983 = vadd.f32 %v912, %v964
        %v984 = vadd.f32 %v913, %v978
        %v985 = vadd.f32 %v914, %v952
        %v986 = vadd.f32 %v915, %v966
        %v987 = vadd.f32 %v916, %v980
        %s988 = scalar_lea.vmem %s2, 40
        %v989 = vld [vmem:[%s988] sm:$0xf]
        %v990 = vld [vmem:[%s988 + $0x4] sm:$0xf]
        %v993 = vunpack.c.l.b16 %v989
        %v994 = vunpack.c.l.b16 %v990
        %v995 = vpack.c.b16 %v994, %v993
        %996 = vrot.lane.b32.xlu0 %v661, 108
        %v997 = vpop.permute.xlu0 %996
        %998 = vrot.lane.b32.xlu0 %v662, 108
        %v999 = vpop.permute.xlu0 %998
        %1000 = vrot.lane.b32.xlu0 %v663, 108
        %v1001 = vpop.permute.xlu0 %1000
        %vm1002 = vcmask 883712
        %v1003 = vsel %vm1002, %v997, %v999
        %v1004 = vsel %vm1002, %v999, %v1001
        %v1009 = vsel %vm676, %v995, 0
        %1011 = vmatpush.bf16.msra.mxu0 0
        %1012 = vmatpush.bf16.msra.mxu0 0
        %1013 = vmatpush.bf16.msra.mxu0 0
        %1014 = vmatpush.bf16.msra.mxu0 0
        %1015 = vmatpush.bf16.msra.mxu0 0
        %1016 = vmatpush.bf16.msra.mxu0 0
        %1017 = vmatpush.bf16.msra.mxu0 0
        %1018 = vmatpush.bf16.msra.mxu0 %v1003
        %1019 = vmatmul.bf16.gmra.mxu0 %v1009
        %v1020 = vpop.f32.mrf.mxu0
        %v1021 = vadd.f32 0.0, %v1020
        %v1022 = vpop.f32.mrf.mxu0
        %v1023 = vadd.f32 0.0, %v1022
        %1024 = vdwg.mxu0
        %1025 = vmatpush.bf16.msra.mxu0 0
        %1026 = vmatpush.bf16.msra.mxu0 0
        %1027 = vmatpush.bf16.msra.mxu0 0
        %1028 = vmatpush.bf16.msra.mxu0 0
        %1029 = vmatpush.bf16.msra.mxu0 0
        %1030 = vmatpush.bf16.msra.mxu0 0
        %1031 = vmatpush.bf16.msra.mxu0 0
        %1032 = vmatpush.bf16.msra.mxu0 %v1004
        %1033 = vmatmul.bf16.gmra.mxu0 %v1009
        %v1034 = vpop.f32.mrf.mxu0
        %v1035 = vadd.f32 0.0, %v1034
        %v1036 = vpop.f32.mrf.mxu0
        %v1037 = vadd.f32 0.0, %v1036
        %1038 = vdwg.mxu0
        %1039 = vmatpush.bf16.msra.mxu0 0
        %1040 = vmatpush.bf16.msra.mxu0 0
        %1041 = vmatpush.bf16.msra.mxu0 0
        %1042 = vmatpush.bf16.msra.mxu0 0
        %1043 = vmatpush.bf16.msra.mxu0 0
        %1044 = vmatpush.bf16.msra.mxu0 0
        %1045 = vmatpush.bf16.msra.mxu0 0
        %1046 = vmatpush.bf16.msra.mxu0 %v1001
        %1047 = vmatmul.bf16.gmra.mxu0 %v1009
        %v1048 = vpop.f32.mrf.mxu0
        %v1049 = vadd.f32 0.0, %v1048
        %v1050 = vpop.f32.mrf.mxu0
        %v1051 = vadd.f32 0.0, %v1050
        %1052 = vdwg.mxu0
        %v1053 = vadd.f32 %v982, %v1021
        %v1054 = vadd.f32 %v983, %v1035
        %v1055 = vadd.f32 %v984, %v1049
        %v1056 = vadd.f32 %v985, %v1023
        %v1057 = vadd.f32 %v986, %v1037
        %v1058 = vadd.f32 %v987, %v1051
        %s1059 = scalar_lea.vmem %s2, 48
        %v1060 = vld [vmem:[%s1059] sm:$0xf]
        %v1061 = vld [vmem:[%s1059 + $0x4] sm:$0xf]
        %v1064 = vunpack.c.l.b16 %v1060
        %v1065 = vunpack.c.l.b16 %v1061
        %v1066 = vpack.c.b16 %v1065, %v1064
        %1067 = vrot.lane.b32.xlu0 %v661, 92
        %v1068 = vpop.permute.xlu0 %1067
        %1069 = vrot.lane.b32.xlu0 %v662, 92
        %v1070 = vpop.permute.xlu0 %1069
        %1071 = vrot.lane.b32.xlu0 %v663, 92
        %v1072 = vpop.permute.xlu0 %1071
        %vm1073 = vcmask 752640
        %v1074 = vsel %vm1073, %v1068, %v1070
        %v1075 = vsel %vm1073, %v1070, %v1072
        %v1080 = vsel %vm676, %v1066, 0
        %1082 = vmatpush.bf16.msra.mxu0 0
        %1083 = vmatpush.bf16.msra.mxu0 0
        %1084 = vmatpush.bf16.msra.mxu0 0
        %1085 = vmatpush.bf16.msra.mxu0 0
        %1086 = vmatpush.bf16.msra.mxu0 0
        %1087 = vmatpush.bf16.msra.mxu0 0
        %1088 = vmatpush.bf16.msra.mxu0 0
        %1089 = vmatpush.bf16.msra.mxu0 %v1074
        %1090 = vmatmul.bf16.gmra.mxu0 %v1080
        %v1091 = vpop.f32.mrf.mxu0
        %v1092 = vadd.f32 0.0, %v1091
        %v1093 = vpop.f32.mrf.mxu0
        %v1094 = vadd.f32 0.0, %v1093
        %1095 = vdwg.mxu0
        %1096 = vmatpush.bf16.msra.mxu0 0
        %1097 = vmatpush.bf16.msra.mxu0 0
        %1098 = vmatpush.bf16.msra.mxu0 0
        %1099 = vmatpush.bf16.msra.mxu0 0
        %1100 = vmatpush.bf16.msra.mxu0 0
        %1101 = vmatpush.bf16.msra.mxu0 0
        %1102 = vmatpush.bf16.msra.mxu0 0
        %1103 = vmatpush.bf16.msra.mxu0 %v1075
        %1104 = vmatmul.bf16.gmra.mxu0 %v1080
        %v1105 = vpop.f32.mrf.mxu0
        %v1106 = vadd.f32 0.0, %v1105
        %v1107 = vpop.f32.mrf.mxu0
        %v1108 = vadd.f32 0.0, %v1107
        %1109 = vdwg.mxu0
        %1110 = vmatpush.bf16.msra.mxu0 0
        %1111 = vmatpush.bf16.msra.mxu0 0
        %1112 = vmatpush.bf16.msra.mxu0 0
        %1113 = vmatpush.bf16.msra.mxu0 0
        %1114 = vmatpush.bf16.msra.mxu0 0
        %1115 = vmatpush.bf16.msra.mxu0 0
        %1116 = vmatpush.bf16.msra.mxu0 0
        %1117 = vmatpush.bf16.msra.mxu0 %v1072
        %1118 = vmatmul.bf16.gmra.mxu0 %v1080
        %v1119 = vpop.f32.mrf.mxu0
        %v1120 = vadd.f32 0.0, %v1119
        %v1121 = vpop.f32.mrf.mxu0
        %v1122 = vadd.f32 0.0, %v1121
        %1123 = vdwg.mxu0
        %v1124 = vadd.f32 %v1053, %v1092
        %v1125 = vadd.f32 %v1054, %v1106
        %v1126 = vadd.f32 %v1055, %v1120
        %v1127 = vadd.f32 %v1056, %v1094
        %v1128 = vadd.f32 %v1057, %v1108
        %v1129 = vadd.f32 %v1058, %v1122
        %s1130 = scalar_lea.vmem %s2, 56
        %v1131 = vld [vmem:[%s1130] sm:$0xf]
        %v1132 = vld [vmem:[%s1130 + $0x4] sm:$0xf]
        %v1135 = vunpack.c.l.b16 %v1131
        %v1136 = vunpack.c.l.b16 %v1132
        %v1137 = vpack.c.b16 %v1136, %v1135
        %1138 = vrot.lane.b32.xlu0 %v661, 91
        %v1139 = vpop.permute.xlu0 %1138
        %1140 = vrot.lane.b32.xlu0 %v662, 91
        %v1141 = vpop.permute.xlu0 %1140
        %1142 = vrot.lane.b32.xlu0 %v663, 91
        %v1143 = vpop.permute.xlu0 %1142
        %vm1144 = vcmask 744448
        %v1145 = vsel %vm1144, %v1139, %v1141
        %v1146 = vsel %vm1144, %v1141, %v1143
        %v1151 = vsel %vm676, %v1137, 0
        %1153 = vmatpush.bf16.msra.mxu0 0
        %1154 = vmatpush.bf16.msra.mxu0 0
        %1155 = vmatpush.bf16.msra.mxu0 0
        %1156 = vmatpush.bf16.msra.mxu0 0
        %1157 = vmatpush.bf16.msra.mxu0 0
        %1158 = vmatpush.bf16.msra.mxu0 0
        %1159 = vmatpush.bf16.msra.mxu0 0
        %1160 = vmatpush.bf16.msra.mxu0 %v1145
        %1161 = vmatmul.bf16.gmra.mxu0 %v1151
        %v1162 = vpop.f32.mrf.mxu0
        %v1163 = vadd.f32 0.0, %v1162
        %v1164 = vpop.f32.mrf.mxu0
        %v1165 = vadd.f32 0.0, %v1164
        %1166 = vdwg.mxu0
        %1167 = vmatpush.bf16.msra.mxu0 0
        %1168 = vmatpush.bf16.msra.mxu0 0
        %1169 = vmatpush.bf16.msra.mxu0 0
        %1170 = vmatpush.bf16.msra.mxu0 0
        %1171 = vmatpush.bf16.msra.mxu0 0
        %1172 = vmatpush.bf16.msra.mxu0 0
        %1173 = vmatpush.bf16.msra.mxu0 0
        %1174 = vmatpush.bf16.msra.mxu0 %v1146
        %1175 = vmatmul.bf16.gmra.mxu0 %v1151
        %v1176 = vpop.f32.mrf.mxu0
        %v1177 = vadd.f32 0.0, %v1176
        %v1178 = vpop.f32.mrf.mxu0
        %v1179 = vadd.f32 0.0, %v1178
        %1180 = vdwg.mxu0
        %1181 = vmatpush.bf16.msra.mxu0 0
        %1182 = vmatpush.bf16.msra.mxu0 0
        %1183 = vmatpush.bf16.msra.mxu0 0
        %1184 = vmatpush.bf16.msra.mxu0 0
        %1185 = vmatpush.bf16.msra.mxu0 0
        %1186 = vmatpush.bf16.msra.mxu0 0
        %1187 = vmatpush.bf16.msra.mxu0 0
        %1188 = vmatpush.bf16.msra.mxu0 %v1143
        %1189 = vmatmul.bf16.gmra.mxu0 %v1151
        %v1190 = vpop.f32.mrf.mxu0
        %v1191 = vadd.f32 0.0, %v1190
        %v1192 = vpop.f32.mrf.mxu0
        %v1193 = vadd.f32 0.0, %v1192
        %1194 = vdwg.mxu0
        %v1195 = vadd.f32 %v1124, %v1163
        %v1196 = vadd.f32 %v1125, %v1177
        %v1197 = vadd.f32 %v1126, %v1191
        %v1198 = vadd.f32 %v1127, %v1165
        %v1199 = vadd.f32 %v1128, %v1179
        %v1200 = vadd.f32 %v1129, %v1193
        %s1201 = scalar_lea.vmem %s2, 64
        %v1202 = vld [vmem:[%s1201] sm:$0xf]
        %v1203 = vld [vmem:[%s1201 + $0x4] sm:$0xf]
        %v1206 = vunpack.c.l.b16 %v1202
        %v1207 = vunpack.c.l.b16 %v1203
        %v1208 = vpack.c.b16 %v1207, %v1206
        %1209 = vrot.lane.b32.xlu0 %v661, 90
        %v1210 = vpop.permute.xlu0 %1209
        %1211 = vrot.lane.b32.xlu0 %v662, 90
        %v1212 = vpop.permute.xlu0 %1211
        %1213 = vrot.lane.b32.xlu0 %v663, 90
        %v1214 = vpop.permute.xlu0 %1213
        %vm1215 = vcmask 736256
        %v1216 = vsel %vm1215, %v1210, %v1212
        %v1217 = vsel %vm1215, %v1212, %v1214
        %v1222 = vsel %vm676, %v1208, 0
        %1224 = vmatpush.bf16.msra.mxu0 0
        %1225 = vmatpush.bf16.msra.mxu0 0
        %1226 = vmatpush.bf16.msra.mxu0 0
        %1227 = vmatpush.bf16.msra.mxu0 0
        %1228 = vmatpush.bf16.msra.mxu0 0
        %1229 = vmatpush.bf16.msra.mxu0 0
        %1230 = vmatpush.bf16.msra.mxu0 0
        %1231 = vmatpush.bf16.msra.mxu0 %v1216
        %1232 = vmatmul.bf16.gmra.mxu0 %v1222
        %v1233 = vpop.f32.mrf.mxu0
        %v1234 = vadd.f32 0.0, %v1233
        %v1235 = vpop.f32.mrf.mxu0
        %v1236 = vadd.f32 0.0, %v1235
        %1237 = vdwg.mxu0
        %1238 = vmatpush.bf16.msra.mxu0 0
        %1239 = vmatpush.bf16.msra.mxu0 0
        %1240 = vmatpush.bf16.msra.mxu0 0
        %1241 = vmatpush.bf16.msra.mxu0 0
        %1242 = vmatpush.bf16.msra.mxu0 0
        %1243 = vmatpush.bf16.msra.mxu0 0
        %1244 = vmatpush.bf16.msra.mxu0 0
        %1245 = vmatpush.bf16.msra.mxu0 %v1217
        %1246 = vmatmul.bf16.gmra.mxu0 %v1222
        %v1247 = vpop.f32.mrf.mxu0
        %v1248 = vadd.f32 0.0, %v1247
        %v1249 = vpop.f32.mrf.mxu0
        %v1250 = vadd.f32 0.0, %v1249
        %1251 = vdwg.mxu0
        %1252 = vmatpush.bf16.msra.mxu0 0
        %1253 = vmatpush.bf16.msra.mxu0 0
        %1254 = vmatpush.bf16.msra.mxu0 0
        %1255 = vmatpush.bf16.msra.mxu0 0
        %1256 = vmatpush.bf16.msra.mxu0 0
        %1257 = vmatpush.bf16.msra.mxu0 0
        %1258 = vmatpush.bf16.msra.mxu0 0
        %1259 = vmatpush.bf16.msra.mxu0 %v1214
        %1260 = vmatmul.bf16.gmra.mxu0 %v1222
        %v1261 = vpop.f32.mrf.mxu0
        %v1262 = vadd.f32 0.0, %v1261
        %v1263 = vpop.f32.mrf.mxu0
        %v1264 = vadd.f32 0.0, %v1263
        %1265 = vdwg.mxu0
        %v1266 = vadd.f32 %v1195, %v1234
        %v1267 = vadd.f32 %v1196, %v1248
        %v1268 = vadd.f32 %v1197, %v1262
        %v1269 = vadd.f32 %v1198, %v1236
        %v1270 = vadd.f32 %v1199, %v1250
        %v1271 = vadd.f32 %v1200, %v1264
        %v1272 = vld [vmem:[#allocation4] sm:$0xff]
        %v1273 = vld [vmem:[#allocation4 + $0x8] sm:$0xff]
        %v1274 = vld [vmem:[#allocation4 + $0x10] sm:$0xff]
        %v1275 = vld [vmem:[#allocation4 + $0x18] sm:$0xff]
        %v1276 = vld [vmem:[#allocation4 + $0x20] sm:$0xff]
        %v1277 = vld [vmem:[#allocation4 + $0x28] sm:$0xff]
        %v1278 = vld [vmem:[#allocation4 + $0x30] sm:$0xff]
        %v1279 = vld [vmem:[#allocation4 + $0x38] sm:$0xff]
        %v1280 = vld [vmem:[#allocation4 + $0x40] sm:$0xff]
        %v1281 = vld [vmem:[#allocation4 + $0x48] sm:$0xff]
        %v1282 = vld [vmem:[#allocation4 + $0x50] sm:$0xff]
        %v1283 = vld [vmem:[#allocation4 + $0x58] sm:$0xff]
        %v1284 = vld [vmem:[#allocation4 + $0x60] sm:$0xff]
        %v1285 = vld [vmem:[#allocation4 + $0x68] sm:$0xff]
        %v1286 = vld [vmem:[#allocation4 + $0x70] sm:$0xff]
        %v1287 = vld [vmem:[#allocation4 + $0x78] sm:$0xff]
        %v1288 = vld [vmem:[#allocation4 + $0x80] sm:$0xff]
        %v1289 = vld [vmem:[#allocation4 + $0x88] sm:$0xff]
        %v1290 = vld [vmem:[#allocation4 + $0x90] sm:$0xff]
        %v1291 = vld [vmem:[#allocation4 + $0x98] sm:$0xff]
        %v1292 = vld [vmem:[#allocation4 + $0xa0] sm:$0xff]
        %v1293 = vld [vmem:[#allocation4 + $0xa8] sm:$0xff]
        %v1294 = vld [vmem:[#allocation4 + $0xb0] sm:$0xff]
        %v1295 = vld [vmem:[#allocation4 + $0xb8] sm:$0xff]
        %v1296 = vld [vmem:[#allocation4 + $0xc0] sm:$0xff]
        %v1297 = vld [vmem:[#allocation4 + $0xc8] sm:$0xff]
        %v1298 = vld [vmem:[#allocation4 + $0xd0] sm:$0xff]
        %v1299 = vld [vmem:[#allocation4 + $0xd8] sm:$0xff]
        %v1300 = vld [vmem:[#allocation4 + $0xe0] sm:$0xff]
        %v1301 = vld [vmem:[#allocation4 + $0xe8] sm:$0xff]
        %v1302 = vld [vmem:[#allocation4 + $0xf0] sm:$0xff]
        %v1303 = vld [vmem:[#allocation4 + $0xf8] sm:$0xff]
        %v1304 = vld [vmem:[#allocation4 + $0x100] sm:$0xff]
        %v1305 = vld [vmem:[#allocation4 + $0x108] sm:$0xff]
        %v1306 = vld [vmem:[#allocation4 + $0x110] sm:$0xff]
        %v1307 = vld [vmem:[#allocation4 + $0x118] sm:$0xff]
        %vm1308 = vcmask 261120
        %v1310 = vsel %vm1308, %v1268, 0
        %v1313 = vsel %vm1308, %v1271, 0
        %1315 = vmatpush.msra.mxu0 %v1287
        %1316 = vmatpush.msra.mxu0 %v1286
        %1317 = vmatpush.msra.mxu0 %v1285
        %1318 = vmatpush.msra.mxu0 %v1284
        %1319 = vmatpush.msra.mxu0 %v1283
        %1320 = vmatpush.msra.mxu0 %v1282
        %1321 = vmatpush.msra.mxu0 %v1281
        %1322 = vmatpush.msra.mxu0 %v1280
        %1323 = vmatpush.msra.mxu0 %v1279
        %1324 = vmatpush.msra.mxu0 %v1278
        %1325 = vmatpush.msra.mxu0 %v1277
        %1326 = vmatpush.msra.mxu0 %v1276
        %1327 = vmatpush.msra.mxu0 %v1275
        %1328 = vmatpush.msra.mxu0 %v1274
        %1329 = vmatpush.msra.mxu0 %v1273
        %1330 = vmatpush.msra.mxu0 %v1272
        %1331 = vmatmul.f32.gmra.mxu0 %v1266
        %v1332 = vpop.f32.mrf.mxu0
        %v1333 = vadd.f32 0.0, %v1332
        %1334 = vmatmul.f32.gmra.mxu0 %v1269
        %v1335 = vpop.f32.mrf.mxu0
        %v1336 = vadd.f32 0.0, %v1335
        %1337 = vdwg.mxu0
        %1338 = vmatpush.msra.mxu0 %v1303
        %1339 = vmatpush.msra.mxu0 %v1302
        %1340 = vmatpush.msra.mxu0 %v1301
        %1341 = vmatpush.msra.mxu0 %v1300
        %1342 = vmatpush.msra.mxu0 %v1299
        %1343 = vmatpush.msra.mxu0 %v1298
        %1344 = vmatpush.msra.mxu0 %v1297
        %1345 = vmatpush.msra.mxu0 %v1296
        %1346 = vmatpush.msra.mxu0 %v1295
        %1347 = vmatpush.msra.mxu0 %v1294
        %1348 = vmatpush.msra.mxu0 %v1293
        %1349 = vmatpush.msra.mxu0 %v1292
        %1350 = vmatpush.msra.mxu0 %v1291
        %1351 = vmatpush.msra.mxu0 %v1290
        %1352 = vmatpush.msra.mxu0 %v1289
        %1353 = vmatpush.msra.mxu0 %v1288
        %1354 = vmatmul.f32.gmra.mxu0 %v1267
        %v1355 = vpop.f32.mrf.mxu0
        %v1356 = vadd.f32 %v1333, %v1355
        %1357 = vmatmul.f32.gmra.mxu0 %v1270
        %v1358 = vpop.f32.mrf.mxu0
        %v1359 = vadd.f32 %v1336, %v1358
        %1360 = vdwg.mxu0
        %1361 = vmatpush.msra.mxu0 0.0
        %1362 = vmatpush.msra.mxu0 0.0
        %1363 = vmatpush.msra.mxu0 0.0
        %1364 = vmatpush.msra.mxu0 0.0
        %1365 = vmatpush.msra.mxu0 0.0
        %1366 = vmatpush.msra.mxu0 0.0
        %1367 = vmatpush.msra.mxu0 0.0
        %1368 = vmatpush.msra.mxu0 0.0
        %1369 = vmatpush.msra.mxu0 0.0
        %1370 = vmatpush.msra.mxu0 0.0
        %1371 = vmatpush.msra.mxu0 0.0
        %1372 = vmatpush.msra.mxu0 0.0
        %1373 = vmatpush.msra.mxu0 %v1307
        %1374 = vmatpush.msra.mxu0 %v1306
        %1375 = vmatpush.msra.mxu0 %v1305
        %1376 = vmatpush.msra.mxu0 %v1304
        %1377 = vmatmul.f32.gmra.mxu0 %v1310
        %v1378 = vpop.f32.mrf.mxu0
        %v1379 = vadd.f32 %v1356, %v1378
        %1380 = vmatmul.f32.gmra.mxu0 %v1313
        %v1381 = vpop.f32.mrf.mxu0
        %v1382 = vadd.f32 %v1359, %v1381
        %1383 = vdwg.mxu0
        %v1384 = vmul.f32 %v1266, %v1266
        %v1385 = vmul.f32 %v1267, %v1267
        %v1386 = vmul.f32 %v1268, %v1268
        %v1387 = vmul.f32 %v1269, %v1269
        %v1388 = vmul.f32 %v1270, %v1270
        %v1389 = vmul.f32 %v1271, %v1271
        %v1391 = vsel %vm1308, %v1386, 0
        %v1394 = vsel %vm1308, %v1389, 0
        %1396 = vmatpush.msra.mxu0 %v1287
        %1397 = vmatpush.msra.mxu0 %v1286
        %1398 = vmatpush.msra.mxu0 %v1285
        %1399 = vmatpush.msra.mxu0 %v1284
        %1400 = vmatpush.msra.mxu0 %v1283
        %1401 = vmatpush.msra.mxu0 %v1282
        %1402 = vmatpush.msra.mxu0 %v1281
        %1403 = vmatpush.msra.mxu0 %v1280
        %1404 = vmatpush.msra.mxu0 %v1279
        %1405 = vmatpush.msra.mxu0 %v1278
        %1406 = vmatpush.msra.mxu0 %v1277
        %1407 = vmatpush.msra.mxu0 %v1276
        %1408 = vmatpush.msra.mxu0 %v1275
        %1409 = vmatpush.msra.mxu0 %v1274
        %1410 = vmatpush.msra.mxu0 %v1273
        %1411 = vmatpush.msra.mxu0 %v1272
        %1412 = vmatmul.f32.gmra.mxu0 %v1384
        %v1413 = vpop.f32.mrf.mxu0
        %v1414 = vadd.f32 0.0, %v1413
        %1415 = vmatmul.f32.gmra.mxu0 %v1387
        %v1416 = vpop.f32.mrf.mxu0
        %v1417 = vadd.f32 0.0, %v1416
        %1418 = vdwg.mxu0
        %1419 = vmatpush.msra.mxu0 %v1303
        %1420 = vmatpush.msra.mxu0 %v1302
        %1421 = vmatpush.msra.mxu0 %v1301
        %1422 = vmatpush.msra.mxu0 %v1300
        %1423 = vmatpush.msra.mxu0 %v1299
        %1424 = vmatpush.msra.mxu0 %v1298
        %1425 = vmatpush.msra.mxu0 %v1297
        %1426 = vmatpush.msra.mxu0 %v1296
        %1427 = vmatpush.msra.mxu0 %v1295
        %1428 = vmatpush.msra.mxu0 %v1294
        %1429 = vmatpush.msra.mxu0 %v1293
        %1430 = vmatpush.msra.mxu0 %v1292
        %1431 = vmatpush.msra.mxu0 %v1291
        %1432 = vmatpush.msra.mxu0 %v1290
        %1433 = vmatpush.msra.mxu0 %v1289
        %1434 = vmatpush.msra.mxu0 %v1288
        %1435 = vmatmul.f32.gmra.mxu0 %v1385
        %v1436 = vpop.f32.mrf.mxu0
        %v1437 = vadd.f32 %v1414, %v1436
        %1438 = vmatmul.f32.gmra.mxu0 %v1388
        %v1439 = vpop.f32.mrf.mxu0
        %v1440 = vadd.f32 %v1417, %v1439
        %1441 = vdwg.mxu0
        %1442 = vmatpush.msra.mxu0 0.0
        %1443 = vmatpush.msra.mxu0 0.0
        %1444 = vmatpush.msra.mxu0 0.0
        %1445 = vmatpush.msra.mxu0 0.0
        %1446 = vmatpush.msra.mxu0 0.0
        %1447 = vmatpush.msra.mxu0 0.0
        %1448 = vmatpush.msra.mxu0 0.0
        %1449 = vmatpush.msra.mxu0 0.0
        %1450 = vmatpush.msra.mxu0 0.0
        %1451 = vmatpush.msra.mxu0 0.0
        %1452 = vmatpush.msra.mxu0 0.0
        %1453 = vmatpush.msra.mxu0 0.0
        %1454 = vmatpush.msra.mxu0 %v1307
        %1455 = vmatpush.msra.mxu0 %v1306
        %1456 = vmatpush.msra.mxu0 %v1305
        %1457 = vmatpush.msra.mxu0 %v1304
        %1458 = vmatmul.f32.gmra.mxu0 %v1391
        %v1459 = vpop.f32.mrf.mxu0
        %v1460 = vadd.f32 %v1437, %v1459
        %1461 = vmatmul.f32.gmra.mxu0 %v1394
        %v1462 = vpop.f32.mrf.mxu0
        %v1463 = vadd.f32 %v1440, %v1462
        %1464 = vdwg.mxu0
        %v1465 = vmul.f32 %v1379, 0.00390625
        %v1466 = vmul.f32 %v1382, 0.00390625
        %v1467 = vmul.f32 %v1460, 0.00390625
        %v1468 = vmul.f32 %v1463, 0.00390625
        %v1469 = vmul.f32 %v1465, %v1465
        %v1470 = vmul.f32 %v1466, %v1466
        %v1471 = vsub.f32 %v1467, %v1469
        %v1472 = vsub.f32 %v1468, %v1470
        %v1473 = vld [vmem:[%s3] sm:$0xff]
        %v1474 = vld [vmem:[%s3 + $0x8] sm:$0xff]
        %v1475 = vadd.f32 %v1471, 1e-05
        %v1476 = vadd.f32 %v1472, 1e-05
        %v1477 = vrsqrt.pop %v1475
        %v1478 = vmul.f32 %v1477, %v1475
        %v1479 = vmul.f32 %v1478, %v1477
        %v1480 = vmul.f32 0.5, %v1479
        %v1481 = vsub.f32 1.5, %v1480
        %v1482 = vmul.f32 %v1477, %v1481
        %vm1483 = vweird.f32 %v1475
        %vm1484 = vweird.f32 %v1477
        %vm1485 = vmor %vm1483, %vm1484
        %v1486 = vsel %vm1485, %v1477, %v1482
        %v1487 = vrsqrt.pop %v1476
        %v1488 = vmul.f32 %v1487, %v1476
        %v1489 = vmul.f32 %v1488, %v1487
        %v1490 = vmul.f32 0.5, %v1489
        %v1491 = vsub.f32 1.5, %v1490
        %v1492 = vmul.f32 %v1487, %v1491
        %vm1493 = vweird.f32 %v1476
        %vm1494 = vweird.f32 %v1487
        %vm1495 = vmor %vm1493, %vm1494
        %v1496 = vsel %vm1495, %v1487, %v1492
        %v1497 = vmul.f32 %v1486, %v1473
        %v1498 = vmul.f32 %v1496, %v1474
        %1500 = vset.pattern.permute.xlu0 0
        %1501 = vperm.xlu0 %1500, %v1465
        %v1502 = vpop.permute.xlu0 %1501
        %1505 = vset.pattern.permute.xlu0 0
        %1506 = vperm.xlu0 %1505, %v1466
        %v1507 = vpop.permute.xlu0 %1506
        %v1509 = vsub.f32 %v1266, %v1502
        %v1510 = vsub.f32 %v1267, %v1502
        %v1511 = vsub.f32 %v1268, %v1502
        %v1512 = vsub.f32 %v1269, %v1507
        %v1513 = vsub.f32 %v1270, %v1507
        %v1514 = vsub.f32 %v1271, %v1507
        %1516 = vset.pattern.permute.xlu0 0
        %1517 = vperm.xlu0 %1516, %v1497
        %v1518 = vpop.permute.xlu0 %1517
        %1521 = vset.pattern.permute.xlu0 0
        %1522 = vperm.xlu0 %1521, %v1498
        %v1523 = vpop.permute.xlu0 %1522
        %v1525 = vmul.f32 %v1509, %v1518
        %v1526 = vmul.f32 %v1510, %v1518
        %v1527 = vmul.f32 %v1511, %v1518
        %v1528 = vmul.f32 %v1512, %v1523
        %v1529 = vmul.f32 %v1513, %v1523
        %v1530 = vmul.f32 %v1514, %v1523
        %1532 = vset.pattern.permute.xlu0 1
        %1533 = vperm.xlu0 %1532, %v1473
        %v1534 = vpop.permute.xlu0 %1533
        %1537 = vset.pattern.permute.xlu0 1
        %1538 = vperm.xlu0 %1537, %v1474
        %v1539 = vpop.permute.xlu0 %1538
        %v1541 = vadd.f32 %v1525, %v1534
        %v1542 = vadd.f32 %v1526, %v1534
        %v1543 = vadd.f32 %v1527, %v1534
        %v1544 = vadd.f32 %v1528, %v1539
        %v1545 = vadd.f32 %v1529, %v1539
        %v1546 = vadd.f32 %v1530, %v1539
        %v1547 = vmax.f32 %v1541, 0.0
        %v1548 = vmax.f32 %v1542, 0.0
        %v1549 = vmax.f32 %v1543, 0.0
        %v1550 = vmax.f32 %v1544, 0.0
        %v1551 = vmax.f32 %v1545, 0.0
        %v1552 = vmax.f32 %v1546, 0.0
        %v1553 = vpack.c.bf16 %v1550, %v1547
        %v1554 = vpack.c.bf16 %v1551, %v1548
        %v1555 = vpack.c.bf16 %v1552, %v1549
        %v1556 = vld [vmem:[#allocation6] sm:$0xff]
        %v1557 = vld [vmem:[#allocation6 + $0x8] sm:$0xff]
        %v1558 = vld [vmem:[#allocation6 + $0x10] sm:$0xff]
        %v1559 = vld [vmem:[#allocation6 + $0x18] sm:$0xff]
        %v1560 = vld [vmem:[#allocation6 + $0x20] sm:$0xff]
        %v1561 = vld [vmem:[#allocation6 + $0x28] sm:$0xff]
        %v1562 = vld [vmem:[#allocation6 + $0x30] sm:$0xff]
        %v1563 = vld [vmem:[#allocation6 + $0x38] sm:$0xff]
        %v1564 = vld [vmem:[#allocation6 + $0x40] sm:$0xff]
        %v1565 = vld [vmem:[#allocation6 + $0x48] sm:$0xff]
        %v1566 = vld [vmem:[#allocation6 + $0x50] sm:$0xff]
        %v1567 = vld [vmem:[#allocation6 + $0x58] sm:$0xff]
        %v1568 = vld [vmem:[#allocation6 + $0x60] sm:$0xff]
        %v1569 = vld [vmem:[#allocation6 + $0x68] sm:$0xff]
        %v1570 = vld [vmem:[#allocation6 + $0x70] sm:$0xff]
        %v1571 = vld [vmem:[#allocation6 + $0x78] sm:$0xff]
        %v1572 = vld [vmem:[#allocation6 + $0x80] sm:$0xff]
        %v1573 = vld [vmem:[#allocation6 + $0x88] sm:$0xff]
        %v1574 = vld [vmem:[#allocation6 + $0x90] sm:$0xff]
        %v1575 = vld [vmem:[#allocation6 + $0x98] sm:$0xff]
        %v1576 = vld [vmem:[#allocation6 + $0xa0] sm:$0xff]
        %v1577 = vld [vmem:[#allocation6 + $0xa8] sm:$0xff]
        %v1578 = vld [vmem:[#allocation6 + $0xb0] sm:$0xff]
        %v1579 = vld [vmem:[#allocation6 + $0xb8] sm:$0xff]
        %v1580 = vld [vmem:[#allocation6 + $0xc0] sm:$0xff]
        %v1581 = vld [vmem:[#allocation6 + $0xc8] sm:$0xff]
        %v1582 = vld [vmem:[#allocation6 + $0xd0] sm:$0xff]
        %v1583 = vld [vmem:[#allocation6 + $0xd8] sm:$0xff]
        %v1584 = vld [vmem:[#allocation6 + $0xe0] sm:$0xff]
        %v1585 = vld [vmem:[#allocation6 + $0xe8] sm:$0xff]
        %v1586 = vld [vmem:[#allocation6 + $0xf0] sm:$0xff]
        %v1587 = vld [vmem:[#allocation6 + $0xf8] sm:$0xff]
        %v1588 = vld [vmem:[#allocation6 + $0x100] sm:$0xff]
        %v1589 = vld [vmem:[#allocation6 + $0x108] sm:$0xff]
        %v1590 = vld [vmem:[#allocation6 + $0x110] sm:$0xff]
        %v1591 = vld [vmem:[#allocation6 + $0x118] sm:$0xff]
        %v1592 = vld [vmem:[#allocation6 + $0x120] sm:$0xff]
        %v1593 = vld [vmem:[#allocation6 + $0x128] sm:$0xff]
        %v1594 = vld [vmem:[#allocation6 + $0x130] sm:$0xff]
        %v1595 = vld [vmem:[#allocation6 + $0x138] sm:$0xff]
        %v1596 = vld [vmem:[#allocation6 + $0x140] sm:$0xff]
        %v1597 = vld [vmem:[#allocation6 + $0x148] sm:$0xff]
        %v1598 = vld [vmem:[#allocation6 + $0x150] sm:$0xff]
        %v1599 = vld [vmem:[#allocation6 + $0x158] sm:$0xff]
        %v1600 = vld [vmem:[#allocation6 + $0x160] sm:$0xff]
        %v1601 = vld [vmem:[#allocation6 + $0x168] sm:$0xff]
        %v1602 = vld [vmem:[#allocation6 + $0x170] sm:$0xff]
        %v1603 = vld [vmem:[#allocation6 + $0x178] sm:$0xff]
        %v1604 = vld [vmem:[#allocation6 + $0x180] sm:$0xff]
        %v1605 = vld [vmem:[#allocation6 + $0x188] sm:$0xff]
        %v1606 = vld [vmem:[#allocation6 + $0x190] sm:$0xff]
        %v1607 = vld [vmem:[#allocation6 + $0x198] sm:$0xff]
        %v1608 = vld [vmem:[#allocation6 + $0x1a0] sm:$0xff]
        %v1609 = vld [vmem:[#allocation6 + $0x1a8] sm:$0xff]
        %v1610 = vld [vmem:[#allocation6 + $0x1b0] sm:$0xff]
        %v1611 = vld [vmem:[#allocation6 + $0x1b8] sm:$0xff]
        %v1612 = vld [vmem:[#allocation6 + $0x1c0] sm:$0xff]
        %v1613 = vld [vmem:[#allocation6 + $0x1c8] sm:$0xff]
        %v1614 = vld [vmem:[#allocation6 + $0x1d0] sm:$0xff]
        %v1615 = vld [vmem:[#allocation6 + $0x1d8] sm:$0xff]
        %v1616 = vld [vmem:[#allocation6 + $0x1e0] sm:$0xff]
        %v1617 = vld [vmem:[#allocation6 + $0x1e8] sm:$0xff]
        %v1618 = vld [vmem:[#allocation6 + $0x1f0] sm:$0xff]
        %v1619 = vld [vmem:[#allocation6 + $0x1f8] sm:$0xff]
        %v1620 = vld [vmem:[#allocation6 + $0x200] sm:$0xff]
        %v1621 = vld [vmem:[#allocation6 + $0x208] sm:$0xff]
        %v1622 = vld [vmem:[#allocation6 + $0x210] sm:$0xff]
        %v1623 = vld [vmem:[#allocation6 + $0x218] sm:$0xff]
        %v1624 = vld [vmem:[#allocation6 + $0x220] sm:$0xff]
        %v1625 = vld [vmem:[#allocation6 + $0x228] sm:$0xff]
        %v1626 = vld [vmem:[#allocation6 + $0x230] sm:$0xff]
        %v1627 = vld [vmem:[#allocation6 + $0x238] sm:$0xff]
        %v1628 = vld [vmem:[#allocation6 + $0x240] sm:$0xff]
        %v1629 = vld [vmem:[#allocation6 + $0x248] sm:$0xff]
        %v1630 = vld [vmem:[#allocation6 + $0x250] sm:$0xff]
        %v1631 = vld [vmem:[#allocation6 + $0x258] sm:$0xff]
        %v1632 = vld [vmem:[#allocation6 + $0x260] sm:$0xff]
        %v1633 = vld [vmem:[#allocation6 + $0x268] sm:$0xff]
        %v1634 = vld [vmem:[#allocation6 + $0x270] sm:$0xff]
        %v1635 = vld [vmem:[#allocation6 + $0x278] sm:$0xff]
        %v1636 = vld [vmem:[#allocation6 + $0x280] sm:$0xff]
        %v1637 = vld [vmem:[#allocation6 + $0x288] sm:$0xff]
        %v1638 = vld [vmem:[#allocation6 + $0x290] sm:$0xff]
        %v1639 = vld [vmem:[#allocation6 + $0x298] sm:$0xff]
        %v1640 = vld [vmem:[#allocation6 + $0x2a0] sm:$0xff]
        %v1641 = vld [vmem:[#allocation6 + $0x2a8] sm:$0xff]
        %v1642 = vld [vmem:[#allocation6 + $0x2b0] sm:$0xff]
        %v1643 = vld [vmem:[#allocation6 + $0x2b8] sm:$0xff]
        %v1644 = vld [vmem:[#allocation6 + $0x2c0] sm:$0xff]
        %v1645 = vld [vmem:[#allocation6 + $0x2c8] sm:$0xff]
        %v1646 = vld [vmem:[#allocation6 + $0x2d0] sm:$0xff]
        %v1647 = vld [vmem:[#allocation6 + $0x2d8] sm:$0xff]
        %v1648 = vld [vmem:[#allocation6 + $0x2e0] sm:$0xff]
        %v1649 = vld [vmem:[#allocation6 + $0x2e8] sm:$0xff]
        %v1650 = vld [vmem:[#allocation6 + $0x2f0] sm:$0xff]
        %v1651 = vld [vmem:[#allocation6 + $0x2f8] sm:$0xff]
        %v1652 = vld [vmem:[#allocation6 + $0x300] sm:$0xff]
        %v1653 = vld [vmem:[#allocation6 + $0x308] sm:$0xff]
        %v1654 = vld [vmem:[#allocation6 + $0x310] sm:$0xff]
        %v1655 = vld [vmem:[#allocation6 + $0x318] sm:$0xff]
        %v1656 = vld [vmem:[#allocation6 + $0x320] sm:$0xff]
        %v1657 = vld [vmem:[#allocation6 + $0x328] sm:$0xff]
        %v1658 = vld [vmem:[#allocation6 + $0x330] sm:$0xff]
        %v1659 = vld [vmem:[#allocation6 + $0x338] sm:$0xff]
        %v1660 = vld [vmem:[#allocation6 + $0x340] sm:$0xff]
        %v1661 = vld [vmem:[#allocation6 + $0x348] sm:$0xff]
        %v1662 = vld [vmem:[#allocation6 + $0x350] sm:$0xff]
        %v1663 = vld [vmem:[#allocation6 + $0x358] sm:$0xff]
        %v1664 = vld [vmem:[#allocation6 + $0x360] sm:$0xff]
        %v1665 = vld [vmem:[#allocation6 + $0x368] sm:$0xff]
        %v1666 = vld [vmem:[#allocation6 + $0x370] sm:$0xff]
        %v1667 = vld [vmem:[#allocation6 + $0x378] sm:$0xff]
        %v1668 = vld [vmem:[#allocation6 + $0x380] sm:$0xff]
        %v1669 = vld [vmem:[#allocation6 + $0x388] sm:$0xff]
        %v1670 = vld [vmem:[#allocation6 + $0x390] sm:$0xff]
        %v1671 = vld [vmem:[#allocation6 + $0x398] sm:$0xff]
        %v1672 = vld [vmem:[#allocation6 + $0x3a0] sm:$0xff]
        %v1673 = vld [vmem:[#allocation6 + $0x3a8] sm:$0xff]
        %v1674 = vld [vmem:[#allocation6 + $0x3b0] sm:$0xff]
        %v1675 = vld [vmem:[#allocation6 + $0x3b8] sm:$0xff]
        %v1676 = vld [vmem:[#allocation6 + $0x3c0] sm:$0xff]
        %v1677 = vld [vmem:[#allocation6 + $0x3c8] sm:$0xff]
        %v1678 = vld [vmem:[#allocation6 + $0x3d0] sm:$0xff]
        %v1679 = vld [vmem:[#allocation6 + $0x3d8] sm:$0xff]
        %v1680 = vld [vmem:[#allocation6 + $0x3e0] sm:$0xff]
        %v1681 = vld [vmem:[#allocation6 + $0x3e8] sm:$0xff]
        %v1682 = vld [vmem:[#allocation6 + $0x3f0] sm:$0xff]
        %v1683 = vld [vmem:[#allocation6 + $0x3f8] sm:$0xff]
        %v1684 = vld [vmem:[#allocation6 + $0x400] sm:$0xff]
        %v1685 = vld [vmem:[#allocation6 + $0x408] sm:$0xff]
        %v1686 = vld [vmem:[#allocation6 + $0x410] sm:$0xff]
        %v1687 = vld [vmem:[#allocation6 + $0x418] sm:$0xff]
        %v1688 = vld [vmem:[#allocation6 + $0x420] sm:$0xff]
        %v1689 = vld [vmem:[#allocation6 + $0x428] sm:$0xff]
        %v1690 = vld [vmem:[#allocation6 + $0x430] sm:$0xff]
        %v1691 = vld [vmem:[#allocation6 + $0x438] sm:$0xff]
        %v1692 = vld [vmem:[#allocation6 + $0x440] sm:$0xff]
        %v1693 = vld [vmem:[#allocation6 + $0x448] sm:$0xff]
        %v1694 = vld [vmem:[#allocation6 + $0x450] sm:$0xff]
        %v1695 = vld [vmem:[#allocation6 + $0x458] sm:$0xff]
        %v1696 = vld [vmem:[#allocation6 + $0x460] sm:$0xff]
        %v1697 = vld [vmem:[#allocation6 + $0x468] sm:$0xff]
        %v1698 = vld [vmem:[#allocation6 + $0x470] sm:$0xff]
        %v1699 = vld [vmem:[#allocation6 + $0x478] sm:$0xff]
        %v1700 = vld [vmem:[#allocation6 + $0x480] sm:$0xff]
        %v1701 = vld [vmem:[#allocation6 + $0x488] sm:$0xff]
        %v1702 = vld [vmem:[#allocation6 + $0x490] sm:$0xff]
        %v1703 = vld [vmem:[#allocation6 + $0x498] sm:$0xff]
        %v1704 = vld [vmem:[#allocation6 + $0x4a0] sm:$0xff]
        %v1705 = vld [vmem:[#allocation6 + $0x4a8] sm:$0xff]
        %v1706 = vld [vmem:[#allocation6 + $0x4b0] sm:$0xff]
        %v1707 = vld [vmem:[#allocation6 + $0x4b8] sm:$0xff]
        %v1708 = vld [vmem:[#allocation6 + $0x4c0] sm:$0xff]
        %v1709 = vld [vmem:[#allocation6 + $0x4c8] sm:$0xff]
        %v1710 = vld [vmem:[#allocation6 + $0x4d0] sm:$0xff]
        %v1711 = vld [vmem:[#allocation6 + $0x4d8] sm:$0xff]
        %v1712 = vld [vmem:[#allocation6 + $0x4e0] sm:$0xff]
        %v1713 = vld [vmem:[#allocation6 + $0x4e8] sm:$0xff]
        %v1714 = vld [vmem:[#allocation6 + $0x4f0] sm:$0xff]
        %v1715 = vld [vmem:[#allocation6 + $0x4f8] sm:$0xff]
        %v1716 = vld [vmem:[#allocation6 + $0x500] sm:$0xff]
        %v1717 = vld [vmem:[#allocation6 + $0x508] sm:$0xff]
        %v1718 = vld [vmem:[#allocation6 + $0x510] sm:$0xff]
        %v1719 = vld [vmem:[#allocation6 + $0x518] sm:$0xff]
        %v1720 = vld [vmem:[#allocation6 + $0x520] sm:$0xff]
        %v1721 = vld [vmem:[#allocation6 + $0x528] sm:$0xff]
        %v1722 = vld [vmem:[#allocation6 + $0x530] sm:$0xff]
        %v1723 = vld [vmem:[#allocation6 + $0x538] sm:$0xff]
        %v1724 = vld [vmem:[#allocation6 + $0x540] sm:$0xff]
        %v1725 = vld [vmem:[#allocation6 + $0x548] sm:$0xff]
        %v1726 = vld [vmem:[#allocation6 + $0x550] sm:$0xff]
        %v1727 = vld [vmem:[#allocation6 + $0x558] sm:$0xff]
        %v1728 = vld [vmem:[#allocation6 + $0x560] sm:$0xff]
        %v1729 = vld [vmem:[#allocation6 + $0x568] sm:$0xff]
        %v1730 = vld [vmem:[#allocation6 + $0x570] sm:$0xff]
        %v1731 = vld [vmem:[#allocation6 + $0x578] sm:$0xff]
        %v1732 = vld [vmem:[#allocation6 + $0x580] sm:$0xff]
        %v1733 = vld [vmem:[#allocation6 + $0x588] sm:$0xff]
        %v1734 = vld [vmem:[#allocation6 + $0x590] sm:$0xff]
        %v1735 = vld [vmem:[#allocation6 + $0x598] sm:$0xff]
        %v1916 = vunpack.c.l.b16 %v1556
        %v1917 = vunpack.c.h.b16 %v1556
        %v1918 = vunpack.c.l.b16 %v1557
        %v1919 = vunpack.c.h.b16 %v1557
        %v1920 = vunpack.c.l.b16 %v1558
        %v1921 = vunpack.c.h.b16 %v1558
        %v1922 = vunpack.c.l.b16 %v1559
        %v1923 = vunpack.c.h.b16 %v1559
        %v1924 = vunpack.c.l.b16 %v1560
        %v1925 = vunpack.c.h.b16 %v1560
        %v1926 = vunpack.c.l.b16 %v1561
        %v1927 = vunpack.c.h.b16 %v1561
        %v1928 = vunpack.c.l.b16 %v1562
        %v1929 = vunpack.c.h.b16 %v1562
        %v1930 = vunpack.c.l.b16 %v1563
        %v1931 = vunpack.c.h.b16 %v1563
        %v1932 = vunpack.c.l.b16 %v1564
        %v1933 = vunpack.c.h.b16 %v1564
        %v1934 = vunpack.c.l.b16 %v1565
        %v1935 = vunpack.c.h.b16 %v1565
        %v1936 = vunpack.c.l.b16 %v1566
        %v1937 = vunpack.c.h.b16 %v1566
        %v1938 = vunpack.c.l.b16 %v1567
        %v1939 = vunpack.c.h.b16 %v1567
        %v1940 = vunpack.c.l.b16 %v1568
        %v1941 = vunpack.c.h.b16 %v1568
        %v1942 = vunpack.c.l.b16 %v1569
        %v1943 = vunpack.c.h.b16 %v1569
        %v1944 = vunpack.c.l.b16 %v1570
        %v1945 = vunpack.c.h.b16 %v1570
        %v1946 = vunpack.c.l.b16 %v1571
        %v1947 = vunpack.c.h.b16 %v1571
        %v1948 = vunpack.c.l.b16 %v1572
        %v1949 = vunpack.c.h.b16 %v1572
        %v1950 = vunpack.c.l.b16 %v1573
        %v1951 = vunpack.c.h.b16 %v1573
        %v1952 = vunpack.c.l.b16 %v1574
        %v1953 = vunpack.c.h.b16 %v1574
        %v1954 = vunpack.c.l.b16 %v1575
        %v1955 = vunpack.c.h.b16 %v1575
        %v1956 = vunpack.c.l.b16 %v1576
        %v1957 = vunpack.c.h.b16 %v1576
        %v1958 = vunpack.c.l.b16 %v1577
        %v1959 = vunpack.c.h.b16 %v1577
        %v1960 = vunpack.c.l.b16 %v1578
        %v1961 = vunpack.c.h.b16 %v1578
        %v1962 = vunpack.c.l.b16 %v1579
        %v1963 = vunpack.c.h.b16 %v1579
        %v1964 = vunpack.c.l.b16 %v1580
        %v1965 = vunpack.c.h.b16 %v1580
        %v1966 = vunpack.c.l.b16 %v1581
        %v1967 = vunpack.c.h.b16 %v1581
        %v1968 = vunpack.c.l.b16 %v1582
        %v1969 = vunpack.c.h.b16 %v1582
        %v1970 = vunpack.c.l.b16 %v1583
        %v1971 = vunpack.c.h.b16 %v1583
        %v1972 = vunpack.c.l.b16 %v1584
        %v1973 = vunpack.c.h.b16 %v1584
        %v1974 = vunpack.c.l.b16 %v1585
        %v1975 = vunpack.c.h.b16 %v1585
        %v1976 = vunpack.c.l.b16 %v1586
        %v1977 = vunpack.c.h.b16 %v1586
        %v1978 = vunpack.c.l.b16 %v1587
        %v1979 = vunpack.c.h.b16 %v1587
        %v1980 = vunpack.c.l.b16 %v1588
        %v1981 = vunpack.c.h.b16 %v1588
        %v1982 = vunpack.c.l.b16 %v1589
        %v1983 = vunpack.c.h.b16 %v1589
        %v1984 = vunpack.c.l.b16 %v1590
        %v1985 = vunpack.c.h.b16 %v1590
        %v1986 = vunpack.c.l.b16 %v1591
        %v1987 = vunpack.c.h.b16 %v1591
        %v1988 = vunpack.c.l.b16 %v1592
        %v1989 = vunpack.c.h.b16 %v1592
        %v1990 = vunpack.c.l.b16 %v1593
        %v1991 = vunpack.c.h.b16 %v1593
        %v1992 = vunpack.c.l.b16 %v1594
        %v1993 = vunpack.c.h.b16 %v1594
        %v1994 = vunpack.c.l.b16 %v1595
        %v1995 = vunpack.c.h.b16 %v1595
        %v1996 = vunpack.c.l.b16 %v1596
        %v1997 = vunpack.c.h.b16 %v1596
        %v1998 = vunpack.c.l.b16 %v1597
        %v1999 = vunpack.c.h.b16 %v1597
        %v2000 = vunpack.c.l.b16 %v1598
        %v2001 = vunpack.c.h.b16 %v1598
        %v2002 = vunpack.c.l.b16 %v1599
        %v2003 = vunpack.c.h.b16 %v1599
        %v2004 = vunpack.c.l.b16 %v1600
        %v2005 = vunpack.c.h.b16 %v1600
        %v2006 = vunpack.c.l.b16 %v1601
        %v2007 = vunpack.c.h.b16 %v1601
        %v2008 = vunpack.c.l.b16 %v1602
        %v2009 = vunpack.c.h.b16 %v1602
        %v2010 = vunpack.c.l.b16 %v1603
        %v2011 = vunpack.c.h.b16 %v1603
        %v2012 = vunpack.c.l.b16 %v1604
        %v2013 = vunpack.c.h.b16 %v1604
        %v2014 = vunpack.c.l.b16 %v1605
        %v2015 = vunpack.c.h.b16 %v1605
        %v2016 = vunpack.c.l.b16 %v1606
        %v2017 = vunpack.c.h.b16 %v1606
        %v2018 = vunpack.c.l.b16 %v1607
        %v2019 = vunpack.c.h.b16 %v1607
        %v2020 = vunpack.c.l.b16 %v1608
        %v2021 = vunpack.c.h.b16 %v1608
        %v2022 = vunpack.c.l.b16 %v1609
        %v2023 = vunpack.c.h.b16 %v1609
        %v2024 = vunpack.c.l.b16 %v1610
        %v2025 = vunpack.c.h.b16 %v1610
        %v2026 = vunpack.c.l.b16 %v1611
        %v2027 = vunpack.c.h.b16 %v1611
        %v2028 = vunpack.c.l.b16 %v1612
        %v2029 = vunpack.c.h.b16 %v1612
        %v2030 = vunpack.c.l.b16 %v1613
        %v2031 = vunpack.c.h.b16 %v1613
        %v2032 = vunpack.c.l.b16 %v1614
        %v2033 = vunpack.c.h.b16 %v1614
        %v2034 = vunpack.c.l.b16 %v1615
        %v2035 = vunpack.c.h.b16 %v1615
        %v2036 = vunpack.c.l.b16 %v1616
        %v2037 = vunpack.c.h.b16 %v1616
        %v2038 = vunpack.c.l.b16 %v1617
        %v2039 = vunpack.c.h.b16 %v1617
        %v2040 = vunpack.c.l.b16 %v1618
        %v2041 = vunpack.c.h.b16 %v1618
        %v2042 = vunpack.c.l.b16 %v1619
        %v2043 = vunpack.c.h.b16 %v1619
        %v2044 = vunpack.c.l.b16 %v1620
        %v2045 = vunpack.c.h.b16 %v1620
        %v2046 = vunpack.c.l.b16 %v1621
        %v2047 = vunpack.c.h.b16 %v1621
        %v2048 = vunpack.c.l.b16 %v1622
        %v2049 = vunpack.c.h.b16 %v1622
        %v2050 = vunpack.c.l.b16 %v1623
        %v2051 = vunpack.c.h.b16 %v1623
        %v2052 = vunpack.c.l.b16 %v1624
        %v2053 = vunpack.c.h.b16 %v1624
        %v2054 = vunpack.c.l.b16 %v1625
        %v2055 = vunpack.c.h.b16 %v1625
        %v2056 = vunpack.c.l.b16 %v1626
        %v2057 = vunpack.c.h.b16 %v1626
        %v2058 = vunpack.c.l.b16 %v1627
        %v2059 = vunpack.c.h.b16 %v1627
        %v2060 = vunpack.c.l.b16 %v1628
        %v2061 = vunpack.c.h.b16 %v1628
        %v2062 = vunpack.c.l.b16 %v1629
        %v2063 = vunpack.c.h.b16 %v1629
        %v2064 = vunpack.c.l.b16 %v1630
        %v2065 = vunpack.c.h.b16 %v1630
        %v2066 = vunpack.c.l.b16 %v1631
        %v2067 = vunpack.c.h.b16 %v1631
        %v2068 = vunpack.c.l.b16 %v1632
        %v2069 = vunpack.c.h.b16 %v1632
        %v2070 = vunpack.c.l.b16 %v1633
        %v2071 = vunpack.c.h.b16 %v1633
        %v2072 = vunpack.c.l.b16 %v1634
        %v2073 = vunpack.c.h.b16 %v1634
        %v2074 = vunpack.c.l.b16 %v1635
        %v2075 = vunpack.c.h.b16 %v1635
        %v2076 = vunpack.c.l.b16 %v1636
        %v2077 = vunpack.c.h.b16 %v1636
        %v2078 = vunpack.c.l.b16 %v1637
        %v2079 = vunpack.c.h.b16 %v1637
        %v2080 = vunpack.c.l.b16 %v1638
        %v2081 = vunpack.c.h.b16 %v1638
        %v2082 = vunpack.c.l.b16 %v1639
        %v2083 = vunpack.c.h.b16 %v1639
        %v2084 = vunpack.c.l.b16 %v1640
        %v2085 = vunpack.c.h.b16 %v1640
        %v2086 = vunpack.c.l.b16 %v1641
        %v2087 = vunpack.c.h.b16 %v1641
        %v2088 = vunpack.c.l.b16 %v1642
        %v2089 = vunpack.c.h.b16 %v1642
        %v2090 = vunpack.c.l.b16 %v1643
        %v2091 = vunpack.c.h.b16 %v1643
        %v2092 = vunpack.c.l.b16 %v1644
        %v2093 = vunpack.c.h.b16 %v1644
        %v2094 = vunpack.c.l.b16 %v1645
        %v2095 = vunpack.c.h.b16 %v1645
        %v2096 = vunpack.c.l.b16 %v1646
        %v2097 = vunpack.c.h.b16 %v1646
        %v2098 = vunpack.c.l.b16 %v1647
        %v2099 = vunpack.c.h.b16 %v1647
        %v2100 = vunpack.c.l.b16 %v1648
        %v2101 = vunpack.c.h.b16 %v1648
        %v2102 = vunpack.c.l.b16 %v1649
        %v2103 = vunpack.c.h.b16 %v1649
        %v2104 = vunpack.c.l.b16 %v1650
        %v2105 = vunpack.c.h.b16 %v1650
        %v2106 = vunpack.c.l.b16 %v1651
        %v2107 = vunpack.c.h.b16 %v1651
        %v2108 = vunpack.c.l.b16 %v1652
        %v2109 = vunpack.c.h.b16 %v1652
        %v2110 = vunpack.c.l.b16 %v1653
        %v2111 = vunpack.c.h.b16 %v1653
        %v2112 = vunpack.c.l.b16 %v1654
        %v2113 = vunpack.c.h.b16 %v1654
        %v2114 = vunpack.c.l.b16 %v1655
        %v2115 = vunpack.c.h.b16 %v1655
        %v2116 = vunpack.c.l.b16 %v1656
        %v2117 = vunpack.c.h.b16 %v1656
        %v2118 = vunpack.c.l.b16 %v1657
        %v2119 = vunpack.c.h.b16 %v1657
        %v2120 = vunpack.c.l.b16 %v1658
        %v2121 = vunpack.c.h.b16 %v1658
        %v2122 = vunpack.c.l.b16 %v1659
        %v2123 = vunpack.c.h.b16 %v1659
        %v2124 = vunpack.c.l.b16 %v1660
        %v2125 = vunpack.c.h.b16 %v1660
        %v2126 = vunpack.c.l.b16 %v1661
        %v2127 = vunpack.c.h.b16 %v1661
        %v2128 = vunpack.c.l.b16 %v1662
        %v2129 = vunpack.c.h.b16 %v1662
        %v2130 = vunpack.c.l.b16 %v1663
        %v2131 = vunpack.c.h.b16 %v1663
        %v2132 = vunpack.c.l.b16 %v1664
        %v2133 = vunpack.c.h.b16 %v1664
        %v2134 = vunpack.c.l.b16 %v1665
        %v2135 = vunpack.c.h.b16 %v1665
        %v2136 = vunpack.c.l.b16 %v1666
        %v2137 = vunpack.c.h.b16 %v1666
        %v2138 = vunpack.c.l.b16 %v1667
        %v2139 = vunpack.c.h.b16 %v1667
        %v2140 = vunpack.c.l.b16 %v1668
        %v2141 = vunpack.c.h.b16 %v1668
        %v2142 = vunpack.c.l.b16 %v1669
        %v2143 = vunpack.c.h.b16 %v1669
        %v2144 = vunpack.c.l.b16 %v1670
        %v2145 = vunpack.c.h.b16 %v1670
        %v2146 = vunpack.c.l.b16 %v1671
        %v2147 = vunpack.c.h.b16 %v1671
        %v2148 = vunpack.c.l.b16 %v1672
        %v2149 = vunpack.c.h.b16 %v1672
        %v2150 = vunpack.c.l.b16 %v1673
        %v2151 = vunpack.c.h.b16 %v1673
        %v2152 = vunpack.c.l.b16 %v1674
        %v2153 = vunpack.c.h.b16 %v1674
        %v2154 = vunpack.c.l.b16 %v1675
        %v2155 = vunpack.c.h.b16 %v1675
        %v2156 = vunpack.c.l.b16 %v1676
        %v2157 = vunpack.c.h.b16 %v1676
        %v2158 = vunpack.c.l.b16 %v1677
        %v2159 = vunpack.c.h.b16 %v1677
        %v2160 = vunpack.c.l.b16 %v1678
        %v2161 = vunpack.c.h.b16 %v1678
        %v2162 = vunpack.c.l.b16 %v1679
        %v2163 = vunpack.c.h.b16 %v1679
        %v2164 = vunpack.c.l.b16 %v1680
        %v2165 = vunpack.c.h.b16 %v1680
        %v2166 = vunpack.c.l.b16 %v1681
        %v2167 = vunpack.c.h.b16 %v1681
        %v2168 = vunpack.c.l.b16 %v1682
        %v2169 = vunpack.c.h.b16 %v1682
        %v2170 = vunpack.c.l.b16 %v1683
        %v2171 = vunpack.c.h.b16 %v1683
        %v2172 = vunpack.c.l.b16 %v1684
        %v2173 = vunpack.c.h.b16 %v1684
        %v2174 = vunpack.c.l.b16 %v1685
        %v2175 = vunpack.c.h.b16 %v1685
        %v2176 = vunpack.c.l.b16 %v1686
        %v2177 = vunpack.c.h.b16 %v1686
        %v2178 = vunpack.c.l.b16 %v1687
        %v2179 = vunpack.c.h.b16 %v1687
        %v2180 = vunpack.c.l.b16 %v1688
        %v2181 = vunpack.c.h.b16 %v1688
        %v2182 = vunpack.c.l.b16 %v1689
        %v2183 = vunpack.c.h.b16 %v1689
        %v2184 = vunpack.c.l.b16 %v1690
        %v2185 = vunpack.c.h.b16 %v1690
        %v2186 = vunpack.c.l.b16 %v1691
        %v2187 = vunpack.c.h.b16 %v1691
        %v2188 = vunpack.c.l.b16 %v1692
        %v2189 = vunpack.c.h.b16 %v1692
        %v2190 = vunpack.c.l.b16 %v1693
        %v2191 = vunpack.c.h.b16 %v1693
        %v2192 = vunpack.c.l.b16 %v1694
        %v2193 = vunpack.c.h.b16 %v1694
        %v2194 = vunpack.c.l.b16 %v1695
        %v2195 = vunpack.c.h.b16 %v1695
        %v2196 = vunpack.c.l.b16 %v1696
        %v2197 = vunpack.c.h.b16 %v1696
        %v2198 = vunpack.c.l.b16 %v1697
        %v2199 = vunpack.c.h.b16 %v1697
        %v2200 = vunpack.c.l.b16 %v1698
        %v2201 = vunpack.c.h.b16 %v1698
        %v2202 = vunpack.c.l.b16 %v1699
        %v2203 = vunpack.c.h.b16 %v1699
        %v2204 = vunpack.c.l.b16 %v1700
        %v2205 = vunpack.c.h.b16 %v1700
        %v2206 = vunpack.c.l.b16 %v1701
        %v2207 = vunpack.c.h.b16 %v1701
        %v2208 = vunpack.c.l.b16 %v1702
        %v2209 = vunpack.c.h.b16 %v1702
        %v2210 = vunpack.c.l.b16 %v1703
        %v2211 = vunpack.c.h.b16 %v1703
        %v2212 = vunpack.c.l.b16 %v1704
        %v2213 = vunpack.c.h.b16 %v1704
        %v2214 = vunpack.c.l.b16 %v1705
        %v2215 = vunpack.c.h.b16 %v1705
        %v2216 = vunpack.c.l.b16 %v1706
        %v2217 = vunpack.c.h.b16 %v1706
        %v2218 = vunpack.c.l.b16 %v1707
        %v2219 = vunpack.c.h.b16 %v1707
        %v2220 = vunpack.c.l.b16 %v1708
        %v2221 = vunpack.c.h.b16 %v1708
        %v2222 = vunpack.c.l.b16 %v1709
        %v2223 = vunpack.c.h.b16 %v1709
        %v2224 = vunpack.c.l.b16 %v1710
        %v2225 = vunpack.c.h.b16 %v1710
        %v2226 = vunpack.c.l.b16 %v1711
        %v2227 = vunpack.c.h.b16 %v1711
        %v2228 = vunpack.c.l.b16 %v1712
        %v2229 = vunpack.c.h.b16 %v1712
        %v2230 = vunpack.c.l.b16 %v1713
        %v2231 = vunpack.c.h.b16 %v1713
        %v2232 = vunpack.c.l.b16 %v1714
        %v2233 = vunpack.c.h.b16 %v1714
        %v2234 = vunpack.c.l.b16 %v1715
        %v2235 = vunpack.c.h.b16 %v1715
        %v2236 = vunpack.c.l.b16 %v1716
        %v2237 = vunpack.c.h.b16 %v1716
        %v2238 = vunpack.c.l.b16 %v1717
        %v2239 = vunpack.c.h.b16 %v1717
        %v2240 = vunpack.c.l.b16 %v1718
        %v2241 = vunpack.c.h.b16 %v1718
        %v2242 = vunpack.c.l.b16 %v1719
        %v2243 = vunpack.c.h.b16 %v1719
        %v2244 = vunpack.c.l.b16 %v1720
        %v2245 = vunpack.c.h.b16 %v1720
        %v2246 = vunpack.c.l.b16 %v1721
        %v2247 = vunpack.c.h.b16 %v1721
        %v2248 = vunpack.c.l.b16 %v1722
        %v2249 = vunpack.c.h.b16 %v1722
        %v2250 = vunpack.c.l.b16 %v1723
        %v2251 = vunpack.c.h.b16 %v1723
        %v2252 = vunpack.c.l.b16 %v1724
        %v2253 = vunpack.c.h.b16 %v1724
        %v2254 = vunpack.c.l.b16 %v1725
        %v2255 = vunpack.c.h.b16 %v1725
        %v2256 = vunpack.c.l.b16 %v1726
        %v2257 = vunpack.c.h.b16 %v1726
        %v2258 = vunpack.c.l.b16 %v1727
        %v2259 = vunpack.c.h.b16 %v1727
        %v2260 = vunpack.c.l.b16 %v1728
        %v2261 = vunpack.c.h.b16 %v1728
        %v2262 = vunpack.c.l.b16 %v1729
        %v2263 = vunpack.c.h.b16 %v1729
        %v2264 = vunpack.c.l.b16 %v1730
        %v2265 = vunpack.c.h.b16 %v1730
        %v2266 = vunpack.c.l.b16 %v1731
        %v2267 = vunpack.c.h.b16 %v1731
        %v2268 = vunpack.c.l.b16 %v1732
        %v2269 = vunpack.c.h.b16 %v1732
        %v2270 = vunpack.c.l.b16 %v1733
        %v2271 = vunpack.c.h.b16 %v1733
        %v2272 = vunpack.c.l.b16 %v1734
        %v2273 = vunpack.c.h.b16 %v1734
        %v2274 = vunpack.c.l.b16 %v1735
        %v2275 = vunpack.c.h.b16 %v1735
        %v2276 = vpack.c.b16 %v1926, %v1916
        %v2277 = vpack.c.b16 %v1927, %v1917
        %v2278 = vpack.c.b16 %v1928, %v1918
        %v2279 = vpack.c.b16 %v1929, %v1919
        %v2280 = vpack.c.b16 %v1930, %v1920
        %v2281 = vpack.c.b16 %v1931, %v1921
        %v2282 = vpack.c.b16 %v1932, %v1922
        %v2283 = vpack.c.b16 %v1933, %v1923
        %v2284 = vpack.c.b16 %v1934, %v1924
        %v2285 = vpack.c.b16 %v1935, %v1925
        %v2286 = vpack.c.b16 %v1946, %v1936
        %v2287 = vpack.c.b16 %v1947, %v1937
        %v2288 = vpack.c.b16 %v1948, %v1938
        %v2289 = vpack.c.b16 %v1949, %v1939
        %v2290 = vpack.c.b16 %v1950, %v1940
        %v2291 = vpack.c.b16 %v1951, %v1941
        %v2292 = vpack.c.b16 %v1952, %v1942
        %v2293 = vpack.c.b16 %v1953, %v1943
        %v2294 = vpack.c.b16 %v1954, %v1944
        %v2295 = vpack.c.b16 %v1955, %v1945
        %v2296 = vpack.c.b16 %v1966, %v1956
        %v2297 = vpack.c.b16 %v1967, %v1957
        %v2298 = vpack.c.b16 %v1968, %v1958
        %v2299 = vpack.c.b16 %v1969, %v1959
        %v2300 = vpack.c.b16 %v1970, %v1960
        %v2301 = vpack.c.b16 %v1971, %v1961
        %v2302 = vpack.c.b16 %v1972, %v1962
        %v2303 = vpack.c.b16 %v1973, %v1963
        %v2304 = vpack.c.b16 %v1974, %v1964
        %v2305 = vpack.c.b16 %v1975, %v1965
        %v2306 = vpack.c.b16 %v1986, %v1976
        %v2307 = vpack.c.b16 %v1987, %v1977
        %v2308 = vpack.c.b16 %v1988, %v1978
        %v2309 = vpack.c.b16 %v1989, %v1979
        %v2310 = vpack.c.b16 %v1990, %v1980
        %v2311 = vpack.c.b16 %v1991, %v1981
        %v2312 = vpack.c.b16 %v1992, %v1982
        %v2313 = vpack.c.b16 %v1993, %v1983
        %v2314 = vpack.c.b16 %v1994, %v1984
        %v2315 = vpack.c.b16 %v1995, %v1985
        %v2316 = vpack.c.b16 %v2006, %v1996
        %v2317 = vpack.c.b16 %v2007, %v1997
        %v2318 = vpack.c.b16 %v2008, %v1998
        %v2319 = vpack.c.b16 %v2009, %v1999
        %v2320 = vpack.c.b16 %v2010, %v2000
        %v2321 = vpack.c.b16 %v2011, %v2001
        %v2322 = vpack.c.b16 %v2012, %v2002
        %v2323 = vpack.c.b16 %v2013, %v2003
        %v2324 = vpack.c.b16 %v2014, %v2004
        %v2325 = vpack.c.b16 %v2015, %v2005
        %v2326 = vpack.c.b16 %v2026, %v2016
        %v2327 = vpack.c.b16 %v2027, %v2017
        %v2328 = vpack.c.b16 %v2028, %v2018
        %v2329 = vpack.c.b16 %v2029, %v2019
        %v2330 = vpack.c.b16 %v2030, %v2020
        %v2331 = vpack.c.b16 %v2031, %v2021
        %v2332 = vpack.c.b16 %v2032, %v2022
        %v2333 = vpack.c.b16 %v2033, %v2023
        %v2334 = vpack.c.b16 %v2034, %v2024
        %v2335 = vpack.c.b16 %v2035, %v2025
        %v2336 = vpack.c.b16 %v2046, %v2036
        %v2337 = vpack.c.b16 %v2047, %v2037
        %v2338 = vpack.c.b16 %v2048, %v2038
        %v2339 = vpack.c.b16 %v2049, %v2039
        %v2340 = vpack.c.b16 %v2050, %v2040
        %v2341 = vpack.c.b16 %v2051, %v2041
        %v2342 = vpack.c.b16 %v2052, %v2042
        %v2343 = vpack.c.b16 %v2053, %v2043
        %v2344 = vpack.c.b16 %v2054, %v2044
        %v2345 = vpack.c.b16 %v2055, %v2045
        %v2346 = vpack.c.b16 %v2066, %v2056
        %v2347 = vpack.c.b16 %v2067, %v2057
        %v2348 = vpack.c.b16 %v2068, %v2058
        %v2349 = vpack.c.b16 %v2069, %v2059
        %v2350 = vpack.c.b16 %v2070, %v2060
        %v2351 = vpack.c.b16 %v2071, %v2061
        %v2352 = vpack.c.b16 %v2072, %v2062
        %v2353 = vpack.c.b16 %v2073, %v2063
        %v2354 = vpack.c.b16 %v2074, %v2064
        %v2355 = vpack.c.b16 %v2075, %v2065
        %v2356 = vpack.c.b16 %v2086, %v2076
        %v2357 = vpack.c.b16 %v2087, %v2077
        %v2358 = vpack.c.b16 %v2088, %v2078
        %v2359 = vpack.c.b16 %v2089, %v2079
        %v2360 = vpack.c.b16 %v2090, %v2080
        %v2361 = vpack.c.b16 %v2091, %v2081
        %v2362 = vpack.c.b16 %v2092, %v2082
        %v2363 = vpack.c.b16 %v2093, %v2083
        %v2364 = vpack.c.b16 %v2094, %v2084
        %v2365 = vpack.c.b16 %v2095, %v2085
        %v2366 = vpack.c.b16 %v2106, %v2096
        %v2367 = vpack.c.b16 %v2107, %v2097
        %v2368 = vpack.c.b16 %v2108, %v2098
        %v2369 = vpack.c.b16 %v2109, %v2099
        %v2370 = vpack.c.b16 %v2110, %v2100
        %v2371 = vpack.c.b16 %v2111, %v2101
        %v2372 = vpack.c.b16 %v2112, %v2102
        %v2373 = vpack.c.b16 %v2113, %v2103
        %v2374 = vpack.c.b16 %v2114, %v2104
        %v2375 = vpack.c.b16 %v2115, %v2105
        %v2376 = vpack.c.b16 %v2126, %v2116
        %v2377 = vpack.c.b16 %v2127, %v2117
        %v2378 = vpack.c.b16 %v2128, %v2118
        %v2379 = vpack.c.b16 %v2129, %v2119
        %v2380 = vpack.c.b16 %v2130, %v2120
        %v2381 = vpack.c.b16 %v2131, %v2121
        %v2382 = vpack.c.b16 %v2132, %v2122
        %v2383 = vpack.c.b16 %v2133, %v2123
        %v2384 = vpack.c.b16 %v2134, %v2124
        %v2385 = vpack.c.b16 %v2135, %v2125
        %v2386 = vpack.c.b16 %v2146, %v2136
        %v2387 = vpack.c.b16 %v2147, %v2137
        %v2388 = vpack.c.b16 %v2148, %v2138
        %v2389 = vpack.c.b16 %v2149, %v2139
        %v2390 = vpack.c.b16 %v2150, %v2140
        %v2391 = vpack.c.b16 %v2151, %v2141
        %v2392 = vpack.c.b16 %v2152, %v2142
        %v2393 = vpack.c.b16 %v2153, %v2143
        %v2394 = vpack.c.b16 %v2154, %v2144
        %v2395 = vpack.c.b16 %v2155, %v2145
        %v2396 = vpack.c.b16 %v2166, %v2156
        %v2397 = vpack.c.b16 %v2167, %v2157
        %v2398 = vpack.c.b16 %v2168, %v2158
        %v2399 = vpack.c.b16 %v2169, %v2159
        %v2400 = vpack.c.b16 %v2170, %v2160
        %v2401 = vpack.c.b16 %v2171, %v2161
        %v2402 = vpack.c.b16 %v2172, %v2162
        %v2403 = vpack.c.b16 %v2173, %v2163
        %v2404 = vpack.c.b16 %v2174, %v2164
        %v2405 = vpack.c.b16 %v2175, %v2165
        %v2406 = vpack.c.b16 %v2186, %v2176
        %v2407 = vpack.c.b16 %v2187, %v2177
        %v2408 = vpack.c.b16 %v2188, %v2178
        %v2409 = vpack.c.b16 %v2189, %v2179
        %v2410 = vpack.c.b16 %v2190, %v2180
        %v2411 = vpack.c.b16 %v2191, %v2181
        %v2412 = vpack.c.b16 %v2192, %v2182
        %v2413 = vpack.c.b16 %v2193, %v2183
        %v2414 = vpack.c.b16 %v2194, %v2184
        %v2415 = vpack.c.b16 %v2195, %v2185
        %v2416 = vpack.c.b16 %v2206, %v2196
        %v2417 = vpack.c.b16 %v2207, %v2197
        %v2418 = vpack.c.b16 %v2208, %v2198
        %v2419 = vpack.c.b16 %v2209, %v2199
        %v2420 = vpack.c.b16 %v2210, %v2200
        %v2421 = vpack.c.b16 %v2211, %v2201
        %v2422 = vpack.c.b16 %v2212, %v2202
        %v2423 = vpack.c.b16 %v2213, %v2203
        %v2424 = vpack.c.b16 %v2214, %v2204
        %v2425 = vpack.c.b16 %v2215, %v2205
        %v2426 = vpack.c.b16 %v2226, %v2216
        %v2427 = vpack.c.b16 %v2227, %v2217
        %v2428 = vpack.c.b16 %v2228, %v2218
        %v2429 = vpack.c.b16 %v2229, %v2219
        %v2430 = vpack.c.b16 %v2230, %v2220
        %v2431 = vpack.c.b16 %v2231, %v2221
        %v2432 = vpack.c.b16 %v2232, %v2222
        %v2433 = vpack.c.b16 %v2233, %v2223
        %v2434 = vpack.c.b16 %v2234, %v2224
        %v2435 = vpack.c.b16 %v2235, %v2225
        %v2436 = vpack.c.b16 %v2246, %v2236
        %v2437 = vpack.c.b16 %v2247, %v2237
        %v2438 = vpack.c.b16 %v2248, %v2238
        %v2439 = vpack.c.b16 %v2249, %v2239
        %v2440 = vpack.c.b16 %v2250, %v2240
        %v2441 = vpack.c.b16 %v2251, %v2241
        %v2442 = vpack.c.b16 %v2252, %v2242
        %v2443 = vpack.c.b16 %v2253, %v2243
        %v2444 = vpack.c.b16 %v2254, %v2244
        %v2445 = vpack.c.b16 %v2255, %v2245
        %v2446 = vpack.c.b16 %v2266, %v2256
        %v2447 = vpack.c.b16 %v2267, %v2257
        %v2448 = vpack.c.b16 %v2268, %v2258
        %v2449 = vpack.c.b16 %v2269, %v2259
        %v2450 = vpack.c.b16 %v2270, %v2260
        %v2451 = vpack.c.b16 %v2271, %v2261
        %v2452 = vpack.c.b16 %v2272, %v2262
        %v2453 = vpack.c.b16 %v2273, %v2263
        %v2454 = vpack.c.b16 %v2274, %v2264
        %v2455 = vpack.c.b16 %v2275, %v2265
        %v2637 = vsel %vm1308, %v1555, 0
        %2639 = vmatpush.bf16.msra.mxu0 %v2346
        %2640 = vmatpush.bf16.msra.mxu0 %v2336
        %2641 = vmatpush.bf16.msra.mxu0 %v2326
        %2642 = vmatpush.bf16.msra.mxu0 %v2316
        %2643 = vmatpush.bf16.msra.mxu0 %v2306
        %2644 = vmatpush.bf16.msra.mxu0 %v2296
        %2645 = vmatpush.bf16.msra.mxu0 %v2286
        %2646 = vmatpush.bf16.msra.mxu0 %v2276
        %2647 = vmatmul.bf16.gmra.mxu0 %v1553
        %v2648 = vpop.f32.mrf.mxu0
        %v2649 = vadd.f32 0.0, %v2648
        %v2650 = vpop.f32.mrf.mxu0
        %v2651 = vadd.f32 0.0, %v2650
        %2652 = vdwg.mxu0
        %2653 = vmatpush.bf16.msra.mxu0 %v2426
        %2654 = vmatpush.bf16.msra.mxu0 %v2416
        %2655 = vmatpush.bf16.msra.mxu0 %v2406
        %2656 = vmatpush.bf16.msra.mxu0 %v2396
        %2657 = vmatpush.bf16.msra.mxu0 %v2386
        %2658 = vmatpush.bf16.msra.mxu0 %v2376
        %2659 = vmatpush.bf16.msra.mxu0 %v2366
        %2660 = vmatpush.bf16.msra.mxu0 %v2356
        %2661 = vmatmul.bf16.gmra.mxu0 %v1554
        %v2662 = vpop.f32.mrf.mxu0
        %v2663 = vadd.f32 %v2649, %v2662
        %v2664 = vpop.f32.mrf.mxu0
        %v2665 = vadd.f32 %v2651, %v2664
        %2666 = vdwg.mxu0
        %2667 = vmatpush.bf16.msra.mxu0 0
        %2668 = vmatpush.bf16.msra.mxu0 0
        %2669 = vmatpush.bf16.msra.mxu0 0
        %2670 = vmatpush.bf16.msra.mxu0 0
        %2671 = vmatpush.bf16.msra.mxu0 0
        %2672 = vmatpush.bf16.msra.mxu0 0
        %2673 = vmatpush.bf16.msra.mxu0 %v2446
        %2674 = vmatpush.bf16.msra.mxu0 %v2436
        %2675 = vmatmul.bf16.gmra.mxu0 %v2637
        %v2676 = vpop.f32.mrf.mxu0
        %v2677 = vadd.f32 %v2663, %v2676
        %v2678 = vpop.f32.mrf.mxu0
        %v2679 = vadd.f32 %v2665, %v2678
        %2680 = vdwg.mxu0
        %2681 = vmatpush.bf16.msra.mxu0 %v2347
        %2682 = vmatpush.bf16.msra.mxu0 %v2337
        %2683 = vmatpush.bf16.msra.mxu0 %v2327
        %2684 = vmatpush.bf16.msra.mxu0 %v2317
        %2685 = vmatpush.bf16.msra.mxu0 %v2307
        %2686 = vmatpush.bf16.msra.mxu0 %v2297
        %2687 = vmatpush.bf16.msra.mxu0 %v2287
        %2688 = vmatpush.bf16.msra.mxu0 %v2277
        %2689 = vmatmul.bf16.gmra.mxu0 %v1553
        %v2690 = vpop.f32.mrf.mxu0
        %v2691 = vadd.f32 0.0, %v2690
        %v2692 = vpop.f32.mrf.mxu0
        %v2693 = vadd.f32 0.0, %v2692
        %2694 = vdwg.mxu0
        %2695 = vmatpush.bf16.msra.mxu0 %v2427
        %2696 = vmatpush.bf16.msra.mxu0 %v2417
        %2697 = vmatpush.bf16.msra.mxu0 %v2407
        %2698 = vmatpush.bf16.msra.mxu0 %v2397
        %2699 = vmatpush.bf16.msra.mxu0 %v2387
        %2700 = vmatpush.bf16.msra.mxu0 %v2377
        %2701 = vmatpush.bf16.msra.mxu0 %v2367
        %2702 = vmatpush.bf16.msra.mxu0 %v2357
        %2703 = vmatmul.bf16.gmra.mxu0 %v1554
        %v2704 = vpop.f32.mrf.mxu0
        %v2705 = vadd.f32 %v2691, %v2704
        %v2706 = vpop.f32.mrf.mxu0
        %v2707 = vadd.f32 %v2693, %v2706
        %2708 = vdwg.mxu0
        %2709 = vmatpush.bf16.msra.mxu0 0
        %2710 = vmatpush.bf16.msra.mxu0 0
        %2711 = vmatpush.bf16.msra.mxu0 0
        %2712 = vmatpush.bf16.msra.mxu0 0
        %2713 = vmatpush.bf16.msra.mxu0 0
        %2714 = vmatpush.bf16.msra.mxu0 0
        %2715 = vmatpush.bf16.msra.mxu0 %v2447
        %2716 = vmatpush.bf16.msra.mxu0 %v2437
        %2717 = vmatmul.bf16.gmra.mxu0 %v2637
        %v2718 = vpop.f32.mrf.mxu0
        %v2719 = vadd.f32 %v2705, %v2718
        %v2720 = vpop.f32.mrf.mxu0
        %v2721 = vadd.f32 %v2707, %v2720
        %2722 = vdwg.mxu0
        %2723 = vmatpush.bf16.msra.mxu0 %v2348
        %2724 = vmatpush.bf16.msra.mxu0 %v2338
        %2725 = vmatpush.bf16.msra.mxu0 %v2328
        %2726 = vmatpush.bf16.msra.mxu0 %v2318
        %2727 = vmatpush.bf16.msra.mxu0 %v2308
        %2728 = vmatpush.bf16.msra.mxu0 %v2298
        %2729 = vmatpush.bf16.msra.mxu0 %v2288
        %2730 = vmatpush.bf16.msra.mxu0 %v2278
        %2731 = vmatmul.bf16.gmra.mxu0 %v1553
        %v2732 = vpop.f32.mrf.mxu0
        %v2733 = vadd.f32 0.0, %v2732
        %v2734 = vpop.f32.mrf.mxu0
        %v2735 = vadd.f32 0.0, %v2734
        %2736 = vdwg.mxu0
        %2737 = vmatpush.bf16.msra.mxu0 %v2428
        %2738 = vmatpush.bf16.msra.mxu0 %v2418
        %2739 = vmatpush.bf16.msra.mxu0 %v2408
        %2740 = vmatpush.bf16.msra.mxu0 %v2398
        %2741 = vmatpush.bf16.msra.mxu0 %v2388
        %2742 = vmatpush.bf16.msra.mxu0 %v2378
        %2743 = vmatpush.bf16.msra.mxu0 %v2368
        %2744 = vmatpush.bf16.msra.mxu0 %v2358
        %2745 = vmatmul.bf16.gmra.mxu0 %v1554
        %v2746 = vpop.f32.mrf.mxu0
        %v2747 = vadd.f32 %v2733, %v2746
        %v2748 = vpop.f32.mrf.mxu0
        %v2749 = vadd.f32 %v2735, %v2748
        %2750 = vdwg.mxu0
        %2751 = vmatpush.bf16.msra.mxu0 0
        %2752 = vmatpush.bf16.msra.mxu0 0
        %2753 = vmatpush.bf16.msra.mxu0 0
        %2754 = vmatpush.bf16.msra.mxu0 0
        %2755 = vmatpush.bf16.msra.mxu0 0
        %2756 = vmatpush.bf16.msra.mxu0 0
        %2757 = vmatpush.bf16.msra.mxu0 %v2448
        %2758 = vmatpush.bf16.msra.mxu0 %v2438
        %2759 = vmatmul.bf16.gmra.mxu0 %v2637
        %v2760 = vpop.f32.mrf.mxu0
        %v2761 = vadd.f32 %v2747, %v2760
        %v2762 = vpop.f32.mrf.mxu0
        %v2763 = vadd.f32 %v2749, %v2762
        %2764 = vdwg.mxu0
        %2765 = vmatpush.bf16.msra.mxu0 %v2349
        %2766 = vmatpush.bf16.msra.mxu0 %v2339
        %2767 = vmatpush.bf16.msra.mxu0 %v2329
        %2768 = vmatpush.bf16.msra.mxu0 %v2319
        %2769 = vmatpush.bf16.msra.mxu0 %v2309
        %2770 = vmatpush.bf16.msra.mxu0 %v2299
        %2771 = vmatpush.bf16.msra.mxu0 %v2289
        %2772 = vmatpush.bf16.msra.mxu0 %v2279
        %2773 = vmatmul.bf16.gmra.mxu0 %v1553
        %v2774 = vpop.f32.mrf.mxu0
        %v2775 = vadd.f32 0.0, %v2774
        %v2776 = vpop.f32.mrf.mxu0
        %v2777 = vadd.f32 0.0, %v2776
        %2778 = vdwg.mxu0
        %2779 = vmatpush.bf16.msra.mxu0 %v2429
        %2780 = vmatpush.bf16.msra.mxu0 %v2419
        %2781 = vmatpush.bf16.msra.mxu0 %v2409
        %2782 = vmatpush.bf16.msra.mxu0 %v2399
        %2783 = vmatpush.bf16.msra.mxu0 %v2389
        %2784 = vmatpush.bf16.msra.mxu0 %v2379
        %2785 = vmatpush.bf16.msra.mxu0 %v2369
        %2786 = vmatpush.bf16.msra.mxu0 %v2359
        %2787 = vmatmul.bf16.gmra.mxu0 %v1554
        %v2788 = vpop.f32.mrf.mxu0
        %v2789 = vadd.f32 %v2775, %v2788
        %v2790 = vpop.f32.mrf.mxu0
        %v2791 = vadd.f32 %v2777, %v2790
        %2792 = vdwg.mxu0
        %2793 = vmatpush.bf16.msra.mxu0 0
        %2794 = vmatpush.bf16.msra.mxu0 0
        %2795 = vmatpush.bf16.msra.mxu0 0
        %2796 = vmatpush.bf16.msra.mxu0 0
        %2797 = vmatpush.bf16.msra.mxu0 0
        %2798 = vmatpush.bf16.msra.mxu0 0
        %2799 = vmatpush.bf16.msra.mxu0 %v2449
        %2800 = vmatpush.bf16.msra.mxu0 %v2439
        %2801 = vmatmul.bf16.gmra.mxu0 %v2637
        %v2802 = vpop.f32.mrf.mxu0
        %v2803 = vadd.f32 %v2789, %v2802
        %v2804 = vpop.f32.mrf.mxu0
        %v2805 = vadd.f32 %v2791, %v2804
        %2806 = vdwg.mxu0
        %2807 = vmatpush.bf16.msra.mxu0 %v2350
        %2808 = vmatpush.bf16.msra.mxu0 %v2340
        %2809 = vmatpush.bf16.msra.mxu0 %v2330
        %2810 = vmatpush.bf16.msra.mxu0 %v2320
        %2811 = vmatpush.bf16.msra.mxu0 %v2310
        %2812 = vmatpush.bf16.msra.mxu0 %v2300
        %2813 = vmatpush.bf16.msra.mxu0 %v2290
        %2814 = vmatpush.bf16.msra.mxu0 %v2280
        %2815 = vmatmul.bf16.gmra.mxu0 %v1553
        %v2816 = vpop.f32.mrf.mxu0
        %v2817 = vadd.f32 0.0, %v2816
        %v2818 = vpop.f32.mrf.mxu0
        %v2819 = vadd.f32 0.0, %v2818
        %2820 = vdwg.mxu0
        %2821 = vmatpush.bf16.msra.mxu0 %v2430
        %2822 = vmatpush.bf16.msra.mxu0 %v2420
        %2823 = vmatpush.bf16.msra.mxu0 %v2410
        %2824 = vmatpush.bf16.msra.mxu0 %v2400
        %2825 = vmatpush.bf16.msra.mxu0 %v2390
        %2826 = vmatpush.bf16.msra.mxu0 %v2380
        %2827 = vmatpush.bf16.msra.mxu0 %v2370
        %2828 = vmatpush.bf16.msra.mxu0 %v2360
        %2829 = vmatmul.bf16.gmra.mxu0 %v1554
        %v2830 = vpop.f32.mrf.mxu0
        %v2831 = vadd.f32 %v2817, %v2830
        %v2832 = vpop.f32.mrf.mxu0
        %v2833 = vadd.f32 %v2819, %v2832
        %2834 = vdwg.mxu0
        %2835 = vmatpush.bf16.msra.mxu0 0
        %2836 = vmatpush.bf16.msra.mxu0 0
        %2837 = vmatpush.bf16.msra.mxu0 0
        %2838 = vmatpush.bf16.msra.mxu0 0
        %2839 = vmatpush.bf16.msra.mxu0 0
        %2840 = vmatpush.bf16.msra.mxu0 0
        %2841 = vmatpush.bf16.msra.mxu0 %v2450
        %2842 = vmatpush.bf16.msra.mxu0 %v2440
        %2843 = vmatmul.bf16.gmra.mxu0 %v2637
        %v2844 = vpop.f32.mrf.mxu0
        %v2845 = vadd.f32 %v2831, %v2844
        %v2846 = vpop.f32.mrf.mxu0
        %v2847 = vadd.f32 %v2833, %v2846
        %2848 = vdwg.mxu0
        %2849 = vmatpush.bf16.msra.mxu0 %v2351
        %2850 = vmatpush.bf16.msra.mxu0 %v2341
        %2851 = vmatpush.bf16.msra.mxu0 %v2331
        %2852 = vmatpush.bf16.msra.mxu0 %v2321
        %2853 = vmatpush.bf16.msra.mxu0 %v2311
        %2854 = vmatpush.bf16.msra.mxu0 %v2301
        %2855 = vmatpush.bf16.msra.mxu0 %v2291
        %2856 = vmatpush.bf16.msra.mxu0 %v2281
        %2857 = vmatmul.bf16.gmra.mxu0 %v1553
        %v2858 = vpop.f32.mrf.mxu0
        %v2859 = vadd.f32 0.0, %v2858
        %v2860 = vpop.f32.mrf.mxu0
        %v2861 = vadd.f32 0.0, %v2860
        %2862 = vdwg.mxu0
        %2863 = vmatpush.bf16.msra.mxu0 %v2431
        %2864 = vmatpush.bf16.msra.mxu0 %v2421
        %2865 = vmatpush.bf16.msra.mxu0 %v2411
        %2866 = vmatpush.bf16.msra.mxu0 %v2401
        %2867 = vmatpush.bf16.msra.mxu0 %v2391
        %2868 = vmatpush.bf16.msra.mxu0 %v2381
        %2869 = vmatpush.bf16.msra.mxu0 %v2371
        %2870 = vmatpush.bf16.msra.mxu0 %v2361
        %2871 = vmatmul.bf16.gmra.mxu0 %v1554
        %v2872 = vpop.f32.mrf.mxu0
        %v2873 = vadd.f32 %v2859, %v2872
        %v2874 = vpop.f32.mrf.mxu0
        %v2875 = vadd.f32 %v2861, %v2874
        %2876 = vdwg.mxu0
        %2877 = vmatpush.bf16.msra.mxu0 0
        %2878 = vmatpush.bf16.msra.mxu0 0
        %2879 = vmatpush.bf16.msra.mxu0 0
        %2880 = vmatpush.bf16.msra.mxu0 0
        %2881 = vmatpush.bf16.msra.mxu0 0
        %2882 = vmatpush.bf16.msra.mxu0 0
        %2883 = vmatpush.bf16.msra.mxu0 %v2451
        %2884 = vmatpush.bf16.msra.mxu0 %v2441
        %2885 = vmatmul.bf16.gmra.mxu0 %v2637
        %v2886 = vpop.f32.mrf.mxu0
        %v2887 = vadd.f32 %v2873, %v2886
        %v2888 = vpop.f32.mrf.mxu0
        %v2889 = vadd.f32 %v2875, %v2888
        %2890 = vdwg.mxu0
        %2891 = vmatpush.bf16.msra.mxu0 %v2352
        %2892 = vmatpush.bf16.msra.mxu0 %v2342
        %2893 = vmatpush.bf16.msra.mxu0 %v2332
        %2894 = vmatpush.bf16.msra.mxu0 %v2322
        %2895 = vmatpush.bf16.msra.mxu0 %v2312
        %2896 = vmatpush.bf16.msra.mxu0 %v2302
        %2897 = vmatpush.bf16.msra.mxu0 %v2292
        %2898 = vmatpush.bf16.msra.mxu0 %v2282
        %2899 = vmatmul.bf16.gmra.mxu0 %v1553
        %v2900 = vpop.f32.mrf.mxu0
        %v2901 = vadd.f32 0.0, %v2900
        %v2902 = vpop.f32.mrf.mxu0
        %v2903 = vadd.f32 0.0, %v2902
        %2904 = vdwg.mxu0
        %2905 = vmatpush.bf16.msra.mxu0 %v2432
        %2906 = vmatpush.bf16.msra.mxu0 %v2422
        %2907 = vmatpush.bf16.msra.mxu0 %v2412
        %2908 = vmatpush.bf16.msra.mxu0 %v2402
        %2909 = vmatpush.bf16.msra.mxu0 %v2392
        %2910 = vmatpush.bf16.msra.mxu0 %v2382
        %2911 = vmatpush.bf16.msra.mxu0 %v2372
        %2912 = vmatpush.bf16.msra.mxu0 %v2362
        %2913 = vmatmul.bf16.gmra.mxu0 %v1554
        %v2914 = vpop.f32.mrf.mxu0
        %v2915 = vadd.f32 %v2901, %v2914
        %v2916 = vpop.f32.mrf.mxu0
        %v2917 = vadd.f32 %v2903, %v2916
        %2918 = vdwg.mxu0
        %2919 = vmatpush.bf16.msra.mxu0 0
        %2920 = vmatpush.bf16.msra.mxu0 0
        %2921 = vmatpush.bf16.msra.mxu0 0
        %2922 = vmatpush.bf16.msra.mxu0 0
        %2923 = vmatpush.bf16.msra.mxu0 0
        %2924 = vmatpush.bf16.msra.mxu0 0
        %2925 = vmatpush.bf16.msra.mxu0 %v2452
        %2926 = vmatpush.bf16.msra.mxu0 %v2442
        %2927 = vmatmul.bf16.gmra.mxu0 %v2637
        %v2928 = vpop.f32.mrf.mxu0
        %v2929 = vadd.f32 %v2915, %v2928
        %v2930 = vpop.f32.mrf.mxu0
        %v2931 = vadd.f32 %v2917, %v2930
        %2932 = vdwg.mxu0
        %2933 = vmatpush.bf16.msra.mxu0 %v2353
        %2934 = vmatpush.bf16.msra.mxu0 %v2343
        %2935 = vmatpush.bf16.msra.mxu0 %v2333
        %2936 = vmatpush.bf16.msra.mxu0 %v2323
        %2937 = vmatpush.bf16.msra.mxu0 %v2313
        %2938 = vmatpush.bf16.msra.mxu0 %v2303
        %2939 = vmatpush.bf16.msra.mxu0 %v2293
        %2940 = vmatpush.bf16.msra.mxu0 %v2283
        %2941 = vmatmul.bf16.gmra.mxu0 %v1553
        %v2942 = vpop.f32.mrf.mxu0
        %v2943 = vadd.f32 0.0, %v2942
        %v2944 = vpop.f32.mrf.mxu0
        %v2945 = vadd.f32 0.0, %v2944
        %2946 = vdwg.mxu0
        %2947 = vmatpush.bf16.msra.mxu0 %v2433
        %2948 = vmatpush.bf16.msra.mxu0 %v2423
        %2949 = vmatpush.bf16.msra.mxu0 %v2413
        %2950 = vmatpush.bf16.msra.mxu0 %v2403
        %2951 = vmatpush.bf16.msra.mxu0 %v2393
        %2952 = vmatpush.bf16.msra.mxu0 %v2383
        %2953 = vmatpush.bf16.msra.mxu0 %v2373
        %2954 = vmatpush.bf16.msra.mxu0 %v2363
        %2955 = vmatmul.bf16.gmra.mxu0 %v1554
        %v2956 = vpop.f32.mrf.mxu0
        %v2957 = vadd.f32 %v2943, %v2956
        %v2958 = vpop.f32.mrf.mxu0
        %v2959 = vadd.f32 %v2945, %v2958
        %2960 = vdwg.mxu0
        %2961 = vmatpush.bf16.msra.mxu0 0
        %2962 = vmatpush.bf16.msra.mxu0 0
        %2963 = vmatpush.bf16.msra.mxu0 0
        %2964 = vmatpush.bf16.msra.mxu0 0
        %2965 = vmatpush.bf16.msra.mxu0 0
        %2966 = vmatpush.bf16.msra.mxu0 0
        %2967 = vmatpush.bf16.msra.mxu0 %v2453
        %2968 = vmatpush.bf16.msra.mxu0 %v2443
        %2969 = vmatmul.bf16.gmra.mxu0 %v2637
        %v2970 = vpop.f32.mrf.mxu0
        %v2971 = vadd.f32 %v2957, %v2970
        %v2972 = vpop.f32.mrf.mxu0
        %v2973 = vadd.f32 %v2959, %v2972
        %2974 = vdwg.mxu0
        %2975 = vmatpush.bf16.msra.mxu0 %v2354
        %2976 = vmatpush.bf16.msra.mxu0 %v2344
        %2977 = vmatpush.bf16.msra.mxu0 %v2334
        %2978 = vmatpush.bf16.msra.mxu0 %v2324
        %2979 = vmatpush.bf16.msra.mxu0 %v2314
        %2980 = vmatpush.bf16.msra.mxu0 %v2304
        %2981 = vmatpush.bf16.msra.mxu0 %v2294
        %2982 = vmatpush.bf16.msra.mxu0 %v2284
        %2983 = vmatmul.bf16.gmra.mxu0 %v1553
        %v2984 = vpop.f32.mrf.mxu0
        %v2985 = vadd.f32 0.0, %v2984
        %v2986 = vpop.f32.mrf.mxu0
        %v2987 = vadd.f32 0.0, %v2986
        %2988 = vdwg.mxu0
        %2989 = vmatpush.bf16.msra.mxu0 %v2434
        %2990 = vmatpush.bf16.msra.mxu0 %v2424
        %2991 = vmatpush.bf16.msra.mxu0 %v2414
        %2992 = vmatpush.bf16.msra.mxu0 %v2404
        %2993 = vmatpush.bf16.msra.mxu0 %v2394
        %2994 = vmatpush.bf16.msra.mxu0 %v2384
        %2995 = vmatpush.bf16.msra.mxu0 %v2374
        %2996 = vmatpush.bf16.msra.mxu0 %v2364
        %2997 = vmatmul.bf16.gmra.mxu0 %v1554
        %v2998 = vpop.f32.mrf.mxu0
        %v2999 = vadd.f32 %v2985, %v2998
        %v3000 = vpop.f32.mrf.mxu0
        %v3001 = vadd.f32 %v2987, %v3000
        %3002 = vdwg.mxu0
        %3003 = vmatpush.bf16.msra.mxu0 0
        %3004 = vmatpush.bf16.msra.mxu0 0
        %3005 = vmatpush.bf16.msra.mxu0 0
        %3006 = vmatpush.bf16.msra.mxu0 0
        %3007 = vmatpush.bf16.msra.mxu0 0
        %3008 = vmatpush.bf16.msra.mxu0 0
        %3009 = vmatpush.bf16.msra.mxu0 %v2454
        %3010 = vmatpush.bf16.msra.mxu0 %v2444
        %3011 = vmatmul.bf16.gmra.mxu0 %v2637
        %v3012 = vpop.f32.mrf.mxu0
        %v3013 = vadd.f32 %v2999, %v3012
        %v3014 = vpop.f32.mrf.mxu0
        %v3015 = vadd.f32 %v3001, %v3014
        %3016 = vdwg.mxu0
        %3017 = vmatpush.bf16.msra.mxu0 %v2355
        %3018 = vmatpush.bf16.msra.mxu0 %v2345
        %3019 = vmatpush.bf16.msra.mxu0 %v2335
        %3020 = vmatpush.bf16.msra.mxu0 %v2325
        %3021 = vmatpush.bf16.msra.mxu0 %v2315
        %3022 = vmatpush.bf16.msra.mxu0 %v2305
        %3023 = vmatpush.bf16.msra.mxu0 %v2295
        %3024 = vmatpush.bf16.msra.mxu0 %v2285
        %3025 = vmatmul.bf16.gmra.mxu0 %v1553
        %v3026 = vpop.f32.mrf.mxu0
        %v3027 = vadd.f32 0.0, %v3026
        %v3028 = vpop.f32.mrf.mxu0
        %v3029 = vadd.f32 0.0, %v3028
        %3030 = vdwg.mxu0
        %3031 = vmatpush.bf16.msra.mxu0 %v2435
        %3032 = vmatpush.bf16.msra.mxu0 %v2425
        %3033 = vmatpush.bf16.msra.mxu0 %v2415
        %3034 = vmatpush.bf16.msra.mxu0 %v2405
        %3035 = vmatpush.bf16.msra.mxu0 %v2395
        %3036 = vmatpush.bf16.msra.mxu0 %v2385
        %3037 = vmatpush.bf16.msra.mxu0 %v2375
        %3038 = vmatpush.bf16.msra.mxu0 %v2365
        %3039 = vmatmul.bf16.gmra.mxu0 %v1554
        %v3040 = vpop.f32.mrf.mxu0
        %v3041 = vadd.f32 %v3027, %v3040
        %v3042 = vpop.f32.mrf.mxu0
        %v3043 = vadd.f32 %v3029, %v3042
        %3044 = vdwg.mxu0
        %3045 = vmatpush.bf16.msra.mxu0 0
        %3046 = vmatpush.bf16.msra.mxu0 0
        %3047 = vmatpush.bf16.msra.mxu0 0
        %3048 = vmatpush.bf16.msra.mxu0 0
        %3049 = vmatpush.bf16.msra.mxu0 0
        %3050 = vmatpush.bf16.msra.mxu0 0
        %3051 = vmatpush.bf16.msra.mxu0 %v2455
        %3052 = vmatpush.bf16.msra.mxu0 %v2445
        %3053 = vmatmul.bf16.gmra.mxu0 %v2637
        %v3054 = vpop.f32.mrf.mxu0
        %v3055 = vadd.f32 %v3041, %v3054
        %v3056 = vpop.f32.mrf.mxu0
        %v3057 = vadd.f32 %v3043, %v3056
        %3058 = vdwg.mxu0
        %v3059 = vpack.c.bf16 %v2719, %v2677
        %v3060 = vpack.c.bf16 %v2803, %v2761
        %v3061 = vpack.c.bf16 %v2887, %v2845
        %v3062 = vpack.c.bf16 %v2971, %v2929
        %v3063 = vpack.c.bf16 %v3055, %v3013
        %v3064 = vpack.c.bf16 %v2721, %v2679
        %v3065 = vpack.c.bf16 %v2805, %v2763
        %v3066 = vpack.c.bf16 %v2889, %v2847
        %v3067 = vpack.c.bf16 %v2973, %v2931
        %v3068 = vpack.c.bf16 %v3057, %v3015
        %3069 = vst [vmem:[#allocation3] sm:$0xff] %v3059
        %3070 = vst [vmem:[#allocation3 + $0x8] sm:$0xff] %v3060
        %3071 = vst [vmem:[#allocation3 + $0x10] sm:$0xff] %v3061
        %3072 = vst [vmem:[#allocation3 + $0x18] sm:$0xff] %v3062
        %3073 = vst [vmem:[#allocation3 + $0x20] sm:$0xff] %v3063
        %3074 = vst [vmem:[#allocation3 + $0x28] sm:$0xff] %v3064
        %3075 = vst [vmem:[#allocation3 + $0x30] sm:$0xff] %v3065
        %3076 = vst [vmem:[#allocation3 + $0x38] sm:$0xff] %v3066
        %3077 = vst [vmem:[#allocation3 + $0x40] sm:$0xff] %v3067
        %3078 = vst [vmem:[#allocation3 + $0x48] sm:$0xff] %v3068
        %v3079 = vld [vmem:[#allocation3] sm:$0xff]
        %v3080 = vld [vmem:[#allocation3 + $0x8] sm:$0xff]
        %v3081 = vld [vmem:[#allocation3 + $0x10] sm:$0xff]
        %v3082 = vld [vmem:[#allocation3 + $0x18] sm:$0xff]
        %v3083 = vld [vmem:[#allocation3 + $0x20] sm:$0xf]
        %v3084 = vld [vmem:[#allocation3 + $0x28] sm:$0xff]
        %v3085 = vld [vmem:[#allocation3 + $0x30] sm:$0xff]
        %v3086 = vld [vmem:[#allocation3 + $0x38] sm:$0xff]
        %v3087 = vld [vmem:[#allocation3 + $0x40] sm:$0xff]
        %v3088 = vld [vmem:[#allocation3 + $0x48] sm:$0xf]
        %v3089 = vld [vmem:[#allocation8] sm:$0xf]
        %v3090 = vld [vmem:[#allocation8 + $0x4] sm:$0xf]
        %s3091 = scalar_lea.vmem [#allocation8], 8
        %v3092 = vld [vmem:[%s3091] sm:$0xf]
        %v3093 = vld [vmem:[%s3091 + $0x4] sm:$0xf]
        %v3096 = vunpack.c.l.b16 %v3092
        %v3097 = vunpack.c.l.b16 %v3093
        %v3098 = vpack.c.b16 %v3097, %v3096
        %v3109 = vunpack.c.l.b16 %v3079
        %v3110 = vunpack.c.h.b16 %v3079
        %v3111 = vunpack.c.l.b16 %v3080
        %v3112 = vunpack.c.h.b16 %v3080
        %v3113 = vunpack.c.l.b16 %v3081
        %v3114 = vunpack.c.h.b16 %v3081
        %v3115 = vunpack.c.l.b16 %v3082
        %v3116 = vunpack.c.h.b16 %v3082
        %v3117 = vunpack.c.l.b16 %v3083
        %v3118 = vunpack.c.l.b16 %v3084
        %v3119 = vunpack.c.h.b16 %v3084
        %v3120 = vunpack.c.l.b16 %v3085
        %v3121 = vunpack.c.h.b16 %v3085
        %v3122 = vunpack.c.l.b16 %v3086
        %v3123 = vunpack.c.h.b16 %v3086
        %v3124 = vunpack.c.l.b16 %v3087
        %v3125 = vunpack.c.h.b16 %v3087
        %v3126 = vunpack.c.l.b16 %v3088
        %v3127 = vpack.c.b16 %v3118, %v3109
        %v3128 = vpack.c.b16 %v3119, %v3110
        %v3129 = vpack.c.b16 %v3120, %v3111
        %v3130 = vpack.c.b16 %v3121, %v3112
        %v3131 = vpack.c.b16 %v3122, %v3113
        %v3132 = vpack.c.b16 %v3123, %v3114
        %v3133 = vpack.c.b16 %v3124, %v3115
        %v3134 = vpack.c.b16 %v3125, %v3116
        %v3135 = vpack.c.b16 %v3126, %v3117
        %3136 = vrot.lane.b32.xlu0 %v3127, 127
        %v3137 = vpop.permute.xlu0 %3136
        %3138 = vrot.lane.b32.xlu0 %v3128, 127
        %v3139 = vpop.permute.xlu0 %3138
        %3140 = vrot.lane.b32.xlu0 %v3129, 127
        %v3141 = vpop.permute.xlu0 %3140
        %3142 = vrot.lane.b32.xlu0 %v3130, 127
        %v3143 = vpop.permute.xlu0 %3142
        %3144 = vrot.lane.b32.xlu0 %v3131, 127
        %v3145 = vpop.permute.xlu0 %3144
        %3146 = vrot.lane.b32.xlu0 %v3132, 127
        %v3147 = vpop.permute.xlu0 %3146
        %3148 = vrot.lane.b32.xlu0 %v3133, 127
        %v3149 = vpop.permute.xlu0 %3148
        %3150 = vrot.lane.b32.xlu0 %v3134, 127
        %v3151 = vpop.permute.xlu0 %3150
        %3152 = vrot.lane.b32.xlu0 %v3135, 127
        %v3153 = vpop.permute.xlu0 %3152
        %v3154 = vsel %vm670, %v3137, %v3139
        %v3155 = vsel %vm670, %v3139, %v3141
        %v3156 = vsel %vm670, %v3141, %v3143
        %v3157 = vsel %vm670, %v3143, %v3145
        %v3158 = vsel %vm670, %v3145, %v3147
        %v3159 = vsel %vm670, %v3147, %v3149
        %v3160 = vsel %vm670, %v3149, %v3151
        %v3161 = vsel %vm670, %v3151, %v3153
        %v3172 = vsel %vm676, %v3098, 0
        %3174 = vmatpush.bf16.msra.mxu0 0
        %3175 = vmatpush.bf16.msra.mxu0 0
        %3176 = vmatpush.bf16.msra.mxu0 0
        %3177 = vmatpush.bf16.msra.mxu0 0
        %3178 = vmatpush.bf16.msra.mxu0 0
        %3179 = vmatpush.bf16.msra.mxu0 0
        %3180 = vmatpush.bf16.msra.mxu0 0
        %3181 = vmatpush.bf16.msra.mxu0 %v3154
        %3182 = vmatmul.bf16.gmra.mxu0 %v3172
        %v3183 = vpop.f32.mrf.mxu0
        %v3184 = vadd.f32 0.0, %v3183
        %v3185 = vpop.f32.mrf.mxu0
        %v3186 = vadd.f32 0.0, %v3185
        %3187 = vdwg.mxu0
        %3188 = vmatpush.bf16.msra.mxu0 0
        %3189 = vmatpush.bf16.msra.mxu0 0
        %3190 = vmatpush.bf16.msra.mxu0 0
        %3191 = vmatpush.bf16.msra.mxu0 0
        %3192 = vmatpush.bf16.msra.mxu0 0
        %3193 = vmatpush.bf16.msra.mxu0 0
        %3194 = vmatpush.bf16.msra.mxu0 0
        %3195 = vmatpush.bf16.msra.mxu0 %v3155
        %3196 = vmatmul.bf16.gmra.mxu0 %v3172
        %v3197 = vpop.f32.mrf.mxu0
        %v3198 = vadd.f32 0.0, %v3197
        %v3199 = vpop.f32.mrf.mxu0
        %v3200 = vadd.f32 0.0, %v3199
        %3201 = vdwg.mxu0
        %3202 = vmatpush.bf16.msra.mxu0 0
        %3203 = vmatpush.bf16.msra.mxu0 0
        %3204 = vmatpush.bf16.msra.mxu0 0
        %3205 = vmatpush.bf16.msra.mxu0 0
        %3206 = vmatpush.bf16.msra.mxu0 0
        %3207 = vmatpush.bf16.msra.mxu0 0
        %3208 = vmatpush.bf16.msra.mxu0 0
        %3209 = vmatpush.bf16.msra.mxu0 %v3156
        %3210 = vmatmul.bf16.gmra.mxu0 %v3172
        %v3211 = vpop.f32.mrf.mxu0
        %v3212 = vadd.f32 0.0, %v3211
        %v3213 = vpop.f32.mrf.mxu0
        %v3214 = vadd.f32 0.0, %v3213
        %3215 = vdwg.mxu0
        %3216 = vmatpush.bf16.msra.mxu0 0
        %3217 = vmatpush.bf16.msra.mxu0 0
        %3218 = vmatpush.bf16.msra.mxu0 0
        %3219 = vmatpush.bf16.msra.mxu0 0
        %3220 = vmatpush.bf16.msra.mxu0 0
        %3221 = vmatpush.bf16.msra.mxu0 0
        %3222 = vmatpush.bf16.msra.mxu0 0
        %3223 = vmatpush.bf16.msra.mxu0 %v3157
        %3224 = vmatmul.bf16.gmra.mxu0 %v3172
        %v3225 = vpop.f32.mrf.mxu0
        %v3226 = vadd.f32 0.0, %v3225
        %v3227 = vpop.f32.mrf.mxu0
        %v3228 = vadd.f32 0.0, %v3227
        %3229 = vdwg.mxu0
        %3230 = vmatpush.bf16.msra.mxu0 0
        %3231 = vmatpush.bf16.msra.mxu0 0
        %3232 = vmatpush.bf16.msra.mxu0 0
        %3233 = vmatpush.bf16.msra.mxu0 0
        %3234 = vmatpush.bf16.msra.mxu0 0
        %3235 = vmatpush.bf16.msra.mxu0 0
        %3236 = vmatpush.bf16.msra.mxu0 0
        %3237 = vmatpush.bf16.msra.mxu0 %v3158
        %3238 = vmatmul.bf16.gmra.mxu0 %v3172
        %v3239 = vpop.f32.mrf.mxu0
        %v3240 = vadd.f32 0.0, %v3239
        %v3241 = vpop.f32.mrf.mxu0
        %v3242 = vadd.f32 0.0, %v3241
        %3243 = vdwg.mxu0
        %3244 = vmatpush.bf16.msra.mxu0 0
        %3245 = vmatpush.bf16.msra.mxu0 0
        %3246 = vmatpush.bf16.msra.mxu0 0
        %3247 = vmatpush.bf16.msra.mxu0 0
        %3248 = vmatpush.bf16.msra.mxu0 0
        %3249 = vmatpush.bf16.msra.mxu0 0
        %3250 = vmatpush.bf16.msra.mxu0 0
        %3251 = vmatpush.bf16.msra.mxu0 %v3159
        %3252 = vmatmul.bf16.gmra.mxu0 %v3172
        %v3253 = vpop.f32.mrf.mxu0
        %v3254 = vadd.f32 0.0, %v3253
        %v3255 = vpop.f32.mrf.mxu0
        %v3256 = vadd.f32 0.0, %v3255
        %3257 = vdwg.mxu0
        %3258 = vmatpush.bf16.msra.mxu0 0
        %3259 = vmatpush.bf16.msra.mxu0 0
        %3260 = vmatpush.bf16.msra.mxu0 0
        %3261 = vmatpush.bf16.msra.mxu0 0
        %3262 = vmatpush.bf16.msra.mxu0 0
        %3263 = vmatpush.bf16.msra.mxu0 0
        %3264 = vmatpush.bf16.msra.mxu0 0
        %3265 = vmatpush.bf16.msra.mxu0 %v3160
        %3266 = vmatmul.bf16.gmra.mxu0 %v3172
        %v3267 = vpop.f32.mrf.mxu0
        %v3268 = vadd.f32 0.0, %v3267
        %v3269 = vpop.f32.mrf.mxu0
        %v3270 = vadd.f32 0.0, %v3269
        %3271 = vdwg.mxu0
        %3272 = vmatpush.bf16.msra.mxu0 0
        %3273 = vmatpush.bf16.msra.mxu0 0
        %3274 = vmatpush.bf16.msra.mxu0 0
        %3275 = vmatpush.bf16.msra.mxu0 0
        %3276 = vmatpush.bf16.msra.mxu0 0
        %3277 = vmatpush.bf16.msra.mxu0 0
        %3278 = vmatpush.bf16.msra.mxu0 0
        %3279 = vmatpush.bf16.msra.mxu0 %v3161
        %3280 = vmatmul.bf16.gmra.mxu0 %v3172
        %v3281 = vpop.f32.mrf.mxu0
        %v3282 = vadd.f32 0.0, %v3281
        %v3283 = vpop.f32.mrf.mxu0
        %v3284 = vadd.f32 0.0, %v3283
        %3285 = vdwg.mxu0
        %3286 = vmatpush.bf16.msra.mxu0 0
        %3287 = vmatpush.bf16.msra.mxu0 0
        %3288 = vmatpush.bf16.msra.mxu0 0
        %3289 = vmatpush.bf16.msra.mxu0 0
        %3290 = vmatpush.bf16.msra.mxu0 0
        %3291 = vmatpush.bf16.msra.mxu0 0
        %3292 = vmatpush.bf16.msra.mxu0 0
        %3293 = vmatpush.bf16.msra.mxu0 %v3153
        %3294 = vmatmul.bf16.gmra.mxu0 %v3172
        %v3295 = vpop.f32.mrf.mxu0
        %v3296 = vadd.f32 0.0, %v3295
        %v3297 = vpop.f32.mrf.mxu0
        %v3298 = vadd.f32 0.0, %v3297
        %3299 = vdwg.mxu0
        %v3302 = vunpack.c.l.b16 %v3089
        %v3303 = vunpack.c.l.b16 %v3090
        %v3304 = vpack.c.b16 %v3303, %v3302
        %v3315 = vsel %vm676, %v3304, 0
        %3317 = vmatpush.bf16.msra.mxu0 0
        %3318 = vmatpush.bf16.msra.mxu0 0
        %3319 = vmatpush.bf16.msra.mxu0 0
        %3320 = vmatpush.bf16.msra.mxu0 0
        %3321 = vmatpush.bf16.msra.mxu0 0
        %3322 = vmatpush.bf16.msra.mxu0 0
        %3323 = vmatpush.bf16.msra.mxu0 0
        %3324 = vmatpush.bf16.msra.mxu0 %v3127
        %3325 = vmatmul.bf16.gmra.mxu0 %v3315
        %v3326 = vpop.f32.mrf.mxu0
        %v3327 = vadd.f32 %v3184, %v3326
        %v3328 = vpop.f32.mrf.mxu0
        %v3329 = vadd.f32 %v3186, %v3328
        %3330 = vdwg.mxu0
        %3331 = vmatpush.bf16.msra.mxu0 0
        %3332 = vmatpush.bf16.msra.mxu0 0
        %3333 = vmatpush.bf16.msra.mxu0 0
        %3334 = vmatpush.bf16.msra.mxu0 0
        %3335 = vmatpush.bf16.msra.mxu0 0
        %3336 = vmatpush.bf16.msra.mxu0 0
        %3337 = vmatpush.bf16.msra.mxu0 0
        %3338 = vmatpush.bf16.msra.mxu0 %v3128
        %3339 = vmatmul.bf16.gmra.mxu0 %v3315
        %v3340 = vpop.f32.mrf.mxu0
        %v3341 = vadd.f32 %v3198, %v3340
        %v3342 = vpop.f32.mrf.mxu0
        %v3343 = vadd.f32 %v3200, %v3342
        %3344 = vdwg.mxu0
        %3345 = vmatpush.bf16.msra.mxu0 0
        %3346 = vmatpush.bf16.msra.mxu0 0
        %3347 = vmatpush.bf16.msra.mxu0 0
        %3348 = vmatpush.bf16.msra.mxu0 0
        %3349 = vmatpush.bf16.msra.mxu0 0
        %3350 = vmatpush.bf16.msra.mxu0 0
        %3351 = vmatpush.bf16.msra.mxu0 0
        %3352 = vmatpush.bf16.msra.mxu0 %v3129
        %3353 = vmatmul.bf16.gmra.mxu0 %v3315
        %v3354 = vpop.f32.mrf.mxu0
        %v3355 = vadd.f32 %v3212, %v3354
        %v3356 = vpop.f32.mrf.mxu0
        %v3357 = vadd.f32 %v3214, %v3356
        %3358 = vdwg.mxu0
        %3359 = vmatpush.bf16.msra.mxu0 0
        %3360 = vmatpush.bf16.msra.mxu0 0
        %3361 = vmatpush.bf16.msra.mxu0 0
        %3362 = vmatpush.bf16.msra.mxu0 0
        %3363 = vmatpush.bf16.msra.mxu0 0
        %3364 = vmatpush.bf16.msra.mxu0 0
        %3365 = vmatpush.bf16.msra.mxu0 0
        %3366 = vmatpush.bf16.msra.mxu0 %v3130
        %3367 = vmatmul.bf16.gmra.mxu0 %v3315
        %v3368 = vpop.f32.mrf.mxu0
        %v3369 = vadd.f32 %v3226, %v3368
        %v3370 = vpop.f32.mrf.mxu0
        %v3371 = vadd.f32 %v3228, %v3370
        %3372 = vdwg.mxu0
        %3373 = vmatpush.bf16.msra.mxu0 0
        %3374 = vmatpush.bf16.msra.mxu0 0
        %3375 = vmatpush.bf16.msra.mxu0 0
        %3376 = vmatpush.bf16.msra.mxu0 0
        %3377 = vmatpush.bf16.msra.mxu0 0
        %3378 = vmatpush.bf16.msra.mxu0 0
        %3379 = vmatpush.bf16.msra.mxu0 0
        %3380 = vmatpush.bf16.msra.mxu0 %v3131
        %3381 = vmatmul.bf16.gmra.mxu0 %v3315
        %v3382 = vpop.f32.mrf.mxu0
        %v3383 = vadd.f32 %v3240, %v3382
        %v3384 = vpop.f32.mrf.mxu0
        %v3385 = vadd.f32 %v3242, %v3384
        %3386 = vdwg.mxu0
        %3387 = vmatpush.bf16.msra.mxu0 0
        %3388 = vmatpush.bf16.msra.mxu0 0
        %3389 = vmatpush.bf16.msra.mxu0 0
        %3390 = vmatpush.bf16.msra.mxu0 0
        %3391 = vmatpush.bf16.msra.mxu0 0
        %3392 = vmatpush.bf16.msra.mxu0 0
        %3393 = vmatpush.bf16.msra.mxu0 0
        %3394 = vmatpush.bf16.msra.mxu0 %v3132
        %3395 = vmatmul.bf16.gmra.mxu0 %v3315
        %v3396 = vpop.f32.mrf.mxu0
        %v3397 = vadd.f32 %v3254, %v3396
        %v3398 = vpop.f32.mrf.mxu0
        %v3399 = vadd.f32 %v3256, %v3398
        %3400 = vdwg.mxu0
        %3401 = vmatpush.bf16.msra.mxu0 0
        %3402 = vmatpush.bf16.msra.mxu0 0
        %3403 = vmatpush.bf16.msra.mxu0 0
        %3404 = vmatpush.bf16.msra.mxu0 0
        %3405 = vmatpush.bf16.msra.mxu0 0
        %3406 = vmatpush.bf16.msra.mxu0 0
        %3407 = vmatpush.bf16.msra.mxu0 0
        %3408 = vmatpush.bf16.msra.mxu0 %v3133
        %3409 = vmatmul.bf16.gmra.mxu0 %v3315
        %v3410 = vpop.f32.mrf.mxu0
        %v3411 = vadd.f32 %v3268, %v3410
        %v3412 = vpop.f32.mrf.mxu0
        %v3413 = vadd.f32 %v3270, %v3412
        %3414 = vdwg.mxu0
        %3415 = vmatpush.bf16.msra.mxu0 0
        %3416 = vmatpush.bf16.msra.mxu0 0
        %3417 = vmatpush.bf16.msra.mxu0 0
        %3418 = vmatpush.bf16.msra.mxu0 0
        %3419 = vmatpush.bf16.msra.mxu0 0
        %3420 = vmatpush.bf16.msra.mxu0 0
        %3421 = vmatpush.bf16.msra.mxu0 0
        %3422 = vmatpush.bf16.msra.mxu0 %v3134
        %3423 = vmatmul.bf16.gmra.mxu0 %v3315
        %v3424 = vpop.f32.mrf.mxu0
        %v3425 = vadd.f32 %v3282, %v3424
        %v3426 = vpop.f32.mrf.mxu0
        %v3427 = vadd.f32 %v3284, %v3426
        %3428 = vdwg.mxu0
        %3429 = vmatpush.bf16.msra.mxu0 0
        %3430 = vmatpush.bf16.msra.mxu0 0
        %3431 = vmatpush.bf16.msra.mxu0 0
        %3432 = vmatpush.bf16.msra.mxu0 0
        %3433 = vmatpush.bf16.msra.mxu0 0
        %3434 = vmatpush.bf16.msra.mxu0 0
        %3435 = vmatpush.bf16.msra.mxu0 0
        %3436 = vmatpush.bf16.msra.mxu0 %v3135
        %3437 = vmatmul.bf16.gmra.mxu0 %v3315
        %v3438 = vpop.f32.mrf.mxu0
        %v3439 = vadd.f32 %v3296, %v3438
        %v3440 = vpop.f32.mrf.mxu0
        %v3441 = vadd.f32 %v3298, %v3440
        %3442 = vdwg.mxu0
        %s3443 = scalar_lea.vmem [#allocation8], 16
        %v3444 = vld [vmem:[%s3443] sm:$0xf]
        %v3445 = vld [vmem:[%s3443 + $0x4] sm:$0xf]
        %v3448 = vunpack.c.l.b16 %v3444
        %v3449 = vunpack.c.l.b16 %v3445
        %v3450 = vpack.c.b16 %v3449, %v3448
        %3451 = vrot.lane.b32.xlu0 %v3127, 126
        %v3452 = vpop.permute.xlu0 %3451
        %3453 = vrot.lane.b32.xlu0 %v3128, 126
        %v3454 = vpop.permute.xlu0 %3453
        %3455 = vrot.lane.b32.xlu0 %v3129, 126
        %v3456 = vpop.permute.xlu0 %3455
        %3457 = vrot.lane.b32.xlu0 %v3130, 126
        %v3458 = vpop.permute.xlu0 %3457
        %3459 = vrot.lane.b32.xlu0 %v3131, 126
        %v3460 = vpop.permute.xlu0 %3459
        %3461 = vrot.lane.b32.xlu0 %v3132, 126
        %v3462 = vpop.permute.xlu0 %3461
        %3463 = vrot.lane.b32.xlu0 %v3133, 126
        %v3464 = vpop.permute.xlu0 %3463
        %3465 = vrot.lane.b32.xlu0 %v3134, 126
        %v3466 = vpop.permute.xlu0 %3465
        %3467 = vrot.lane.b32.xlu0 %v3135, 126
        %v3468 = vpop.permute.xlu0 %3467
        %v3469 = vsel %vm789, %v3452, %v3454
        %v3470 = vsel %vm789, %v3454, %v3456
        %v3471 = vsel %vm789, %v3456, %v3458
        %v3472 = vsel %vm789, %v3458, %v3460
        %v3473 = vsel %vm789, %v3460, %v3462
        %v3474 = vsel %vm789, %v3462, %v3464
        %v3475 = vsel %vm789, %v3464, %v3466
        %v3476 = vsel %vm789, %v3466, %v3468
        %v3487 = vsel %vm676, %v3450, 0
        %3489 = vmatpush.bf16.msra.mxu0 0
        %3490 = vmatpush.bf16.msra.mxu0 0
        %3491 = vmatpush.bf16.msra.mxu0 0
        %3492 = vmatpush.bf16.msra.mxu0 0
        %3493 = vmatpush.bf16.msra.mxu0 0
        %3494 = vmatpush.bf16.msra.mxu0 0
        %3495 = vmatpush.bf16.msra.mxu0 0
        %3496 = vmatpush.bf16.msra.mxu0 %v3469
        %3497 = vmatmul.bf16.gmra.mxu0 %v3487
        %v3498 = vpop.f32.mrf.mxu0
        %v3499 = vadd.f32 0.0, %v3498
        %v3500 = vpop.f32.mrf.mxu0
        %v3501 = vadd.f32 0.0, %v3500
        %3502 = vdwg.mxu0
        %3503 = vmatpush.bf16.msra.mxu0 0
        %3504 = vmatpush.bf16.msra.mxu0 0
        %3505 = vmatpush.bf16.msra.mxu0 0
        %3506 = vmatpush.bf16.msra.mxu0 0
        %3507 = vmatpush.bf16.msra.mxu0 0
        %3508 = vmatpush.bf16.msra.mxu0 0
        %3509 = vmatpush.bf16.msra.mxu0 0
        %3510 = vmatpush.bf16.msra.mxu0 %v3470
        %3511 = vmatmul.bf16.gmra.mxu0 %v3487
        %v3512 = vpop.f32.mrf.mxu0
        %v3513 = vadd.f32 0.0, %v3512
        %v3514 = vpop.f32.mrf.mxu0
        %v3515 = vadd.f32 0.0, %v3514
        %3516 = vdwg.mxu0
        %3517 = vmatpush.bf16.msra.mxu0 0
        %3518 = vmatpush.bf16.msra.mxu0 0
        %3519 = vmatpush.bf16.msra.mxu0 0
        %3520 = vmatpush.bf16.msra.mxu0 0
        %3521 = vmatpush.bf16.msra.mxu0 0
        %3522 = vmatpush.bf16.msra.mxu0 0
        %3523 = vmatpush.bf16.msra.mxu0 0
        %3524 = vmatpush.bf16.msra.mxu0 %v3471
        %3525 = vmatmul.bf16.gmra.mxu0 %v3487
        %v3526 = vpop.f32.mrf.mxu0
        %v3527 = vadd.f32 0.0, %v3526
        %v3528 = vpop.f32.mrf.mxu0
        %v3529 = vadd.f32 0.0, %v3528
        %3530 = vdwg.mxu0
        %3531 = vmatpush.bf16.msra.mxu0 0
        %3532 = vmatpush.bf16.msra.mxu0 0
        %3533 = vmatpush.bf16.msra.mxu0 0
        %3534 = vmatpush.bf16.msra.mxu0 0
        %3535 = vmatpush.bf16.msra.mxu0 0
        %3536 = vmatpush.bf16.msra.mxu0 0
        %3537 = vmatpush.bf16.msra.mxu0 0
        %3538 = vmatpush.bf16.msra.mxu0 %v3472
        %3539 = vmatmul.bf16.gmra.mxu0 %v3487
        %v3540 = vpop.f32.mrf.mxu0
        %v3541 = vadd.f32 0.0, %v3540
        %v3542 = vpop.f32.mrf.mxu0
        %v3543 = vadd.f32 0.0, %v3542
        %3544 = vdwg.mxu0
        %3545 = vmatpush.bf16.msra.mxu0 0
        %3546 = vmatpush.bf16.msra.mxu0 0
        %3547 = vmatpush.bf16.msra.mxu0 0
        %3548 = vmatpush.bf16.msra.mxu0 0
        %3549 = vmatpush.bf16.msra.mxu0 0
        %3550 = vmatpush.bf16.msra.mxu0 0
        %3551 = vmatpush.bf16.msra.mxu0 0
        %3552 = vmatpush.bf16.msra.mxu0 %v3473
        %3553 = vmatmul.bf16.gmra.mxu0 %v3487
        %v3554 = vpop.f32.mrf.mxu0
        %v3555 = vadd.f32 0.0, %v3554
        %v3556 = vpop.f32.mrf.mxu0
        %v3557 = vadd.f32 0.0, %v3556
        %3558 = vdwg.mxu0
        %3559 = vmatpush.bf16.msra.mxu0 0
        %3560 = vmatpush.bf16.msra.mxu0 0
        %3561 = vmatpush.bf16.msra.mxu0 0
        %3562 = vmatpush.bf16.msra.mxu0 0
        %3563 = vmatpush.bf16.msra.mxu0 0
        %3564 = vmatpush.bf16.msra.mxu0 0
        %3565 = vmatpush.bf16.msra.mxu0 0
        %3566 = vmatpush.bf16.msra.mxu0 %v3474
        %3567 = vmatmul.bf16.gmra.mxu0 %v3487
        %v3568 = vpop.f32.mrf.mxu0
        %v3569 = vadd.f32 0.0, %v3568
        %v3570 = vpop.f32.mrf.mxu0
        %v3571 = vadd.f32 0.0, %v3570
        %3572 = vdwg.mxu0
        %3573 = vmatpush.bf16.msra.mxu0 0
        %3574 = vmatpush.bf16.msra.mxu0 0
        %3575 = vmatpush.bf16.msra.mxu0 0
        %3576 = vmatpush.bf16.msra.mxu0 0
        %3577 = vmatpush.bf16.msra.mxu0 0
        %3578 = vmatpush.bf16.msra.mxu0 0
        %3579 = vmatpush.bf16.msra.mxu0 0
        %3580 = vmatpush.bf16.msra.mxu0 %v3475
        %3581 = vmatmul.bf16.gmra.mxu0 %v3487
        %v3582 = vpop.f32.mrf.mxu0
        %v3583 = vadd.f32 0.0, %v3582
        %v3584 = vpop.f32.mrf.mxu0
        %v3585 = vadd.f32 0.0, %v3584
        %3586 = vdwg.mxu0
        %3587 = vmatpush.bf16.msra.mxu0 0
        %3588 = vmatpush.bf16.msra.mxu0 0
        %3589 = vmatpush.bf16.msra.mxu0 0
        %3590 = vmatpush.bf16.msra.mxu0 0
        %3591 = vmatpush.bf16.msra.mxu0 0
        %3592 = vmatpush.bf16.msra.mxu0 0
        %3593 = vmatpush.bf16.msra.mxu0 0
        %3594 = vmatpush.bf16.msra.mxu0 %v3476
        %3595 = vmatmul.bf16.gmra.mxu0 %v3487
        %v3596 = vpop.f32.mrf.mxu0
        %v3597 = vadd.f32 0.0, %v3596
        %v3598 = vpop.f32.mrf.mxu0
        %v3599 = vadd.f32 0.0, %v3598
        %3600 = vdwg.mxu0
        %3601 = vmatpush.bf16.msra.mxu0 0
        %3602 = vmatpush.bf16.msra.mxu0 0
        %3603 = vmatpush.bf16.msra.mxu0 0
        %3604 = vmatpush.bf16.msra.mxu0 0
        %3605 = vmatpush.bf16.msra.mxu0 0
        %3606 = vmatpush.bf16.msra.mxu0 0
        %3607 = vmatpush.bf16.msra.mxu0 0
        %3608 = vmatpush.bf16.msra.mxu0 %v3468
        %3609 = vmatmul.bf16.gmra.mxu0 %v3487
        %v3610 = vpop.f32.mrf.mxu0
        %v3611 = vadd.f32 0.0, %v3610
        %v3612 = vpop.f32.mrf.mxu0
        %v3613 = vadd.f32 0.0, %v3612
        %3614 = vdwg.mxu0
        %v3615 = vadd.f32 %v3327, %v3499
        %v3616 = vadd.f32 %v3341, %v3513
        %v3617 = vadd.f32 %v3355, %v3527
        %v3618 = vadd.f32 %v3369, %v3541
        %v3619 = vadd.f32 %v3383, %v3555
        %v3620 = vadd.f32 %v3397, %v3569
        %v3621 = vadd.f32 %v3411, %v3583
        %v3622 = vadd.f32 %v3425, %v3597
        %v3623 = vadd.f32 %v3439, %v3611
        %v3624 = vadd.f32 %v3329, %v3501
        %v3625 = vadd.f32 %v3343, %v3515
        %v3626 = vadd.f32 %v3357, %v3529
        %v3627 = vadd.f32 %v3371, %v3543
        %v3628 = vadd.f32 %v3385, %v3557
        %v3629 = vadd.f32 %v3399, %v3571
        %v3630 = vadd.f32 %v3413, %v3585
        %v3631 = vadd.f32 %v3427, %v3599
        %v3632 = vadd.f32 %v3441, %v3613
        %s3633 = scalar_lea.vmem [#allocation8], 24
        %v3634 = vld [vmem:[%s3633] sm:$0xf]
        %v3635 = vld [vmem:[%s3633 + $0x4] sm:$0xf]
        %v3638 = vunpack.c.l.b16 %v3634
        %v3639 = vunpack.c.l.b16 %v3635
        %v3640 = vpack.c.b16 %v3639, %v3638
        %3641 = vrot.lane.b32.xlu0 %v3127, 94
        %v3642 = vpop.permute.xlu0 %3641
        %3643 = vrot.lane.b32.xlu0 %v3128, 94
        %v3644 = vpop.permute.xlu0 %3643
        %3645 = vrot.lane.b32.xlu0 %v3129, 94
        %v3646 = vpop.permute.xlu0 %3645
        %3647 = vrot.lane.b32.xlu0 %v3130, 94
        %v3648 = vpop.permute.xlu0 %3647
        %3649 = vrot.lane.b32.xlu0 %v3131, 94
        %v3650 = vpop.permute.xlu0 %3649
        %3651 = vrot.lane.b32.xlu0 %v3132, 94
        %v3652 = vpop.permute.xlu0 %3651
        %3653 = vrot.lane.b32.xlu0 %v3133, 94
        %v3654 = vpop.permute.xlu0 %3653
        %3655 = vrot.lane.b32.xlu0 %v3134, 94
        %v3656 = vpop.permute.xlu0 %3655
        %3657 = vrot.lane.b32.xlu0 %v3135, 94
        %v3658 = vpop.permute.xlu0 %3657
        %vm3659 = vcmask 769024
        %v3660 = vsel %vm3659, %v3642, %v3644
        %v3661 = vsel %vm3659, %v3644, %v3646
        %v3662 = vsel %vm3659, %v3646, %v3648
        %v3663 = vsel %vm3659, %v3648, %v3650
        %v3664 = vsel %vm3659, %v3650, %v3652
        %v3665 = vsel %vm3659, %v3652, %v3654
        %v3666 = vsel %vm3659, %v3654, %v3656
        %v3667 = vsel %vm3659, %v3656, %v3658
        %v3678 = vsel %vm676, %v3640, 0
        %3680 = vmatpush.bf16.msra.mxu0 0
        %3681 = vmatpush.bf16.msra.mxu0 0
        %3682 = vmatpush.bf16.msra.mxu0 0
        %3683 = vmatpush.bf16.msra.mxu0 0
        %3684 = vmatpush.bf16.msra.mxu0 0
        %3685 = vmatpush.bf16.msra.mxu0 0
        %3686 = vmatpush.bf16.msra.mxu0 0
        %3687 = vmatpush.bf16.msra.mxu0 %v3660
        %3688 = vmatmul.bf16.gmra.mxu0 %v3678
        %v3689 = vpop.f32.mrf.mxu0
        %v3690 = vadd.f32 0.0, %v3689
        %v3691 = vpop.f32.mrf.mxu0
        %v3692 = vadd.f32 0.0, %v3691
        %3693 = vdwg.mxu0
        %3694 = vmatpush.bf16.msra.mxu0 0
        %3695 = vmatpush.bf16.msra.mxu0 0
        %3696 = vmatpush.bf16.msra.mxu0 0
        %3697 = vmatpush.bf16.msra.mxu0 0
        %3698 = vmatpush.bf16.msra.mxu0 0
        %3699 = vmatpush.bf16.msra.mxu0 0
        %3700 = vmatpush.bf16.msra.mxu0 0
        %3701 = vmatpush.bf16.msra.mxu0 %v3661
        %3702 = vmatmul.bf16.gmra.mxu0 %v3678
        %v3703 = vpop.f32.mrf.mxu0
        %v3704 = vadd.f32 0.0, %v3703
        %v3705 = vpop.f32.mrf.mxu0
        %v3706 = vadd.f32 0.0, %v3705
        %3707 = vdwg.mxu0
        %3708 = vmatpush.bf16.msra.mxu0 0
        %3709 = vmatpush.bf16.msra.mxu0 0
        %3710 = vmatpush.bf16.msra.mxu0 0
        %3711 = vmatpush.bf16.msra.mxu0 0
        %3712 = vmatpush.bf16.msra.mxu0 0
        %3713 = vmatpush.bf16.msra.mxu0 0
        %3714 = vmatpush.bf16.msra.mxu0 0
        %3715 = vmatpush.bf16.msra.mxu0 %v3662
        %3716 = vmatmul.bf16.gmra.mxu0 %v3678
        %v3717 = vpop.f32.mrf.mxu0
        %v3718 = vadd.f32 0.0, %v3717
        %v3719 = vpop.f32.mrf.mxu0
        %v3720 = vadd.f32 0.0, %v3719
        %3721 = vdwg.mxu0
        %3722 = vmatpush.bf16.msra.mxu0 0
        %3723 = vmatpush.bf16.msra.mxu0 0
        %3724 = vmatpush.bf16.msra.mxu0 0
        %3725 = vmatpush.bf16.msra.mxu0 0
        %3726 = vmatpush.bf16.msra.mxu0 0
        %3727 = vmatpush.bf16.msra.mxu0 0
        %3728 = vmatpush.bf16.msra.mxu0 0
        %3729 = vmatpush.bf16.msra.mxu0 %v3663
        %3730 = vmatmul.bf16.gmra.mxu0 %v3678
        %v3731 = vpop.f32.mrf.mxu0
        %v3732 = vadd.f32 0.0, %v3731
        %v3733 = vpop.f32.mrf.mxu0
        %v3734 = vadd.f32 0.0, %v3733
        %3735 = vdwg.mxu0
        %3736 = vmatpush.bf16.msra.mxu0 0
        %3737 = vmatpush.bf16.msra.mxu0 0
        %3738 = vmatpush.bf16.msra.mxu0 0
        %3739 = vmatpush.bf16.msra.mxu0 0
        %3740 = vmatpush.bf16.msra.mxu0 0
        %3741 = vmatpush.bf16.msra.mxu0 0
        %3742 = vmatpush.bf16.msra.mxu0 0
        %3743 = vmatpush.bf16.msra.mxu0 %v3664
        %3744 = vmatmul.bf16.gmra.mxu0 %v3678
        %v3745 = vpop.f32.mrf.mxu0
        %v3746 = vadd.f32 0.0, %v3745
        %v3747 = vpop.f32.mrf.mxu0
        %v3748 = vadd.f32 0.0, %v3747
        %3749 = vdwg.mxu0
        %3750 = vmatpush.bf16.msra.mxu0 0
        %3751 = vmatpush.bf16.msra.mxu0 0
        %3752 = vmatpush.bf16.msra.mxu0 0
        %3753 = vmatpush.bf16.msra.mxu0 0
        %3754 = vmatpush.bf16.msra.mxu0 0
        %3755 = vmatpush.bf16.msra.mxu0 0
        %3756 = vmatpush.bf16.msra.mxu0 0
        %3757 = vmatpush.bf16.msra.mxu0 %v3665
        %3758 = vmatmul.bf16.gmra.mxu0 %v3678
        %v3759 = vpop.f32.mrf.mxu0
        %v3760 = vadd.f32 0.0, %v3759
        %v3761 = vpop.f32.mrf.mxu0
        %v3762 = vadd.f32 0.0, %v3761
        %3763 = vdwg.mxu0
        %3764 = vmatpush.bf16.msra.mxu0 0
        %3765 = vmatpush.bf16.msra.mxu0 0
        %3766 = vmatpush.bf16.msra.mxu0 0
        %3767 = vmatpush.bf16.msra.mxu0 0
        %3768 = vmatpush.bf16.msra.mxu0 0
        %3769 = vmatpush.bf16.msra.mxu0 0
        %3770 = vmatpush.bf16.msra.mxu0 0
        %3771 = vmatpush.bf16.msra.mxu0 %v3666
        %3772 = vmatmul.bf16.gmra.mxu0 %v3678
        %v3773 = vpop.f32.mrf.mxu0
        %v3774 = vadd.f32 0.0, %v3773
        %v3775 = vpop.f32.mrf.mxu0
        %v3776 = vadd.f32 0.0, %v3775
        %3777 = vdwg.mxu0
        %3778 = vmatpush.bf16.msra.mxu0 0
        %3779 = vmatpush.bf16.msra.mxu0 0
        %3780 = vmatpush.bf16.msra.mxu0 0
        %3781 = vmatpush.bf16.msra.mxu0 0
        %3782 = vmatpush.bf16.msra.mxu0 0
        %3783 = vmatpush.bf16.msra.mxu0 0
        %3784 = vmatpush.bf16.msra.mxu0 0
        %3785 = vmatpush.bf16.msra.mxu0 %v3667
        %3786 = vmatmul.bf16.gmra.mxu0 %v3678
        %v3787 = vpop.f32.mrf.mxu0
        %v3788 = vadd.f32 0.0, %v3787
        %v3789 = vpop.f32.mrf.mxu0
        %v3790 = vadd.f32 0.0, %v3789
        %3791 = vdwg.mxu0
        %3792 = vmatpush.bf16.msra.mxu0 0
        %3793 = vmatpush.bf16.msra.mxu0 0
        %3794 = vmatpush.bf16.msra.mxu0 0
        %3795 = vmatpush.bf16.msra.mxu0 0
        %3796 = vmatpush.bf16.msra.mxu0 0
        %3797 = vmatpush.bf16.msra.mxu0 0
        %3798 = vmatpush.bf16.msra.mxu0 0
        %3799 = vmatpush.bf16.msra.mxu0 %v3658
        %3800 = vmatmul.bf16.gmra.mxu0 %v3678
        %v3801 = vpop.f32.mrf.mxu0
        %v3802 = vadd.f32 0.0, %v3801
        %v3803 = vpop.f32.mrf.mxu0
        %v3804 = vadd.f32 0.0, %v3803
        %3805 = vdwg.mxu0
        %v3806 = vadd.f32 %v3615, %v3690
        %v3807 = vadd.f32 %v3616, %v3704
        %v3808 = vadd.f32 %v3617, %v3718
        %v3809 = vadd.f32 %v3618, %v3732
        %v3810 = vadd.f32 %v3619, %v3746
        %v3811 = vadd.f32 %v3620, %v3760
        %v3812 = vadd.f32 %v3621, %v3774
        %v3813 = vadd.f32 %v3622, %v3788
        %v3814 = vadd.f32 %v3623, %v3802
        %v3815 = vadd.f32 %v3624, %v3692
        %v3816 = vadd.f32 %v3625, %v3706
        %v3817 = vadd.f32 %v3626, %v3720
        %v3818 = vadd.f32 %v3627, %v3734
        %v3819 = vadd.f32 %v3628, %v3748
        %v3820 = vadd.f32 %v3629, %v3762
        %v3821 = vadd.f32 %v3630, %v3776
        %v3822 = vadd.f32 %v3631, %v3790
        %v3823 = vadd.f32 %v3632, %v3804
        %s3824 = scalar_lea.vmem [#allocation8], 32
        %v3825 = vld [vmem:[%s3824] sm:$0xf]
        %v3826 = vld [vmem:[%s3824 + $0x4] sm:$0xf]
        %v3829 = vunpack.c.l.b16 %v3825
        %v3830 = vunpack.c.l.b16 %v3826
        %v3831 = vpack.c.b16 %v3830, %v3829
        %3832 = vrot.lane.b32.xlu0 %v3127, 93
        %v3833 = vpop.permute.xlu0 %3832
        %3834 = vrot.lane.b32.xlu0 %v3128, 93
        %v3835 = vpop.permute.xlu0 %3834
        %3836 = vrot.lane.b32.xlu0 %v3129, 93
        %v3837 = vpop.permute.xlu0 %3836
        %3838 = vrot.lane.b32.xlu0 %v3130, 93
        %v3839 = vpop.permute.xlu0 %3838
        %3840 = vrot.lane.b32.xlu0 %v3131, 93
        %v3841 = vpop.permute.xlu0 %3840
        %3842 = vrot.lane.b32.xlu0 %v3132, 93
        %v3843 = vpop.permute.xlu0 %3842
        %3844 = vrot.lane.b32.xlu0 %v3133, 93
        %v3845 = vpop.permute.xlu0 %3844
        %3846 = vrot.lane.b32.xlu0 %v3134, 93
        %v3847 = vpop.permute.xlu0 %3846
        %3848 = vrot.lane.b32.xlu0 %v3135, 93
        %v3849 = vpop.permute.xlu0 %3848
        %vm3850 = vcmask 760832
        %v3851 = vsel %vm3850, %v3833, %v3835
        %v3852 = vsel %vm3850, %v3835, %v3837
        %v3853 = vsel %vm3850, %v3837, %v3839
        %v3854 = vsel %vm3850, %v3839, %v3841
        %v3855 = vsel %vm3850, %v3841, %v3843
        %v3856 = vsel %vm3850, %v3843, %v3845
        %v3857 = vsel %vm3850, %v3845, %v3847
        %v3858 = vsel %vm3850, %v3847, %v3849
        %v3869 = vsel %vm676, %v3831, 0
        %3871 = vmatpush.bf16.msra.mxu0 0
        %3872 = vmatpush.bf16.msra.mxu0 0
        %3873 = vmatpush.bf16.msra.mxu0 0
        %3874 = vmatpush.bf16.msra.mxu0 0
        %3875 = vmatpush.bf16.msra.mxu0 0
        %3876 = vmatpush.bf16.msra.mxu0 0
        %3877 = vmatpush.bf16.msra.mxu0 0
        %3878 = vmatpush.bf16.msra.mxu0 %v3851
        %3879 = vmatmul.bf16.gmra.mxu0 %v3869
        %v3880 = vpop.f32.mrf.mxu0
        %v3881 = vadd.f32 0.0, %v3880
        %v3882 = vpop.f32.mrf.mxu0
        %v3883 = vadd.f32 0.0, %v3882
        %3884 = vdwg.mxu0
        %3885 = vmatpush.bf16.msra.mxu0 0
        %3886 = vmatpush.bf16.msra.mxu0 0
        %3887 = vmatpush.bf16.msra.mxu0 0
        %3888 = vmatpush.bf16.msra.mxu0 0
        %3889 = vmatpush.bf16.msra.mxu0 0
        %3890 = vmatpush.bf16.msra.mxu0 0
        %3891 = vmatpush.bf16.msra.mxu0 0
        %3892 = vmatpush.bf16.msra.mxu0 %v3852
        %3893 = vmatmul.bf16.gmra.mxu0 %v3869
        %v3894 = vpop.f32.mrf.mxu0
        %v3895 = vadd.f32 0.0, %v3894
        %v3896 = vpop.f32.mrf.mxu0
        %v3897 = vadd.f32 0.0, %v3896
        %3898 = vdwg.mxu0
        %3899 = vmatpush.bf16.msra.mxu0 0
        %3900 = vmatpush.bf16.msra.mxu0 0
        %3901 = vmatpush.bf16.msra.mxu0 0
        %3902 = vmatpush.bf16.msra.mxu0 0
        %3903 = vmatpush.bf16.msra.mxu0 0
        %3904 = vmatpush.bf16.msra.mxu0 0
        %3905 = vmatpush.bf16.msra.mxu0 0
        %3906 = vmatpush.bf16.msra.mxu0 %v3853
        %3907 = vmatmul.bf16.gmra.mxu0 %v3869
        %v3908 = vpop.f32.mrf.mxu0
        %v3909 = vadd.f32 0.0, %v3908
        %v3910 = vpop.f32.mrf.mxu0
        %v3911 = vadd.f32 0.0, %v3910
        %3912 = vdwg.mxu0
        %3913 = vmatpush.bf16.msra.mxu0 0
        %3914 = vmatpush.bf16.msra.mxu0 0
        %3915 = vmatpush.bf16.msra.mxu0 0
        %3916 = vmatpush.bf16.msra.mxu0 0
        %3917 = vmatpush.bf16.msra.mxu0 0
        %3918 = vmatpush.bf16.msra.mxu0 0
        %3919 = vmatpush.bf16.msra.mxu0 0
        %3920 = vmatpush.bf16.msra.mxu0 %v3854
        %3921 = vmatmul.bf16.gmra.mxu0 %v3869
        %v3922 = vpop.f32.mrf.mxu0
        %v3923 = vadd.f32 0.0, %v3922
        %v3924 = vpop.f32.mrf.mxu0
        %v3925 = vadd.f32 0.0, %v3924
        %3926 = vdwg.mxu0
        %3927 = vmatpush.bf16.msra.mxu0 0
        %3928 = vmatpush.bf16.msra.mxu0 0
        %3929 = vmatpush.bf16.msra.mxu0 0
        %3930 = vmatpush.bf16.msra.mxu0 0
        %3931 = vmatpush.bf16.msra.mxu0 0
        %3932 = vmatpush.bf16.msra.mxu0 0
        %3933 = vmatpush.bf16.msra.mxu0 0
        %3934 = vmatpush.bf16.msra.mxu0 %v3855
        %3935 = vmatmul.bf16.gmra.mxu0 %v3869
        %v3936 = vpop.f32.mrf.mxu0
        %v3937 = vadd.f32 0.0, %v3936
        %v3938 = vpop.f32.mrf.mxu0
        %v3939 = vadd.f32 0.0, %v3938
        %3940 = vdwg.mxu0
        %3941 = vmatpush.bf16.msra.mxu0 0
        %3942 = vmatpush.bf16.msra.mxu0 0
        %3943 = vmatpush.bf16.msra.mxu0 0
        %3944 = vmatpush.bf16.msra.mxu0 0
        %3945 = vmatpush.bf16.msra.mxu0 0
        %3946 = vmatpush.bf16.msra.mxu0 0
        %3947 = vmatpush.bf16.msra.mxu0 0
        %3948 = vmatpush.bf16.msra.mxu0 %v3856
        %3949 = vmatmul.bf16.gmra.mxu0 %v3869
        %v3950 = vpop.f32.mrf.mxu0
        %v3951 = vadd.f32 0.0, %v3950
        %v3952 = vpop.f32.mrf.mxu0
        %v3953 = vadd.f32 0.0, %v3952
        %3954 = vdwg.mxu0
        %3955 = vmatpush.bf16.msra.mxu0 0
        %3956 = vmatpush.bf16.msra.mxu0 0
        %3957 = vmatpush.bf16.msra.mxu0 0
        %3958 = vmatpush.bf16.msra.mxu0 0
        %3959 = vmatpush.bf16.msra.mxu0 0
        %3960 = vmatpush.bf16.msra.mxu0 0
        %3961 = vmatpush.bf16.msra.mxu0 0
        %3962 = vmatpush.bf16.msra.mxu0 %v3857
        %3963 = vmatmul.bf16.gmra.mxu0 %v3869
        %v3964 = vpop.f32.mrf.mxu0
        %v3965 = vadd.f32 0.0, %v3964
        %v3966 = vpop.f32.mrf.mxu0
        %v3967 = vadd.f32 0.0, %v3966
        %3968 = vdwg.mxu0
        %3969 = vmatpush.bf16.msra.mxu0 0
        %3970 = vmatpush.bf16.msra.mxu0 0
        %3971 = vmatpush.bf16.msra.mxu0 0
        %3972 = vmatpush.bf16.msra.mxu0 0
        %3973 = vmatpush.bf16.msra.mxu0 0
        %3974 = vmatpush.bf16.msra.mxu0 0
        %3975 = vmatpush.bf16.msra.mxu0 0
        %3976 = vmatpush.bf16.msra.mxu0 %v3858
        %3977 = vmatmul.bf16.gmra.mxu0 %v3869
        %v3978 = vpop.f32.mrf.mxu0
        %v3979 = vadd.f32 0.0, %v3978
        %v3980 = vpop.f32.mrf.mxu0
        %v3981 = vadd.f32 0.0, %v3980
        %3982 = vdwg.mxu0
        %3983 = vmatpush.bf16.msra.mxu0 0
        %3984 = vmatpush.bf16.msra.mxu0 0
        %3985 = vmatpush.bf16.msra.mxu0 0
        %3986 = vmatpush.bf16.msra.mxu0 0
        %3987 = vmatpush.bf16.msra.mxu0 0
        %3988 = vmatpush.bf16.msra.mxu0 0
        %3989 = vmatpush.bf16.msra.mxu0 0
        %3990 = vmatpush.bf16.msra.mxu0 %v3849
        %3991 = vmatmul.bf16.gmra.mxu0 %v3869
        %v3992 = vpop.f32.mrf.mxu0
        %v3993 = vadd.f32 0.0, %v3992
        %v3994 = vpop.f32.mrf.mxu0
        %v3995 = vadd.f32 0.0, %v3994
        %3996 = vdwg.mxu0
        %v3997 = vadd.f32 %v3806, %v3881
        %v3998 = vadd.f32 %v3807, %v3895
        %v3999 = vadd.f32 %v3808, %v3909
        %v4000 = vadd.f32 %v3809, %v3923
        %v4001 = vadd.f32 %v3810, %v3937
        %v4002 = vadd.f32 %v3811, %v3951
        %v4003 = vadd.f32 %v3812, %v3965
        %v4004 = vadd.f32 %v3813, %v3979
        %v4005 = vadd.f32 %v3814, %v3993
        %v4006 = vadd.f32 %v3815, %v3883
        %v4007 = vadd.f32 %v3816, %v3897
        %v4008 = vadd.f32 %v3817, %v3911
        %v4009 = vadd.f32 %v3818, %v3925
        %v4010 = vadd.f32 %v3819, %v3939
        %v4011 = vadd.f32 %v3820, %v3953
        %v4012 = vadd.f32 %v3821, %v3967
        %v4013 = vadd.f32 %v3822, %v3981
        %v4014 = vadd.f32 %v3823, %v3995
        %s4015 = scalar_lea.vmem [#allocation8], 40
        %v4016 = vld [vmem:[%s4015] sm:$0xf]
        %v4017 = vld [vmem:[%s4015 + $0x4] sm:$0xf]
        %v4020 = vunpack.c.l.b16 %v4016
        %v4021 = vunpack.c.l.b16 %v4017
        %v4022 = vpack.c.b16 %v4021, %v4020
        %4023 = vrot.lane.b32.xlu0 %v3127, 92
        %v4024 = vpop.permute.xlu0 %4023
        %4025 = vrot.lane.b32.xlu0 %v3128, 92
        %v4026 = vpop.permute.xlu0 %4025
        %4027 = vrot.lane.b32.xlu0 %v3129, 92
        %v4028 = vpop.permute.xlu0 %4027
        %4029 = vrot.lane.b32.xlu0 %v3130, 92
        %v4030 = vpop.permute.xlu0 %4029
        %4031 = vrot.lane.b32.xlu0 %v3131, 92
        %v4032 = vpop.permute.xlu0 %4031
        %4033 = vrot.lane.b32.xlu0 %v3132, 92
        %v4034 = vpop.permute.xlu0 %4033
        %4035 = vrot.lane.b32.xlu0 %v3133, 92
        %v4036 = vpop.permute.xlu0 %4035
        %4037 = vrot.lane.b32.xlu0 %v3134, 92
        %v4038 = vpop.permute.xlu0 %4037
        %4039 = vrot.lane.b32.xlu0 %v3135, 92
        %v4040 = vpop.permute.xlu0 %4039
        %v4041 = vsel %vm1073, %v4024, %v4026
        %v4042 = vsel %vm1073, %v4026, %v4028
        %v4043 = vsel %vm1073, %v4028, %v4030
        %v4044 = vsel %vm1073, %v4030, %v4032
        %v4045 = vsel %vm1073, %v4032, %v4034
        %v4046 = vsel %vm1073, %v4034, %v4036
        %v4047 = vsel %vm1073, %v4036, %v4038
        %v4048 = vsel %vm1073, %v4038, %v4040
        %v4059 = vsel %vm676, %v4022, 0
        %4061 = vmatpush.bf16.msra.mxu0 0
        %4062 = vmatpush.bf16.msra.mxu0 0
        %4063 = vmatpush.bf16.msra.mxu0 0
        %4064 = vmatpush.bf16.msra.mxu0 0
        %4065 = vmatpush.bf16.msra.mxu0 0
        %4066 = vmatpush.bf16.msra.mxu0 0
        %4067 = vmatpush.bf16.msra.mxu0 0
        %4068 = vmatpush.bf16.msra.mxu0 %v4041
        %4069 = vmatmul.bf16.gmra.mxu0 %v4059
        %v4070 = vpop.f32.mrf.mxu0
        %v4071 = vadd.f32 0.0, %v4070
        %v4072 = vpop.f32.mrf.mxu0
        %v4073 = vadd.f32 0.0, %v4072
        %4074 = vdwg.mxu0
        %4075 = vmatpush.bf16.msra.mxu0 0
        %4076 = vmatpush.bf16.msra.mxu0 0
        %4077 = vmatpush.bf16.msra.mxu0 0
        %4078 = vmatpush.bf16.msra.mxu0 0
        %4079 = vmatpush.bf16.msra.mxu0 0
        %4080 = vmatpush.bf16.msra.mxu0 0
        %4081 = vmatpush.bf16.msra.mxu0 0
        %4082 = vmatpush.bf16.msra.mxu0 %v4042
        %4083 = vmatmul.bf16.gmra.mxu0 %v4059
        %v4084 = vpop.f32.mrf.mxu0
        %v4085 = vadd.f32 0.0, %v4084
        %v4086 = vpop.f32.mrf.mxu0
        %v4087 = vadd.f32 0.0, %v4086
        %4088 = vdwg.mxu0
        %4089 = vmatpush.bf16.msra.mxu0 0
        %4090 = vmatpush.bf16.msra.mxu0 0
        %4091 = vmatpush.bf16.msra.mxu0 0
        %4092 = vmatpush.bf16.msra.mxu0 0
        %4093 = vmatpush.bf16.msra.mxu0 0
        %4094 = vmatpush.bf16.msra.mxu0 0
        %4095 = vmatpush.bf16.msra.mxu0 0
        %4096 = vmatpush.bf16.msra.mxu0 %v4043
        %4097 = vmatmul.bf16.gmra.mxu0 %v4059
        %v4098 = vpop.f32.mrf.mxu0
        %v4099 = vadd.f32 0.0, %v4098
        %v4100 = vpop.f32.mrf.mxu0
        %v4101 = vadd.f32 0.0, %v4100
        %4102 = vdwg.mxu0
        %4103 = vmatpush.bf16.msra.mxu0 0
        %4104 = vmatpush.bf16.msra.mxu0 0
        %4105 = vmatpush.bf16.msra.mxu0 0
        %4106 = vmatpush.bf16.msra.mxu0 0
        %4107 = vmatpush.bf16.msra.mxu0 0
        %4108 = vmatpush.bf16.msra.mxu0 0
        %4109 = vmatpush.bf16.msra.mxu0 0
        %4110 = vmatpush.bf16.msra.mxu0 %v4044
        %4111 = vmatmul.bf16.gmra.mxu0 %v4059
        %v4112 = vpop.f32.mrf.mxu0
        %v4113 = vadd.f32 0.0, %v4112
        %v4114 = vpop.f32.mrf.mxu0
        %v4115 = vadd.f32 0.0, %v4114
        %4116 = vdwg.mxu0
        %4117 = vmatpush.bf16.msra.mxu0 0
        %4118 = vmatpush.bf16.msra.mxu0 0
        %4119 = vmatpush.bf16.msra.mxu0 0
        %4120 = vmatpush.bf16.msra.mxu0 0
        %4121 = vmatpush.bf16.msra.mxu0 0
        %4122 = vmatpush.bf16.msra.mxu0 0
        %4123 = vmatpush.bf16.msra.mxu0 0
        %4124 = vmatpush.bf16.msra.mxu0 %v4045
        %4125 = vmatmul.bf16.gmra.mxu0 %v4059
        %v4126 = vpop.f32.mrf.mxu0
        %v4127 = vadd.f32 0.0, %v4126
        %v4128 = vpop.f32.mrf.mxu0
        %v4129 = vadd.f32 0.0, %v4128
        %4130 = vdwg.mxu0
        %4131 = vmatpush.bf16.msra.mxu0 0
        %4132 = vmatpush.bf16.msra.mxu0 0
        %4133 = vmatpush.bf16.msra.mxu0 0
        %4134 = vmatpush.bf16.msra.mxu0 0
        %4135 = vmatpush.bf16.msra.mxu0 0
        %4136 = vmatpush.bf16.msra.mxu0 0
        %4137 = vmatpush.bf16.msra.mxu0 0
        %4138 = vmatpush.bf16.msra.mxu0 %v4046
        %4139 = vmatmul.bf16.gmra.mxu0 %v4059
        %v4140 = vpop.f32.mrf.mxu0
        %v4141 = vadd.f32 0.0, %v4140
        %v4142 = vpop.f32.mrf.mxu0
        %v4143 = vadd.f32 0.0, %v4142
        %4144 = vdwg.mxu0
        %4145 = vmatpush.bf16.msra.mxu0 0
        %4146 = vmatpush.bf16.msra.mxu0 0
        %4147 = vmatpush.bf16.msra.mxu0 0
        %4148 = vmatpush.bf16.msra.mxu0 0
        %4149 = vmatpush.bf16.msra.mxu0 0
        %4150 = vmatpush.bf16.msra.mxu0 0
        %4151 = vmatpush.bf16.msra.mxu0 0
        %4152 = vmatpush.bf16.msra.mxu0 %v4047
        %4153 = vmatmul.bf16.gmra.mxu0 %v4059
        %v4154 = vpop.f32.mrf.mxu0
        %v4155 = vadd.f32 0.0, %v4154
        %v4156 = vpop.f32.mrf.mxu0
        %v4157 = vadd.f32 0.0, %v4156
        %4158 = vdwg.mxu0
        %4159 = vmatpush.bf16.msra.mxu0 0
        %4160 = vmatpush.bf16.msra.mxu0 0
        %4161 = vmatpush.bf16.msra.mxu0 0
        %4162 = vmatpush.bf16.msra.mxu0 0
        %4163 = vmatpush.bf16.msra.mxu0 0
        %4164 = vmatpush.bf16.msra.mxu0 0
        %4165 = vmatpush.bf16.msra.mxu0 0
        %4166 = vmatpush.bf16.msra.mxu0 %v4048
        %4167 = vmatmul.bf16.gmra.mxu0 %v4059
        %v4168 = vpop.f32.mrf.mxu0
        %v4169 = vadd.f32 0.0, %v4168
        %v4170 = vpop.f32.mrf.mxu0
        %v4171 = vadd.f32 0.0, %v4170
        %4172 = vdwg.mxu0
        %4173 = vmatpush.bf16.msra.mxu0 0
        %4174 = vmatpush.bf16.msra.mxu0 0
        %4175 = vmatpush.bf16.msra.mxu0 0
        %4176 = vmatpush.bf16.msra.mxu0 0
        %4177 = vmatpush.bf16.msra.mxu0 0
        %4178 = vmatpush.bf16.msra.mxu0 0
        %4179 = vmatpush.bf16.msra.mxu0 0
        %4180 = vmatpush.bf16.msra.mxu0 %v4040
        %4181 = vmatmul.bf16.gmra.mxu0 %v4059
        %v4182 = vpop.f32.mrf.mxu0
        %v4183 = vadd.f32 0.0, %v4182
        %v4184 = vpop.f32.mrf.mxu0
        %v4185 = vadd.f32 0.0, %v4184
        %4186 = vdwg.mxu0
        %v4187 = vadd.f32 %v3997, %v4071
        %v4188 = vadd.f32 %v3998, %v4085
        %v4189 = vadd.f32 %v3999, %v4099
        %v4190 = vadd.f32 %v4000, %v4113
        %v4191 = vadd.f32 %v4001, %v4127
        %v4192 = vadd.f32 %v4002, %v4141
        %v4193 = vadd.f32 %v4003, %v4155
        %v4194 = vadd.f32 %v4004, %v4169
        %v4195 = vadd.f32 %v4005, %v4183
        %v4196 = vadd.f32 %v4006, %v4073
        %v4197 = vadd.f32 %v4007, %v4087
        %v4198 = vadd.f32 %v4008, %v4101
        %v4199 = vadd.f32 %v4009, %v4115
        %v4200 = vadd.f32 %v4010, %v4129
        %v4201 = vadd.f32 %v4011, %v4143
        %v4202 = vadd.f32 %v4012, %v4157
        %v4203 = vadd.f32 %v4013, %v4171
        %v4204 = vadd.f32 %v4014, %v4185
        %v4205 = vld [vmem:[#allocation3] sm:$0xff]
        %v4206 = vld [vmem:[#allocation3 + $0x8] sm:$0xff]
        %v4207 = vld [vmem:[#allocation3 + $0x10] sm:$0xff]
        %v4208 = vld [vmem:[#allocation3 + $0x18] sm:$0xff]
        %v4209 = vld [vmem:[#allocation3 + $0x20] sm:$0xff]
        %v4210 = vld [vmem:[#allocation3 + $0x28] sm:$0xff]
        %v4211 = vld [vmem:[#allocation3 + $0x30] sm:$0xff]
        %v4212 = vld [vmem:[#allocation3 + $0x38] sm:$0xff]
        %v4213 = vld [vmem:[#allocation3 + $0x40] sm:$0xff]
        %v4214 = vld [vmem:[#allocation3 + $0x48] sm:$0xff]
        %s4215 = scalar_lea.vmem [#allocation8], 48
        %v4216 = vld [vmem:[%s4215] sm:$0xf]
        %v4217 = vld [vmem:[%s4215 + $0x4] sm:$0xf]
        %v4220 = vunpack.c.l.b16 %v4216
        %v4221 = vunpack.c.l.b16 %v4217
        %v4222 = vpack.c.b16 %v4221, %v4220
        %v4233 = vunpack.c.l.b16 %v4205
        %v4234 = vunpack.c.h.b16 %v4205
        %v4235 = vunpack.c.l.b16 %v4206
        %v4236 = vunpack.c.h.b16 %v4206
        %v4237 = vunpack.c.l.b16 %v4207
        %v4238 = vunpack.c.h.b16 %v4207
        %v4239 = vunpack.c.l.b16 %v4208
        %v4240 = vunpack.c.h.b16 %v4208
        %v4241 = vunpack.c.l.b16 %v4209
        %v4242 = vunpack.c.h.b16 %v4209
        %v4243 = vunpack.c.l.b16 %v4210
        %v4244 = vunpack.c.h.b16 %v4210
        %v4245 = vunpack.c.l.b16 %v4211
        %v4246 = vunpack.c.h.b16 %v4211
        %v4247 = vunpack.c.l.b16 %v4212
        %v4248 = vunpack.c.h.b16 %v4212
        %v4249 = vunpack.c.l.b16 %v4213
        %v4250 = vunpack.c.h.b16 %v4213
        %v4251 = vunpack.c.l.b16 %v4214
        %v4252 = vunpack.c.h.b16 %v4214
        %v4253 = vpack.c.b16 %v4243, %v4233
        %v4254 = vpack.c.b16 %v4244, %v4234
        %v4255 = vpack.c.b16 %v4245, %v4235
        %v4256 = vpack.c.b16 %v4246, %v4236
        %v4257 = vpack.c.b16 %v4247, %v4237
        %v4258 = vpack.c.b16 %v4248, %v4238
        %v4259 = vpack.c.b16 %v4249, %v4239
        %v4260 = vpack.c.b16 %v4250, %v4240
        %v4261 = vpack.c.b16 %v4251, %v4241
        %v4262 = vpack.c.b16 %v4252, %v4242
        %4263 = vrot.lane.b32.xlu0 %v4253, 60
        %v4264 = vpop.permute.xlu0 %4263
        %4265 = vrot.lane.b32.xlu0 %v4254, 60
        %v4266 = vpop.permute.xlu0 %4265
        %4267 = vrot.lane.b32.xlu0 %v4255, 60
        %v4268 = vpop.permute.xlu0 %4267
        %4269 = vrot.lane.b32.xlu0 %v4256, 60
        %v4270 = vpop.permute.xlu0 %4269
        %4271 = vrot.lane.b32.xlu0 %v4257, 60
        %v4272 = vpop.permute.xlu0 %4271
        %4273 = vrot.lane.b32.xlu0 %v4258, 60
        %v4274 = vpop.permute.xlu0 %4273
        %4275 = vrot.lane.b32.xlu0 %v4259, 60
        %v4276 = vpop.permute.xlu0 %4275
        %4277 = vrot.lane.b32.xlu0 %v4260, 60
        %v4278 = vpop.permute.xlu0 %4277
        %4279 = vrot.lane.b32.xlu0 %v4261, 60
        %v4280 = vpop.permute.xlu0 %4279
        %4281 = vrot.lane.b32.xlu0 %v4262, 60
        %v4282 = vpop.permute.xlu0 %4281
        %vm4283 = vcmask 490496
        %v4284 = vsel %vm4283, %v4264, %v4266
        %v4285 = vsel %vm4283, %v4266, %v4268
        %v4286 = vsel %vm4283, %v4268, %v4270
        %v4287 = vsel %vm4283, %v4270, %v4272
        %v4288 = vsel %vm4283, %v4272, %v4274
        %v4289 = vsel %vm4283, %v4274, %v4276
        %v4290 = vsel %vm4283, %v4276, %v4278
        %v4291 = vsel %vm4283, %v4278, %v4280
        %v4292 = vsel %vm4283, %v4280, %v4282
        %v4303 = vsel %vm676, %v4222, 0
        %4305 = vmatpush.bf16.msra.mxu0 0
        %4306 = vmatpush.bf16.msra.mxu0 0
        %4307 = vmatpush.bf16.msra.mxu0 0
        %4308 = vmatpush.bf16.msra.mxu0 0
        %4309 = vmatpush.bf16.msra.mxu0 0
        %4310 = vmatpush.bf16.msra.mxu0 0
        %4311 = vmatpush.bf16.msra.mxu0 0
        %4312 = vmatpush.bf16.msra.mxu0 %v4284
        %4313 = vmatmul.bf16.gmra.mxu0 %v4303
        %v4314 = vpop.f32.mrf.mxu0
        %v4315 = vadd.f32 0.0, %v4314
        %v4316 = vpop.f32.mrf.mxu0
        %v4317 = vadd.f32 0.0, %v4316
        %4318 = vdwg.mxu0
        %4319 = vmatpush.bf16.msra.mxu0 0
        %4320 = vmatpush.bf16.msra.mxu0 0
        %4321 = vmatpush.bf16.msra.mxu0 0
        %4322 = vmatpush.bf16.msra.mxu0 0
        %4323 = vmatpush.bf16.msra.mxu0 0
        %4324 = vmatpush.bf16.msra.mxu0 0
        %4325 = vmatpush.bf16.msra.mxu0 0
        %4326 = vmatpush.bf16.msra.mxu0 %v4285
        %4327 = vmatmul.bf16.gmra.mxu0 %v4303
        %v4328 = vpop.f32.mrf.mxu0
        %v4329 = vadd.f32 0.0, %v4328
        %v4330 = vpop.f32.mrf.mxu0
        %v4331 = vadd.f32 0.0, %v4330
        %4332 = vdwg.mxu0
        %4333 = vmatpush.bf16.msra.mxu0 0
        %4334 = vmatpush.bf16.msra.mxu0 0
        %4335 = vmatpush.bf16.msra.mxu0 0
        %4336 = vmatpush.bf16.msra.mxu0 0
        %4337 = vmatpush.bf16.msra.mxu0 0
        %4338 = vmatpush.bf16.msra.mxu0 0
        %4339 = vmatpush.bf16.msra.mxu0 0
        %4340 = vmatpush.bf16.msra.mxu0 %v4286
        %4341 = vmatmul.bf16.gmra.mxu0 %v4303
        %v4342 = vpop.f32.mrf.mxu0
        %v4343 = vadd.f32 0.0, %v4342
        %v4344 = vpop.f32.mrf.mxu0
        %v4345 = vadd.f32 0.0, %v4344
        %4346 = vdwg.mxu0
        %4347 = vmatpush.bf16.msra.mxu0 0
        %4348 = vmatpush.bf16.msra.mxu0 0
        %4349 = vmatpush.bf16.msra.mxu0 0
        %4350 = vmatpush.bf16.msra.mxu0 0
        %4351 = vmatpush.bf16.msra.mxu0 0
        %4352 = vmatpush.bf16.msra.mxu0 0
        %4353 = vmatpush.bf16.msra.mxu0 0
        %4354 = vmatpush.bf16.msra.mxu0 %v4287
        %4355 = vmatmul.bf16.gmra.mxu0 %v4303
        %v4356 = vpop.f32.mrf.mxu0
        %v4357 = vadd.f32 0.0, %v4356
        %v4358 = vpop.f32.mrf.mxu0
        %v4359 = vadd.f32 0.0, %v4358
        %4360 = vdwg.mxu0
        %4361 = vmatpush.bf16.msra.mxu0 0
        %4362 = vmatpush.bf16.msra.mxu0 0
        %4363 = vmatpush.bf16.msra.mxu0 0
        %4364 = vmatpush.bf16.msra.mxu0 0
        %4365 = vmatpush.bf16.msra.mxu0 0
        %4366 = vmatpush.bf16.msra.mxu0 0
        %4367 = vmatpush.bf16.msra.mxu0 0
        %4368 = vmatpush.bf16.msra.mxu0 %v4288
        %4369 = vmatmul.bf16.gmra.mxu0 %v4303
        %v4370 = vpop.f32.mrf.mxu0
        %v4371 = vadd.f32 0.0, %v4370
        %v4372 = vpop.f32.mrf.mxu0
        %v4373 = vadd.f32 0.0, %v4372
        %4374 = vdwg.mxu0
        %4375 = vmatpush.bf16.msra.mxu0 0
        %4376 = vmatpush.bf16.msra.mxu0 0
        %4377 = vmatpush.bf16.msra.mxu0 0
        %4378 = vmatpush.bf16.msra.mxu0 0
        %4379 = vmatpush.bf16.msra.mxu0 0
        %4380 = vmatpush.bf16.msra.mxu0 0
        %4381 = vmatpush.bf16.msra.mxu0 0
        %4382 = vmatpush.bf16.msra.mxu0 %v4289
        %4383 = vmatmul.bf16.gmra.mxu0 %v4303
        %v4384 = vpop.f32.mrf.mxu0
        %v4385 = vadd.f32 0.0, %v4384
        %v4386 = vpop.f32.mrf.mxu0
        %v4387 = vadd.f32 0.0, %v4386
        %4388 = vdwg.mxu0
        %4389 = vmatpush.bf16.msra.mxu0 0
        %4390 = vmatpush.bf16.msra.mxu0 0
        %4391 = vmatpush.bf16.msra.mxu0 0
        %4392 = vmatpush.bf16.msra.mxu0 0
        %4393 = vmatpush.bf16.msra.mxu0 0
        %4394 = vmatpush.bf16.msra.mxu0 0
        %4395 = vmatpush.bf16.msra.mxu0 0
        %4396 = vmatpush.bf16.msra.mxu0 %v4290
        %4397 = vmatmul.bf16.gmra.mxu0 %v4303
        %v4398 = vpop.f32.mrf.mxu0
        %v4399 = vadd.f32 0.0, %v4398
        %v4400 = vpop.f32.mrf.mxu0
        %v4401 = vadd.f32 0.0, %v4400
        %4402 = vdwg.mxu0
        %4403 = vmatpush.bf16.msra.mxu0 0
        %4404 = vmatpush.bf16.msra.mxu0 0
        %4405 = vmatpush.bf16.msra.mxu0 0
        %4406 = vmatpush.bf16.msra.mxu0 0
        %4407 = vmatpush.bf16.msra.mxu0 0
        %4408 = vmatpush.bf16.msra.mxu0 0
        %4409 = vmatpush.bf16.msra.mxu0 0
        %4410 = vmatpush.bf16.msra.mxu0 %v4291
        %4411 = vmatmul.bf16.gmra.mxu0 %v4303
        %v4412 = vpop.f32.mrf.mxu0
        %v4413 = vadd.f32 0.0, %v4412
        %v4414 = vpop.f32.mrf.mxu0
        %v4415 = vadd.f32 0.0, %v4414
        %4416 = vdwg.mxu0
        %4417 = vmatpush.bf16.msra.mxu0 0
        %4418 = vmatpush.bf16.msra.mxu0 0
        %4419 = vmatpush.bf16.msra.mxu0 0
        %4420 = vmatpush.bf16.msra.mxu0 0
        %4421 = vmatpush.bf16.msra.mxu0 0
        %4422 = vmatpush.bf16.msra.mxu0 0
        %4423 = vmatpush.bf16.msra.mxu0 0
        %4424 = vmatpush.bf16.msra.mxu0 %v4292
        %4425 = vmatmul.bf16.gmra.mxu0 %v4303
        %v4426 = vpop.f32.mrf.mxu0
        %v4427 = vadd.f32 0.0, %v4426
        %v4428 = vpop.f32.mrf.mxu0
        %v4429 = vadd.f32 0.0, %v4428
        %4430 = vdwg.mxu0
        %v4431 = vadd.f32 %v4187, %v4315
        %v4432 = vadd.f32 %v4188, %v4329
        %v4433 = vadd.f32 %v4189, %v4343
        %v4434 = vadd.f32 %v4190, %v4357
        %v4435 = vadd.f32 %v4191, %v4371
        %v4436 = vadd.f32 %v4192, %v4385
        %v4437 = vadd.f32 %v4193, %v4399
        %v4438 = vadd.f32 %v4194, %v4413
        %v4439 = vadd.f32 %v4195, %v4427
        %v4440 = vadd.f32 %v4196, %v4317
        %v4441 = vadd.f32 %v4197, %v4331
        %v4442 = vadd.f32 %v4198, %v4345
        %v4443 = vadd.f32 %v4199, %v4359
        %v4444 = vadd.f32 %v4200, %v4373
        %v4445 = vadd.f32 %v4201, %v4387
        %v4446 = vadd.f32 %v4202, %v4401
        %v4447 = vadd.f32 %v4203, %v4415
        %v4448 = vadd.f32 %v4204, %v4429
        %s4449 = scalar_lea.vmem [#allocation8], 56
        %v4450 = vld [vmem:[%s4449] sm:$0xf]
        %v4451 = vld [vmem:[%s4449 + $0x4] sm:$0xf]
        %v4454 = vunpack.c.l.b16 %v4450
        %v4455 = vunpack.c.l.b16 %v4451
        %v4456 = vpack.c.b16 %v4455, %v4454
        %4457 = vrot.lane.b32.xlu0 %v4253, 59
        %v4458 = vpop.permute.xlu0 %4457
        %4459 = vrot.lane.b32.xlu0 %v4254, 59
        %v4460 = vpop.permute.xlu0 %4459
        %4461 = vrot.lane.b32.xlu0 %v4255, 59
        %v4462 = vpop.permute.xlu0 %4461
        %4463 = vrot.lane.b32.xlu0 %v4256, 59
        %v4464 = vpop.permute.xlu0 %4463
        %4465 = vrot.lane.b32.xlu0 %v4257, 59
        %v4466 = vpop.permute.xlu0 %4465
        %4467 = vrot.lane.b32.xlu0 %v4258, 59
        %v4468 = vpop.permute.xlu0 %4467
        %4469 = vrot.lane.b32.xlu0 %v4259, 59
        %v4470 = vpop.permute.xlu0 %4469
        %4471 = vrot.lane.b32.xlu0 %v4260, 59
        %v4472 = vpop.permute.xlu0 %4471
        %4473 = vrot.lane.b32.xlu0 %v4261, 59
        %v4474 = vpop.permute.xlu0 %4473
        %4475 = vrot.lane.b32.xlu0 %v4262, 59
        %v4476 = vpop.permute.xlu0 %4475
        %vm4477 = vcmask 482304
        %v4478 = vsel %vm4477, %v4458, %v4460
        %v4479 = vsel %vm4477, %v4460, %v4462
        %v4480 = vsel %vm4477, %v4462, %v4464
        %v4481 = vsel %vm4477, %v4464, %v4466
        %v4482 = vsel %vm4477, %v4466, %v4468
        %v4483 = vsel %vm4477, %v4468, %v4470
        %v4484 = vsel %vm4477, %v4470, %v4472
        %v4485 = vsel %vm4477, %v4472, %v4474
        %v4486 = vsel %vm4477, %v4474, %v4476
        %v4497 = vsel %vm676, %v4456, 0
        %4499 = vmatpush.bf16.msra.mxu0 0
        %4500 = vmatpush.bf16.msra.mxu0 0
        %4501 = vmatpush.bf16.msra.mxu0 0
        %4502 = vmatpush.bf16.msra.mxu0 0
        %4503 = vmatpush.bf16.msra.mxu0 0
        %4504 = vmatpush.bf16.msra.mxu0 0
        %4505 = vmatpush.bf16.msra.mxu0 0
        %4506 = vmatpush.bf16.msra.mxu0 %v4478
        %4507 = vmatmul.bf16.gmra.mxu0 %v4497
        %v4508 = vpop.f32.mrf.mxu0
        %v4509 = vadd.f32 0.0, %v4508
        %v4510 = vpop.f32.mrf.mxu0
        %v4511 = vadd.f32 0.0, %v4510
        %4512 = vdwg.mxu0
        %4513 = vmatpush.bf16.msra.mxu0 0
        %4514 = vmatpush.bf16.msra.mxu0 0
        %4515 = vmatpush.bf16.msra.mxu0 0
        %4516 = vmatpush.bf16.msra.mxu0 0
        %4517 = vmatpush.bf16.msra.mxu0 0
        %4518 = vmatpush.bf16.msra.mxu0 0
        %4519 = vmatpush.bf16.msra.mxu0 0
        %4520 = vmatpush.bf16.msra.mxu0 %v4479
        %4521 = vmatmul.bf16.gmra.mxu0 %v4497
        %v4522 = vpop.f32.mrf.mxu0
        %v4523 = vadd.f32 0.0, %v4522
        %v4524 = vpop.f32.mrf.mxu0
        %v4525 = vadd.f32 0.0, %v4524
        %4526 = vdwg.mxu0
        %4527 = vmatpush.bf16.msra.mxu0 0
        %4528 = vmatpush.bf16.msra.mxu0 0
        %4529 = vmatpush.bf16.msra.mxu0 0
        %4530 = vmatpush.bf16.msra.mxu0 0
        %4531 = vmatpush.bf16.msra.mxu0 0
        %4532 = vmatpush.bf16.msra.mxu0 0
        %4533 = vmatpush.bf16.msra.mxu0 0
        %4534 = vmatpush.bf16.msra.mxu0 %v4480
        %4535 = vmatmul.bf16.gmra.mxu0 %v4497
        %v4536 = vpop.f32.mrf.mxu0
        %v4537 = vadd.f32 0.0, %v4536
        %v4538 = vpop.f32.mrf.mxu0
        %v4539 = vadd.f32 0.0, %v4538
        %4540 = vdwg.mxu0
        %4541 = vmatpush.bf16.msra.mxu0 0
        %4542 = vmatpush.bf16.msra.mxu0 0
        %4543 = vmatpush.bf16.msra.mxu0 0
        %4544 = vmatpush.bf16.msra.mxu0 0
        %4545 = vmatpush.bf16.msra.mxu0 0
        %4546 = vmatpush.bf16.msra.mxu0 0
        %4547 = vmatpush.bf16.msra.mxu0 0
        %4548 = vmatpush.bf16.msra.mxu0 %v4481
        %4549 = vmatmul.bf16.gmra.mxu0 %v4497
        %v4550 = vpop.f32.mrf.mxu0
        %v4551 = vadd.f32 0.0, %v4550
        %v4552 = vpop.f32.mrf.mxu0
        %v4553 = vadd.f32 0.0, %v4552
        %4554 = vdwg.mxu0
        %4555 = vmatpush.bf16.msra.mxu0 0
        %4556 = vmatpush.bf16.msra.mxu0 0
        %4557 = vmatpush.bf16.msra.mxu0 0
        %4558 = vmatpush.bf16.msra.mxu0 0
        %4559 = vmatpush.bf16.msra.mxu0 0
        %4560 = vmatpush.bf16.msra.mxu0 0
        %4561 = vmatpush.bf16.msra.mxu0 0
        %4562 = vmatpush.bf16.msra.mxu0 %v4482
        %4563 = vmatmul.bf16.gmra.mxu0 %v4497
        %v4564 = vpop.f32.mrf.mxu0
        %v4565 = vadd.f32 0.0, %v4564
        %v4566 = vpop.f32.mrf.mxu0
        %v4567 = vadd.f32 0.0, %v4566
        %4568 = vdwg.mxu0
        %4569 = vmatpush.bf16.msra.mxu0 0
        %4570 = vmatpush.bf16.msra.mxu0 0
        %4571 = vmatpush.bf16.msra.mxu0 0
        %4572 = vmatpush.bf16.msra.mxu0 0
        %4573 = vmatpush.bf16.msra.mxu0 0
        %4574 = vmatpush.bf16.msra.mxu0 0
        %4575 = vmatpush.bf16.msra.mxu0 0
        %4576 = vmatpush.bf16.msra.mxu0 %v4483
        %4577 = vmatmul.bf16.gmra.mxu0 %v4497
        %v4578 = vpop.f32.mrf.mxu0
        %v4579 = vadd.f32 0.0, %v4578
        %v4580 = vpop.f32.mrf.mxu0
        %v4581 = vadd.f32 0.0, %v4580
        %4582 = vdwg.mxu0
        %4583 = vmatpush.bf16.msra.mxu0 0
        %4584 = vmatpush.bf16.msra.mxu0 0
        %4585 = vmatpush.bf16.msra.mxu0 0
        %4586 = vmatpush.bf16.msra.mxu0 0
        %4587 = vmatpush.bf16.msra.mxu0 0
        %4588 = vmatpush.bf16.msra.mxu0 0
        %4589 = vmatpush.bf16.msra.mxu0 0
        %4590 = vmatpush.bf16.msra.mxu0 %v4484
        %4591 = vmatmul.bf16.gmra.mxu0 %v4497
        %v4592 = vpop.f32.mrf.mxu0
        %v4593 = vadd.f32 0.0, %v4592
        %v4594 = vpop.f32.mrf.mxu0
        %v4595 = vadd.f32 0.0, %v4594
        %4596 = vdwg.mxu0
        %4597 = vmatpush.bf16.msra.mxu0 0
        %4598 = vmatpush.bf16.msra.mxu0 0
        %4599 = vmatpush.bf16.msra.mxu0 0
        %4600 = vmatpush.bf16.msra.mxu0 0
        %4601 = vmatpush.bf16.msra.mxu0 0
        %4602 = vmatpush.bf16.msra.mxu0 0
        %4603 = vmatpush.bf16.msra.mxu0 0
        %4604 = vmatpush.bf16.msra.mxu0 %v4485
        %4605 = vmatmul.bf16.gmra.mxu0 %v4497
        %v4606 = vpop.f32.mrf.mxu0
        %v4607 = vadd.f32 0.0, %v4606
        %v4608 = vpop.f32.mrf.mxu0
        %v4609 = vadd.f32 0.0, %v4608
        %4610 = vdwg.mxu0
        %4611 = vmatpush.bf16.msra.mxu0 0
        %4612 = vmatpush.bf16.msra.mxu0 0
        %4613 = vmatpush.bf16.msra.mxu0 0
        %4614 = vmatpush.bf16.msra.mxu0 0
        %4615 = vmatpush.bf16.msra.mxu0 0
        %4616 = vmatpush.bf16.msra.mxu0 0
        %4617 = vmatpush.bf16.msra.mxu0 0
        %4618 = vmatpush.bf16.msra.mxu0 %v4486
        %4619 = vmatmul.bf16.gmra.mxu0 %v4497
        %v4620 = vpop.f32.mrf.mxu0
        %v4621 = vadd.f32 0.0, %v4620
        %v4622 = vpop.f32.mrf.mxu0
        %v4623 = vadd.f32 0.0, %v4622
        %4624 = vdwg.mxu0
        %v4625 = vadd.f32 %v4431, %v4509
        %v4626 = vadd.f32 %v4432, %v4523
        %v4627 = vadd.f32 %v4433, %v4537
        %v4628 = vadd.f32 %v4434, %v4551
        %v4629 = vadd.f32 %v4435, %v4565
        %v4630 = vadd.f32 %v4436, %v4579
        %v4631 = vadd.f32 %v4437, %v4593
        %v4632 = vadd.f32 %v4438, %v4607
        %v4633 = vadd.f32 %v4439, %v4621
        %v4634 = vadd.f32 %v4440, %v4511
        %v4635 = vadd.f32 %v4441, %v4525
        %v4636 = vadd.f32 %v4442, %v4539
        %v4637 = vadd.f32 %v4443, %v4553
        %v4638 = vadd.f32 %v4444, %v4567
        %v4639 = vadd.f32 %v4445, %v4581
        %v4640 = vadd.f32 %v4446, %v4595
        %v4641 = vadd.f32 %v4447, %v4609
        %v4642 = vadd.f32 %v4448, %v4623
        %s4643 = scalar_lea.vmem [#allocation8], 64
        %v4644 = vld [vmem:[%s4643] sm:$0xf]
        %v4645 = vld [vmem:[%s4643 + $0x4] sm:$0xf]
        %v4648 = vunpack.c.l.b16 %v4644
        %v4649 = vunpack.c.l.b16 %v4645
        %v4650 = vpack.c.b16 %v4649, %v4648
        %4651 = vrot.lane.b32.xlu0 %v4253, 58
        %v4652 = vpop.permute.xlu0 %4651
        %4653 = vrot.lane.b32.xlu0 %v4254, 58
        %v4654 = vpop.permute.xlu0 %4653
        %4655 = vrot.lane.b32.xlu0 %v4255, 58
        %v4656 = vpop.permute.xlu0 %4655
        %4657 = vrot.lane.b32.xlu0 %v4256, 58
        %v4658 = vpop.permute.xlu0 %4657
        %4659 = vrot.lane.b32.xlu0 %v4257, 58
        %v4660 = vpop.permute.xlu0 %4659
        %4661 = vrot.lane.b32.xlu0 %v4258, 58
        %v4662 = vpop.permute.xlu0 %4661
        %4663 = vrot.lane.b32.xlu0 %v4259, 58
        %v4664 = vpop.permute.xlu0 %4663
        %4665 = vrot.lane.b32.xlu0 %v4260, 58
        %v4666 = vpop.permute.xlu0 %4665
        %4667 = vrot.lane.b32.xlu0 %v4261, 58
        %v4668 = vpop.permute.xlu0 %4667
        %4669 = vrot.lane.b32.xlu0 %v4262, 58
        %v4670 = vpop.permute.xlu0 %4669
        %vm4671 = vcmask 474112
        %v4672 = vsel %vm4671, %v4652, %v4654
        %v4673 = vsel %vm4671, %v4654, %v4656
        %v4674 = vsel %vm4671, %v4656, %v4658
        %v4675 = vsel %vm4671, %v4658, %v4660
        %v4676 = vsel %vm4671, %v4660, %v4662
        %v4677 = vsel %vm4671, %v4662, %v4664
        %v4678 = vsel %vm4671, %v4664, %v4666
        %v4679 = vsel %vm4671, %v4666, %v4668
        %v4680 = vsel %vm4671, %v4668, %v4670
        %v4691 = vsel %vm676, %v4650, 0
        %4693 = vmatpush.bf16.msra.mxu0 0
        %4694 = vmatpush.bf16.msra.mxu0 0
        %4695 = vmatpush.bf16.msra.mxu0 0
        %4696 = vmatpush.bf16.msra.mxu0 0
        %4697 = vmatpush.bf16.msra.mxu0 0
        %4698 = vmatpush.bf16.msra.mxu0 0
        %4699 = vmatpush.bf16.msra.mxu0 0
        %4700 = vmatpush.bf16.msra.mxu0 %v4672
        %4701 = vmatmul.bf16.gmra.mxu0 %v4691
        %v4702 = vpop.f32.mrf.mxu0
        %v4703 = vadd.f32 0.0, %v4702
        %v4704 = vpop.f32.mrf.mxu0
        %v4705 = vadd.f32 0.0, %v4704
        %4706 = vdwg.mxu0
        %4707 = vmatpush.bf16.msra.mxu0 0
        %4708 = vmatpush.bf16.msra.mxu0 0
        %4709 = vmatpush.bf16.msra.mxu0 0
        %4710 = vmatpush.bf16.msra.mxu0 0
        %4711 = vmatpush.bf16.msra.mxu0 0
        %4712 = vmatpush.bf16.msra.mxu0 0
        %4713 = vmatpush.bf16.msra.mxu0 0
        %4714 = vmatpush.bf16.msra.mxu0 %v4673
        %4715 = vmatmul.bf16.gmra.mxu0 %v4691
        %v4716 = vpop.f32.mrf.mxu0
        %v4717 = vadd.f32 0.0, %v4716
        %v4718 = vpop.f32.mrf.mxu0
        %v4719 = vadd.f32 0.0, %v4718
        %4720 = vdwg.mxu0
        %4721 = vmatpush.bf16.msra.mxu0 0
        %4722 = vmatpush.bf16.msra.mxu0 0
        %4723 = vmatpush.bf16.msra.mxu0 0
        %4724 = vmatpush.bf16.msra.mxu0 0
        %4725 = vmatpush.bf16.msra.mxu0 0
        %4726 = vmatpush.bf16.msra.mxu0 0
        %4727 = vmatpush.bf16.msra.mxu0 0
        %4728 = vmatpush.bf16.msra.mxu0 %v4674
        %4729 = vmatmul.bf16.gmra.mxu0 %v4691
        %v4730 = vpop.f32.mrf.mxu0
        %v4731 = vadd.f32 0.0, %v4730
        %v4732 = vpop.f32.mrf.mxu0
        %v4733 = vadd.f32 0.0, %v4732
        %4734 = vdwg.mxu0
        %4735 = vmatpush.bf16.msra.mxu0 0
        %4736 = vmatpush.bf16.msra.mxu0 0
        %4737 = vmatpush.bf16.msra.mxu0 0
        %4738 = vmatpush.bf16.msra.mxu0 0
        %4739 = vmatpush.bf16.msra.mxu0 0
        %4740 = vmatpush.bf16.msra.mxu0 0
        %4741 = vmatpush.bf16.msra.mxu0 0
        %4742 = vmatpush.bf16.msra.mxu0 %v4675
        %4743 = vmatmul.bf16.gmra.mxu0 %v4691
        %v4744 = vpop.f32.mrf.mxu0
        %v4745 = vadd.f32 0.0, %v4744
        %v4746 = vpop.f32.mrf.mxu0
        %v4747 = vadd.f32 0.0, %v4746
        %4748 = vdwg.mxu0
        %4749 = vmatpush.bf16.msra.mxu0 0
        %4750 = vmatpush.bf16.msra.mxu0 0
        %4751 = vmatpush.bf16.msra.mxu0 0
        %4752 = vmatpush.bf16.msra.mxu0 0
        %4753 = vmatpush.bf16.msra.mxu0 0
        %4754 = vmatpush.bf16.msra.mxu0 0
        %4755 = vmatpush.bf16.msra.mxu0 0
        %4756 = vmatpush.bf16.msra.mxu0 %v4676
        %4757 = vmatmul.bf16.gmra.mxu0 %v4691
        %v4758 = vpop.f32.mrf.mxu0
        %v4759 = vadd.f32 0.0, %v4758
        %v4760 = vpop.f32.mrf.mxu0
        %v4761 = vadd.f32 0.0, %v4760
        %4762 = vdwg.mxu0
        %4763 = vmatpush.bf16.msra.mxu0 0
        %4764 = vmatpush.bf16.msra.mxu0 0
        %4765 = vmatpush.bf16.msra.mxu0 0
        %4766 = vmatpush.bf16.msra.mxu0 0
        %4767 = vmatpush.bf16.msra.mxu0 0
        %4768 = vmatpush.bf16.msra.mxu0 0
        %4769 = vmatpush.bf16.msra.mxu0 0
        %4770 = vmatpush.bf16.msra.mxu0 %v4677
        %4771 = vmatmul.bf16.gmra.mxu0 %v4691
        %v4772 = vpop.f32.mrf.mxu0
        %v4773 = vadd.f32 0.0, %v4772
        %v4774 = vpop.f32.mrf.mxu0
        %v4775 = vadd.f32 0.0, %v4774
        %4776 = vdwg.mxu0
        %4777 = vmatpush.bf16.msra.mxu0 0
        %4778 = vmatpush.bf16.msra.mxu0 0
        %4779 = vmatpush.bf16.msra.mxu0 0
        %4780 = vmatpush.bf16.msra.mxu0 0
        %4781 = vmatpush.bf16.msra.mxu0 0
        %4782 = vmatpush.bf16.msra.mxu0 0
        %4783 = vmatpush.bf16.msra.mxu0 0
        %4784 = vmatpush.bf16.msra.mxu0 %v4678
        %4785 = vmatmul.bf16.gmra.mxu0 %v4691
        %v4786 = vpop.f32.mrf.mxu0
        %v4787 = vadd.f32 0.0, %v4786
        %v4788 = vpop.f32.mrf.mxu0
        %v4789 = vadd.f32 0.0, %v4788
        %4790 = vdwg.mxu0
        %4791 = vmatpush.bf16.msra.mxu0 0
        %4792 = vmatpush.bf16.msra.mxu0 0
        %4793 = vmatpush.bf16.msra.mxu0 0
        %4794 = vmatpush.bf16.msra.mxu0 0
        %4795 = vmatpush.bf16.msra.mxu0 0
        %4796 = vmatpush.bf16.msra.mxu0 0
        %4797 = vmatpush.bf16.msra.mxu0 0
        %4798 = vmatpush.bf16.msra.mxu0 %v4679
        %4799 = vmatmul.bf16.gmra.mxu0 %v4691
        %v4800 = vpop.f32.mrf.mxu0
        %v4801 = vadd.f32 0.0, %v4800
        %v4802 = vpop.f32.mrf.mxu0
        %v4803 = vadd.f32 0.0, %v4802
        %4804 = vdwg.mxu0
        %4805 = vmatpush.bf16.msra.mxu0 0
        %4806 = vmatpush.bf16.msra.mxu0 0
        %4807 = vmatpush.bf16.msra.mxu0 0
        %4808 = vmatpush.bf16.msra.mxu0 0
        %4809 = vmatpush.bf16.msra.mxu0 0
        %4810 = vmatpush.bf16.msra.mxu0 0
        %4811 = vmatpush.bf16.msra.mxu0 0
        %4812 = vmatpush.bf16.msra.mxu0 %v4680
        %4813 = vmatmul.bf16.gmra.mxu0 %v4691
        %v4814 = vpop.f32.mrf.mxu0
        %v4815 = vadd.f32 0.0, %v4814
        %v4816 = vpop.f32.mrf.mxu0
        %v4817 = vadd.f32 0.0, %v4816
        %4818 = vdwg.mxu0
        %v4819 = vadd.f32 %v4625, %v4703
        %v4820 = vadd.f32 %v4626, %v4717
        %v4821 = vadd.f32 %v4627, %v4731
        %v4822 = vadd.f32 %v4628, %v4745
        %v4823 = vadd.f32 %v4629, %v4759
        %v4824 = vadd.f32 %v4630, %v4773
        %v4825 = vadd.f32 %v4631, %v4787
        %v4826 = vadd.f32 %v4632, %v4801
        %v4827 = vadd.f32 %v4633, %v4815
        %v4828 = vadd.f32 %v4634, %v4705
        %v4829 = vadd.f32 %v4635, %v4719
        %v4830 = vadd.f32 %v4636, %v4733
        %v4831 = vadd.f32 %v4637, %v4747
        %v4832 = vadd.f32 %v4638, %v4761
        %v4833 = vadd.f32 %v4639, %v4775
        %v4834 = vadd.f32 %v4640, %v4789
        %v4835 = vadd.f32 %v4641, %v4803
        %v4836 = vadd.f32 %v4642, %v4817
        %v4837 = vld [vmem:[#allocation9] sm:$0xff]
        %v4838 = vld [vmem:[#allocation9 + $0x8] sm:$0xff]
        %v4839 = vld [vmem:[#allocation9 + $0x10] sm:$0xff]
        %v4840 = vld [vmem:[#allocation9 + $0x18] sm:$0xff]
        %v4841 = vld [vmem:[#allocation9 + $0x20] sm:$0xff]
        %v4842 = vld [vmem:[#allocation9 + $0x28] sm:$0xff]
        %v4843 = vld [vmem:[#allocation9 + $0x30] sm:$0xff]
        %v4844 = vld [vmem:[#allocation9 + $0x38] sm:$0xff]
        %v4845 = vld [vmem:[#allocation9 + $0x40] sm:$0xff]
        %v4846 = vld [vmem:[#allocation9 + $0x48] sm:$0xff]
        %v4847 = vld [vmem:[#allocation9 + $0x50] sm:$0xff]
        %v4848 = vld [vmem:[#allocation9 + $0x58] sm:$0xff]
        %v4849 = vld [vmem:[#allocation9 + $0x60] sm:$0xff]
        %v4850 = vld [vmem:[#allocation9 + $0x68] sm:$0xff]
        %v4851 = vld [vmem:[#allocation9 + $0x70] sm:$0xff]
        %v4852 = vld [vmem:[#allocation9 + $0x78] sm:$0xff]
        %v4853 = vld [vmem:[#allocation9 + $0x80] sm:$0xff]
        %v4854 = vld [vmem:[#allocation9 + $0x88] sm:$0xff]
        %v4855 = vld [vmem:[#allocation9 + $0x90] sm:$0xff]
        %v4856 = vld [vmem:[#allocation9 + $0x98] sm:$0xff]
        %v4857 = vld [vmem:[#allocation9 + $0xa0] sm:$0xff]
        %v4858 = vld [vmem:[#allocation9 + $0xa8] sm:$0xff]
        %v4859 = vld [vmem:[#allocation9 + $0xb0] sm:$0xff]
        %v4860 = vld [vmem:[#allocation9 + $0xb8] sm:$0xff]
        %v4861 = vld [vmem:[#allocation9 + $0xc0] sm:$0xff]
        %v4862 = vld [vmem:[#allocation9 + $0xc8] sm:$0xff]
        %v4863 = vld [vmem:[#allocation9 + $0xd0] sm:$0xff]
        %v4864 = vld [vmem:[#allocation9 + $0xd8] sm:$0xff]
        %v4865 = vld [vmem:[#allocation9 + $0xe0] sm:$0xff]
        %v4866 = vld [vmem:[#allocation9 + $0xe8] sm:$0xff]
        %v4867 = vld [vmem:[#allocation9 + $0xf0] sm:$0xff]
        %v4868 = vld [vmem:[#allocation9 + $0xf8] sm:$0xff]
        %v4869 = vld [vmem:[#allocation9 + $0x100] sm:$0xff]
        %v4870 = vld [vmem:[#allocation9 + $0x108] sm:$0xff]
        %v4871 = vld [vmem:[#allocation9 + $0x110] sm:$0xff]
        %v4872 = vld [vmem:[#allocation9 + $0x118] sm:$0xff]
        %v4873 = vld [vmem:[#allocation9 + $0x120] sm:$0xff]
        %v4874 = vld [vmem:[#allocation9 + $0x128] sm:$0xff]
        %v4875 = vld [vmem:[#allocation9 + $0x130] sm:$0xff]
        %v4876 = vld [vmem:[#allocation9 + $0x138] sm:$0xff]
        %v4877 = vld [vmem:[#allocation9 + $0x140] sm:$0xff]
        %v4878 = vld [vmem:[#allocation9 + $0x148] sm:$0xff]
        %v4879 = vld [vmem:[#allocation9 + $0x150] sm:$0xff]
        %v4880 = vld [vmem:[#allocation9 + $0x158] sm:$0xff]
        %v4881 = vld [vmem:[#allocation9 + $0x160] sm:$0xff]
        %v4882 = vld [vmem:[#allocation9 + $0x168] sm:$0xff]
        %v4883 = vld [vmem:[#allocation9 + $0x170] sm:$0xff]
        %v4884 = vld [vmem:[#allocation9 + $0x178] sm:$0xff]
        %v4885 = vld [vmem:[#allocation9 + $0x180] sm:$0xff]
        %v4886 = vld [vmem:[#allocation9 + $0x188] sm:$0xff]
        %v4887 = vld [vmem:[#allocation9 + $0x190] sm:$0xff]
        %v4888 = vld [vmem:[#allocation9 + $0x198] sm:$0xff]
        %v4889 = vld [vmem:[#allocation9 + $0x1a0] sm:$0xff]
        %v4890 = vld [vmem:[#allocation9 + $0x1a8] sm:$0xff]
        %v4891 = vld [vmem:[#allocation9 + $0x1b0] sm:$0xff]
        %v4892 = vld [vmem:[#allocation9 + $0x1b8] sm:$0xff]
        %v4893 = vld [vmem:[#allocation9 + $0x1c0] sm:$0xff]
        %v4894 = vld [vmem:[#allocation9 + $0x1c8] sm:$0xff]
        %v4895 = vld [vmem:[#allocation9 + $0x1d0] sm:$0xff]
        %v4896 = vld [vmem:[#allocation9 + $0x1d8] sm:$0xff]
        %v4897 = vld [vmem:[#allocation9 + $0x1e0] sm:$0xff]
        %v4898 = vld [vmem:[#allocation9 + $0x1e8] sm:$0xff]
        %v4899 = vld [vmem:[#allocation9 + $0x1f0] sm:$0xff]
        %v4900 = vld [vmem:[#allocation9 + $0x1f8] sm:$0xff]
        %v4901 = vld [vmem:[#allocation9 + $0x200] sm:$0xff]
        %v4902 = vld [vmem:[#allocation9 + $0x208] sm:$0xff]
        %v4903 = vld [vmem:[#allocation9 + $0x210] sm:$0xff]
        %v4904 = vld [vmem:[#allocation9 + $0x218] sm:$0xff]
        %v4905 = vld [vmem:[#allocation9 + $0x220] sm:$0xff]
        %v4906 = vld [vmem:[#allocation9 + $0x228] sm:$0xff]
        %v4907 = vld [vmem:[#allocation9 + $0x230] sm:$0xff]
        %v4908 = vld [vmem:[#allocation9 + $0x238] sm:$0xff]
        %v4909 = vld [vmem:[#allocation9 + $0x240] sm:$0xff]
        %v4910 = vld [vmem:[#allocation9 + $0x248] sm:$0xff]
        %v4911 = vld [vmem:[#allocation9 + $0x250] sm:$0xff]
        %v4912 = vld [vmem:[#allocation9 + $0x258] sm:$0xff]
        %v4913 = vld [vmem:[#allocation9 + $0x260] sm:$0xff]
        %v4914 = vld [vmem:[#allocation9 + $0x268] sm:$0xff]
        %v4915 = vld [vmem:[#allocation9 + $0x270] sm:$0xff]
        %v4916 = vld [vmem:[#allocation9 + $0x278] sm:$0xff]
        %v4917 = vld [vmem:[#allocation9 + $0x280] sm:$0xff]
        %v4918 = vld [vmem:[#allocation9 + $0x288] sm:$0xff]
        %v4919 = vld [vmem:[#allocation9 + $0x290] sm:$0xff]
        %v4920 = vld [vmem:[#allocation9 + $0x298] sm:$0xff]
        %v4921 = vld [vmem:[#allocation9 + $0x2a0] sm:$0xff]
        %v4922 = vld [vmem:[#allocation9 + $0x2a8] sm:$0xff]
        %v4923 = vld [vmem:[#allocation9 + $0x2b0] sm:$0xff]
        %v4924 = vld [vmem:[#allocation9 + $0x2b8] sm:$0xff]
        %v4925 = vld [vmem:[#allocation9 + $0x2c0] sm:$0xff]
        %v4926 = vld [vmem:[#allocation9 + $0x2c8] sm:$0xff]
        %v4927 = vld [vmem:[#allocation9 + $0x2d0] sm:$0xff]
        %v4928 = vld [vmem:[#allocation9 + $0x2d8] sm:$0xff]
        %v4929 = vld [vmem:[#allocation9 + $0x2e0] sm:$0xff]
        %v4930 = vld [vmem:[#allocation9 + $0x2e8] sm:$0xff]
        %v4931 = vld [vmem:[#allocation9 + $0x2f0] sm:$0xff]
        %v4932 = vld [vmem:[#allocation9 + $0x2f8] sm:$0xff]
        %v4933 = vld [vmem:[#allocation9 + $0x300] sm:$0xff]
        %v4934 = vld [vmem:[#allocation9 + $0x308] sm:$0xff]
        %v4935 = vld [vmem:[#allocation9 + $0x310] sm:$0xff]
        %v4936 = vld [vmem:[#allocation9 + $0x318] sm:$0xff]
        %v4937 = vld [vmem:[#allocation9 + $0x320] sm:$0xff]
        %v4938 = vld [vmem:[#allocation9 + $0x328] sm:$0xff]
        %v4939 = vld [vmem:[#allocation9 + $0x330] sm:$0xff]
        %v4940 = vld [vmem:[#allocation9 + $0x338] sm:$0xff]
        %v4941 = vld [vmem:[#allocation9 + $0x340] sm:$0xff]
        %v4942 = vld [vmem:[#allocation9 + $0x348] sm:$0xff]
        %v4943 = vld [vmem:[#allocation9 + $0x350] sm:$0xff]
        %v4944 = vld [vmem:[#allocation9 + $0x358] sm:$0xff]
        %v4945 = vld [vmem:[#allocation9 + $0x360] sm:$0xff]
        %v4946 = vld [vmem:[#allocation9 + $0x368] sm:$0xff]
        %v4947 = vld [vmem:[#allocation9 + $0x370] sm:$0xff]
        %v4948 = vld [vmem:[#allocation9 + $0x378] sm:$0xff]
        %v4949 = vld [vmem:[#allocation9 + $0x380] sm:$0xff]
        %v4950 = vld [vmem:[#allocation9 + $0x388] sm:$0xff]
        %v4951 = vld [vmem:[#allocation9 + $0x390] sm:$0xff]
        %v4952 = vld [vmem:[#allocation9 + $0x398] sm:$0xff]
        %v4953 = vld [vmem:[#allocation9 + $0x3a0] sm:$0xff]
        %v4954 = vld [vmem:[#allocation9 + $0x3a8] sm:$0xff]
        %v4955 = vld [vmem:[#allocation9 + $0x3b0] sm:$0xff]
        %v4956 = vld [vmem:[#allocation9 + $0x3b8] sm:$0xff]
        %v4957 = vld [vmem:[#allocation9 + $0x3c0] sm:$0xff]
        %v4958 = vld [vmem:[#allocation9 + $0x3c8] sm:$0xff]
        %v4959 = vld [vmem:[#allocation9 + $0x3d0] sm:$0xff]
        %v4960 = vld [vmem:[#allocation9 + $0x3d8] sm:$0xff]
        %v4961 = vld [vmem:[#allocation9 + $0x3e0] sm:$0xff]
        %v4962 = vld [vmem:[#allocation9 + $0x3e8] sm:$0xff]
        %v4963 = vld [vmem:[#allocation9 + $0x3f0] sm:$0xff]
        %v4964 = vld [vmem:[#allocation9 + $0x3f8] sm:$0xff]
        %v4965 = vld [vmem:[#allocation9 + $0x400] sm:$0xff]
        %v4966 = vld [vmem:[#allocation9 + $0x408] sm:$0xff]
        %v4967 = vld [vmem:[#allocation9 + $0x410] sm:$0xff]
        %v4968 = vld [vmem:[#allocation9 + $0x418] sm:$0xff]
        %v4969 = vld [vmem:[#allocation9 + $0x420] sm:$0xff]
        %v4970 = vld [vmem:[#allocation9 + $0x428] sm:$0xff]
        %v4971 = vld [vmem:[#allocation9 + $0x430] sm:$0xff]
        %v4972 = vld [vmem:[#allocation9 + $0x438] sm:$0xff]
        %v4974 = vsel %vm583, %v4827, 0
        %v4977 = vsel %vm583, %v4836, 0
        %4979 = vmatpush.msra.mxu0 %v4852
        %4980 = vmatpush.msra.mxu0 %v4851
        %4981 = vmatpush.msra.mxu0 %v4850
        %4982 = vmatpush.msra.mxu0 %v4849
        %4983 = vmatpush.msra.mxu0 %v4848
        %4984 = vmatpush.msra.mxu0 %v4847
        %4985 = vmatpush.msra.mxu0 %v4846
        %4986 = vmatpush.msra.mxu0 %v4845
        %4987 = vmatpush.msra.mxu0 %v4844
        %4988 = vmatpush.msra.mxu0 %v4843
        %4989 = vmatpush.msra.mxu0 %v4842
        %4990 = vmatpush.msra.mxu0 %v4841
        %4991 = vmatpush.msra.mxu0 %v4840
        %4992 = vmatpush.msra.mxu0 %v4839
        %4993 = vmatpush.msra.mxu0 %v4838
        %4994 = vmatpush.msra.mxu0 %v4837
        %4995 = vmatmul.f32.gmra.mxu0 %v4819
        %v4996 = vpop.f32.mrf.mxu0
        %v4997 = vadd.f32 0.0, %v4996
        %4998 = vmatmul.f32.gmra.mxu0 %v4828
        %v4999 = vpop.f32.mrf.mxu0
        %v5000 = vadd.f32 0.0, %v4999
        %5001 = vdwg.mxu0
        %5002 = vmatpush.msra.mxu0 %v4868
        %5003 = vmatpush.msra.mxu0 %v4867
        %5004 = vmatpush.msra.mxu0 %v4866
        %5005 = vmatpush.msra.mxu0 %v4865
        %5006 = vmatpush.msra.mxu0 %v4864
        %5007 = vmatpush.msra.mxu0 %v4863
        %5008 = vmatpush.msra.mxu0 %v4862
        %5009 = vmatpush.msra.mxu0 %v4861
        %5010 = vmatpush.msra.mxu0 %v4860
        %5011 = vmatpush.msra.mxu0 %v4859
        %5012 = vmatpush.msra.mxu0 %v4858
        %5013 = vmatpush.msra.mxu0 %v4857
        %5014 = vmatpush.msra.mxu0 %v4856
        %5015 = vmatpush.msra.mxu0 %v4855
        %5016 = vmatpush.msra.mxu0 %v4854
        %5017 = vmatpush.msra.mxu0 %v4853
        %5018 = vmatmul.f32.gmra.mxu0 %v4820
        %v5019 = vpop.f32.mrf.mxu0
        %v5020 = vadd.f32 %v4997, %v5019
        %5021 = vmatmul.f32.gmra.mxu0 %v4829
        %v5022 = vpop.f32.mrf.mxu0
        %v5023 = vadd.f32 %v5000, %v5022
        %5024 = vdwg.mxu0
        %5025 = vmatpush.msra.mxu0 %v4884
        %5026 = vmatpush.msra.mxu0 %v4883
        %5027 = vmatpush.msra.mxu0 %v4882
        %5028 = vmatpush.msra.mxu0 %v4881
        %5029 = vmatpush.msra.mxu0 %v4880
        %5030 = vmatpush.msra.mxu0 %v4879
        %5031 = vmatpush.msra.mxu0 %v4878
        %5032 = vmatpush.msra.mxu0 %v4877
        %5033 = vmatpush.msra.mxu0 %v4876
        %5034 = vmatpush.msra.mxu0 %v4875
        %5035 = vmatpush.msra.mxu0 %v4874
        %5036 = vmatpush.msra.mxu0 %v4873
        %5037 = vmatpush.msra.mxu0 %v4872
        %5038 = vmatpush.msra.mxu0 %v4871
        %5039 = vmatpush.msra.mxu0 %v4870
        %5040 = vmatpush.msra.mxu0 %v4869
        %5041 = vmatmul.f32.gmra.mxu0 %v4821
        %v5042 = vpop.f32.mrf.mxu0
        %v5043 = vadd.f32 %v5020, %v5042
        %5044 = vmatmul.f32.gmra.mxu0 %v4830
        %v5045 = vpop.f32.mrf.mxu0
        %v5046 = vadd.f32 %v5023, %v5045
        %5047 = vdwg.mxu0
        %5048 = vmatpush.msra.mxu0 %v4900
        %5049 = vmatpush.msra.mxu0 %v4899
        %5050 = vmatpush.msra.mxu0 %v4898
        %5051 = vmatpush.msra.mxu0 %v4897
        %5052 = vmatpush.msra.mxu0 %v4896
        %5053 = vmatpush.msra.mxu0 %v4895
        %5054 = vmatpush.msra.mxu0 %v4894
        %5055 = vmatpush.msra.mxu0 %v4893
        %5056 = vmatpush.msra.mxu0 %v4892
        %5057 = vmatpush.msra.mxu0 %v4891
        %5058 = vmatpush.msra.mxu0 %v4890
        %5059 = vmatpush.msra.mxu0 %v4889
        %5060 = vmatpush.msra.mxu0 %v4888
        %5061 = vmatpush.msra.mxu0 %v4887
        %5062 = vmatpush.msra.mxu0 %v4886
        %5063 = vmatpush.msra.mxu0 %v4885
        %5064 = vmatmul.f32.gmra.mxu0 %v4822
        %v5065 = vpop.f32.mrf.mxu0
        %v5066 = vadd.f32 %v5043, %v5065
        %5067 = vmatmul.f32.gmra.mxu0 %v4831
        %v5068 = vpop.f32.mrf.mxu0
        %v5069 = vadd.f32 %v5046, %v5068
        %5070 = vdwg.mxu0
        %5071 = vmatpush.msra.mxu0 %v4916
        %5072 = vmatpush.msra.mxu0 %v4915
        %5073 = vmatpush.msra.mxu0 %v4914
        %5074 = vmatpush.msra.mxu0 %v4913
        %5075 = vmatpush.msra.mxu0 %v4912
        %5076 = vmatpush.msra.mxu0 %v4911
        %5077 = vmatpush.msra.mxu0 %v4910
        %5078 = vmatpush.msra.mxu0 %v4909
        %5079 = vmatpush.msra.mxu0 %v4908
        %5080 = vmatpush.msra.mxu0 %v4907
        %5081 = vmatpush.msra.mxu0 %v4906
        %5082 = vmatpush.msra.mxu0 %v4905
        %5083 = vmatpush.msra.mxu0 %v4904
        %5084 = vmatpush.msra.mxu0 %v4903
        %5085 = vmatpush.msra.mxu0 %v4902
        %5086 = vmatpush.msra.mxu0 %v4901
        %5087 = vmatmul.f32.gmra.mxu0 %v4823
        %v5088 = vpop.f32.mrf.mxu0
        %v5089 = vadd.f32 %v5066, %v5088
        %5090 = vmatmul.f32.gmra.mxu0 %v4832
        %v5091 = vpop.f32.mrf.mxu0
        %v5092 = vadd.f32 %v5069, %v5091
        %5093 = vdwg.mxu0
        %5094 = vmatpush.msra.mxu0 %v4932
        %5095 = vmatpush.msra.mxu0 %v4931
        %5096 = vmatpush.msra.mxu0 %v4930
        %5097 = vmatpush.msra.mxu0 %v4929
        %5098 = vmatpush.msra.mxu0 %v4928
        %5099 = vmatpush.msra.mxu0 %v4927
        %5100 = vmatpush.msra.mxu0 %v4926
        %5101 = vmatpush.msra.mxu0 %v4925
        %5102 = vmatpush.msra.mxu0 %v4924
        %5103 = vmatpush.msra.mxu0 %v4923
        %5104 = vmatpush.msra.mxu0 %v4922
        %5105 = vmatpush.msra.mxu0 %v4921
        %5106 = vmatpush.msra.mxu0 %v4920
        %5107 = vmatpush.msra.mxu0 %v4919
        %5108 = vmatpush.msra.mxu0 %v4918
        %5109 = vmatpush.msra.mxu0 %v4917
        %5110 = vmatmul.f32.gmra.mxu0 %v4824
        %v5111 = vpop.f32.mrf.mxu0
        %v5112 = vadd.f32 %v5089, %v5111
        %5113 = vmatmul.f32.gmra.mxu0 %v4833
        %v5114 = vpop.f32.mrf.mxu0
        %v5115 = vadd.f32 %v5092, %v5114
        %5116 = vdwg.mxu0
        %5117 = vmatpush.msra.mxu0 %v4948
        %5118 = vmatpush.msra.mxu0 %v4947
        %5119 = vmatpush.msra.mxu0 %v4946
        %5120 = vmatpush.msra.mxu0 %v4945
        %5121 = vmatpush.msra.mxu0 %v4944
        %5122 = vmatpush.msra.mxu0 %v4943
        %5123 = vmatpush.msra.mxu0 %v4942
        %5124 = vmatpush.msra.mxu0 %v4941
        %5125 = vmatpush.msra.mxu0 %v4940
        %5126 = vmatpush.msra.mxu0 %v4939
        %5127 = vmatpush.msra.mxu0 %v4938
        %5128 = vmatpush.msra.mxu0 %v4937
        %5129 = vmatpush.msra.mxu0 %v4936
        %5130 = vmatpush.msra.mxu0 %v4935
        %5131 = vmatpush.msra.mxu0 %v4934
        %5132 = vmatpush.msra.mxu0 %v4933
        %5133 = vmatmul.f32.gmra.mxu0 %v4825
        %v5134 = vpop.f32.mrf.mxu0
        %v5135 = vadd.f32 %v5112, %v5134
        %5136 = vmatmul.f32.gmra.mxu0 %v4834
        %v5137 = vpop.f32.mrf.mxu0
        %v5138 = vadd.f32 %v5115, %v5137
        %5139 = vdwg.mxu0
        %5140 = vmatpush.msra.mxu0 %v4964
        %5141 = vmatpush.msra.mxu0 %v4963
        %5142 = vmatpush.msra.mxu0 %v4962
        %5143 = vmatpush.msra.mxu0 %v4961
        %5144 = vmatpush.msra.mxu0 %v4960
        %5145 = vmatpush.msra.mxu0 %v4959
        %5146 = vmatpush.msra.mxu0 %v4958
        %5147 = vmatpush.msra.mxu0 %v4957
        %5148 = vmatpush.msra.mxu0 %v4956
        %5149 = vmatpush.msra.mxu0 %v4955
        %5150 = vmatpush.msra.mxu0 %v4954
        %5151 = vmatpush.msra.mxu0 %v4953
        %5152 = vmatpush.msra.mxu0 %v4952
        %5153 = vmatpush.msra.mxu0 %v4951
        %5154 = vmatpush.msra.mxu0 %v4950
        %5155 = vmatpush.msra.mxu0 %v4949
        %5156 = vmatmul.f32.gmra.mxu0 %v4826
        %v5157 = vpop.f32.mrf.mxu0
        %v5158 = vadd.f32 %v5135, %v5157
        %5159 = vmatmul.f32.gmra.mxu0 %v4835
        %v5160 = vpop.f32.mrf.mxu0
        %v5161 = vadd.f32 %v5138, %v5160
        %5162 = vdwg.mxu0
        %5163 = vmatpush.msra.mxu0 0.0
        %5164 = vmatpush.msra.mxu0 0.0
        %5165 = vmatpush.msra.mxu0 0.0
        %5166 = vmatpush.msra.mxu0 0.0
        %5167 = vmatpush.msra.mxu0 0.0
        %5168 = vmatpush.msra.mxu0 0.0
        %5169 = vmatpush.msra.mxu0 0.0
        %5170 = vmatpush.msra.mxu0 0.0
        %5171 = vmatpush.msra.mxu0 %v4972
        %5172 = vmatpush.msra.mxu0 %v4971
        %5173 = vmatpush.msra.mxu0 %v4970
        %5174 = vmatpush.msra.mxu0 %v4969
        %5175 = vmatpush.msra.mxu0 %v4968
        %5176 = vmatpush.msra.mxu0 %v4967
        %5177 = vmatpush.msra.mxu0 %v4966
        %5178 = vmatpush.msra.mxu0 %v4965
        %5179 = vmatmul.f32.gmra.mxu0 %v4974
        %v5180 = vpop.f32.mrf.mxu0
        %v5181 = vadd.f32 %v5158, %v5180
        %5182 = vmatmul.f32.gmra.mxu0 %v4977
        %v5183 = vpop.f32.mrf.mxu0
        %v5184 = vadd.f32 %v5161, %v5183
        %5185 = vdwg.mxu0
        %v5186 = vmul.f32 %v4819, %v4819
        %v5187 = vmul.f32 %v4820, %v4820
        %v5188 = vmul.f32 %v4821, %v4821
        %v5189 = vmul.f32 %v4822, %v4822
        %v5190 = vmul.f32 %v4823, %v4823
        %v5191 = vmul.f32 %v4824, %v4824
        %v5192 = vmul.f32 %v4825, %v4825
        %v5193 = vmul.f32 %v4826, %v4826
        %v5194 = vmul.f32 %v4827, %v4827
        %v5195 = vmul.f32 %v4828, %v4828
        %v5196 = vmul.f32 %v4829, %v4829
        %v5197 = vmul.f32 %v4830, %v4830
        %v5198 = vmul.f32 %v4831, %v4831
        %v5199 = vmul.f32 %v4832, %v4832
        %v5200 = vmul.f32 %v4833, %v4833
        %v5201 = vmul.f32 %v4834, %v4834
        %v5202 = vmul.f32 %v4835, %v4835
        %v5203 = vmul.f32 %v4836, %v4836
        %v5205 = vsel %vm583, %v5194, 0
        %v5208 = vsel %vm583, %v5203, 0
        %5210 = vmatpush.msra.mxu0 %v4852
        %5211 = vmatpush.msra.mxu0 %v4851
        %5212 = vmatpush.msra.mxu0 %v4850
        %5213 = vmatpush.msra.mxu0 %v4849
        %5214 = vmatpush.msra.mxu0 %v4848
        %5215 = vmatpush.msra.mxu0 %v4847
        %5216 = vmatpush.msra.mxu0 %v4846
        %5217 = vmatpush.msra.mxu0 %v4845
        %5218 = vmatpush.msra.mxu0 %v4844
        %5219 = vmatpush.msra.mxu0 %v4843
        %5220 = vmatpush.msra.mxu0 %v4842
        %5221 = vmatpush.msra.mxu0 %v4841
        %5222 = vmatpush.msra.mxu0 %v4840
        %5223 = vmatpush.msra.mxu0 %v4839
        %5224 = vmatpush.msra.mxu0 %v4838
        %5225 = vmatpush.msra.mxu0 %v4837
        %5226 = vmatmul.f32.gmra.mxu0 %v5186
        %v5227 = vpop.f32.mrf.mxu0
        %v5228 = vadd.f32 0.0, %v5227
        %5229 = vmatmul.f32.gmra.mxu0 %v5195
        %v5230 = vpop.f32.mrf.mxu0
        %v5231 = vadd.f32 0.0, %v5230
        %5232 = vdwg.mxu0
        %5233 = vmatpush.msra.mxu0 %v4868
        %5234 = vmatpush.msra.mxu0 %v4867
        %5235 = vmatpush.msra.mxu0 %v4866
        %5236 = vmatpush.msra.mxu0 %v4865
        %5237 = vmatpush.msra.mxu0 %v4864
        %5238 = vmatpush.msra.mxu0 %v4863
        %5239 = vmatpush.msra.mxu0 %v4862
        %5240 = vmatpush.msra.mxu0 %v4861
        %5241 = vmatpush.msra.mxu0 %v4860
        %5242 = vmatpush.msra.mxu0 %v4859
        %5243 = vmatpush.msra.mxu0 %v4858
        %5244 = vmatpush.msra.mxu0 %v4857
        %5245 = vmatpush.msra.mxu0 %v4856
        %5246 = vmatpush.msra.mxu0 %v4855
        %5247 = vmatpush.msra.mxu0 %v4854
        %5248 = vmatpush.msra.mxu0 %v4853
        %5249 = vmatmul.f32.gmra.mxu0 %v5187
        %v5250 = vpop.f32.mrf.mxu0
        %v5251 = vadd.f32 %v5228, %v5250
        %5252 = vmatmul.f32.gmra.mxu0 %v5196
        %v5253 = vpop.f32.mrf.mxu0
        %v5254 = vadd.f32 %v5231, %v5253
        %5255 = vdwg.mxu0
        %5256 = vmatpush.msra.mxu0 %v4884
        %5257 = vmatpush.msra.mxu0 %v4883
        %5258 = vmatpush.msra.mxu0 %v4882
        %5259 = vmatpush.msra.mxu0 %v4881
        %5260 = vmatpush.msra.mxu0 %v4880
        %5261 = vmatpush.msra.mxu0 %v4879
        %5262 = vmatpush.msra.mxu0 %v4878
        %5263 = vmatpush.msra.mxu0 %v4877
        %5264 = vmatpush.msra.mxu0 %v4876
        %5265 = vmatpush.msra.mxu0 %v4875
        %5266 = vmatpush.msra.mxu0 %v4874
        %5267 = vmatpush.msra.mxu0 %v4873
        %5268 = vmatpush.msra.mxu0 %v4872
        %5269 = vmatpush.msra.mxu0 %v4871
        %5270 = vmatpush.msra.mxu0 %v4870
        %5271 = vmatpush.msra.mxu0 %v4869
        %5272 = vmatmul.f32.gmra.mxu0 %v5188
        %v5273 = vpop.f32.mrf.mxu0
        %v5274 = vadd.f32 %v5251, %v5273
        %5275 = vmatmul.f32.gmra.mxu0 %v5197
        %v5276 = vpop.f32.mrf.mxu0
        %v5277 = vadd.f32 %v5254, %v5276
        %5278 = vdwg.mxu0
        %5279 = vmatpush.msra.mxu0 %v4900
        %5280 = vmatpush.msra.mxu0 %v4899
        %5281 = vmatpush.msra.mxu0 %v4898
        %5282 = vmatpush.msra.mxu0 %v4897
        %5283 = vmatpush.msra.mxu0 %v4896
        %5284 = vmatpush.msra.mxu0 %v4895
        %5285 = vmatpush.msra.mxu0 %v4894
        %5286 = vmatpush.msra.mxu0 %v4893
        %5287 = vmatpush.msra.mxu0 %v4892
        %5288 = vmatpush.msra.mxu0 %v4891
        %5289 = vmatpush.msra.mxu0 %v4890
        %5290 = vmatpush.msra.mxu0 %v4889
        %5291 = vmatpush.msra.mxu0 %v4888
        %5292 = vmatpush.msra.mxu0 %v4887
        %5293 = vmatpush.msra.mxu0 %v4886
        %5294 = vmatpush.msra.mxu0 %v4885
        %5295 = vmatmul.f32.gmra.mxu0 %v5189
        %v5296 = vpop.f32.mrf.mxu0
        %v5297 = vadd.f32 %v5274, %v5296
        %5298 = vmatmul.f32.gmra.mxu0 %v5198
        %v5299 = vpop.f32.mrf.mxu0
        %v5300 = vadd.f32 %v5277, %v5299
        %5301 = vdwg.mxu0
        %5302 = vmatpush.msra.mxu0 %v4916
        %5303 = vmatpush.msra.mxu0 %v4915
        %5304 = vmatpush.msra.mxu0 %v4914
        %5305 = vmatpush.msra.mxu0 %v4913
        %5306 = vmatpush.msra.mxu0 %v4912
        %5307 = vmatpush.msra.mxu0 %v4911
        %5308 = vmatpush.msra.mxu0 %v4910
        %5309 = vmatpush.msra.mxu0 %v4909
        %5310 = vmatpush.msra.mxu0 %v4908
        %5311 = vmatpush.msra.mxu0 %v4907
        %5312 = vmatpush.msra.mxu0 %v4906
        %5313 = vmatpush.msra.mxu0 %v4905
        %5314 = vmatpush.msra.mxu0 %v4904
        %5315 = vmatpush.msra.mxu0 %v4903
        %5316 = vmatpush.msra.mxu0 %v4902
        %5317 = vmatpush.msra.mxu0 %v4901
        %5318 = vmatmul.f32.gmra.mxu0 %v5190
        %v5319 = vpop.f32.mrf.mxu0
        %v5320 = vadd.f32 %v5297, %v5319
        %5321 = vmatmul.f32.gmra.mxu0 %v5199
        %v5322 = vpop.f32.mrf.mxu0
        %v5323 = vadd.f32 %v5300, %v5322
        %5324 = vdwg.mxu0
        %5325 = vmatpush.msra.mxu0 %v4932
        %5326 = vmatpush.msra.mxu0 %v4931
        %5327 = vmatpush.msra.mxu0 %v4930
        %5328 = vmatpush.msra.mxu0 %v4929
        %5329 = vmatpush.msra.mxu0 %v4928
        %5330 = vmatpush.msra.mxu0 %v4927
        %5331 = vmatpush.msra.mxu0 %v4926
        %5332 = vmatpush.msra.mxu0 %v4925
        %5333 = vmatpush.msra.mxu0 %v4924
        %5334 = vmatpush.msra.mxu0 %v4923
        %5335 = vmatpush.msra.mxu0 %v4922
        %5336 = vmatpush.msra.mxu0 %v4921
        %5337 = vmatpush.msra.mxu0 %v4920
        %5338 = vmatpush.msra.mxu0 %v4919
        %5339 = vmatpush.msra.mxu0 %v4918
        %5340 = vmatpush.msra.mxu0 %v4917
        %5341 = vmatmul.f32.gmra.mxu0 %v5191
        %v5342 = vpop.f32.mrf.mxu0
        %v5343 = vadd.f32 %v5320, %v5342
        %5344 = vmatmul.f32.gmra.mxu0 %v5200
        %v5345 = vpop.f32.mrf.mxu0
        %v5346 = vadd.f32 %v5323, %v5345
        %5347 = vdwg.mxu0
        %5348 = vmatpush.msra.mxu0 %v4948
        %5349 = vmatpush.msra.mxu0 %v4947
        %5350 = vmatpush.msra.mxu0 %v4946
        %5351 = vmatpush.msra.mxu0 %v4945
        %5352 = vmatpush.msra.mxu0 %v4944
        %5353 = vmatpush.msra.mxu0 %v4943
        %5354 = vmatpush.msra.mxu0 %v4942
        %5355 = vmatpush.msra.mxu0 %v4941
        %5356 = vmatpush.msra.mxu0 %v4940
        %5357 = vmatpush.msra.mxu0 %v4939
        %5358 = vmatpush.msra.mxu0 %v4938
        %5359 = vmatpush.msra.mxu0 %v4937
        %5360 = vmatpush.msra.mxu0 %v4936
        %5361 = vmatpush.msra.mxu0 %v4935
        %5362 = vmatpush.msra.mxu0 %v4934
        %5363 = vmatpush.msra.mxu0 %v4933
        %5364 = vmatmul.f32.gmra.mxu0 %v5192
        %v5365 = vpop.f32.mrf.mxu0
        %v5366 = vadd.f32 %v5343, %v5365
        %5367 = vmatmul.f32.gmra.mxu0 %v5201
        %v5368 = vpop.f32.mrf.mxu0
        %v5369 = vadd.f32 %v5346, %v5368
        %5370 = vdwg.mxu0
        %5371 = vmatpush.msra.mxu0 %v4964
        %5372 = vmatpush.msra.mxu0 %v4963
        %5373 = vmatpush.msra.mxu0 %v4962
        %5374 = vmatpush.msra.mxu0 %v4961
        %5375 = vmatpush.msra.mxu0 %v4960
        %5376 = vmatpush.msra.mxu0 %v4959
        %5377 = vmatpush.msra.mxu0 %v4958
        %5378 = vmatpush.msra.mxu0 %v4957
        %5379 = vmatpush.msra.mxu0 %v4956
        %5380 = vmatpush.msra.mxu0 %v4955
        %5381 = vmatpush.msra.mxu0 %v4954
        %5382 = vmatpush.msra.mxu0 %v4953
        %5383 = vmatpush.msra.mxu0 %v4952
        %5384 = vmatpush.msra.mxu0 %v4951
        %5385 = vmatpush.msra.mxu0 %v4950
        %5386 = vmatpush.msra.mxu0 %v4949
        %5387 = vmatmul.f32.gmra.mxu0 %v5193
        %v5388 = vpop.f32.mrf.mxu0
        %v5389 = vadd.f32 %v5366, %v5388
        %5390 = vmatmul.f32.gmra.mxu0 %v5202
        %v5391 = vpop.f32.mrf.mxu0
        %v5392 = vadd.f32 %v5369, %v5391
        %5393 = vdwg.mxu0
        %5394 = vmatpush.msra.mxu0 0.0
        %5395 = vmatpush.msra.mxu0 0.0
        %5396 = vmatpush.msra.mxu0 0.0
        %5397 = vmatpush.msra.mxu0 0.0
        %5398 = vmatpush.msra.mxu0 0.0
        %5399 = vmatpush.msra.mxu0 0.0
        %5400 = vmatpush.msra.mxu0 0.0
        %5401 = vmatpush.msra.mxu0 0.0
        %5402 = vmatpush.msra.mxu0 %v4972
        %5403 = vmatpush.msra.mxu0 %v4971
        %5404 = vmatpush.msra.mxu0 %v4970
        %5405 = vmatpush.msra.mxu0 %v4969
        %5406 = vmatpush.msra.mxu0 %v4968
        %5407 = vmatpush.msra.mxu0 %v4967
        %5408 = vmatpush.msra.mxu0 %v4966
        %5409 = vmatpush.msra.mxu0 %v4965
        %5410 = vmatmul.f32.gmra.mxu0 %v5205
        %v5411 = vpop.f32.mrf.mxu0
        %v5412 = vadd.f32 %v5389, %v5411
        %5413 = vmatmul.f32.gmra.mxu0 %v5208
        %v5414 = vpop.f32.mrf.mxu0
        %v5415 = vadd.f32 %v5392, %v5414
        %5416 = vdwg.mxu0
        %v5417 = vmul.f32 %v5181, 0.0009765625
        %v5418 = vmul.f32 %v5184, 0.0009765625
        %v5419 = vmul.f32 %v5412, 0.0009765625
        %v5420 = vmul.f32 %v5415, 0.0009765625
        %v5421 = vmul.f32 %v5417, %v5417
        %v5422 = vmul.f32 %v5418, %v5418
        %v5423 = vsub.f32 %v5419, %v5421
        %v5424 = vsub.f32 %v5420, %v5422
        %v5425 = vld [vmem:[%s7] sm:$0xff]
        %v5426 = vld [vmem:[%s7 + $0x8] sm:$0xff]
        %v5427 = vadd.f32 %v5423, 1e-05
        %v5428 = vadd.f32 %v5424, 1e-05
        %v5429 = vrsqrt.pop %v5427
        %v5430 = vmul.f32 %v5429, %v5427
        %v5431 = vmul.f32 %v5430, %v5429
        %v5432 = vmul.f32 0.5, %v5431
        %v5433 = vsub.f32 1.5, %v5432
        %v5434 = vmul.f32 %v5429, %v5433
        %vm5435 = vweird.f32 %v5427
        %vm5436 = vweird.f32 %v5429
        %vm5437 = vmor %vm5435, %vm5436
        %v5438 = vsel %vm5437, %v5429, %v5434
        %v5439 = vrsqrt.pop %v5428
        %v5440 = vmul.f32 %v5439, %v5428
        %v5441 = vmul.f32 %v5440, %v5439
        %v5442 = vmul.f32 0.5, %v5441
        %v5443 = vsub.f32 1.5, %v5442
        %v5444 = vmul.f32 %v5439, %v5443
        %vm5445 = vweird.f32 %v5428
        %vm5446 = vweird.f32 %v5439
        %vm5447 = vmor %vm5445, %vm5446
        %v5448 = vsel %vm5447, %v5439, %v5444
        %v5449 = vmul.f32 %v5438, %v5425
        %v5450 = vmul.f32 %v5448, %v5426
        %5452 = vset.pattern.permute.xlu0 0
        %5453 = vperm.xlu0 %5452, %v5417
        %v5454 = vpop.permute.xlu0 %5453
        %5457 = vset.pattern.permute.xlu0 0
        %5458 = vperm.xlu0 %5457, %v5418
        %v5459 = vpop.permute.xlu0 %5458
        %v5461 = vsub.f32 %v4819, %v5454
        %v5462 = vsub.f32 %v4820, %v5454
        %v5463 = vsub.f32 %v4821, %v5454
        %v5464 = vsub.f32 %v4822, %v5454
        %v5465 = vsub.f32 %v4823, %v5454
        %v5466 = vsub.f32 %v4824, %v5454
        %v5467 = vsub.f32 %v4825, %v5454
        %v5468 = vsub.f32 %v4826, %v5454
        %v5469 = vsub.f32 %v4827, %v5454
        %v5470 = vsub.f32 %v4828, %v5459
        %v5471 = vsub.f32 %v4829, %v5459
        %v5472 = vsub.f32 %v4830, %v5459
        %v5473 = vsub.f32 %v4831, %v5459
        %v5474 = vsub.f32 %v4832, %v5459
        %v5475 = vsub.f32 %v4833, %v5459
        %v5476 = vsub.f32 %v4834, %v5459
        %v5477 = vsub.f32 %v4835, %v5459
        %v5478 = vsub.f32 %v4836, %v5459
        %5480 = vset.pattern.permute.xlu0 0
        %5481 = vperm.xlu0 %5480, %v5449
        %v5482 = vpop.permute.xlu0 %5481
        %5485 = vset.pattern.permute.xlu0 0
        %5486 = vperm.xlu0 %5485, %v5450
        %v5487 = vpop.permute.xlu0 %5486
        %v5489 = vmul.f32 %v5461, %v5482
        %v5490 = vmul.f32 %v5462, %v5482
        %v5491 = vmul.f32 %v5463, %v5482
        %v5492 = vmul.f32 %v5464, %v5482
        %v5493 = vmul.f32 %v5465, %v5482
        %v5494 = vmul.f32 %v5466, %v5482
        %v5495 = vmul.f32 %v5467, %v5482
        %v5496 = vmul.f32 %v5468, %v5482
        %v5497 = vmul.f32 %v5469, %v5482
        %v5498 = vmul.f32 %v5470, %v5487
        %v5499 = vmul.f32 %v5471, %v5487
        %v5500 = vmul.f32 %v5472, %v5487
        %v5501 = vmul.f32 %v5473, %v5487
        %v5502 = vmul.f32 %v5474, %v5487
        %v5503 = vmul.f32 %v5475, %v5487
        %v5504 = vmul.f32 %v5476, %v5487
        %v5505 = vmul.f32 %v5477, %v5487
        %v5506 = vmul.f32 %v5478, %v5487
        %5508 = vset.pattern.permute.xlu0 1
        %5509 = vperm.xlu0 %5508, %v5425
        %v5510 = vpop.permute.xlu0 %5509
        %5513 = vset.pattern.permute.xlu0 1
        %5514 = vperm.xlu0 %5513, %v5426
        %v5515 = vpop.permute.xlu0 %5514
        %v5517 = vadd.f32 %v5489, %v5510
        %v5518 = vadd.f32 %v5490, %v5510
        %v5519 = vadd.f32 %v5491, %v5510
        %v5520 = vadd.f32 %v5492, %v5510
        %v5521 = vadd.f32 %v5493, %v5510
        %v5522 = vadd.f32 %v5494, %v5510
        %v5523 = vadd.f32 %v5495, %v5510
        %v5524 = vadd.f32 %v5496, %v5510
        %v5525 = vadd.f32 %v5497, %v5510
        %v5526 = vadd.f32 %v5498, %v5515
        %v5527 = vadd.f32 %v5499, %v5515
        %v5528 = vadd.f32 %v5500, %v5515
        %v5529 = vadd.f32 %v5501, %v5515
        %v5530 = vadd.f32 %v5502, %v5515
        %v5531 = vadd.f32 %v5503, %v5515
        %v5532 = vadd.f32 %v5504, %v5515
        %v5533 = vadd.f32 %v5505, %v5515
        %v5534 = vadd.f32 %v5506, %v5515
        %v5535 = vmax.f32 %v5517, 0.0
        %v5536 = vmax.f32 %v5518, 0.0
        %v5537 = vmax.f32 %v5519, 0.0
        %v5538 = vmax.f32 %v5520, 0.0
        %v5539 = vmax.f32 %v5521, 0.0
        %v5540 = vmax.f32 %v5522, 0.0
        %v5541 = vmax.f32 %v5523, 0.0
        %v5542 = vmax.f32 %v5524, 0.0
        %v5543 = vmax.f32 %v5525, 0.0
        %v5544 = vmax.f32 %v5526, 0.0
        %v5545 = vmax.f32 %v5527, 0.0
        %v5546 = vmax.f32 %v5528, 0.0
        %v5547 = vmax.f32 %v5529, 0.0
        %v5548 = vmax.f32 %v5530, 0.0
        %v5549 = vmax.f32 %v5531, 0.0
        %v5550 = vmax.f32 %v5532, 0.0
        %v5551 = vmax.f32 %v5533, 0.0
        %v5552 = vmax.f32 %v5534, 0.0
        %v5553 = vpack.c.bf16 %v5536, %v5535
        %v5554 = vpack.c.bf16 %v5538, %v5537
        %v5555 = vpack.c.bf16 %v5540, %v5539
        %v5556 = vpack.c.bf16 %v5542, %v5541
        %v5557 = vpack.c.bf16 %v5543, %v5543
        %v5558 = vpack.c.bf16 %v5545, %v5544
        %v5559 = vpack.c.bf16 %v5547, %v5546
        %v5560 = vpack.c.bf16 %v5549, %v5548
        %v5561 = vpack.c.bf16 %v5551, %v5550
        %v5562 = vpack.c.bf16 %v5552, %v5552
        %5573 = vrot.lane.b32.xlu0 %v5553, 35
        %v5574 = vpop.permute.xlu0 %5573
        %5575 = vrot.lane.b32.xlu0 %v5554, 35
        %v5576 = vpop.permute.xlu0 %5575
        %5577 = vrot.lane.b32.xlu0 %v5555, 35
        %v5578 = vpop.permute.xlu0 %5577
        %5579 = vrot.lane.b32.xlu0 %v5556, 35
        %v5580 = vpop.permute.xlu0 %5579
        %5581 = vrot.lane.b32.xlu0 %v5557, 35
        %v5582 = vpop.permute.xlu0 %5581
        %5583 = vrot.lane.b32.xlu0 %v5558, 35
        %v5584 = vpop.permute.xlu0 %5583
        %5585 = vrot.lane.b32.xlu0 %v5559, 35
        %v5586 = vpop.permute.xlu0 %5585
        %5587 = vrot.lane.b32.xlu0 %v5560, 35
        %v5588 = vpop.permute.xlu0 %5587
        %5589 = vrot.lane.b32.xlu0 %v5561, 35
        %v5590 = vpop.permute.xlu0 %5589
        %5591 = vrot.lane.b32.xlu0 %v5562, 35
        %v5592 = vpop.permute.xlu0 %5591
        %v5593 = vrot.slane %v5574, 4
        %v5594 = vrot.slane %v5576, 4
        %v5595 = vrot.slane %v5578, 4
        %v5596 = vrot.slane %v5580, 4
        %v5597 = vrot.slane %v5584, 4
        %v5598 = vrot.slane %v5586, 4
        %v5599 = vrot.slane %v5588, 4
        %v5600 = vrot.slane %v5590, 4
        %vm5601 = vcmask 285696
        %v5602 = vsel %vm5601, %v5593, %v5574
        %vm5603 = vcmask 1043456
        %v5604 = vsel %vm5603, %v5593, %v5594
        %v5605 = vsel %vm5601, %v5604, %v5576
        %v5606 = vsel %vm5603, %v5594, %v5595
        %v5607 = vsel %vm5601, %v5606, %v5578
        %v5608 = vsel %vm5603, %v5595, %v5596
        %v5609 = vsel %vm5601, %v5608, %v5580
        %v5610 = vsel %vm5601, %v5596, %v5582
        %v5611 = vsel %vm5601, %v5597, %v5584
        %v5612 = vsel %vm5603, %v5597, %v5598
        %v5613 = vsel %vm5601, %v5612, %v5586
        %v5614 = vsel %vm5603, %v5598, %v5599
        %v5615 = vsel %vm5601, %v5614, %v5588
        %v5616 = vsel %vm5603, %v5599, %v5600
        %v5617 = vsel %vm5601, %v5616, %v5590
        %v5618 = vsel %vm5601, %v5600, %v5592
        %vm5629 = vcmask 1043736
        %vm5630 = vcmask 1047556
        %vm5631 = vmor %vm5630, %vm5629
        %5632 = vst.msk [vmem:[#allocation3] sm:$0xff] %vm5631, %v5602
        %5633 = vst [vmem:[#allocation3 + $0x8] sm:$0xff] %v5605
        %5634 = vst [vmem:[#allocation3 + $0x10] sm:$0xff] %v5607
        %5635 = vst [vmem:[#allocation3 + $0x18] sm:$0xff] %v5609
        %vm5636 = vcmask 805888
        %5637 = vst.msk [vmem:[#allocation3 + $0x20] sm:$0xf] %vm5636, %v5610
        %5638 = vst.msk [vmem:[#allocation3 + $0x28] sm:$0xff] %vm5631, %v5611
        %5639 = vst [vmem:[#allocation3 + $0x30] sm:$0xff] %v5613
        %5640 = vst [vmem:[#allocation3 + $0x38] sm:$0xff] %v5615
        %5641 = vst [vmem:[#allocation3 + $0x40] sm:$0xff] %v5617
        %5642 = vst.msk [vmem:[#allocation3 + $0x48] sm:$0xf] %vm5636, %v5618
        %v5643 = vld [vmem:[#allocation3] sm:$0xff]
        %v5644 = vld [vmem:[#allocation3 + $0x8] sm:$0xff]
        %v5645 = vld [vmem:[#allocation3 + $0x10] sm:$0xff]
        %v5646 = vld [vmem:[#allocation3 + $0x18] sm:$0xff]
        %v5647 = vld [vmem:[#allocation3 + $0x20] sm:$0xf]
        %v5648 = vld [vmem:[#allocation3 + $0x28] sm:$0xff]
        %v5649 = vld [vmem:[#allocation3 + $0x30] sm:$0xff]
        %v5650 = vld [vmem:[#allocation3 + $0x38] sm:$0xff]
        %v5651 = vld [vmem:[#allocation3 + $0x40] sm:$0xff]
        %v5652 = vld [vmem:[#allocation3 + $0x48] sm:$0xf]
        %v5653 = vld [vmem:[%s9] ss:$2 sm:$0xff]
        %s5654 = scalar_lea.vmem %s9, 16
        %v5655 = vld [vmem:[%s5654] ss:$2 sm:$0x1]
        %vm5656 = vcmp.gt.f32.partialorder %v5653, 0.5
        %vm5657 = vcmp.gt.f32.partialorder %v5655, 0.5
        %s5658 = scalar_lea.vmem %s9, 1
        %v5659 = vld [vmem:[%s5658] ss:$2 sm:$0xff]
        %s5660 = scalar_lea.vmem %s9, 17
        %v5661 = vld [vmem:[%s5660] ss:$2 sm:$0x1]
        %vm5662 = vcmp.gt.f32.partialorder %v5659, 0.5
        %vm5663 = vcmp.gt.f32.partialorder %v5661, 0.5
        %v5664 = vsel %vm5662, 1, 0
        %v5665 = vsel %vm5663, 1, 0
        %v5666 = vperm.slane %v5664, 0
        %v5667 = vperm.slane %v5664, 1
        %v5668 = vperm.slane %v5664, 2
        %v5669 = vperm.slane %v5664, 3
        %v5670 = vperm.slane %v5664, 4
        %v5671 = vperm.slane %v5664, 5
        %v5672 = vperm.slane %v5664, 6
        %v5673 = vperm.slane %v5664, 7
        %v5674 = vperm.slane %v5665, 0
        %vm5675 = vcmp.eq.s32.totalorder %v5666, 1
        %vm5676 = vcmp.eq.s32.totalorder %v5667, 1
        %vm5677 = vcmp.eq.s32.totalorder %v5668, 1
        %vm5678 = vcmp.eq.s32.totalorder %v5669, 1
        %vm5679 = vcmp.eq.s32.totalorder %v5670, 1
        %vm5680 = vcmp.eq.s32.totalorder %v5671, 1
        %vm5681 = vcmp.eq.s32.totalorder %v5672, 1
        %vm5682 = vcmp.eq.s32.totalorder %v5673, 1
        %vm5683 = vcmp.eq.s32.totalorder %v5674, 1
        %vm5684 = vmpackc.low %vm5676, %vm5675
        %vm5685 = vmpackc.low %vm5678, %vm5677
        %vm5686 = vmpackc.low %vm5680, %vm5679
        %vm5687 = vmpackc.low %vm5682, %vm5681
        %vm5688 = vmpackc.low %vm5683, %vm5683
        %v5689 = vsel %vm5684, 65537, 0
        %v5690 = vsel %vm5685, 65537, 0
        %v5691 = vsel %vm5686, 65537, 0
        %v5692 = vsel %vm5687, 65537, 0
        %v5693 = vsel %vm5688, 65537, 0
        %5694 = vrot.lane.b32.xlu0 %v5689, 33
        %v5695 = vpop.permute.xlu0 %5694
        %5696 = vrot.lane.b32.xlu0 %v5690, 33
        %v5697 = vpop.permute.xlu0 %5696
        %5698 = vrot.lane.b32.xlu0 %v5691, 33
        %v5699 = vpop.permute.xlu0 %5698
        %5700 = vrot.lane.b32.xlu0 %v5692, 33
        %v5701 = vpop.permute.xlu0 %5700
        %5702 = vrot.lane.b32.xlu0 %v5693, 33
        %v5703 = vpop.permute.xlu0 %5702
        %v5704 = vrot.slane %v5695, 4
        %v5705 = vrot.slane %v5697, 4
        %v5706 = vrot.slane %v5699, 4
        %v5707 = vrot.slane %v5701, 4
        %vm5708 = vcmask 269312
        %v5709 = vsel %vm5708, %v5704, %v5695
        %v5710 = vsel %vm5603, %v5704, %v5705
        %v5711 = vsel %vm5708, %v5710, %v5697
        %v5712 = vsel %vm5603, %v5705, %v5706
        %v5713 = vsel %vm5708, %v5712, %v5699
        %v5714 = vsel %vm5603, %v5706, %v5707
        %v5715 = vsel %vm5708, %v5714, %v5701
        %v5716 = vsel %vm5708, %v5707, %v5703
        %v5717 = vunpack.c.l.b16 %v5709
        %v5718 = vunpack.c.h.b16 %v5709
        %v5719 = vunpack.c.l.b16 0
        %v5720 = vunpack.c.h.b16 0
        %vm5721 = vcmp.ne.s32.totalorder %v5717, %v5719
        %vm5722 = vcmp.ne.s32.totalorder %v5718, %v5720
        %vm5723 = vmpackc.low %vm5722, %vm5721
        %v5724 = vunpack.c.l.b16 %v5711
        %v5725 = vunpack.c.h.b16 %v5711
        %v5726 = vunpack.c.l.b16 0
        %v5727 = vunpack.c.h.b16 0
        %vm5728 = vcmp.ne.s32.totalorder %v5724, %v5726
        %vm5729 = vcmp.ne.s32.totalorder %v5725, %v5727
        %vm5730 = vmpackc.low %vm5729, %vm5728
        %v5731 = vunpack.c.l.b16 %v5713
        %v5732 = vunpack.c.h.b16 %v5713
        %v5733 = vunpack.c.l.b16 0
        %v5734 = vunpack.c.h.b16 0
        %vm5735 = vcmp.ne.s32.totalorder %v5731, %v5733
        %vm5736 = vcmp.ne.s32.totalorder %v5732, %v5734
        %vm5737 = vmpackc.low %vm5736, %vm5735
        %v5738 = vunpack.c.l.b16 %v5715
        %v5739 = vunpack.c.h.b16 %v5715
        %v5740 = vunpack.c.l.b16 0
        %v5741 = vunpack.c.h.b16 0
        %vm5742 = vcmp.ne.s32.totalorder %v5738, %v5740
        %vm5743 = vcmp.ne.s32.totalorder %v5739, %v5741
        %vm5744 = vmpackc.low %vm5743, %vm5742
        %v5745 = vunpack.c.l.b16 %v5716
        %v5746 = vunpack.c.h.b16 %v5716
        %v5747 = vunpack.c.l.b16 0
        %v5748 = vunpack.c.h.b16 0
        %vm5749 = vcmp.ne.s32.totalorder %v5745, %v5747
        %vm5750 = vcmp.ne.s32.totalorder %v5746, %v5748
        %vm5751 = vmpackc.low %vm5750, %vm5749
        %5752 = vrot.lane.b32.xlu0 %v5553, 33
        %v5753 = vpop.permute.xlu0 %5752
        %5754 = vrot.lane.b32.xlu0 %v5554, 33
        %v5755 = vpop.permute.xlu0 %5754
        %5756 = vrot.lane.b32.xlu0 %v5555, 33
        %v5757 = vpop.permute.xlu0 %5756
        %5758 = vrot.lane.b32.xlu0 %v5556, 33
        %v5759 = vpop.permute.xlu0 %5758
        %5760 = vrot.lane.b32.xlu0 %v5557, 33
        %v5761 = vpop.permute.xlu0 %5760
        %5762 = vrot.lane.b32.xlu0 %v5558, 33
        %v5763 = vpop.permute.xlu0 %5762
        %5764 = vrot.lane.b32.xlu0 %v5559, 33
        %v5765 = vpop.permute.xlu0 %5764
        %5766 = vrot.lane.b32.xlu0 %v5560, 33
        %v5767 = vpop.permute.xlu0 %5766
        %5768 = vrot.lane.b32.xlu0 %v5561, 33
        %v5769 = vpop.permute.xlu0 %5768
        %5770 = vrot.lane.b32.xlu0 %v5562, 33
        %v5771 = vpop.permute.xlu0 %5770
        %v5772 = vrot.slane %v5753, 4
        %v5773 = vrot.slane %v5755, 4
        %v5774 = vrot.slane %v5757, 4
        %v5775 = vrot.slane %v5759, 4
        %v5776 = vrot.slane %v5763, 4
        %v5777 = vrot.slane %v5765, 4
        %v5778 = vrot.slane %v5767, 4
        %v5779 = vrot.slane %v5769, 4
        %v5780 = vsel %vm5708, %v5772, %v5753
        %v5781 = vsel %vm5603, %v5772, %v5773
        %v5782 = vsel %vm5708, %v5781, %v5755
        %v5783 = vsel %vm5603, %v5773, %v5774
        %v5784 = vsel %vm5708, %v5783, %v5757
        %v5785 = vsel %vm5603, %v5774, %v5775
        %v5786 = vsel %vm5708, %v5785, %v5759
        %v5787 = vsel %vm5708, %v5775, %v5761
        %v5788 = vsel %vm5708, %v5776, %v5763
        %v5789 = vsel %vm5603, %v5776, %v5777
        %v5790 = vsel %vm5708, %v5789, %v5765
        %v5791 = vsel %vm5603, %v5777, %v5778
        %v5792 = vsel %vm5708, %v5791, %v5767
        %v5793 = vsel %vm5603, %v5778, %v5779
        %v5794 = vsel %vm5708, %v5793, %v5769
        %v5795 = vsel %vm5708, %v5779, %v5771
        %v5806 = vsel %vm5723, %v5643, %v5780
        %v5807 = vsel %vm5730, %v5644, %v5782
        %v5808 = vsel %vm5737, %v5645, %v5784
        %v5809 = vsel %vm5744, %v5646, %v5786
        %v5810 = vsel %vm5751, %v5647, %v5787
        %v5811 = vsel %vm5723, %v5648, %v5788
        %v5812 = vsel %vm5730, %v5649, %v5790
        %v5813 = vsel %vm5737, %v5650, %v5792
        %v5814 = vsel %vm5744, %v5651, %v5794
        %v5815 = vsel %vm5751, %v5652, %v5795
        %v5816 = vsel %vm5656, 1, 0
        %v5817 = vsel %vm5657, 1, 0
        %v5818 = vperm.slane %v5816, 0
        %v5819 = vperm.slane %v5816, 1
        %v5820 = vperm.slane %v5816, 2
        %v5821 = vperm.slane %v5816, 3
        %v5822 = vperm.slane %v5816, 4
        %v5823 = vperm.slane %v5816, 5
        %v5824 = vperm.slane %v5816, 6
        %v5825 = vperm.slane %v5816, 7
        %v5826 = vperm.slane %v5817, 0
        %vm5827 = vcmp.eq.s32.totalorder %v5818, 1
        %vm5828 = vcmp.eq.s32.totalorder %v5819, 1
        %vm5829 = vcmp.eq.s32.totalorder %v5820, 1
        %vm5830 = vcmp.eq.s32.totalorder %v5821, 1
        %vm5831 = vcmp.eq.s32.totalorder %v5822, 1
        %vm5832 = vcmp.eq.s32.totalorder %v5823, 1
        %vm5833 = vcmp.eq.s32.totalorder %v5824, 1
        %vm5834 = vcmp.eq.s32.totalorder %v5825, 1
        %vm5835 = vcmp.eq.s32.totalorder %v5826, 1
        %vm5836 = vmpackc.low %vm5828, %vm5827
        %vm5837 = vmpackc.low %vm5830, %vm5829
        %vm5838 = vmpackc.low %vm5832, %vm5831
        %vm5839 = vmpackc.low %vm5834, %vm5833
        %vm5840 = vmpackc.low %vm5835, %vm5835
        %v5841 = vsel %vm5836, 65537, 0
        %v5842 = vsel %vm5837, 65537, 0
        %v5843 = vsel %vm5838, 65537, 0
        %v5844 = vsel %vm5839, 65537, 0
        %v5845 = vsel %vm5840, 65537, 0
        %5846 = vrot.lane.b32.xlu0 %v5841, 37
        %v5847 = vpop.permute.xlu0 %5846
        %5848 = vrot.lane.b32.xlu0 %v5842, 37
        %v5849 = vpop.permute.xlu0 %5848
        %5850 = vrot.lane.b32.xlu0 %v5843, 37
        %v5851 = vpop.permute.xlu0 %5850
        %5852 = vrot.lane.b32.xlu0 %v5844, 37
        %v5853 = vpop.permute.xlu0 %5852
        %5854 = vrot.lane.b32.xlu0 %v5845, 37
        %v5855 = vpop.permute.xlu0 %5854
        %v5856 = vrot.slane %v5847, 4
        %v5857 = vrot.slane %v5849, 4
        %v5858 = vrot.slane %v5851, 4
        %v5859 = vrot.slane %v5853, 4
        %vm5860 = vcmask 302080
        %v5861 = vsel %vm5860, %v5856, %v5847
        %v5862 = vsel %vm5603, %v5856, %v5857
        %v5863 = vsel %vm5860, %v5862, %v5849
        %v5864 = vsel %vm5603, %v5857, %v5858
        %v5865 = vsel %vm5860, %v5864, %v5851
        %v5866 = vsel %vm5603, %v5858, %v5859
        %v5867 = vsel %vm5860, %v5866, %v5853
        %v5868 = vsel %vm5860, %v5859, %v5855
        %v5869 = vunpack.c.l.b16 %v5861
        %v5870 = vunpack.c.h.b16 %v5861
        %v5871 = vunpack.c.l.b16 0
        %v5872 = vunpack.c.h.b16 0
        %vm5873 = vcmp.ne.s32.totalorder %v5869, %v5871
        %vm5874 = vcmp.ne.s32.totalorder %v5870, %v5872
        %vm5875 = vmpackc.low %vm5874, %vm5873
        %v5876 = vunpack.c.l.b16 %v5863
        %v5877 = vunpack.c.h.b16 %v5863
        %v5878 = vunpack.c.l.b16 0
        %v5879 = vunpack.c.h.b16 0
        %vm5880 = vcmp.ne.s32.totalorder %v5876, %v5878
        %vm5881 = vcmp.ne.s32.totalorder %v5877, %v5879
        %vm5882 = vmpackc.low %vm5881, %vm5880
        %v5883 = vunpack.c.l.b16 %v5865
        %v5884 = vunpack.c.h.b16 %v5865
        %v5885 = vunpack.c.l.b16 0
        %v5886 = vunpack.c.h.b16 0
        %vm5887 = vcmp.ne.s32.totalorder %v5883, %v5885
        %vm5888 = vcmp.ne.s32.totalorder %v5884, %v5886
        %vm5889 = vmpackc.low %vm5888, %vm5887
        %v5890 = vunpack.c.l.b16 %v5867
        %v5891 = vunpack.c.h.b16 %v5867
        %v5892 = vunpack.c.l.b16 0
        %v5893 = vunpack.c.h.b16 0
        %vm5894 = vcmp.ne.s32.totalorder %v5890, %v5892
        %vm5895 = vcmp.ne.s32.totalorder %v5891, %v5893
        %vm5896 = vmpackc.low %vm5895, %vm5894
        %v5897 = vunpack.c.l.b16 %v5868
        %v5898 = vunpack.c.h.b16 %v5868
        %v5899 = vunpack.c.l.b16 0
        %v5900 = vunpack.c.h.b16 0
        %vm5901 = vcmp.ne.s32.totalorder %v5897, %v5899
        %vm5902 = vcmp.ne.s32.totalorder %v5898, %v5900
        %vm5903 = vmpackc.low %vm5902, %vm5901
        %5914 = vrot.lane.b32.xlu0 %v5806, 4
        %v5915 = vpop.permute.xlu0 %5914
        %5916 = vrot.lane.b32.xlu0 %v5807, 4
        %v5917 = vpop.permute.xlu0 %5916
        %5918 = vrot.lane.b32.xlu0 %v5808, 4
        %v5919 = vpop.permute.xlu0 %5918
        %5920 = vrot.lane.b32.xlu0 %v5809, 4
        %v5921 = vpop.permute.xlu0 %5920
        %5922 = vrot.lane.b32.xlu0 %v5810, 4
        %v5923 = vpop.permute.xlu0 %5922
        %5924 = vrot.lane.b32.xlu0 %v5811, 4
        %v5925 = vpop.permute.xlu0 %5924
        %5926 = vrot.lane.b32.xlu0 %v5812, 4
        %v5927 = vpop.permute.xlu0 %5926
        %5928 = vrot.lane.b32.xlu0 %v5813, 4
        %v5929 = vpop.permute.xlu0 %5928
        %5930 = vrot.lane.b32.xlu0 %v5814, 4
        %v5931 = vpop.permute.xlu0 %5930
        %5932 = vrot.lane.b32.xlu0 %v5815, 4
        %v5933 = vpop.permute.xlu0 %5932
        %v5934 = vrot.slane %v5915, 4
        %v5935 = vrot.slane %v5917, 4
        %v5936 = vrot.slane %v5919, 4
        %v5937 = vrot.slane %v5921, 4
        %v5938 = vrot.slane %v5925, 4
        %v5939 = vrot.slane %v5927, 4
        %v5940 = vrot.slane %v5929, 4
        %v5941 = vrot.slane %v5931, 4
        %vm5942 = vcmask 31744
        %v5943 = vsel %vm5942, %v5934, %v5915
        %v5944 = vsel %vm5603, %v5934, %v5935
        %v5945 = vsel %vm5942, %v5944, %v5917
        %v5946 = vsel %vm5603, %v5935, %v5936
        %v5947 = vsel %vm5942, %v5946, %v5919
        %v5948 = vsel %vm5603, %v5936, %v5937
        %v5949 = vsel %vm5942, %v5948, %v5921
        %v5950 = vsel %vm5942, %v5937, %v5923
        %v5951 = vsel %vm5942, %v5938, %v5925
        %v5952 = vsel %vm5603, %v5938, %v5939
        %v5953 = vsel %vm5942, %v5952, %v5927
        %v5954 = vsel %vm5603, %v5939, %v5940
        %v5955 = vsel %vm5942, %v5954, %v5929
        %v5956 = vsel %vm5603, %v5940, %v5941
        %v5957 = vsel %vm5942, %v5956, %v5931
        %v5958 = vsel %vm5942, %v5941, %v5933
        %v5969 = vsel %vm5875, %v5643, %v5943
        %v5970 = vsel %vm5882, %v5644, %v5945
        %v5971 = vsel %vm5889, %v5645, %v5947
        %v5972 = vsel %vm5896, %v5646, %v5949
        %v5973 = vsel %vm5903, %v5647, %v5950
        %v5974 = vsel %vm5875, %v5648, %v5951
        %v5975 = vsel %vm5882, %v5649, %v5953
        %v5976 = vsel %vm5889, %v5650, %v5955
        %v5977 = vsel %vm5896, %v5651, %v5957
        %v5978 = vsel %vm5903, %v5652, %v5958
        %5989 = vrot.lane.b32.xlu0 %v5969, 126
        %v5990 = vpop.permute.xlu0 %5989
        %5991 = vrot.lane.b32.xlu0 %v5970, 126
        %v5992 = vpop.permute.xlu0 %5991
        %5993 = vrot.lane.b32.xlu0 %v5971, 126
        %v5994 = vpop.permute.xlu0 %5993
        %5995 = vrot.lane.b32.xlu0 %v5972, 126
        %v5996 = vpop.permute.xlu0 %5995
        %5997 = vrot.lane.b32.xlu0 %v5973, 126
        %v5998 = vpop.permute.xlu0 %5997
        %5999 = vrot.lane.b32.xlu0 %v5974, 126
        %v6000 = vpop.permute.xlu0 %5999
        %6001 = vrot.lane.b32.xlu0 %v5975, 126
        %v6002 = vpop.permute.xlu0 %6001
        %6003 = vrot.lane.b32.xlu0 %v5976, 126
        %v6004 = vpop.permute.xlu0 %6003
        %6005 = vrot.lane.b32.xlu0 %v5977, 126
        %v6006 = vpop.permute.xlu0 %6005
        %6007 = vrot.lane.b32.xlu0 %v5978, 126
        %v6008 = vpop.permute.xlu0 %6007
        %v6009 = vrot.slane %v5990, 4
        %v6010 = vrot.slane %v5992, 4
        %v6011 = vrot.slane %v5994, 4
        %v6012 = vrot.slane %v5996, 4
        %v6013 = vrot.slane %v5998, 4
        %v6014 = vrot.slane %v6000, 4
        %v6015 = vrot.slane %v6002, 4
        %v6016 = vrot.slane %v6004, 4
        %v6017 = vrot.slane %v6006, 4
        %v6018 = vrot.slane %v6008, 4
        %v6019 = vsel %vm5603, %v6009, %v6010
        %v6020 = vsel %vm789, %v5990, %v6019
        %v6021 = vsel %vm5603, %v6010, %v6011
        %v6022 = vsel %vm789, %v5992, %v6021
        %v6023 = vsel %vm5603, %v6011, %v6012
        %v6024 = vsel %vm789, %v5994, %v6023
        %v6025 = vsel %vm5603, %v6012, %v6013
        %v6026 = vsel %vm789, %v5996, %v6025
        %v6027 = vsel %vm5603, %v6014, %v6015
        %v6028 = vsel %vm789, %v6000, %v6027
        %v6029 = vsel %vm5603, %v6015, %v6016
        %v6030 = vsel %vm789, %v6002, %v6029
        %v6031 = vsel %vm5603, %v6016, %v6017
        %v6032 = vsel %vm789, %v6004, %v6031
        %v6033 = vsel %vm5603, %v6017, %v6018
        %v6034 = vsel %vm789, %v6006, %v6033
        %6045 = vst.msk [vmem:[#allocation3] sm:$0xff] %vm5631, %v6020
        %6046 = vst [vmem:[#allocation3 + $0x8] sm:$0xff] %v6022
        %6047 = vst [vmem:[#allocation3 + $0x10] sm:$0xff] %v6024
        %6048 = vst [vmem:[#allocation3 + $0x18] sm:$0xff] %v6026
        %6049 = vst.msk [vmem:[#allocation3 + $0x20] sm:$0xf] %vm5636, %v5998
        %6050 = vst.msk [vmem:[#allocation3 + $0x28] sm:$0xff] %vm5631, %v6028
        %6051 = vst [vmem:[#allocation3 + $0x30] sm:$0xff] %v6030
        %6052 = vst [vmem:[#allocation3 + $0x38] sm:$0xff] %v6032
        %6053 = vst [vmem:[#allocation3 + $0x40] sm:$0xff] %v6034
        %6054 = vst.msk [vmem:[#allocation3 + $0x48] sm:$0xf] %vm5636, %v6008
        %v6055 = vld [vmem:[#allocation3] sm:$0xf]
        %v6056 = vld [vmem:[#allocation3 + $0x28] sm:$0xf]
        %6059 = vrot.lane.b32.xlu0 %v6055, 60
        %v6060 = vpop.permute.xlu0 %6059
        %6061 = vrot.lane.b32.xlu0 %v6056, 60
        %v6062 = vpop.permute.xlu0 %6061
        %vm6065 = vcmask 281608
        %6066 = vst.msk [vmem:[#allocation3] sm:$0xf] %vm6065, %v6060
        %6067 = vst.msk [vmem:[#allocation3 + $0x28] sm:$0xf] %vm6065, %v6062
        %v6068 = vld [vmem:[#allocation3 + $0x20] sm:$0xf]
        %v6069 = vld [vmem:[#allocation3 + $0x48] sm:$0xf]
        %6072 = vrot.lane.b32.xlu0 %v6068, 68
        %v6073 = vpop.permute.xlu0 %6072
        %6074 = vrot.lane.b32.xlu0 %v6069, 68
        %v6075 = vpop.permute.xlu0 %6074
        %v6076 = vrot.slane %v6073, 4
        %v6077 = vrot.slane %v6075, 4
        %vm6078 = vcmask 556032
        %v6079 = vsel %vm6078, %v6076, %v6073
        %v6080 = vsel %vm6078, %v6077, %v6075
        %vm6083 = vcmask 1044248
        %vm6084 = vcmask 39940
        %vm6085 = vmor %vm6084, %vm6083
        %6086 = vst.msk [vmem:[#allocation3 + $0x20] sm:$0xff] %vm6085, %v6079
        %6087 = vst.msk [vmem:[#allocation3 + $0x48] sm:$0xff] %vm6085, %v6080
        %v6088 = vld [vmem:[#allocation3] sm:$0xff]
        %v6089 = vld [vmem:[#allocation3 + $0x8] sm:$0xff]
        %v6090 = vld [vmem:[#allocation3 + $0x10] sm:$0xff]
        %v6091 = vld [vmem:[#allocation3 + $0x18] sm:$0xff]
        %v6092 = vld [vmem:[#allocation3 + $0x20] sm:$0xf]
        %v6093 = vld [vmem:[#allocation3 + $0x28] sm:$0xff]
        %v6094 = vld [vmem:[#allocation3 + $0x30] sm:$0xff]
        %v6095 = vld [vmem:[#allocation3 + $0x38] sm:$0xff]
        %v6096 = vld [vmem:[#allocation3 + $0x40] sm:$0xff]
        %v6097 = vld [vmem:[#allocation3 + $0x48] sm:$0xf]
        %v6098 = vld [vmem:[#allocation11] sm:$0x3]
        %s6099 = scalar_lea.vmem [#allocation11], 2
        %v6100 = vld [vmem:[%s6099] sm:$0x3]
        %v6111 = vunpack.c.l.b16 %v6088
        %v6112 = vunpack.c.h.b16 %v6088
        %v6113 = vunpack.c.l.b16 %v6089
        %v6114 = vunpack.c.h.b16 %v6089
        %v6115 = vunpack.c.l.b16 %v6090
        %v6116 = vunpack.c.h.b16 %v6090
        %v6117 = vunpack.c.l.b16 %v6091
        %v6118 = vunpack.c.h.b16 %v6091
        %v6119 = vunpack.c.l.b16 %v6092
        %v6120 = vunpack.c.l.b16 %v6093
        %v6121 = vunpack.c.h.b16 %v6093
        %v6122 = vunpack.c.l.b16 %v6094
        %v6123 = vunpack.c.h.b16 %v6094
        %v6124 = vunpack.c.l.b16 %v6095
        %v6125 = vunpack.c.h.b16 %v6095
        %v6126 = vunpack.c.l.b16 %v6096
        %v6127 = vunpack.c.h.b16 %v6096
        %v6128 = vunpack.c.l.b16 %v6097
        %v6129 = vpack.c.b16 %v6120, %v6111
        %v6130 = vpack.c.b16 %v6121, %v6112
        %v6131 = vpack.c.b16 %v6122, %v6113
        %v6132 = vpack.c.b16 %v6123, %v6114
        %v6133 = vpack.c.b16 %v6124, %v6115
        %v6134 = vpack.c.b16 %v6125, %v6116
        %v6135 = vpack.c.b16 %v6126, %v6117
        %v6136 = vpack.c.b16 %v6127, %v6118
        %v6137 = vpack.c.b16 %v6128, %v6119
        %6138 = vrot.lane.b32.xlu0 %v6129, 127
        %v6139 = vpop.permute.xlu0 %6138
        %6140 = vrot.lane.b32.xlu0 %v6130, 127
        %v6141 = vpop.permute.xlu0 %6140
        %6142 = vrot.lane.b32.xlu0 %v6131, 127
        %v6143 = vpop.permute.xlu0 %6142
        %6144 = vrot.lane.b32.xlu0 %v6132, 127
        %v6145 = vpop.permute.xlu0 %6144
        %6146 = vrot.lane.b32.xlu0 %v6133, 127
        %v6147 = vpop.permute.xlu0 %6146
        %6148 = vrot.lane.b32.xlu0 %v6134, 127
        %v6149 = vpop.permute.xlu0 %6148
        %6150 = vrot.lane.b32.xlu0 %v6135, 127
        %v6151 = vpop.permute.xlu0 %6150
        %6152 = vrot.lane.b32.xlu0 %v6136, 127
        %v6153 = vpop.permute.xlu0 %6152
        %6154 = vrot.lane.b32.xlu0 %v6137, 127
        %v6155 = vpop.permute.xlu0 %6154
        %v6156 = vsel %vm670, %v6139, %v6141
        %v6157 = vsel %vm670, %v6141, %v6143
        %v6158 = vsel %vm670, %v6143, %v6145
        %v6159 = vsel %vm670, %v6145, %v6147
        %v6160 = vsel %vm670, %v6147, %v6149
        %v6161 = vsel %vm670, %v6149, %v6151
        %v6162 = vsel %vm670, %v6151, %v6153
        %v6163 = vsel %vm670, %v6153, %v6155
        %v6174 = vsel %vm676, %v6100, 0
        %6176 = vmatpush.bf16.msra.mxu0 0
        %6177 = vmatpush.bf16.msra.mxu0 0
        %6178 = vmatpush.bf16.msra.mxu0 0
        %6179 = vmatpush.bf16.msra.mxu0 0
        %6180 = vmatpush.bf16.msra.mxu0 0
        %6181 = vmatpush.bf16.msra.mxu0 0
        %6182 = vmatpush.bf16.msra.mxu0 0
        %6183 = vmatpush.bf16.msra.mxu0 %v6156
        %6184 = vmatmul.bf16.gmra.mxu0 %v6174
        %v6185 = vpop.f32.mrf.mxu0
        %v6186 = vadd.f32 0.0, %v6185
        %v6187 = vpop.f32.mrf.mxu0
        %6188 = vdwg.mxu0
        %6189 = vmatpush.bf16.msra.mxu0 0
        %6190 = vmatpush.bf16.msra.mxu0 0
        %6191 = vmatpush.bf16.msra.mxu0 0
        %6192 = vmatpush.bf16.msra.mxu0 0
        %6193 = vmatpush.bf16.msra.mxu0 0
        %6194 = vmatpush.bf16.msra.mxu0 0
        %6195 = vmatpush.bf16.msra.mxu0 0
        %6196 = vmatpush.bf16.msra.mxu0 %v6157
        %6197 = vmatmul.bf16.gmra.mxu0 %v6174
        %v6198 = vpop.f32.mrf.mxu0
        %v6199 = vadd.f32 0.0, %v6198
        %v6200 = vpop.f32.mrf.mxu0
        %6201 = vdwg.mxu0
        %6202 = vmatpush.bf16.msra.mxu0 0
        %6203 = vmatpush.bf16.msra.mxu0 0
        %6204 = vmatpush.bf16.msra.mxu0 0
        %6205 = vmatpush.bf16.msra.mxu0 0
        %6206 = vmatpush.bf16.msra.mxu0 0
        %6207 = vmatpush.bf16.msra.mxu0 0
        %6208 = vmatpush.bf16.msra.mxu0 0
        %6209 = vmatpush.bf16.msra.mxu0 %v6158
        %6210 = vmatmul.bf16.gmra.mxu0 %v6174
        %v6211 = vpop.f32.mrf.mxu0
        %v6212 = vadd.f32 0.0, %v6211
        %v6213 = vpop.f32.mrf.mxu0
        %6214 = vdwg.mxu0
        %6215 = vmatpush.bf16.msra.mxu0 0
        %6216 = vmatpush.bf16.msra.mxu0 0
        %6217 = vmatpush.bf16.msra.mxu0 0
        %6218 = vmatpush.bf16.msra.mxu0 0
        %6219 = vmatpush.bf16.msra.mxu0 0
        %6220 = vmatpush.bf16.msra.mxu0 0
        %6221 = vmatpush.bf16.msra.mxu0 0
        %6222 = vmatpush.bf16.msra.mxu0 %v6159
        %6223 = vmatmul.bf16.gmra.mxu0 %v6174
        %v6224 = vpop.f32.mrf.mxu0
        %v6225 = vadd.f32 0.0, %v6224
        %v6226 = vpop.f32.mrf.mxu0
        %6227 = vdwg.mxu0
        %6228 = vmatpush.bf16.msra.mxu0 0
        %6229 = vmatpush.bf16.msra.mxu0 0
        %6230 = vmatpush.bf16.msra.mxu0 0
        %6231 = vmatpush.bf16.msra.mxu0 0
        %6232 = vmatpush.bf16.msra.mxu0 0
        %6233 = vmatpush.bf16.msra.mxu0 0
        %6234 = vmatpush.bf16.msra.mxu0 0
        %6235 = vmatpush.bf16.msra.mxu0 %v6160
        %6236 = vmatmul.bf16.gmra.mxu0 %v6174
        %v6237 = vpop.f32.mrf.mxu0
        %v6238 = vadd.f32 0.0, %v6237
        %v6239 = vpop.f32.mrf.mxu0
        %6240 = vdwg.mxu0
        %6241 = vmatpush.bf16.msra.mxu0 0
        %6242 = vmatpush.bf16.msra.mxu0 0
        %6243 = vmatpush.bf16.msra.mxu0 0
        %6244 = vmatpush.bf16.msra.mxu0 0
        %6245 = vmatpush.bf16.msra.mxu0 0
        %6246 = vmatpush.bf16.msra.mxu0 0
        %6247 = vmatpush.bf16.msra.mxu0 0
        %6248 = vmatpush.bf16.msra.mxu0 %v6161
        %6249 = vmatmul.bf16.gmra.mxu0 %v6174
        %v6250 = vpop.f32.mrf.mxu0
        %v6251 = vadd.f32 0.0, %v6250
        %v6252 = vpop.f32.mrf.mxu0
        %6253 = vdwg.mxu0
        %6254 = vmatpush.bf16.msra.mxu0 0
        %6255 = vmatpush.bf16.msra.mxu0 0
        %6256 = vmatpush.bf16.msra.mxu0 0
        %6257 = vmatpush.bf16.msra.mxu0 0
        %6258 = vmatpush.bf16.msra.mxu0 0
        %6259 = vmatpush.bf16.msra.mxu0 0
        %6260 = vmatpush.bf16.msra.mxu0 0
        %6261 = vmatpush.bf16.msra.mxu0 %v6162
        %6262 = vmatmul.bf16.gmra.mxu0 %v6174
        %v6263 = vpop.f32.mrf.mxu0
        %v6264 = vadd.f32 0.0, %v6263
        %v6265 = vpop.f32.mrf.mxu0
        %6266 = vdwg.mxu0
        %6267 = vmatpush.bf16.msra.mxu0 0
        %6268 = vmatpush.bf16.msra.mxu0 0
        %6269 = vmatpush.bf16.msra.mxu0 0
        %6270 = vmatpush.bf16.msra.mxu0 0
        %6271 = vmatpush.bf16.msra.mxu0 0
        %6272 = vmatpush.bf16.msra.mxu0 0
        %6273 = vmatpush.bf16.msra.mxu0 0
        %6274 = vmatpush.bf16.msra.mxu0 %v6163
        %6275 = vmatmul.bf16.gmra.mxu0 %v6174
        %v6276 = vpop.f32.mrf.mxu0
        %v6277 = vadd.f32 0.0, %v6276
        %v6278 = vpop.f32.mrf.mxu0
        %6279 = vdwg.mxu0
        %6280 = vmatpush.bf16.msra.mxu0 0
        %6281 = vmatpush.bf16.msra.mxu0 0
        %6282 = vmatpush.bf16.msra.mxu0 0
        %6283 = vmatpush.bf16.msra.mxu0 0
        %6284 = vmatpush.bf16.msra.mxu0 0
        %6285 = vmatpush.bf16.msra.mxu0 0
        %6286 = vmatpush.bf16.msra.mxu0 0
        %6287 = vmatpush.bf16.msra.mxu0 %v6155
        %6288 = vmatmul.bf16.gmra.mxu0 %v6174
        %v6289 = vpop.f32.mrf.mxu0
        %v6290 = vadd.f32 0.0, %v6289
        %v6291 = vpop.f32.mrf.mxu0
        %6292 = vdwg.mxu0
        %v6303 = vsel %vm676, %v6098, 0
        %6305 = vmatpush.bf16.msra.mxu0 0
        %6306 = vmatpush.bf16.msra.mxu0 0
        %6307 = vmatpush.bf16.msra.mxu0 0
        %6308 = vmatpush.bf16.msra.mxu0 0
        %6309 = vmatpush.bf16.msra.mxu0 0
        %6310 = vmatpush.bf16.msra.mxu0 0
        %6311 = vmatpush.bf16.msra.mxu0 0
        %6312 = vmatpush.bf16.msra.mxu0 %v6129
        %6313 = vmatmul.bf16.gmra.mxu0 %v6303
        %v6314 = vpop.f32.mrf.mxu0
        %v6315 = vadd.f32 %v6186, %v6314
        %v6316 = vpop.f32.mrf.mxu0
        %6317 = vdwg.mxu0
        %6318 = vmatpush.bf16.msra.mxu0 0
        %6319 = vmatpush.bf16.msra.mxu0 0
        %6320 = vmatpush.bf16.msra.mxu0 0
        %6321 = vmatpush.bf16.msra.mxu0 0
        %6322 = vmatpush.bf16.msra.mxu0 0
        %6323 = vmatpush.bf16.msra.mxu0 0
        %6324 = vmatpush.bf16.msra.mxu0 0
        %6325 = vmatpush.bf16.msra.mxu0 %v6130
        %6326 = vmatmul.bf16.gmra.mxu0 %v6303
        %v6327 = vpop.f32.mrf.mxu0
        %v6328 = vadd.f32 %v6199, %v6327
        %v6329 = vpop.f32.mrf.mxu0
        %6330 = vdwg.mxu0
        %6331 = vmatpush.bf16.msra.mxu0 0
        %6332 = vmatpush.bf16.msra.mxu0 0
        %6333 = vmatpush.bf16.msra.mxu0 0
        %6334 = vmatpush.bf16.msra.mxu0 0
        %6335 = vmatpush.bf16.msra.mxu0 0
        %6336 = vmatpush.bf16.msra.mxu0 0
        %6337 = vmatpush.bf16.msra.mxu0 0
        %6338 = vmatpush.bf16.msra.mxu0 %v6131
        %6339 = vmatmul.bf16.gmra.mxu0 %v6303
        %v6340 = vpop.f32.mrf.mxu0
        %v6341 = vadd.f32 %v6212, %v6340
        %v6342 = vpop.f32.mrf.mxu0
        %6343 = vdwg.mxu0
        %6344 = vmatpush.bf16.msra.mxu0 0
        %6345 = vmatpush.bf16.msra.mxu0 0
        %6346 = vmatpush.bf16.msra.mxu0 0
        %6347 = vmatpush.bf16.msra.mxu0 0
        %6348 = vmatpush.bf16.msra.mxu0 0
        %6349 = vmatpush.bf16.msra.mxu0 0
        %6350 = vmatpush.bf16.msra.mxu0 0
        %6351 = vmatpush.bf16.msra.mxu0 %v6132
        %6352 = vmatmul.bf16.gmra.mxu0 %v6303
        %v6353 = vpop.f32.mrf.mxu0
        %v6354 = vadd.f32 %v6225, %v6353
        %v6355 = vpop.f32.mrf.mxu0
        %6356 = vdwg.mxu0
        %6357 = vmatpush.bf16.msra.mxu0 0
        %6358 = vmatpush.bf16.msra.mxu0 0
        %6359 = vmatpush.bf16.msra.mxu0 0
        %6360 = vmatpush.bf16.msra.mxu0 0
        %6361 = vmatpush.bf16.msra.mxu0 0
        %6362 = vmatpush.bf16.msra.mxu0 0
        %6363 = vmatpush.bf16.msra.mxu0 0
        %6364 = vmatpush.bf16.msra.mxu0 %v6133
        %6365 = vmatmul.bf16.gmra.mxu0 %v6303
        %v6366 = vpop.f32.mrf.mxu0
        %v6367 = vadd.f32 %v6238, %v6366
        %v6368 = vpop.f32.mrf.mxu0
        %6369 = vdwg.mxu0
        %6370 = vmatpush.bf16.msra.mxu0 0
        %6371 = vmatpush.bf16.msra.mxu0 0
        %6372 = vmatpush.bf16.msra.mxu0 0
        %6373 = vmatpush.bf16.msra.mxu0 0
        %6374 = vmatpush.bf16.msra.mxu0 0
        %6375 = vmatpush.bf16.msra.mxu0 0
        %6376 = vmatpush.bf16.msra.mxu0 0
        %6377 = vmatpush.bf16.msra.mxu0 %v6134
        %6378 = vmatmul.bf16.gmra.mxu0 %v6303
        %v6379 = vpop.f32.mrf.mxu0
        %v6380 = vadd.f32 %v6251, %v6379
        %v6381 = vpop.f32.mrf.mxu0
        %6382 = vdwg.mxu0
        %6383 = vmatpush.bf16.msra.mxu0 0
        %6384 = vmatpush.bf16.msra.mxu0 0
        %6385 = vmatpush.bf16.msra.mxu0 0
        %6386 = vmatpush.bf16.msra.mxu0 0
        %6387 = vmatpush.bf16.msra.mxu0 0
        %6388 = vmatpush.bf16.msra.mxu0 0
        %6389 = vmatpush.bf16.msra.mxu0 0
        %6390 = vmatpush.bf16.msra.mxu0 %v6135
        %6391 = vmatmul.bf16.gmra.mxu0 %v6303
        %v6392 = vpop.f32.mrf.mxu0
        %v6393 = vadd.f32 %v6264, %v6392
        %v6394 = vpop.f32.mrf.mxu0
        %6395 = vdwg.mxu0
        %6396 = vmatpush.bf16.msra.mxu0 0
        %6397 = vmatpush.bf16.msra.mxu0 0
        %6398 = vmatpush.bf16.msra.mxu0 0
        %6399 = vmatpush.bf16.msra.mxu0 0
        %6400 = vmatpush.bf16.msra.mxu0 0
        %6401 = vmatpush.bf16.msra.mxu0 0
        %6402 = vmatpush.bf16.msra.mxu0 0
        %6403 = vmatpush.bf16.msra.mxu0 %v6136
        %6404 = vmatmul.bf16.gmra.mxu0 %v6303
        %v6405 = vpop.f32.mrf.mxu0
        %v6406 = vadd.f32 %v6277, %v6405
        %v6407 = vpop.f32.mrf.mxu0
        %6408 = vdwg.mxu0
        %6409 = vmatpush.bf16.msra.mxu0 0
        %6410 = vmatpush.bf16.msra.mxu0 0
        %6411 = vmatpush.bf16.msra.mxu0 0
        %6412 = vmatpush.bf16.msra.mxu0 0
        %6413 = vmatpush.bf16.msra.mxu0 0
        %6414 = vmatpush.bf16.msra.mxu0 0
        %6415 = vmatpush.bf16.msra.mxu0 0
        %6416 = vmatpush.bf16.msra.mxu0 %v6137
        %6417 = vmatmul.bf16.gmra.mxu0 %v6303
        %v6418 = vpop.f32.mrf.mxu0
        %v6419 = vadd.f32 %v6290, %v6418
        %v6420 = vpop.f32.mrf.mxu0
        %6421 = vdwg.mxu0
        %s6422 = scalar_lea.vmem [#allocation11], 4
        %v6423 = vld [vmem:[%s6422] sm:$0x3]
        %6424 = vrot.lane.b32.xlu0 %v6129, 126
        %v6425 = vpop.permute.xlu0 %6424
        %6426 = vrot.lane.b32.xlu0 %v6130, 126
        %v6427 = vpop.permute.xlu0 %6426
        %6428 = vrot.lane.b32.xlu0 %v6131, 126
        %v6429 = vpop.permute.xlu0 %6428
        %6430 = vrot.lane.b32.xlu0 %v6132, 126
        %v6431 = vpop.permute.xlu0 %6430
        %6432 = vrot.lane.b32.xlu0 %v6133, 126
        %v6433 = vpop.permute.xlu0 %6432
        %6434 = vrot.lane.b32.xlu0 %v6134, 126
        %v6435 = vpop.permute.xlu0 %6434
        %6436 = vrot.lane.b32.xlu0 %v6135, 126
        %v6437 = vpop.permute.xlu0 %6436
        %6438 = vrot.lane.b32.xlu0 %v6136, 126
        %v6439 = vpop.permute.xlu0 %6438
        %6440 = vrot.lane.b32.xlu0 %v6137, 126
        %v6441 = vpop.permute.xlu0 %6440
        %v6442 = vsel %vm789, %v6425, %v6427
        %v6443 = vsel %vm789, %v6427, %v6429
        %v6444 = vsel %vm789, %v6429, %v6431
        %v6445 = vsel %vm789, %v6431, %v6433
        %v6446 = vsel %vm789, %v6433, %v6435
        %v6447 = vsel %vm789, %v6435, %v6437
        %v6448 = vsel %vm789, %v6437, %v6439
        %v6449 = vsel %vm789, %v6439, %v6441
        %v6460 = vsel %vm676, %v6423, 0
        %6462 = vmatpush.bf16.msra.mxu0 0
        %6463 = vmatpush.bf16.msra.mxu0 0
        %6464 = vmatpush.bf16.msra.mxu0 0
        %6465 = vmatpush.bf16.msra.mxu0 0
        %6466 = vmatpush.bf16.msra.mxu0 0
        %6467 = vmatpush.bf16.msra.mxu0 0
        %6468 = vmatpush.bf16.msra.mxu0 0
        %6469 = vmatpush.bf16.msra.mxu0 %v6442
        %6470 = vmatmul.bf16.gmra.mxu0 %v6460
        %v6471 = vpop.f32.mrf.mxu0
        %v6472 = vadd.f32 0.0, %v6471
        %v6473 = vpop.f32.mrf.mxu0
        %6474 = vdwg.mxu0
        %6475 = vmatpush.bf16.msra.mxu0 0
        %6476 = vmatpush.bf16.msra.mxu0 0
        %6477 = vmatpush.bf16.msra.mxu0 0
        %6478 = vmatpush.bf16.msra.mxu0 0
        %6479 = vmatpush.bf16.msra.mxu0 0
        %6480 = vmatpush.bf16.msra.mxu0 0
        %6481 = vmatpush.bf16.msra.mxu0 0
        %6482 = vmatpush.bf16.msra.mxu0 %v6443
        %6483 = vmatmul.bf16.gmra.mxu0 %v6460
        %v6484 = vpop.f32.mrf.mxu0
        %v6485 = vadd.f32 0.0, %v6484
        %v6486 = vpop.f32.mrf.mxu0
        %6487 = vdwg.mxu0
        %6488 = vmatpush.bf16.msra.mxu0 0
        %6489 = vmatpush.bf16.msra.mxu0 0
        %6490 = vmatpush.bf16.msra.mxu0 0
        %6491 = vmatpush.bf16.msra.mxu0 0
        %6492 = vmatpush.bf16.msra.mxu0 0
        %6493 = vmatpush.bf16.msra.mxu0 0
        %6494 = vmatpush.bf16.msra.mxu0 0
        %6495 = vmatpush.bf16.msra.mxu0 %v6444
        %6496 = vmatmul.bf16.gmra.mxu0 %v6460
        %v6497 = vpop.f32.mrf.mxu0
        %v6498 = vadd.f32 0.0, %v6497
        %v6499 = vpop.f32.mrf.mxu0
        %6500 = vdwg.mxu0
        %6501 = vmatpush.bf16.msra.mxu0 0
        %6502 = vmatpush.bf16.msra.mxu0 0
        %6503 = vmatpush.bf16.msra.mxu0 0
        %6504 = vmatpush.bf16.msra.mxu0 0
        %6505 = vmatpush.bf16.msra.mxu0 0
        %6506 = vmatpush.bf16.msra.mxu0 0
        %6507 = vmatpush.bf16.msra.mxu0 0
        %6508 = vmatpush.bf16.msra.mxu0 %v6445
        %6509 = vmatmul.bf16.gmra.mxu0 %v6460
        %v6510 = vpop.f32.mrf.mxu0
        %v6511 = vadd.f32 0.0, %v6510
        %v6512 = vpop.f32.mrf.mxu0
        %6513 = vdwg.mxu0
        %6514 = vmatpush.bf16.msra.mxu0 0
        %6515 = vmatpush.bf16.msra.mxu0 0
        %6516 = vmatpush.bf16.msra.mxu0 0
        %6517 = vmatpush.bf16.msra.mxu0 0
        %6518 = vmatpush.bf16.msra.mxu0 0
        %6519 = vmatpush.bf16.msra.mxu0 0
        %6520 = vmatpush.bf16.msra.mxu0 0
        %6521 = vmatpush.bf16.msra.mxu0 %v6446
        %6522 = vmatmul.bf16.gmra.mxu0 %v6460
        %v6523 = vpop.f32.mrf.mxu0
        %v6524 = vadd.f32 0.0, %v6523
        %v6525 = vpop.f32.mrf.mxu0
        %6526 = vdwg.mxu0
        %6527 = vmatpush.bf16.msra.mxu0 0
        %6528 = vmatpush.bf16.msra.mxu0 0
        %6529 = vmatpush.bf16.msra.mxu0 0
        %6530 = vmatpush.bf16.msra.mxu0 0
        %6531 = vmatpush.bf16.msra.mxu0 0
        %6532 = vmatpush.bf16.msra.mxu0 0
        %6533 = vmatpush.bf16.msra.mxu0 0
        %6534 = vmatpush.bf16.msra.mxu0 %v6447
        %6535 = vmatmul.bf16.gmra.mxu0 %v6460
        %v6536 = vpop.f32.mrf.mxu0
        %v6537 = vadd.f32 0.0, %v6536
        %v6538 = vpop.f32.mrf.mxu0
        %6539 = vdwg.mxu0
        %6540 = vmatpush.bf16.msra.mxu0 0
        %6541 = vmatpush.bf16.msra.mxu0 0
        %6542 = vmatpush.bf16.msra.mxu0 0
        %6543 = vmatpush.bf16.msra.mxu0 0
        %6544 = vmatpush.bf16.msra.mxu0 0
        %6545 = vmatpush.bf16.msra.mxu0 0
        %6546 = vmatpush.bf16.msra.mxu0 0
        %6547 = vmatpush.bf16.msra.mxu0 %v6448
        %6548 = vmatmul.bf16.gmra.mxu0 %v6460
        %v6549 = vpop.f32.mrf.mxu0
        %v6550 = vadd.f32 0.0, %v6549
        %v6551 = vpop.f32.mrf.mxu0
        %6552 = vdwg.mxu0
        %6553 = vmatpush.bf16.msra.mxu0 0
        %6554 = vmatpush.bf16.msra.mxu0 0
        %6555 = vmatpush.bf16.msra.mxu0 0
        %6556 = vmatpush.bf16.msra.mxu0 0
        %6557 = vmatpush.bf16.msra.mxu0 0
        %6558 = vmatpush.bf16.msra.mxu0 0
        %6559 = vmatpush.bf16.msra.mxu0 0
        %6560 = vmatpush.bf16.msra.mxu0 %v6449
        %6561 = vmatmul.bf16.gmra.mxu0 %v6460
        %v6562 = vpop.f32.mrf.mxu0
        %v6563 = vadd.f32 0.0, %v6562
        %v6564 = vpop.f32.mrf.mxu0
        %6565 = vdwg.mxu0
        %6566 = vmatpush.bf16.msra.mxu0 0
        %6567 = vmatpush.bf16.msra.mxu0 0
        %6568 = vmatpush.bf16.msra.mxu0 0
        %6569 = vmatpush.bf16.msra.mxu0 0
        %6570 = vmatpush.bf16.msra.mxu0 0
        %6571 = vmatpush.bf16.msra.mxu0 0
        %6572 = vmatpush.bf16.msra.mxu0 0
        %6573 = vmatpush.bf16.msra.mxu0 %v6441
        %6574 = vmatmul.bf16.gmra.mxu0 %v6460
        %v6575 = vpop.f32.mrf.mxu0
        %v6576 = vadd.f32 0.0, %v6575
        %v6577 = vpop.f32.mrf.mxu0
        %6578 = vdwg.mxu0
        %v6579 = vadd.f32 %v6315, %v6472
        %v6580 = vadd.f32 %v6328, %v6485
        %v6581 = vadd.f32 %v6341, %v6498
        %v6582 = vadd.f32 %v6354, %v6511
        %v6583 = vadd.f32 %v6367, %v6524
        %v6584 = vadd.f32 %v6380, %v6537
        %v6585 = vadd.f32 %v6393, %v6550
        %v6586 = vadd.f32 %v6406, %v6563
        %v6587 = vadd.f32 %v6419, %v6576
        %s6588 = scalar_lea.vmem [#allocation11], 6
        %v6589 = vld [vmem:[%s6588] sm:$0x3]
        %6590 = vrot.lane.b32.xlu0 %v6129, 94
        %v6591 = vpop.permute.xlu0 %6590
        %6592 = vrot.lane.b32.xlu0 %v6130, 94
        %v6593 = vpop.permute.xlu0 %6592
        %6594 = vrot.lane.b32.xlu0 %v6131, 94
        %v6595 = vpop.permute.xlu0 %6594
        %6596 = vrot.lane.b32.xlu0 %v6132, 94
        %v6597 = vpop.permute.xlu0 %6596
        %6598 = vrot.lane.b32.xlu0 %v6133, 94
        %v6599 = vpop.permute.xlu0 %6598
        %6600 = vrot.lane.b32.xlu0 %v6134, 94
        %v6601 = vpop.permute.xlu0 %6600
        %6602 = vrot.lane.b32.xlu0 %v6135, 94
        %v6603 = vpop.permute.xlu0 %6602
        %6604 = vrot.lane.b32.xlu0 %v6136, 94
        %v6605 = vpop.permute.xlu0 %6604
        %6606 = vrot.lane.b32.xlu0 %v6137, 94
        %v6607 = vpop.permute.xlu0 %6606
        %v6608 = vsel %vm3659, %v6591, %v6593
        %v6609 = vsel %vm3659, %v6593, %v6595
        %v6610 = vsel %vm3659, %v6595, %v6597
        %v6611 = vsel %vm3659, %v6597, %v6599
        %v6612 = vsel %vm3659, %v6599, %v6601
        %v6613 = vsel %vm3659, %v6601, %v6603
        %v6614 = vsel %vm3659, %v6603, %v6605
        %v6615 = vsel %vm3659, %v6605, %v6607
        %v6626 = vsel %vm676, %v6589, 0
        %6628 = vmatpush.bf16.msra.mxu0 0
        %6629 = vmatpush.bf16.msra.mxu0 0
        %6630 = vmatpush.bf16.msra.mxu0 0
        %6631 = vmatpush.bf16.msra.mxu0 0
        %6632 = vmatpush.bf16.msra.mxu0 0
        %6633 = vmatpush.bf16.msra.mxu0 0
        %6634 = vmatpush.bf16.msra.mxu0 0
        %6635 = vmatpush.bf16.msra.mxu0 %v6608
        %6636 = vmatmul.bf16.gmra.mxu0 %v6626
        %v6637 = vpop.f32.mrf.mxu0
        %v6638 = vadd.f32 0.0, %v6637
        %v6639 = vpop.f32.mrf.mxu0
        %6640 = vdwg.mxu0
        %6641 = vmatpush.bf16.msra.mxu0 0
        %6642 = vmatpush.bf16.msra.mxu0 0
        %6643 = vmatpush.bf16.msra.mxu0 0
        %6644 = vmatpush.bf16.msra.mxu0 0
        %6645 = vmatpush.bf16.msra.mxu0 0
        %6646 = vmatpush.bf16.msra.mxu0 0
        %6647 = vmatpush.bf16.msra.mxu0 0
        %6648 = vmatpush.bf16.msra.mxu0 %v6609
        %6649 = vmatmul.bf16.gmra.mxu0 %v6626
        %v6650 = vpop.f32.mrf.mxu0
        %v6651 = vadd.f32 0.0, %v6650
        %v6652 = vpop.f32.mrf.mxu0
        %6653 = vdwg.mxu0
        %6654 = vmatpush.bf16.msra.mxu0 0
        %6655 = vmatpush.bf16.msra.mxu0 0
        %6656 = vmatpush.bf16.msra.mxu0 0
        %6657 = vmatpush.bf16.msra.mxu0 0
        %6658 = vmatpush.bf16.msra.mxu0 0
        %6659 = vmatpush.bf16.msra.mxu0 0
        %6660 = vmatpush.bf16.msra.mxu0 0
        %6661 = vmatpush.bf16.msra.mxu0 %v6610
        %6662 = vmatmul.bf16.gmra.mxu0 %v6626
        %v6663 = vpop.f32.mrf.mxu0
        %v6664 = vadd.f32 0.0, %v6663
        %v6665 = vpop.f32.mrf.mxu0
        %6666 = vdwg.mxu0
        %6667 = vmatpush.bf16.msra.mxu0 0
        %6668 = vmatpush.bf16.msra.mxu0 0
        %6669 = vmatpush.bf16.msra.mxu0 0
        %6670 = vmatpush.bf16.msra.mxu0 0
        %6671 = vmatpush.bf16.msra.mxu0 0
        %6672 = vmatpush.bf16.msra.mxu0 0
        %6673 = vmatpush.bf16.msra.mxu0 0
        %6674 = vmatpush.bf16.msra.mxu0 %v6611
        %6675 = vmatmul.bf16.gmra.mxu0 %v6626
        %v6676 = vpop.f32.mrf.mxu0
        %v6677 = vadd.f32 0.0, %v6676
        %v6678 = vpop.f32.mrf.mxu0
        %6679 = vdwg.mxu0
        %6680 = vmatpush.bf16.msra.mxu0 0
        %6681 = vmatpush.bf16.msra.mxu0 0
        %6682 = vmatpush.bf16.msra.mxu0 0
        %6683 = vmatpush.bf16.msra.mxu0 0
        %6684 = vmatpush.bf16.msra.mxu0 0
        %6685 = vmatpush.bf16.msra.mxu0 0
        %6686 = vmatpush.bf16.msra.mxu0 0
        %6687 = vmatpush.bf16.msra.mxu0 %v6612
        %6688 = vmatmul.bf16.gmra.mxu0 %v6626
        %v6689 = vpop.f32.mrf.mxu0
        %v6690 = vadd.f32 0.0, %v6689
        %v6691 = vpop.f32.mrf.mxu0
        %6692 = vdwg.mxu0
        %6693 = vmatpush.bf16.msra.mxu0 0
        %6694 = vmatpush.bf16.msra.mxu0 0
        %6695 = vmatpush.bf16.msra.mxu0 0
        %6696 = vmatpush.bf16.msra.mxu0 0
        %6697 = vmatpush.bf16.msra.mxu0 0
        %6698 = vmatpush.bf16.msra.mxu0 0
        %6699 = vmatpush.bf16.msra.mxu0 0
        %6700 = vmatpush.bf16.msra.mxu0 %v6613
        %6701 = vmatmul.bf16.gmra.mxu0 %v6626
        %v6702 = vpop.f32.mrf.mxu0
        %v6703 = vadd.f32 0.0, %v6702
        %v6704 = vpop.f32.mrf.mxu0
        %6705 = vdwg.mxu0
        %6706 = vmatpush.bf16.msra.mxu0 0
        %6707 = vmatpush.bf16.msra.mxu0 0
        %6708 = vmatpush.bf16.msra.mxu0 0
        %6709 = vmatpush.bf16.msra.mxu0 0
        %6710 = vmatpush.bf16.msra.mxu0 0
        %6711 = vmatpush.bf16.msra.mxu0 0
        %6712 = vmatpush.bf16.msra.mxu0 0
        %6713 = vmatpush.bf16.msra.mxu0 %v6614
        %6714 = vmatmul.bf16.gmra.mxu0 %v6626
        %v6715 = vpop.f32.mrf.mxu0
        %v6716 = vadd.f32 0.0, %v6715
        %v6717 = vpop.f32.mrf.mxu0
        %6718 = vdwg.mxu0
        %6719 = vmatpush.bf16.msra.mxu0 0
        %6720 = vmatpush.bf16.msra.mxu0 0
        %6721 = vmatpush.bf16.msra.mxu0 0
        %6722 = vmatpush.bf16.msra.mxu0 0
        %6723 = vmatpush.bf16.msra.mxu0 0
        %6724 = vmatpush.bf16.msra.mxu0 0
        %6725 = vmatpush.bf16.msra.mxu0 0
        %6726 = vmatpush.bf16.msra.mxu0 %v6615
        %6727 = vmatmul.bf16.gmra.mxu0 %v6626
        %v6728 = vpop.f32.mrf.mxu0
        %v6729 = vadd.f32 0.0, %v6728
        %v6730 = vpop.f32.mrf.mxu0
        %6731 = vdwg.mxu0
        %6732 = vmatpush.bf16.msra.mxu0 0
        %6733 = vmatpush.bf16.msra.mxu0 0
        %6734 = vmatpush.bf16.msra.mxu0 0
        %6735 = vmatpush.bf16.msra.mxu0 0
        %6736 = vmatpush.bf16.msra.mxu0 0
        %6737 = vmatpush.bf16.msra.mxu0 0
        %6738 = vmatpush.bf16.msra.mxu0 0
        %6739 = vmatpush.bf16.msra.mxu0 %v6607
        %6740 = vmatmul.bf16.gmra.mxu0 %v6626
        %v6741 = vpop.f32.mrf.mxu0
        %v6742 = vadd.f32 0.0, %v6741
        %v6743 = vpop.f32.mrf.mxu0
        %6744 = vdwg.mxu0
        %v6745 = vadd.f32 %v6579, %v6638
        %v6746 = vadd.f32 %v6580, %v6651
        %v6747 = vadd.f32 %v6581, %v6664
        %v6748 = vadd.f32 %v6582, %v6677
        %v6749 = vadd.f32 %v6583, %v6690
        %v6750 = vadd.f32 %v6584, %v6703
        %v6751 = vadd.f32 %v6585, %v6716
        %v6752 = vadd.f32 %v6586, %v6729
        %v6753 = vadd.f32 %v6587, %v6742
        %s6754 = scalar_lea.vmem [#allocation11], 8
        %v6755 = vld [vmem:[%s6754] sm:$0x3]
        %6756 = vrot.lane.b32.xlu0 %v6129, 93
        %v6757 = vpop.permute.xlu0 %6756
        %6758 = vrot.lane.b32.xlu0 %v6130, 93
        %v6759 = vpop.permute.xlu0 %6758
        %6760 = vrot.lane.b32.xlu0 %v6131, 93
        %v6761 = vpop.permute.xlu0 %6760
        %6762 = vrot.lane.b32.xlu0 %v6132, 93
        %v6763 = vpop.permute.xlu0 %6762
        %6764 = vrot.lane.b32.xlu0 %v6133, 93
        %v6765 = vpop.permute.xlu0 %6764
        %6766 = vrot.lane.b32.xlu0 %v6134, 93
        %v6767 = vpop.permute.xlu0 %6766
        %6768 = vrot.lane.b32.xlu0 %v6135, 93
        %v6769 = vpop.permute.xlu0 %6768
        %6770 = vrot.lane.b32.xlu0 %v6136, 93
        %v6771 = vpop.permute.xlu0 %6770
        %6772 = vrot.lane.b32.xlu0 %v6137, 93
        %v6773 = vpop.permute.xlu0 %6772
        %v6774 = vsel %vm3850, %v6757, %v6759
        %v6775 = vsel %vm3850, %v6759, %v6761
        %v6776 = vsel %vm3850, %v6761, %v6763
        %v6777 = vsel %vm3850, %v6763, %v6765
        %v6778 = vsel %vm3850, %v6765, %v6767
        %v6779 = vsel %vm3850, %v6767, %v6769
        %v6780 = vsel %vm3850, %v6769, %v6771
        %v6781 = vsel %vm3850, %v6771, %v6773
        %v6792 = vsel %vm676, %v6755, 0
        %6794 = vmatpush.bf16.msra.mxu0 0
        %6795 = vmatpush.bf16.msra.mxu0 0
        %6796 = vmatpush.bf16.msra.mxu0 0
        %6797 = vmatpush.bf16.msra.mxu0 0
        %6798 = vmatpush.bf16.msra.mxu0 0
        %6799 = vmatpush.bf16.msra.mxu0 0
        %6800 = vmatpush.bf16.msra.mxu0 0
        %6801 = vmatpush.bf16.msra.mxu0 %v6774
        %6802 = vmatmul.bf16.gmra.mxu0 %v6792
        %v6803 = vpop.f32.mrf.mxu0
        %v6804 = vadd.f32 0.0, %v6803
        %v6805 = vpop.f32.mrf.mxu0
        %6806 = vdwg.mxu0
        %6807 = vmatpush.bf16.msra.mxu0 0
        %6808 = vmatpush.bf16.msra.mxu0 0
        %6809 = vmatpush.bf16.msra.mxu0 0
        %6810 = vmatpush.bf16.msra.mxu0 0
        %6811 = vmatpush.bf16.msra.mxu0 0
        %6812 = vmatpush.bf16.msra.mxu0 0
        %6813 = vmatpush.bf16.msra.mxu0 0
        %6814 = vmatpush.bf16.msra.mxu0 %v6775
        %6815 = vmatmul.bf16.gmra.mxu0 %v6792
        %v6816 = vpop.f32.mrf.mxu0
        %v6817 = vadd.f32 0.0, %v6816
        %v6818 = vpop.f32.mrf.mxu0
        %6819 = vdwg.mxu0
        %6820 = vmatpush.bf16.msra.mxu0 0
        %6821 = vmatpush.bf16.msra.mxu0 0
        %6822 = vmatpush.bf16.msra.mxu0 0
        %6823 = vmatpush.bf16.msra.mxu0 0
        %6824 = vmatpush.bf16.msra.mxu0 0
        %6825 = vmatpush.bf16.msra.mxu0 0
        %6826 = vmatpush.bf16.msra.mxu0 0
        %6827 = vmatpush.bf16.msra.mxu0 %v6776
        %6828 = vmatmul.bf16.gmra.mxu0 %v6792
        %v6829 = vpop.f32.mrf.mxu0
        %v6830 = vadd.f32 0.0, %v6829
        %v6831 = vpop.f32.mrf.mxu0
        %6832 = vdwg.mxu0
        %6833 = vmatpush.bf16.msra.mxu0 0
        %6834 = vmatpush.bf16.msra.mxu0 0
        %6835 = vmatpush.bf16.msra.mxu0 0
        %6836 = vmatpush.bf16.msra.mxu0 0
        %6837 = vmatpush.bf16.msra.mxu0 0
        %6838 = vmatpush.bf16.msra.mxu0 0
        %6839 = vmatpush.bf16.msra.mxu0 0
        %6840 = vmatpush.bf16.msra.mxu0 %v6777
        %6841 = vmatmul.bf16.gmra.mxu0 %v6792
        %v6842 = vpop.f32.mrf.mxu0
        %v6843 = vadd.f32 0.0, %v6842
        %v6844 = vpop.f32.mrf.mxu0
        %6845 = vdwg.mxu0
        %6846 = vmatpush.bf16.msra.mxu0 0
        %6847 = vmatpush.bf16.msra.mxu0 0
        %6848 = vmatpush.bf16.msra.mxu0 0
        %6849 = vmatpush.bf16.msra.mxu0 0
        %6850 = vmatpush.bf16.msra.mxu0 0
        %6851 = vmatpush.bf16.msra.mxu0 0
        %6852 = vmatpush.bf16.msra.mxu0 0
        %6853 = vmatpush.bf16.msra.mxu0 %v6778
        %6854 = vmatmul.bf16.gmra.mxu0 %v6792
        %v6855 = vpop.f32.mrf.mxu0
        %v6856 = vadd.f32 0.0, %v6855
        %v6857 = vpop.f32.mrf.mxu0
        %6858 = vdwg.mxu0
        %6859 = vmatpush.bf16.msra.mxu0 0
        %6860 = vmatpush.bf16.msra.mxu0 0
        %6861 = vmatpush.bf16.msra.mxu0 0
        %6862 = vmatpush.bf16.msra.mxu0 0
        %6863 = vmatpush.bf16.msra.mxu0 0
        %6864 = vmatpush.bf16.msra.mxu0 0
        %6865 = vmatpush.bf16.msra.mxu0 0
        %6866 = vmatpush.bf16.msra.mxu0 %v6779
        %6867 = vmatmul.bf16.gmra.mxu0 %v6792
        %v6868 = vpop.f32.mrf.mxu0
        %v6869 = vadd.f32 0.0, %v6868
        %v6870 = vpop.f32.mrf.mxu0
        %6871 = vdwg.mxu0
        %6872 = vmatpush.bf16.msra.mxu0 0
        %6873 = vmatpush.bf16.msra.mxu0 0
        %6874 = vmatpush.bf16.msra.mxu0 0
        %6875 = vmatpush.bf16.msra.mxu0 0
        %6876 = vmatpush.bf16.msra.mxu0 0
        %6877 = vmatpush.bf16.msra.mxu0 0
        %6878 = vmatpush.bf16.msra.mxu0 0
        %6879 = vmatpush.bf16.msra.mxu0 %v6780
        %6880 = vmatmul.bf16.gmra.mxu0 %v6792
        %v6881 = vpop.f32.mrf.mxu0
        %v6882 = vadd.f32 0.0, %v6881
        %v6883 = vpop.f32.mrf.mxu0
        %6884 = vdwg.mxu0
        %6885 = vmatpush.bf16.msra.mxu0 0
        %6886 = vmatpush.bf16.msra.mxu0 0
        %6887 = vmatpush.bf16.msra.mxu0 0
        %6888 = vmatpush.bf16.msra.mxu0 0
        %6889 = vmatpush.bf16.msra.mxu0 0
        %6890 = vmatpush.bf16.msra.mxu0 0
        %6891 = vmatpush.bf16.msra.mxu0 0
        %6892 = vmatpush.bf16.msra.mxu0 %v6781
        %6893 = vmatmul.bf16.gmra.mxu0 %v6792
        %v6894 = vpop.f32.mrf.mxu0
        %v6895 = vadd.f32 0.0, %v6894
        %v6896 = vpop.f32.mrf.mxu0
        %6897 = vdwg.mxu0
        %6898 = vmatpush.bf16.msra.mxu0 0
        %6899 = vmatpush.bf16.msra.mxu0 0
        %6900 = vmatpush.bf16.msra.mxu0 0
        %6901 = vmatpush.bf16.msra.mxu0 0
        %6902 = vmatpush.bf16.msra.mxu0 0
        %6903 = vmatpush.bf16.msra.mxu0 0
        %6904 = vmatpush.bf16.msra.mxu0 0
        %6905 = vmatpush.bf16.msra.mxu0 %v6773
        %6906 = vmatmul.bf16.gmra.mxu0 %v6792
        %v6907 = vpop.f32.mrf.mxu0
        %v6908 = vadd.f32 0.0, %v6907
        %v6909 = vpop.f32.mrf.mxu0
        %6910 = vdwg.mxu0
        %v6911 = vadd.f32 %v6745, %v6804
        %v6912 = vadd.f32 %v6746, %v6817
        %v6913 = vadd.f32 %v6747, %v6830
        %v6914 = vadd.f32 %v6748, %v6843
        %v6915 = vadd.f32 %v6749, %v6856
        %v6916 = vadd.f32 %v6750, %v6869
        %v6917 = vadd.f32 %v6751, %v6882
        %v6918 = vadd.f32 %v6752, %v6895
        %v6919 = vadd.f32 %v6753, %v6908
        %s6920 = scalar_lea.vmem [#allocation11], 10
        %v6921 = vld [vmem:[%s6920] sm:$0x3]
        %6922 = vrot.lane.b32.xlu0 %v6129, 92
        %v6923 = vpop.permute.xlu0 %6922
        %6924 = vrot.lane.b32.xlu0 %v6130, 92
        %v6925 = vpop.permute.xlu0 %6924
        %6926 = vrot.lane.b32.xlu0 %v6131, 92
        %v6927 = vpop.permute.xlu0 %6926
        %6928 = vrot.lane.b32.xlu0 %v6132, 92
        %v6929 = vpop.permute.xlu0 %6928
        %6930 = vrot.lane.b32.xlu0 %v6133, 92
        %v6931 = vpop.permute.xlu0 %6930
        %6932 = vrot.lane.b32.xlu0 %v6134, 92
        %v6933 = vpop.permute.xlu0 %6932
        %6934 = vrot.lane.b32.xlu0 %v6135, 92
        %v6935 = vpop.permute.xlu0 %6934
        %6936 = vrot.lane.b32.xlu0 %v6136, 92
        %v6937 = vpop.permute.xlu0 %6936
        %6938 = vrot.lane.b32.xlu0 %v6137, 92
        %v6939 = vpop.permute.xlu0 %6938
        %v6940 = vsel %vm1073, %v6923, %v6925
        %v6941 = vsel %vm1073, %v6925, %v6927
        %v6942 = vsel %vm1073, %v6927, %v6929
        %v6943 = vsel %vm1073, %v6929, %v6931
        %v6944 = vsel %vm1073, %v6931, %v6933
        %v6945 = vsel %vm1073, %v6933, %v6935
        %v6946 = vsel %vm1073, %v6935, %v6937
        %v6947 = vsel %vm1073, %v6937, %v6939
        %v6958 = vsel %vm676, %v6921, 0
        %6960 = vmatpush.bf16.msra.mxu0 0
        %6961 = vmatpush.bf16.msra.mxu0 0
        %6962 = vmatpush.bf16.msra.mxu0 0
        %6963 = vmatpush.bf16.msra.mxu0 0
        %6964 = vmatpush.bf16.msra.mxu0 0
        %6965 = vmatpush.bf16.msra.mxu0 0
        %6966 = vmatpush.bf16.msra.mxu0 0
        %6967 = vmatpush.bf16.msra.mxu0 %v6940
        %6968 = vmatmul.bf16.gmra.mxu0 %v6958
        %v6969 = vpop.f32.mrf.mxu0
        %v6970 = vadd.f32 0.0, %v6969
        %v6971 = vpop.f32.mrf.mxu0
        %6972 = vdwg.mxu0
        %6973 = vmatpush.bf16.msra.mxu0 0
        %6974 = vmatpush.bf16.msra.mxu0 0
        %6975 = vmatpush.bf16.msra.mxu0 0
        %6976 = vmatpush.bf16.msra.mxu0 0
        %6977 = vmatpush.bf16.msra.mxu0 0
        %6978 = vmatpush.bf16.msra.mxu0 0
        %6979 = vmatpush.bf16.msra.mxu0 0
        %6980 = vmatpush.bf16.msra.mxu0 %v6941
        %6981 = vmatmul.bf16.gmra.mxu0 %v6958
        %v6982 = vpop.f32.mrf.mxu0
        %v6983 = vadd.f32 0.0, %v6982
        %v6984 = vpop.f32.mrf.mxu0
        %6985 = vdwg.mxu0
        %6986 = vmatpush.bf16.msra.mxu0 0
        %6987 = vmatpush.bf16.msra.mxu0 0
        %6988 = vmatpush.bf16.msra.mxu0 0
        %6989 = vmatpush.bf16.msra.mxu0 0
        %6990 = vmatpush.bf16.msra.mxu0 0
        %6991 = vmatpush.bf16.msra.mxu0 0
        %6992 = vmatpush.bf16.msra.mxu0 0
        %6993 = vmatpush.bf16.msra.mxu0 %v6942
        %6994 = vmatmul.bf16.gmra.mxu0 %v6958
        %v6995 = vpop.f32.mrf.mxu0
        %v6996 = vadd.f32 0.0, %v6995
        %v6997 = vpop.f32.mrf.mxu0
        %6998 = vdwg.mxu0
        %6999 = vmatpush.bf16.msra.mxu0 0
        %7000 = vmatpush.bf16.msra.mxu0 0
        %7001 = vmatpush.bf16.msra.mxu0 0
        %7002 = vmatpush.bf16.msra.mxu0 0
        %7003 = vmatpush.bf16.msra.mxu0 0
        %7004 = vmatpush.bf16.msra.mxu0 0
        %7005 = vmatpush.bf16.msra.mxu0 0
        %7006 = vmatpush.bf16.msra.mxu0 %v6943
        %7007 = vmatmul.bf16.gmra.mxu0 %v6958
        %v7008 = vpop.f32.mrf.mxu0
        %v7009 = vadd.f32 0.0, %v7008
        %v7010 = vpop.f32.mrf.mxu0
        %7011 = vdwg.mxu0
        %7012 = vmatpush.bf16.msra.mxu0 0
        %7013 = vmatpush.bf16.msra.mxu0 0
        %7014 = vmatpush.bf16.msra.mxu0 0
        %7015 = vmatpush.bf16.msra.mxu0 0
        %7016 = vmatpush.bf16.msra.mxu0 0
        %7017 = vmatpush.bf16.msra.mxu0 0
        %7018 = vmatpush.bf16.msra.mxu0 0
        %7019 = vmatpush.bf16.msra.mxu0 %v6944
        %7020 = vmatmul.bf16.gmra.mxu0 %v6958
        %v7021 = vpop.f32.mrf.mxu0
        %v7022 = vadd.f32 0.0, %v7021
        %v7023 = vpop.f32.mrf.mxu0
        %7024 = vdwg.mxu0
        %7025 = vmatpush.bf16.msra.mxu0 0
        %7026 = vmatpush.bf16.msra.mxu0 0
        %7027 = vmatpush.bf16.msra.mxu0 0
        %7028 = vmatpush.bf16.msra.mxu0 0
        %7029 = vmatpush.bf16.msra.mxu0 0
        %7030 = vmatpush.bf16.msra.mxu0 0
        %7031 = vmatpush.bf16.msra.mxu0 0
        %7032 = vmatpush.bf16.msra.mxu0 %v6945
        %7033 = vmatmul.bf16.gmra.mxu0 %v6958
        %v7034 = vpop.f32.mrf.mxu0
        %v7035 = vadd.f32 0.0, %v7034
        %v7036 = vpop.f32.mrf.mxu0
        %7037 = vdwg.mxu0
        %7038 = vmatpush.bf16.msra.mxu0 0
        %7039 = vmatpush.bf16.msra.mxu0 0
        %7040 = vmatpush.bf16.msra.mxu0 0
        %7041 = vmatpush.bf16.msra.mxu0 0
        %7042 = vmatpush.bf16.msra.mxu0 0
        %7043 = vmatpush.bf16.msra.mxu0 0
        %7044 = vmatpush.bf16.msra.mxu0 0
        %7045 = vmatpush.bf16.msra.mxu0 %v6946
        %7046 = vmatmul.bf16.gmra.mxu0 %v6958
        %v7047 = vpop.f32.mrf.mxu0
        %v7048 = vadd.f32 0.0, %v7047
        %v7049 = vpop.f32.mrf.mxu0
        %7050 = vdwg.mxu0
        %7051 = vmatpush.bf16.msra.mxu0 0
        %7052 = vmatpush.bf16.msra.mxu0 0
        %7053 = vmatpush.bf16.msra.mxu0 0
        %7054 = vmatpush.bf16.msra.mxu0 0
        %7055 = vmatpush.bf16.msra.mxu0 0
        %7056 = vmatpush.bf16.msra.mxu0 0
        %7057 = vmatpush.bf16.msra.mxu0 0
        %7058 = vmatpush.bf16.msra.mxu0 %v6947
        %7059 = vmatmul.bf16.gmra.mxu0 %v6958
        %v7060 = vpop.f32.mrf.mxu0
        %v7061 = vadd.f32 0.0, %v7060
        %v7062 = vpop.f32.mrf.mxu0
        %7063 = vdwg.mxu0
        %7064 = vmatpush.bf16.msra.mxu0 0
        %7065 = vmatpush.bf16.msra.mxu0 0
        %7066 = vmatpush.bf16.msra.mxu0 0
        %7067 = vmatpush.bf16.msra.mxu0 0
        %7068 = vmatpush.bf16.msra.mxu0 0
        %7069 = vmatpush.bf16.msra.mxu0 0
        %7070 = vmatpush.bf16.msra.mxu0 0
        %7071 = vmatpush.bf16.msra.mxu0 %v6939
        %7072 = vmatmul.bf16.gmra.mxu0 %v6958
        %v7073 = vpop.f32.mrf.mxu0
        %v7074 = vadd.f32 0.0, %v7073
        %v7075 = vpop.f32.mrf.mxu0
        %7076 = vdwg.mxu0
        %v7077 = vadd.f32 %v6911, %v6970
        %v7078 = vadd.f32 %v6912, %v6983
        %v7079 = vadd.f32 %v6913, %v6996
        %v7080 = vadd.f32 %v6914, %v7009
        %v7081 = vadd.f32 %v6915, %v7022
        %v7082 = vadd.f32 %v6916, %v7035
        %v7083 = vadd.f32 %v6917, %v7048
        %v7084 = vadd.f32 %v6918, %v7061
        %v7085 = vadd.f32 %v6919, %v7074
        %v7086 = vld [vmem:[#allocation3] sm:$0xff]
        %v7087 = vld [vmem:[#allocation3 + $0x8] sm:$0xff]
        %v7088 = vld [vmem:[#allocation3 + $0x10] sm:$0xff]
        %v7089 = vld [vmem:[#allocation3 + $0x18] sm:$0xff]
        %v7090 = vld [vmem:[#allocation3 + $0x20] sm:$0xff]
        %v7091 = vld [vmem:[#allocation3 + $0x28] sm:$0xff]
        %v7092 = vld [vmem:[#allocation3 + $0x30] sm:$0xff]
        %v7093 = vld [vmem:[#allocation3 + $0x38] sm:$0xff]
        %v7094 = vld [vmem:[#allocation3 + $0x40] sm:$0xff]
        %v7095 = vld [vmem:[#allocation3 + $0x48] sm:$0xff]
        %s7096 = scalar_lea.vmem [#allocation11], 12
        %v7097 = vld [vmem:[%s7096] sm:$0x3]
        %v7108 = vunpack.c.l.b16 %v7086
        %v7109 = vunpack.c.h.b16 %v7086
        %v7110 = vunpack.c.l.b16 %v7087
        %v7111 = vunpack.c.h.b16 %v7087
        %v7112 = vunpack.c.l.b16 %v7088
        %v7113 = vunpack.c.h.b16 %v7088
        %v7114 = vunpack.c.l.b16 %v7089
        %v7115 = vunpack.c.h.b16 %v7089
        %v7116 = vunpack.c.l.b16 %v7090
        %v7117 = vunpack.c.h.b16 %v7090
        %v7118 = vunpack.c.l.b16 %v7091
        %v7119 = vunpack.c.h.b16 %v7091
        %v7120 = vunpack.c.l.b16 %v7092
        %v7121 = vunpack.c.h.b16 %v7092
        %v7122 = vunpack.c.l.b16 %v7093
        %v7123 = vunpack.c.h.b16 %v7093
        %v7124 = vunpack.c.l.b16 %v7094
        %v7125 = vunpack.c.h.b16 %v7094
        %v7126 = vunpack.c.l.b16 %v7095
        %v7127 = vunpack.c.h.b16 %v7095
        %v7128 = vpack.c.b16 %v7118, %v7108
        %v7129 = vpack.c.b16 %v7119, %v7109
        %v7130 = vpack.c.b16 %v7120, %v7110
        %v7131 = vpack.c.b16 %v7121, %v7111
        %v7132 = vpack.c.b16 %v7122, %v7112
        %v7133 = vpack.c.b16 %v7123, %v7113
        %v7134 = vpack.c.b16 %v7124, %v7114
        %v7135 = vpack.c.b16 %v7125, %v7115
        %v7136 = vpack.c.b16 %v7126, %v7116
        %v7137 = vpack.c.b16 %v7127, %v7117
        %7138 = vrot.lane.b32.xlu0 %v7128, 60
        %v7139 = vpop.permute.xlu0 %7138
        %7140 = vrot.lane.b32.xlu0 %v7129, 60
        %v7141 = vpop.permute.xlu0 %7140
        %7142 = vrot.lane.b32.xlu0 %v7130, 60
        %v7143 = vpop.permute.xlu0 %7142
        %7144 = vrot.lane.b32.xlu0 %v7131, 60
        %v7145 = vpop.permute.xlu0 %7144
        %7146 = vrot.lane.b32.xlu0 %v7132, 60
        %v7147 = vpop.permute.xlu0 %7146
        %7148 = vrot.lane.b32.xlu0 %v7133, 60
        %v7149 = vpop.permute.xlu0 %7148
        %7150 = vrot.lane.b32.xlu0 %v7134, 60
        %v7151 = vpop.permute.xlu0 %7150
        %7152 = vrot.lane.b32.xlu0 %v7135, 60
        %v7153 = vpop.permute.xlu0 %7152
        %7154 = vrot.lane.b32.xlu0 %v7136, 60
        %v7155 = vpop.permute.xlu0 %7154
        %7156 = vrot.lane.b32.xlu0 %v7137, 60
        %v7157 = vpop.permute.xlu0 %7156
        %v7158 = vsel %vm4283, %v7139, %v7141
        %v7159 = vsel %vm4283, %v7141, %v7143
        %v7160 = vsel %vm4283, %v7143, %v7145
        %v7161 = vsel %vm4283, %v7145, %v7147
        %v7162 = vsel %vm4283, %v7147, %v7149
        %v7163 = vsel %vm4283, %v7149, %v7151
        %v7164 = vsel %vm4283, %v7151, %v7153
        %v7165 = vsel %vm4283, %v7153, %v7155
        %v7166 = vsel %vm4283, %v7155, %v7157
        %v7177 = vsel %vm676, %v7097, 0
        %7179 = vmatpush.bf16.msra.mxu0 0
        %7180 = vmatpush.bf16.msra.mxu0 0
        %7181 = vmatpush.bf16.msra.mxu0 0
        %7182 = vmatpush.bf16.msra.mxu0 0
        %7183 = vmatpush.bf16.msra.mxu0 0
        %7184 = vmatpush.bf16.msra.mxu0 0
        %7185 = vmatpush.bf16.msra.mxu0 0
        %7186 = vmatpush.bf16.msra.mxu0 %v7158
        %7187 = vmatmul.bf16.gmra.mxu0 %v7177
        %v7188 = vpop.f32.mrf.mxu0
        %v7189 = vadd.f32 0.0, %v7188
        %v7190 = vpop.f32.mrf.mxu0
        %7191 = vdwg.mxu0
        %7192 = vmatpush.bf16.msra.mxu0 0
        %7193 = vmatpush.bf16.msra.mxu0 0
        %7194 = vmatpush.bf16.msra.mxu0 0
        %7195 = vmatpush.bf16.msra.mxu0 0
        %7196 = vmatpush.bf16.msra.mxu0 0
        %7197 = vmatpush.bf16.msra.mxu0 0
        %7198 = vmatpush.bf16.msra.mxu0 0
        %7199 = vmatpush.bf16.msra.mxu0 %v7159
        %7200 = vmatmul.bf16.gmra.mxu0 %v7177
        %v7201 = vpop.f32.mrf.mxu0
        %v7202 = vadd.f32 0.0, %v7201
        %v7203 = vpop.f32.mrf.mxu0
        %7204 = vdwg.mxu0
        %7205 = vmatpush.bf16.msra.mxu0 0
        %7206 = vmatpush.bf16.msra.mxu0 0
        %7207 = vmatpush.bf16.msra.mxu0 0
        %7208 = vmatpush.bf16.msra.mxu0 0
        %7209 = vmatpush.bf16.msra.mxu0 0
        %7210 = vmatpush.bf16.msra.mxu0 0
        %7211 = vmatpush.bf16.msra.mxu0 0
        %7212 = vmatpush.bf16.msra.mxu0 %v7160
        %7213 = vmatmul.bf16.gmra.mxu0 %v7177
        %v7214 = vpop.f32.mrf.mxu0
        %v7215 = vadd.f32 0.0, %v7214
        %v7216 = vpop.f32.mrf.mxu0
        %7217 = vdwg.mxu0
        %7218 = vmatpush.bf16.msra.mxu0 0
        %7219 = vmatpush.bf16.msra.mxu0 0
        %7220 = vmatpush.bf16.msra.mxu0 0
        %7221 = vmatpush.bf16.msra.mxu0 0
        %7222 = vmatpush.bf16.msra.mxu0 0
        %7223 = vmatpush.bf16.msra.mxu0 0
        %7224 = vmatpush.bf16.msra.mxu0 0
        %7225 = vmatpush.bf16.msra.mxu0 %v7161
        %7226 = vmatmul.bf16.gmra.mxu0 %v7177
        %v7227 = vpop.f32.mrf.mxu0
        %v7228 = vadd.f32 0.0, %v7227
        %v7229 = vpop.f32.mrf.mxu0
        %7230 = vdwg.mxu0
        %7231 = vmatpush.bf16.msra.mxu0 0
        %7232 = vmatpush.bf16.msra.mxu0 0
        %7233 = vmatpush.bf16.msra.mxu0 0
        %7234 = vmatpush.bf16.msra.mxu0 0
        %7235 = vmatpush.bf16.msra.mxu0 0
        %7236 = vmatpush.bf16.msra.mxu0 0
        %7237 = vmatpush.bf16.msra.mxu0 0
        %7238 = vmatpush.bf16.msra.mxu0 %v7162
        %7239 = vmatmul.bf16.gmra.mxu0 %v7177
        %v7240 = vpop.f32.mrf.mxu0
        %v7241 = vadd.f32 0.0, %v7240
        %v7242 = vpop.f32.mrf.mxu0
        %7243 = vdwg.mxu0
        %7244 = vmatpush.bf16.msra.mxu0 0
        %7245 = vmatpush.bf16.msra.mxu0 0
        %7246 = vmatpush.bf16.msra.mxu0 0
        %7247 = vmatpush.bf16.msra.mxu0 0
        %7248 = vmatpush.bf16.msra.mxu0 0
        %7249 = vmatpush.bf16.msra.mxu0 0
        %7250 = vmatpush.bf16.msra.mxu0 0
        %7251 = vmatpush.bf16.msra.mxu0 %v7163
        %7252 = vmatmul.bf16.gmra.mxu0 %v7177
        %v7253 = vpop.f32.mrf.mxu0
        %v7254 = vadd.f32 0.0, %v7253
        %v7255 = vpop.f32.mrf.mxu0
        %7256 = vdwg.mxu0
        %7257 = vmatpush.bf16.msra.mxu0 0
        %7258 = vmatpush.bf16.msra.mxu0 0
        %7259 = vmatpush.bf16.msra.mxu0 0
        %7260 = vmatpush.bf16.msra.mxu0 0
        %7261 = vmatpush.bf16.msra.mxu0 0
        %7262 = vmatpush.bf16.msra.mxu0 0
        %7263 = vmatpush.bf16.msra.mxu0 0
        %7264 = vmatpush.bf16.msra.mxu0 %v7164
        %7265 = vmatmul.bf16.gmra.mxu0 %v7177
        %v7266 = vpop.f32.mrf.mxu0
        %v7267 = vadd.f32 0.0, %v7266
        %v7268 = vpop.f32.mrf.mxu0
        %7269 = vdwg.mxu0
        %7270 = vmatpush.bf16.msra.mxu0 0
        %7271 = vmatpush.bf16.msra.mxu0 0
        %7272 = vmatpush.bf16.msra.mxu0 0
        %7273 = vmatpush.bf16.msra.mxu0 0
        %7274 = vmatpush.bf16.msra.mxu0 0
        %7275 = vmatpush.bf16.msra.mxu0 0
        %7276 = vmatpush.bf16.msra.mxu0 0
        %7277 = vmatpush.bf16.msra.mxu0 %v7165
        %7278 = vmatmul.bf16.gmra.mxu0 %v7177
        %v7279 = vpop.f32.mrf.mxu0
        %v7280 = vadd.f32 0.0, %v7279
        %v7281 = vpop.f32.mrf.mxu0
        %7282 = vdwg.mxu0
        %7283 = vmatpush.bf16.msra.mxu0 0
        %7284 = vmatpush.bf16.msra.mxu0 0
        %7285 = vmatpush.bf16.msra.mxu0 0
        %7286 = vmatpush.bf16.msra.mxu0 0
        %7287 = vmatpush.bf16.msra.mxu0 0
        %7288 = vmatpush.bf16.msra.mxu0 0
        %7289 = vmatpush.bf16.msra.mxu0 0
        %7290 = vmatpush.bf16.msra.mxu0 %v7166
        %7291 = vmatmul.bf16.gmra.mxu0 %v7177
        %v7292 = vpop.f32.mrf.mxu0
        %v7293 = vadd.f32 0.0, %v7292
        %v7294 = vpop.f32.mrf.mxu0
        %7295 = vdwg.mxu0
        %v7296 = vadd.f32 %v7077, %v7189
        %v7297 = vadd.f32 %v7078, %v7202
        %v7298 = vadd.f32 %v7079, %v7215
        %v7299 = vadd.f32 %v7080, %v7228
        %v7300 = vadd.f32 %v7081, %v7241
        %v7301 = vadd.f32 %v7082, %v7254
        %v7302 = vadd.f32 %v7083, %v7267
        %v7303 = vadd.f32 %v7084, %v7280
        %v7304 = vadd.f32 %v7085, %v7293
        %s7305 = scalar_lea.vmem [#allocation11], 14
        %v7306 = vld [vmem:[%s7305] sm:$0x3]
        %7307 = vrot.lane.b32.xlu0 %v7128, 59
        %v7308 = vpop.permute.xlu0 %7307
        %7309 = vrot.lane.b32.xlu0 %v7129, 59
        %v7310 = vpop.permute.xlu0 %7309
        %7311 = vrot.lane.b32.xlu0 %v7130, 59
        %v7312 = vpop.permute.xlu0 %7311
        %7313 = vrot.lane.b32.xlu0 %v7131, 59
        %v7314 = vpop.permute.xlu0 %7313
        %7315 = vrot.lane.b32.xlu0 %v7132, 59
        %v7316 = vpop.permute.xlu0 %7315
        %7317 = vrot.lane.b32.xlu0 %v7133, 59
        %v7318 = vpop.permute.xlu0 %7317
        %7319 = vrot.lane.b32.xlu0 %v7134, 59
        %v7320 = vpop.permute.xlu0 %7319
        %7321 = vrot.lane.b32.xlu0 %v7135, 59
        %v7322 = vpop.permute.xlu0 %7321
        %7323 = vrot.lane.b32.xlu0 %v7136, 59
        %v7324 = vpop.permute.xlu0 %7323
        %7325 = vrot.lane.b32.xlu0 %v7137, 59
        %v7326 = vpop.permute.xlu0 %7325
        %v7327 = vsel %vm4477, %v7308, %v7310
        %v7328 = vsel %vm4477, %v7310, %v7312
        %v7329 = vsel %vm4477, %v7312, %v7314
        %v7330 = vsel %vm4477, %v7314, %v7316
        %v7331 = vsel %vm4477, %v7316, %v7318
        %v7332 = vsel %vm4477, %v7318, %v7320
        %v7333 = vsel %vm4477, %v7320, %v7322
        %v7334 = vsel %vm4477, %v7322, %v7324
        %v7335 = vsel %vm4477, %v7324, %v7326
        %v7346 = vsel %vm676, %v7306, 0
        %7348 = vmatpush.bf16.msra.mxu0 0
        %7349 = vmatpush.bf16.msra.mxu0 0
        %7350 = vmatpush.bf16.msra.mxu0 0
        %7351 = vmatpush.bf16.msra.mxu0 0
        %7352 = vmatpush.bf16.msra.mxu0 0
        %7353 = vmatpush.bf16.msra.mxu0 0
        %7354 = vmatpush.bf16.msra.mxu0 0
        %7355 = vmatpush.bf16.msra.mxu0 %v7327
        %7356 = vmatmul.bf16.gmra.mxu0 %v7346
        %v7357 = vpop.f32.mrf.mxu0
        %v7358 = vadd.f32 0.0, %v7357
        %v7359 = vpop.f32.mrf.mxu0
        %7360 = vdwg.mxu0
        %7361 = vmatpush.bf16.msra.mxu0 0
        %7362 = vmatpush.bf16.msra.mxu0 0
        %7363 = vmatpush.bf16.msra.mxu0 0
        %7364 = vmatpush.bf16.msra.mxu0 0
        %7365 = vmatpush.bf16.msra.mxu0 0
        %7366 = vmatpush.bf16.msra.mxu0 0
        %7367 = vmatpush.bf16.msra.mxu0 0
        %7368 = vmatpush.bf16.msra.mxu0 %v7328
        %7369 = vmatmul.bf16.gmra.mxu0 %v7346
        %v7370 = vpop.f32.mrf.mxu0
        %v7371 = vadd.f32 0.0, %v7370
        %v7372 = vpop.f32.mrf.mxu0
        %7373 = vdwg.mxu0
        %7374 = vmatpush.bf16.msra.mxu0 0
        %7375 = vmatpush.bf16.msra.mxu0 0
        %7376 = vmatpush.bf16.msra.mxu0 0
        %7377 = vmatpush.bf16.msra.mxu0 0
        %7378 = vmatpush.bf16.msra.mxu0 0
        %7379 = vmatpush.bf16.msra.mxu0 0
        %7380 = vmatpush.bf16.msra.mxu0 0
        %7381 = vmatpush.bf16.msra.mxu0 %v7329
        %7382 = vmatmul.bf16.gmra.mxu0 %v7346
        %v7383 = vpop.f32.mrf.mxu0
        %v7384 = vadd.f32 0.0, %v7383
        %v7385 = vpop.f32.mrf.mxu0
        %7386 = vdwg.mxu0
        %7387 = vmatpush.bf16.msra.mxu0 0
        %7388 = vmatpush.bf16.msra.mxu0 0
        %7389 = vmatpush.bf16.msra.mxu0 0
        %7390 = vmatpush.bf16.msra.mxu0 0
        %7391 = vmatpush.bf16.msra.mxu0 0
        %7392 = vmatpush.bf16.msra.mxu0 0
        %7393 = vmatpush.bf16.msra.mxu0 0
        %7394 = vmatpush.bf16.msra.mxu0 %v7330
        %7395 = vmatmul.bf16.gmra.mxu0 %v7346
        %v7396 = vpop.f32.mrf.mxu0
        %v7397 = vadd.f32 0.0, %v7396
        %v7398 = vpop.f32.mrf.mxu0
        %7399 = vdwg.mxu0
        %7400 = vmatpush.bf16.msra.mxu0 0
        %7401 = vmatpush.bf16.msra.mxu0 0
        %7402 = vmatpush.bf16.msra.mxu0 0
        %7403 = vmatpush.bf16.msra.mxu0 0
        %7404 = vmatpush.bf16.msra.mxu0 0
        %7405 = vmatpush.bf16.msra.mxu0 0
        %7406 = vmatpush.bf16.msra.mxu0 0
        %7407 = vmatpush.bf16.msra.mxu0 %v7331
        %7408 = vmatmul.bf16.gmra.mxu0 %v7346
        %v7409 = vpop.f32.mrf.mxu0
        %v7410 = vadd.f32 0.0, %v7409
        %v7411 = vpop.f32.mrf.mxu0
        %7412 = vdwg.mxu0
        %7413 = vmatpush.bf16.msra.mxu0 0
        %7414 = vmatpush.bf16.msra.mxu0 0
        %7415 = vmatpush.bf16.msra.mxu0 0
        %7416 = vmatpush.bf16.msra.mxu0 0
        %7417 = vmatpush.bf16.msra.mxu0 0
        %7418 = vmatpush.bf16.msra.mxu0 0
        %7419 = vmatpush.bf16.msra.mxu0 0
        %7420 = vmatpush.bf16.msra.mxu0 %v7332
        %7421 = vmatmul.bf16.gmra.mxu0 %v7346
        %v7422 = vpop.f32.mrf.mxu0
        %v7423 = vadd.f32 0.0, %v7422
        %v7424 = vpop.f32.mrf.mxu0
        %7425 = vdwg.mxu0
        %7426 = vmatpush.bf16.msra.mxu0 0
        %7427 = vmatpush.bf16.msra.mxu0 0
        %7428 = vmatpush.bf16.msra.mxu0 0
        %7429 = vmatpush.bf16.msra.mxu0 0
        %7430 = vmatpush.bf16.msra.mxu0 0
        %7431 = vmatpush.bf16.msra.mxu0 0
        %7432 = vmatpush.bf16.msra.mxu0 0
        %7433 = vmatpush.bf16.msra.mxu0 %v7333
        %7434 = vmatmul.bf16.gmra.mxu0 %v7346
        %v7435 = vpop.f32.mrf.mxu0
        %v7436 = vadd.f32 0.0, %v7435
        %v7437 = vpop.f32.mrf.mxu0
        %7438 = vdwg.mxu0
        %7439 = vmatpush.bf16.msra.mxu0 0
        %7440 = vmatpush.bf16.msra.mxu0 0
        %7441 = vmatpush.bf16.msra.mxu0 0
        %7442 = vmatpush.bf16.msra.mxu0 0
        %7443 = vmatpush.bf16.msra.mxu0 0
        %7444 = vmatpush.bf16.msra.mxu0 0
        %7445 = vmatpush.bf16.msra.mxu0 0
        %7446 = vmatpush.bf16.msra.mxu0 %v7334
        %7447 = vmatmul.bf16.gmra.mxu0 %v7346
        %v7448 = vpop.f32.mrf.mxu0
        %v7449 = vadd.f32 0.0, %v7448
        %v7450 = vpop.f32.mrf.mxu0
        %7451 = vdwg.mxu0
        %7452 = vmatpush.bf16.msra.mxu0 0
        %7453 = vmatpush.bf16.msra.mxu0 0
        %7454 = vmatpush.bf16.msra.mxu0 0
        %7455 = vmatpush.bf16.msra.mxu0 0
        %7456 = vmatpush.bf16.msra.mxu0 0
        %7457 = vmatpush.bf16.msra.mxu0 0
        %7458 = vmatpush.bf16.msra.mxu0 0
        %7459 = vmatpush.bf16.msra.mxu0 %v7335
        %7460 = vmatmul.bf16.gmra.mxu0 %v7346
        %v7461 = vpop.f32.mrf.mxu0
        %v7462 = vadd.f32 0.0, %v7461
        %v7463 = vpop.f32.mrf.mxu0
        %7464 = vdwg.mxu0
        %v7465 = vadd.f32 %v7296, %v7358
        %v7466 = vadd.f32 %v7297, %v7371
        %v7467 = vadd.f32 %v7298, %v7384
        %v7468 = vadd.f32 %v7299, %v7397
        %v7469 = vadd.f32 %v7300, %v7410
        %v7470 = vadd.f32 %v7301, %v7423
        %v7471 = vadd.f32 %v7302, %v7436
        %v7472 = vadd.f32 %v7303, %v7449
        %v7473 = vadd.f32 %v7304, %v7462
        %s7474 = scalar_lea.vmem [#allocation11], 16
        %v7475 = vld [vmem:[%s7474] sm:$0x3]
        %7476 = vrot.lane.b32.xlu0 %v7128, 58
        %v7477 = vpop.permute.xlu0 %7476
        %7478 = vrot.lane.b32.xlu0 %v7129, 58
        %v7479 = vpop.permute.xlu0 %7478
        %7480 = vrot.lane.b32.xlu0 %v7130, 58
        %v7481 = vpop.permute.xlu0 %7480
        %7482 = vrot.lane.b32.xlu0 %v7131, 58
        %v7483 = vpop.permute.xlu0 %7482
        %7484 = vrot.lane.b32.xlu0 %v7132, 58
        %v7485 = vpop.permute.xlu0 %7484
        %7486 = vrot.lane.b32.xlu0 %v7133, 58
        %v7487 = vpop.permute.xlu0 %7486
        %7488 = vrot.lane.b32.xlu0 %v7134, 58
        %v7489 = vpop.permute.xlu0 %7488
        %7490 = vrot.lane.b32.xlu0 %v7135, 58
        %v7491 = vpop.permute.xlu0 %7490
        %7492 = vrot.lane.b32.xlu0 %v7136, 58
        %v7493 = vpop.permute.xlu0 %7492
        %7494 = vrot.lane.b32.xlu0 %v7137, 58
        %v7495 = vpop.permute.xlu0 %7494
        %v7496 = vsel %vm4671, %v7477, %v7479
        %v7497 = vsel %vm4671, %v7479, %v7481
        %v7498 = vsel %vm4671, %v7481, %v7483
        %v7499 = vsel %vm4671, %v7483, %v7485
        %v7500 = vsel %vm4671, %v7485, %v7487
        %v7501 = vsel %vm4671, %v7487, %v7489
        %v7502 = vsel %vm4671, %v7489, %v7491
        %v7503 = vsel %vm4671, %v7491, %v7493
        %v7504 = vsel %vm4671, %v7493, %v7495
        %v7515 = vsel %vm676, %v7475, 0
        %7517 = vmatpush.bf16.msra.mxu0 0
        %7518 = vmatpush.bf16.msra.mxu0 0
        %7519 = vmatpush.bf16.msra.mxu0 0
        %7520 = vmatpush.bf16.msra.mxu0 0
        %7521 = vmatpush.bf16.msra.mxu0 0
        %7522 = vmatpush.bf16.msra.mxu0 0
        %7523 = vmatpush.bf16.msra.mxu0 0
        %7524 = vmatpush.bf16.msra.mxu0 %v7496
        %7525 = vmatmul.bf16.gmra.mxu0 %v7515
        %v7526 = vpop.f32.mrf.mxu0
        %v7527 = vadd.f32 0.0, %v7526
        %v7528 = vpop.f32.mrf.mxu0
        %7529 = vdwg.mxu0
        %7530 = vmatpush.bf16.msra.mxu0 0
        %7531 = vmatpush.bf16.msra.mxu0 0
        %7532 = vmatpush.bf16.msra.mxu0 0
        %7533 = vmatpush.bf16.msra.mxu0 0
        %7534 = vmatpush.bf16.msra.mxu0 0
        %7535 = vmatpush.bf16.msra.mxu0 0
        %7536 = vmatpush.bf16.msra.mxu0 0
        %7537 = vmatpush.bf16.msra.mxu0 %v7497
        %7538 = vmatmul.bf16.gmra.mxu0 %v7515
        %v7539 = vpop.f32.mrf.mxu0
        %v7540 = vadd.f32 0.0, %v7539
        %v7541 = vpop.f32.mrf.mxu0
        %7542 = vdwg.mxu0
        %7543 = vmatpush.bf16.msra.mxu0 0
        %7544 = vmatpush.bf16.msra.mxu0 0
        %7545 = vmatpush.bf16.msra.mxu0 0
        %7546 = vmatpush.bf16.msra.mxu0 0
        %7547 = vmatpush.bf16.msra.mxu0 0
        %7548 = vmatpush.bf16.msra.mxu0 0
        %7549 = vmatpush.bf16.msra.mxu0 0
        %7550 = vmatpush.bf16.msra.mxu0 %v7498
        %7551 = vmatmul.bf16.gmra.mxu0 %v7515
        %v7552 = vpop.f32.mrf.mxu0
        %v7553 = vadd.f32 0.0, %v7552
        %v7554 = vpop.f32.mrf.mxu0
        %7555 = vdwg.mxu0
        %7556 = vmatpush.bf16.msra.mxu0 0
        %7557 = vmatpush.bf16.msra.mxu0 0
        %7558 = vmatpush.bf16.msra.mxu0 0
        %7559 = vmatpush.bf16.msra.mxu0 0
        %7560 = vmatpush.bf16.msra.mxu0 0
        %7561 = vmatpush.bf16.msra.mxu0 0
        %7562 = vmatpush.bf16.msra.mxu0 0
        %7563 = vmatpush.bf16.msra.mxu0 %v7499
        %7564 = vmatmul.bf16.gmra.mxu0 %v7515
        %v7565 = vpop.f32.mrf.mxu0
        %v7566 = vadd.f32 0.0, %v7565
        %v7567 = vpop.f32.mrf.mxu0
        %7568 = vdwg.mxu0
        %7569 = vmatpush.bf16.msra.mxu0 0
        %7570 = vmatpush.bf16.msra.mxu0 0
        %7571 = vmatpush.bf16.msra.mxu0 0
        %7572 = vmatpush.bf16.msra.mxu0 0
        %7573 = vmatpush.bf16.msra.mxu0 0
        %7574 = vmatpush.bf16.msra.mxu0 0
        %7575 = vmatpush.bf16.msra.mxu0 0
        %7576 = vmatpush.bf16.msra.mxu0 %v7500
        %7577 = vmatmul.bf16.gmra.mxu0 %v7515
        %v7578 = vpop.f32.mrf.mxu0
        %v7579 = vadd.f32 0.0, %v7578
        %v7580 = vpop.f32.mrf.mxu0
        %7581 = vdwg.mxu0
        %7582 = vmatpush.bf16.msra.mxu0 0
        %7583 = vmatpush.bf16.msra.mxu0 0
        %7584 = vmatpush.bf16.msra.mxu0 0
        %7585 = vmatpush.bf16.msra.mxu0 0
        %7586 = vmatpush.bf16.msra.mxu0 0
        %7587 = vmatpush.bf16.msra.mxu0 0
        %7588 = vmatpush.bf16.msra.mxu0 0
        %7589 = vmatpush.bf16.msra.mxu0 %v7501
        %7590 = vmatmul.bf16.gmra.mxu0 %v7515
        %v7591 = vpop.f32.mrf.mxu0
        %v7592 = vadd.f32 0.0, %v7591
        %v7593 = vpop.f32.mrf.mxu0
        %7594 = vdwg.mxu0
        %7595 = vmatpush.bf16.msra.mxu0 0
        %7596 = vmatpush.bf16.msra.mxu0 0
        %7597 = vmatpush.bf16.msra.mxu0 0
        %7598 = vmatpush.bf16.msra.mxu0 0
        %7599 = vmatpush.bf16.msra.mxu0 0
        %7600 = vmatpush.bf16.msra.mxu0 0
        %7601 = vmatpush.bf16.msra.mxu0 0
        %7602 = vmatpush.bf16.msra.mxu0 %v7502
        %7603 = vmatmul.bf16.gmra.mxu0 %v7515
        %v7604 = vpop.f32.mrf.mxu0
        %v7605 = vadd.f32 0.0, %v7604
        %v7606 = vpop.f32.mrf.mxu0
        %7607 = vdwg.mxu0
        %7608 = vmatpush.bf16.msra.mxu0 0
        %7609 = vmatpush.bf16.msra.mxu0 0
        %7610 = vmatpush.bf16.msra.mxu0 0
        %7611 = vmatpush.bf16.msra.mxu0 0
        %7612 = vmatpush.bf16.msra.mxu0 0
        %7613 = vmatpush.bf16.msra.mxu0 0
        %7614 = vmatpush.bf16.msra.mxu0 0
        %7615 = vmatpush.bf16.msra.mxu0 %v7503
        %7616 = vmatmul.bf16.gmra.mxu0 %v7515
        %v7617 = vpop.f32.mrf.mxu0
        %v7618 = vadd.f32 0.0, %v7617
        %v7619 = vpop.f32.mrf.mxu0
        %7620 = vdwg.mxu0
        %7621 = vmatpush.bf16.msra.mxu0 0
        %7622 = vmatpush.bf16.msra.mxu0 0
        %7623 = vmatpush.bf16.msra.mxu0 0
        %7624 = vmatpush.bf16.msra.mxu0 0
        %7625 = vmatpush.bf16.msra.mxu0 0
        %7626 = vmatpush.bf16.msra.mxu0 0
        %7627 = vmatpush.bf16.msra.mxu0 0
        %7628 = vmatpush.bf16.msra.mxu0 %v7504
        %7629 = vmatmul.bf16.gmra.mxu0 %v7515
        %v7630 = vpop.f32.mrf.mxu0
        %v7631 = vadd.f32 0.0, %v7630
        %v7632 = vpop.f32.mrf.mxu0
        %7633 = vdwg.mxu0
        %v7634 = vadd.f32 %v7465, %v7527
        %v7635 = vadd.f32 %v7466, %v7540
        %v7636 = vadd.f32 %v7467, %v7553
        %v7637 = vadd.f32 %v7468, %v7566
        %v7638 = vadd.f32 %v7469, %v7579
        %v7639 = vadd.f32 %v7470, %v7592
        %v7640 = vadd.f32 %v7471, %v7605
        %v7641 = vadd.f32 %v7472, %v7618
        %v7642 = vadd.f32 %v7473, %v7631
        %v7643 = vld [vmem:[%s11] sm:$0x7]
        %7645 = vset.pattern.permute.xlu0 0
        %7646 = vperm.xlu0 %7645, %v7643
        %v7647 = vpop.permute.xlu0 %7646
        %v7649 = vadd.f32 %v7634, %v7647
        %v7650 = vadd.f32 %v7635, %v7647
        %v7651 = vadd.f32 %v7636, %v7647
        %v7652 = vadd.f32 %v7637, %v7647
        %v7653 = vadd.f32 %v7638, %v7647
        %v7654 = vadd.f32 %v7639, %v7647
        %v7655 = vadd.f32 %v7640, %v7647
        %v7656 = vadd.f32 %v7641, %v7647
        %v7657 = vadd.f32 %v7642, %v7647
        %v7666 = vrot.slane %v7650, 4
        %v7667 = vrot.slane %v7652, 4
        %v7668 = vrot.slane %v7654, 4
        %v7669 = vrot.slane %v7656, 4
        %vm7670 = vcmask 1043456
        %v7671 = vsel %vm7670, %v7649, %v7666
        %v7672 = vsel %vm7670, %v7651, %v7667
        %v7673 = vsel %vm7670, %v7653, %v7668
        %v7674 = vsel %vm7670, %v7655, %v7669
        %7679 = vst [vmem:[%s496] sm:$0x77] %v7671
        %7680 = vst [vmem:[%s496 + $0x8] sm:$0x77] %v7672
        %7681 = vst [vmem:[%s496 + $0x10] sm:$0x77] %v7673
        %7682 = vst [vmem:[%s496 + $0x18] sm:$0x77] %v7674
        %vm7683 = vcmask 518144
        %7684 = vst.msk [vmem:[%s496 + $0x20] sm:$0x7] %vm7683, %v7657
        %p7685 = scmp.lt.s32.totalorder %s26, 1
        %s7686 = scalar_select %p7685, %s26, 1
        %s7687 = smul.addr %s7686, 9
        %s7688 = smul.addr %s7687, 4
        %s7689 = scalar_lea.vmem %s12, %s7688
        // Predicated region
        $region89: #{decoder_forward.1} parent=67 // pred_check
          %p7690 = pneg %p301
        $region90: #{decoder_forward.1} parent=67 // pred_check_branch
          %7692 = sbr.rel (%p7690) target = $region92
        $region91: #{decoder_forward.1} parent=67 // pred_region
          _
        $region92: #{decoder_forward.1} parent=67 // pred_fallthru
          _
      $region68: #{decoder_forward.1} parent=5 // pred_fallthru
        _
      %p7693 = scmp.le.s32.totalorder 2, %s21
      // Predicated region
      $region93: #{decoder_forward.1} parent=5 // pred_check
        %p7694 = pneg %p7693
      $region94: #{decoder_forward.1} parent=5 // pred_check_branch
        %7696 = sbr.rel (%p7694) target = $region96
      $region95: #{decoder_forward.1} parent=5 // pred_region
        %s7697 = ssub.s32 %s21, 2
        // Predicated region
        $region97: #{decoder_forward.1} parent=95 // pred_check
          %p7698 = pneg %p307
        $region98: #{decoder_forward.1} parent=95 // pred_check_branch
          %7700 = sbr.rel (%p7698) target = $region100
        $region99: #{decoder_forward.1} parent=95 // pred_region
          %p7701 = scmp.lt.s32.totalorder %s27, 1
          %s7702 = scalar_select %p7701, %s27, 1
          %s7703 = smul.addr %s7702, 9
          %s7704 = smul.addr %s7703, 4
          %s7705 = scalar_lea.vmem %s12, %s7704
        $region100: #{decoder_forward.1} parent=95 // pred_fallthru
          _
      $region96: #{decoder_forward.1} parent=5 // pred_fallthru
        _
    $region6: #{decoder_forward.1} parent=1 // loop_footer
      %s25 = sadd.s32 1, %s21
    $region7: #{decoder_forward.1} parent=1 // loop_footer_branch
      %20 = sbr.rel target = $region3
    $region8: #{decoder_forward.1} parent=1 // loop_exit
      _
    %7706 = vsyncpa [#allocation5], 1
    %s7707 = scalar_lea.sflag [#allocation5], 1
    %7708 = vsyncpa %s7707, 1
    %7709 = vsyncpa [#allocation7], 1
    %7710 = vsyncpa [#allocation10], 1

</llo_original>
